<compile_context>
chip_gen: v5e
topology: v5e:2x2
jax: 0.10.0
libtpu: 0.0.40
codegen_flags: <defaults>
</compile_context>

<pallas_src>
import functools
import math

import jax
import jax.numpy as jnp
from jax.experimental import pallas as pl
from jax.experimental.pallas import tpu as pltpu


# ----------------------------------------------------------------------------
# helpers
# ----------------------------------------------------------------------------
def _rup(x, m):
    return (x + m - 1) // m * m


def _tile(dim, cap, align):
    """Pick (tile, padded_dim) with tile | padded_dim, tile <= cap, align | tile."""
    dp = _rup(dim, align)
    if dp <= cap:
        return dp, dp
    return cap, _rup(dim, cap)


def _choose_bh(h, w, k3):
    """Row-block size BH for the 3x3 conv: BH | H, BH*W >= 256 if possible, halo block bounded."""
    vmem_cap = 4 << 20                                    # bf16 halo block budget per buffer
    divs = [d for d in range(1, h + 1) if h % d == 0]
    fit = [d for d in divs if (d + 2) * w * k3 * 2 <= vmem_cap] or [1]
    geq = [d for d in fit if d * w >= 256]
    return min(geq) if geq else max(fit)


# ----------------------------------------------------------------------------
# Pallas kernels
# ----------------------------------------------------------------------------
def _gemm_epilogue_kernel(a_ref, b_ref, s_ref, c_ref, o_ref, acc_ref, *, relu):
    """out = act((A @ B) * scale + bias); grid=(Mt, Nt, Kt), K innermost."""
    k = pl.program_id(2)

    @pl.when(k == 0)
    def _():
        acc_ref[...] = jnp.zeros_like(acc_ref)

    acc_ref[...] += jnp.dot(a_ref[...], b_ref[...],
                            preferred_element_type=jnp.float32)

    @pl.when(k == pl.num_programs(2) - 1)
    def _():
        y = acc_ref[...] * s_ref[...] + c_ref[...]
        if relu:
            y = jnp.maximum(y, 0.0)
        o_ref[...] = y.astype(o_ref.dtype)


def _conv3x3_rows_kernel(xb_ref, w_ref, s_ref, b_ref, o_ref, acc_ref, *, relu):
    """BH output rows per grid step.

    xb_ref : [1, 1, BH+2, W, 3*Cin] bf16 — (BH+2)-row halo block, already W-shift expanded
             with channel layout (dj, cin).
    w_ref  : [3, 3*Cin, tn] bf16 — per vertical tap di, weights flattened as (dj, cin).
    acc_ref: VMEM [BH*W, tn] f32 scratch — accumulator for the 3 vertical-tap GEMMs.
    """
    bh = o_ref.shape[1]
    w = o_ref.shape[2]
    k3 = xb_ref.shape[-1]
    m = bh * w

    x0 = xb_ref[0, 0, 0:bh, :, :].reshape(m, k3)
    acc_ref[...] = jnp.dot(x0, w_ref[0, :, :], preferred_element_type=jnp.float32)
    x1 = xb_ref[0, 0, 1:bh + 1, :, :].reshape(m, k3)
    acc_ref[...] += jnp.dot(x1, w_ref[1, :, :], preferred_element_type=jnp.float32)
    x2 = xb_ref[0, 0, 2:bh + 2, :, :].reshape(m, k3)
    acc_ref[...] += jnp.dot(x2, w_ref[2, :, :], preferred_element_type=jnp.float32)

    y = acc_ref[...] * s_ref[...] + b_ref[...]
    if relu:
        y = jnp.maximum(y, 0.0)
    o_ref[0] = y.reshape(bh, w, -1).astype(o_ref.dtype)


# ----------------------------------------------------------------------------
# Pallas wrappers
# ----------------------------------------------------------------------------
def pallas_gemm_bias_act(a, b, scale, bias, relu, out_dtype):
    """a:[M,K], b:[K,N] (cast to bf16), scale/bias:[N] f32 -> [M,N] out_dtype."""
    M, K = a.shape
    K2, N = b.shape
    assert K2 == K

    tm, Mp = _tile(M, 512, 128)
    tn, Np = _tile(N, 512, 128)
    tk, Kp = _tile(K, 512, 128)

    a_p = a.astype(jnp.bfloat16)
    if (Mp, Kp) != (M, K):
        a_p = jnp.pad(a_p, ((0, Mp - M), (0, Kp - K)))
    b_p = b.astype(jnp.bfloat16)
    if (Kp, Np) != (K, N):
        b_p = jnp.pad(b_p, ((0, Kp - K), (0, Np - N)))
    s_p = scale.reshape(1, N).astype(jnp.float32)
    c_p = bias.reshape(1, N).astype(jnp.float32)
    if Np != N:
        s_p = jnp.pad(s_p, ((0, 0), (0, Np - N)))
        c_p = jnp.pad(c_p, ((0, 0), (0, Np - N)))

    grid = (Mp // tm, Np // tn, Kp // tk)

    out = pl.pallas_call(
        functools.partial(_gemm_epilogue_kernel, relu=relu),
        out_shape=jax.ShapeDtypeStruct((Mp, Np), out_dtype),
        grid_spec=pltpu.PrefetchScalarGridSpec(
            num_scalar_prefetch=0,
            grid=grid,
            in_specs=[
                pl.BlockSpec((tm, tk), lambda i, j, k: (i, k)),
                pl.BlockSpec((tk, tn), lambda i, j, k: (k, j)),
                pl.BlockSpec((1, tn), lambda i, j, k: (0, j)),
                pl.BlockSpec((1, tn), lambda i, j, k: (0, j)),
            ],
            out_specs=pl.BlockSpec((tm, tn), lambda i, j, k: (i, j)),
            scratch_shapes=[pltpu.VMEM((tm, tn), jnp.float32)],
        ),
        compiler_params=pltpu.CompilerParams(
            dimension_semantics=("parallel", "parallel", "arbitrary"),
        ),
    )(a_p, b_p, s_p, c_p)

    if (Mp, Np) != (M, N):
        out = out[:M, :N]
    return out


def conv3x3_bn_relu(sources, cp, relu, out_dtype):
    """3x3 conv (pad=1, stride=1) + folded BN/bias + optional ReLU, row-blocked.

    `sources` is a list of NHWC tensors concatenated along channels (fuses the skip concat —
    and, for conv1, the ConvTranspose pixel shuffle — into the conv input build).  Only a 3x
    W-shift expansion plus a (BH+2)/BH halo duplication is materialized in XLA; the 3 vertical
    taps are sliced from the halo block and accumulated in-kernel.
    """
    N, H, W, _ = sources[0].shape
    cin = sum(s.shape[-1] for s in sources)
    assert cin == cp['cin'], (cin, cp['cin'])
    coutp = cp['w'].shape[-1]
    cout = cp['cout']
    k3 = 3 * cin

    # output-channel tile (multiple of 128; >=256 when coutp allows, for the 256-wide MXU)
    tn = min(coutp, 512)
    while coutp % tn:
        tn -= 128
    nct = coutp // tn

    bh = _choose_bh(H, W, k3)
    hb = H // bh

    # zero-pad H and W by 1, cast to bf16, build the W-shift expansion
    # xw[n, r, wo, dj*cin + c] = x_pad[n, r, wo + dj, c]   (channel order matches torch.cat)
    padded = [jnp.pad(s.astype(jnp.bfloat16), ((0, 0), (1, 1), (1, 1), (0, 0)))
              for s in sources]
    cols = []
    for dj in range(3):
        for p_ in padded:
            cols.append(p_[:, :, dj:dj + W, :])
    xw = jnp.concatenate(cols, axis=-1)                       # [N, H+2, W, 3*cin] bf16
    # (BH+2)-row halo blocks so each grid step gets its full vertical footprint in one DMA.
    xb = jnp.stack([xw[:, i * bh:i * bh + bh + 2] for i in range(hb)], axis=1)
    # xb: [N, HB, BH+2, W, 3*cin]

    # h innermost => the weight/scale/bias block indices are constant across the H sweep,
    # so Pallas keeps the (3, 3*cin, tn) weight tile resident instead of re-DMA'ing it.
    grid = (N, nct, hb)

    out = pl.pallas_call(
        functools.partial(_conv3x3_rows_kernel, relu=relu),
        out_shape=jax.ShapeDtypeStruct((N, H, W, coutp), out_dtype),
        grid_spec=pltpu.PrefetchScalarGridSpec(
            num_scalar_prefetch=0,
            grid=grid,
            in_specs=[
                pl.BlockSpec((1, 1, bh + 2, W, k3), lambda n, ct, h: (n, h, 0, 0, 0)),
                pl.BlockSpec((3, k3, tn), lambda n, ct, h: (0, 0, ct)),
                pl.BlockSpec((1, tn), lambda n, ct, h: (0, ct)),
                pl.BlockSpec((1, tn), lambda n, ct, h: (0, ct)),
            ],
            out_specs=pl.BlockSpec((1, bh, W, tn), lambda n, ct, h: (n, h, 0, ct)),
            scratch_shapes=[pltpu.VMEM((bh * W, tn), jnp.float32)],
        ),
        compiler_params=pltpu.CompilerParams(
            dimension_semantics=("parallel", "parallel", "arbitrary"),
        ),
    )(xb, cp['w'], cp['scale'], cp['bias'])

    if coutp != cout:
        out = out[..., :cout]
    return out


def conv_transpose2x2(x, params):
    """nn.ConvTranspose2d(Cin, Cout, kernel_size=2, stride=2): one GEMM + pixel shuffle view."""
    N, H, W, Cin = x.shape
    cout = params['wt'].shape[1] // 4
    a = x.reshape(N * H * W, Cin)
    y = pallas_gemm_bias_act(a, params['wt'], params['up_scale'], params['up_bias'],
                             relu=False, out_dtype=jnp.bfloat16)
    # The pixel shuffle below stays a lazy XLA view: its only consumer is conv1's input build
    # (pad/shift/concat), so XLA fuses the permute there instead of materializing x1u.
    # TODO(synk): a strided out_spec on the GEMM could write the shuffled layout directly.
    y = y.reshape(N, H, W, 2, 2, cout)
    y = y.transpose(0, 1, 3, 2, 4, 5).reshape(N, 2 * H, 2 * W, cout)
    return y


# ----------------------------------------------------------------------------
# Deterministic parameter construction (weights pre-reshaped / pre-cast to bf16)
# ----------------------------------------------------------------------------
class KeyGen:
    def __init__(self, seed=0):
        self._key = jax.random.PRNGKey(seed)
        self._i = 0

    def __call__(self):
        self._i += 1
        return jax.random.fold_in(self._key, self._i)


def _bn_fold(kg, c, eps=1e-5):
    gamma = 1.0 + 0.05 * jax.random.normal(kg(), (c,), jnp.float32)
    beta = 0.05 * jax.random.normal(kg(), (c,), jnp.float32)
    mean = 0.05 * jax.random.normal(kg(), (c,), jnp.float32)
    var = 1.0 + 0.05 * jnp.abs(jax.random.normal(kg(), (c,), jnp.float32))
    scale = gamma / jnp.sqrt(var + eps)
    shift = beta - mean * scale
    return scale, shift


def make_conv3x3_params(kg, cin, cout):
    w = jax.random.normal(kg(), (3, 3, cin, cout), jnp.float32) * math.sqrt(2.0 / (9 * cin))
    b = 0.01 * jax.random.normal(kg(), (cout,), jnp.float32)
    scale, shift = _bn_fold(kg, cout)
    bias_eff = shift + b * scale            # BN(conv(x) + b) folded into scale / bias
    coutp = _rup(cout, 128)
    w3 = w.reshape(3, 3 * cin, cout)        # per vertical tap di: (dj, cin) flattened
    if coutp != cout:
        w3 = jnp.pad(w3, ((0, 0), (0, 0), (0, coutp - cout)))
        scale = jnp.pad(scale, (0, coutp - cout))
        bias_eff = jnp.pad(bias_eff, (0, coutp - cout))
    return {
        'w': w3.astype(jnp.bfloat16),                        # [3, 3*cin, coutp] bf16
        'scale': scale.reshape(1, coutp).astype(jnp.float32),
        'bias': bias_eff.reshape(1, coutp).astype(jnp.float32),
        'cin': cin,
        'cout': cout,
    }


def build_up_params(x1_dim, x2_dim, out_dim, seed=0):
    kg = KeyGen(seed)
    mid = x1_dim // 2
    wt = jax.random.normal(kg(), (x1_dim, 2, 2, mid), jnp.float32) * math.sqrt(1.0 / (4 * x1_dim))
    bt = 0.01 * jax.random.normal(kg(), (mid,), jnp.float32)
    return {
        'wt': wt.reshape(x1_dim, 4 * mid).astype(jnp.bfloat16),   # GEMM-ready [Cin, 4*Cout]
        'up_scale': jnp.ones((4 * mid,), jnp.float32),
        'up_bias': jnp.tile(bt, 4).astype(jnp.float32),
        'c1': make_conv3x3_params(kg, mid + x2_dim, out_dim),
        'c2': make_conv3x3_params(kg, out_dim, out_dim),
    }


# ----------------------------------------------------------------------------
# Up.forward
# ----------------------------------------------------------------------------
def up_forward_nchw(x1_nchw, x2_nchw, params):
    x1 = jnp.transpose(x1_nchw, (0, 2, 3, 1)).astype(jnp.bfloat16)
    x2 = None if x2_nchw is None else jnp.transpose(x2_nchw, (0, 2, 3, 1))

    x1u = conv_transpose2x2(x1, params)                      # [N, 2H, 2W, mid] bf16 (lazy view)
    srcs = [x1u] if x2 is None else [x1u, x2]                # torch.cat([x1, x2], dim=1) order
    h = conv3x3_bn_relu(srcs, params['c1'], relu=True, out_dtype=jnp.bfloat16)
    h = conv3x3_bn_relu([h], params['c2'], relu=True, out_dtype=jnp.float32)
    return jnp.transpose(h, (0, 3, 1, 2))                    # NCHW f32


# ----------------------------------------------------------------------------
# Main
# ----------------------------------------------------------------------------
if __name__ == "__main__":
    x1_dim, x2_dim, out_dim = 256, 128, 128
    params = build_up_params(x1_dim, x2_dim, out_dim, seed=0)

    key = jax.random.PRNGKey(0)
    k1, k2 = jax.random.split(key)
    x1 = jax.random.normal(k1, (2, x1_dim, 8, 8), jnp.float32)    # NCHW, like PyTorch
    x2 = jax.random.normal(k2, (2, x2_dim, 16, 16), jnp.float32)

    fwd = jax.jit(lambda a, b: up_forward_nchw(a, b, params))
    out = jax.block_until_ready(fwd(x1, x2))

    assert out.shape == (2, out_dim, 16, 16), out.shape
    assert bool(jnp.all(jnp.isfinite(out)))
    print("KERNEL_OK")
</pallas_src>

<mosaic_0001>
module attributes {stable_mosaic.version = 11 : i64} {
  func.func @_gemm_epilogue_kernel(%arg0: i32, %arg1: i32, %arg2: i32, %arg3: memref<128x256xbf16, #tpu.memory_space<vmem>>, %arg4: memref<256x512xbf16, #tpu.memory_space<vmem>>, %arg5: memref<1x512xf32, #tpu.memory_space<vmem>>, %arg6: memref<1x512xf32, #tpu.memory_space<vmem>>, %arg7: memref<128x512xbf16, #tpu.memory_space<vmem>>, %arg8: memref<128x512xf32, #tpu.memory_space<vmem>>) attributes {dimension_semantics = [#tpu.dimension_semantics<parallel>, #tpu.dimension_semantics<parallel>, #tpu.dimension_semantics<arbitrary>], iteration_bounds = array<i64: 1, 1, 1>, scalar_prefetch = 0 : i64, scratch_operands = 1 : i64, tpu.core_type = #tpu.core_type<tc>, window_params = [{transform_indices = @transform_0, window_bounds = array<i64: 128, 256>}, {transform_indices = @transform_1, window_bounds = array<i64: 256, 512>}, {transform_indices = @transform_2, window_bounds = array<i64: 1, 512>}, {transform_indices = @transform_3, window_bounds = array<i64: 1, 512>}, {transform_indices = @transform_4, window_bounds = array<i64: 128, 512>}]} {
    %c0_i32 = arith.constant 0 : i32
    %0 = arith.cmpi eq, %arg2, %c0_i32 : i32
    %1 = arith.extui %0 : i1 to i32
    %c0_i32_0 = arith.constant 0 : i32
    %2 = arith.cmpi ne, %1, %c0_i32_0 : i32
    scf.if %2 {
      %cst_10 = arith.constant 0.000000e+00 : f32
      %12 = vector.broadcast %cst_10 : f32 to vector<128x512xf32>
      %c0_11 = arith.constant 0 : index
      %c0_12 = arith.constant 0 : index
      %13 = vector.load %arg8[%c0_11, %c0_12] : memref<128x512xf32, #tpu.memory_space<vmem>>, vector<128x512xf32>
      tpu.vector_store %arg8[%c0_11, %c0_12], %12 {strides = array<i32>} : memref<128x512xf32, #tpu.memory_space<vmem>>, vector<128x512xf32>,
    } else {
    }
    %c0 = arith.constant 0 : index
    %c0_1 = arith.constant 0 : index
    %3 = vector.load %arg8[%c0, %c0_1] : memref<128x512xf32, #tpu.memory_space<vmem>>, vector<128x512xf32>
    %c0_2 = arith.constant 0 : index
    %c0_3 = arith.constant 0 : index
    %4 = vector.load %arg3[%c0_2, %c0_3] : memref<128x256xbf16, #tpu.memory_space<vmem>>, vector<128x256xbf16>
    %c0_4 = arith.constant 0 : index
    %c0_5 = arith.constant 0 : index
    %5 = vector.load %arg4[%c0_4, %c0_5] : memref<256x512xbf16, #tpu.memory_space<vmem>>, vector<256x512xbf16>
    %cst = arith.constant dense<0.000000e+00> : vector<128x512xf32>
    %6 = tpu.matmul %4, %5, %cst {dimension_numbers = #tpu.dot_dimension_numbers<[1], [0], [0], [1], [0, 0, 1, 1], [], []>} : vector<128x256xbf16>, vector<256x512xbf16>, vector<128x512xf32> -> vector<128x512xf32>
    %7 = arith.addf %3, %6 : vector<128x512xf32>
    %c0_6 = arith.constant 0 : index
    %c0_7 = arith.constant 0 : index
    %8 = vector.load %arg8[%c0_6, %c0_7] : memref<128x512xf32, #tpu.memory_space<vmem>>, vector<128x512xf32>
    tpu.vector_store %arg8[%c0_6, %c0_7], %7 {strides = array<i32>} : memref<128x512xf32, #tpu.memory_space<vmem>>, vector<128x512xf32>,
    %c0_i32_8 = arith.constant 0 : i32
    %9 = arith.cmpi eq, %arg2, %c0_i32_8 : i32
    %10 = arith.extui %9 : i1 to i32
    %c0_i32_9 = arith.constant 0 : i32
    %11 = arith.cmpi ne, %10, %c0_i32_9 : i32
    scf.if %11 {
      %c0_10 = arith.constant 0 : index
      %c0_11 = arith.constant 0 : index
      %12 = vector.load %arg8[%c0_10, %c0_11] : memref<128x512xf32, #tpu.memory_space<vmem>>, vector<128x512xf32>
      %c0_12 = arith.constant 0 : index
      %c0_13 = arith.constant 0 : index
      %13 = vector.load %arg5[%c0_12, %c0_13] : memref<1x512xf32, #tpu.memory_space<vmem>>, vector<1x512xf32>
      %14 = vector.broadcast %13 : vector<1x512xf32> to vector<128x512xf32>
      %15 = arith.mulf %12, %14 : vector<128x512xf32>
      %c0_14 = arith.constant 0 : index
      %c0_15 = arith.constant 0 : index
      %16 = vector.load %arg6[%c0_14, %c0_15] : memref<1x512xf32, #tpu.memory_space<vmem>>, vector<1x512xf32>
      %17 = vector.broadcast %16 : vector<1x512xf32> to vector<128x512xf32>
      %18 = arith.addf %15, %17 : vector<128x512xf32>
      %19 = arith.truncf %18 : vector<128x512xf32> to vector<128x512xbf16>
      %c0_16 = arith.constant 0 : index
      %c0_17 = arith.constant 0 : index
      %20 = vector.load %arg7[%c0_16, %c0_17] : memref<128x512xbf16, #tpu.memory_space<vmem>>, vector<128x512xbf16>
      tpu.vector_store %arg7[%c0_16, %c0_17], %19 {strides = array<i32>} : memref<128x512xbf16, #tpu.memory_space<vmem>>, vector<128x512xbf16>,
    } else {
    }
    return
  }
  func.func @transform_0(%arg0: i32, %arg1: i32, %arg2: i32) -> (i32, i32) {
    %c0_i32 = arith.constant 0 : i32
    return %arg0, %arg2 : i32, i32
  }
  func.func @transform_1(%arg0: i32, %arg1: i32, %arg2: i32) -> (i32, i32) {
    %c0_i32 = arith.constant 0 : i32
    return %arg2, %arg1 : i32, i32
  }
  func.func @transform_2(%arg0: i32, %arg1: i32, %arg2: i32) -> (i32, i32) {
    %c0_i32 = arith.constant 0 : i32
    %c0_i32_0 = arith.constant 0 : i32
    return %c0_i32, %arg1 : i32, i32
  }
  func.func @transform_3(%arg0: i32, %arg1: i32, %arg2: i32) -> (i32, i32) {
    %c0_i32 = arith.constant 0 : i32
    %c0_i32_0 = arith.constant 0 : i32
    return %c0_i32, %arg1 : i32, i32
  }
  func.func @transform_4(%arg0: i32, %arg1: i32, %arg2: i32) -> (i32, i32) {
    %c0_i32 = arith.constant 0 : i32
    return %arg0, %arg1 : i32, i32
  }
}

module attributes {stable_mosaic.version = 11 : i64} {
  func.func @_conv3x3_rows_kernel(%arg0: i32, %arg1: i32, %arg2: i32, %arg3: memref<1x1x18x16x768xbf16, #tpu.memory_space<vmem>>, %arg4: memref<3x768x128xbf16, #tpu.memory_space<vmem>>, %arg5: memref<1x128xf32, #tpu.memory_space<vmem>>, %arg6: memref<1x128xf32, #tpu.memory_space<vmem>>, %arg7: memref<1x16x16x128xbf16, #tpu.memory_space<vmem>>, %arg8: memref<256x128xf32, #tpu.memory_space<vmem>>) attributes {dimension_semantics = [#tpu.dimension_semantics<parallel>, #tpu.dimension_semantics<parallel>, #tpu.dimension_semantics<arbitrary>], iteration_bounds = array<i64: 2, 1, 1>, scalar_prefetch = 0 : i64, scratch_operands = 1 : i64, tpu.core_type = #tpu.core_type<tc>, window_params = [{transform_indices = @transform_0, window_bounds = array<i64: 1, 1, 18, 16, 768>}, {transform_indices = @transform_1, window_bounds = array<i64: 3, 768, 128>}, {transform_indices = @transform_2, window_bounds = array<i64: 1, 128>}, {transform_indices = @transform_3, window_bounds = array<i64: 1, 128>}, {transform_indices = @transform_4, window_bounds = array<i64: 1, 16, 16, 128>}]} {
    %c0 = arith.constant 0 : index
    %c0_0 = arith.constant 0 : index
    %c0_1 = arith.constant 0 : index
    %c0_2 = arith.constant 0 : index
    %c0_3 = arith.constant 0 : index
    %0 = vector.load %arg3[%c0, %c0_0, %c0_1, %c0_2, %c0_3] : memref<1x1x18x16x768xbf16, #tpu.memory_space<vmem>>, vector<1x1x16x16x768xbf16>
    %1 = vector.shape_cast %0 : vector<1x1x16x16x768xbf16> to vector<16x16x768xbf16>
    %2 = vector.shape_cast %1 : vector<16x16x768xbf16> to vector<256x768xbf16>
    %c0_4 = arith.constant 0 : index
    %c0_5 = arith.constant 0 : index
    %c0_6 = arith.constant 0 : index
    %3 = vector.load %arg4[%c0_4, %c0_5, %c0_6] : memref<3x768x128xbf16, #tpu.memory_space<vmem>>, vector<1x768x128xbf16>
    %4 = vector.shape_cast %3 : vector<1x768x128xbf16> to vector<768x128xbf16>
    %cst = arith.constant dense<0.000000e+00> : vector<256x128xf32>
    %5 = tpu.matmul %2, %4, %cst {dimension_numbers = #tpu.dot_dimension_numbers<[1], [0], [0], [1], [0, 0, 1, 1], [], []>} : vector<256x768xbf16>, vector<768x128xbf16>, vector<256x128xf32> -> vector<256x128xf32>
    %c0_7 = arith.constant 0 : index
    %c0_8 = arith.constant 0 : index
    %6 = vector.load %arg8[%c0_7, %c0_8] : memref<256x128xf32, #tpu.memory_space<vmem>>, vector<256x128xf32>
    tpu.vector_store %arg8[%c0_7, %c0_8], %5 {strides = array<i32>} : memref<256x128xf32, #tpu.memory_space<vmem>>, vector<256x128xf32>,
    %c0_9 = arith.constant 0 : index
    %c0_10 = arith.constant 0 : index
    %c1 = arith.constant 1 : index
    %c0_11 = arith.constant 0 : index
    %c0_12 = arith.constant 0 : index
    %7 = vector.load %arg3[%c0_9, %c0_10, %c1, %c0_11, %c0_12] : memref<1x1x18x16x768xbf16, #tpu.memory_space<vmem>>, vector<1x1x16x16x768xbf16>
    %8 = vector.shape_cast %7 : vector<1x1x16x16x768xbf16> to vector<16x16x768xbf16>
    %9 = vector.shape_cast %8 : vector<16x16x768xbf16> to vector<256x768xbf16>
    %c0_13 = arith.constant 0 : index
    %c0_14 = arith.constant 0 : index
    %10 = vector.load %arg8[%c0_13, %c0_14] : memref<256x128xf32, #tpu.memory_space<vmem>>, vector<256x128xf32>
    %c1_15 = arith.constant 1 : index
    %c0_16 = arith.constant 0 : index
    %c0_17 = arith.constant 0 : index
    %11 = vector.load %arg4[%c1_15, %c0_16, %c0_17] : memref<3x768x128xbf16, #tpu.memory_space<vmem>>, vector<1x768x128xbf16>
    %12 = vector.shape_cast %11 : vector<1x768x128xbf16> to vector<768x128xbf16>
    %cst_18 = arith.constant dense<0.000000e+00> : vector<256x128xf32>
    %13 = tpu.matmul %9, %12, %cst_18 {dimension_numbers = #tpu.dot_dimension_numbers<[1], [0], [0], [1], [0, 0, 1, 1], [], []>} : vector<256x768xbf16>, vector<768x128xbf16>, vector<256x128xf32> -> vector<256x128xf32>
    %14 = arith.addf %10, %13 : vector<256x128xf32>
    %c0_19 = arith.constant 0 : index
    %c0_20 = arith.constant 0 : index
    %15 = vector.load %arg8[%c0_19, %c0_20] : memref<256x128xf32, #tpu.memory_space<vmem>>, vector<256x128xf32>
    tpu.vector_store %arg8[%c0_19, %c0_20], %14 {strides = array<i32>} : memref<256x128xf32, #tpu.memory_space<vmem>>, vector<256x128xf32>,
    %c0_21 = arith.constant 0 : index
    %c0_22 = arith.constant 0 : index
    %c2 = arith.constant 2 : index
    %c0_23 = arith.constant 0 : index
    %c0_24 = arith.constant 0 : index
    %16 = vector.load %arg3[%c0_21, %c0_22, %c2, %c0_23, %c0_24] : memref<1x1x18x16x768xbf16, #tpu.memory_space<vmem>>, vector<1x1x16x16x768xbf16>
    %17 = vector.shape_cast %16 : vector<1x1x16x16x768xbf16> to vector<16x16x768xbf16>
    %18 = vector.shape_cast %17 : vector<16x16x768xbf16> to vector<256x768xbf16>
    %c0_25 = arith.constant 0 : index
    %c0_26 = arith.constant 0 : index
    %19 = vector.load %arg8[%c0_25, %c0_26] : memref<256x128xf32, #tpu.memory_space<vmem>>, vector<256x128xf32>
    %c2_27 = arith.constant 2 : index
    %c0_28 = arith.constant 0 : index
    %c0_29 = arith.constant 0 : index
    %20 = vector.load %arg4[%c2_27, %c0_28, %c0_29] : memref<3x768x128xbf16, #tpu.memory_space<vmem>>, vector<1x768x128xbf16>
    %21 = vector.shape_cast %20 : vector<1x768x128xbf16> to vector<768x128xbf16>
    %cst_30 = arith.constant dense<0.000000e+00> : vector<256x128xf32>
    %22 = tpu.matmul %18, %21, %cst_30 {dimension_numbers = #tpu.dot_dimension_numbers<[1], [0], [0], [1], [0, 0, 1, 1], [], []>} : vector<256x768xbf16>, vector<768x128xbf16>, vector<256x128xf32> -> vector<256x128xf32>
    %23 = arith.addf %19, %22 : vector<256x128xf32>
    %c0_31 = arith.constant 0 : index
    %c0_32 = arith.constant 0 : index
    %24 = vector.load %arg8[%c0_31, %c0_32] : memref<256x128xf32, #tpu.memory_space<vmem>>, vector<256x128xf32>
    tpu.vector_store %arg8[%c0_31, %c0_32], %23 {strides = array<i32>} : memref<256x128xf32, #tpu.memory_space<vmem>>, vector<256x128xf32>,
    %c0_33 = arith.constant 0 : index
    %c0_34 = arith.constant 0 : index
    %25 = vector.load %arg8[%c0_33, %c0_34] : memref<256x128xf32, #tpu.memory_space<vmem>>, vector<256x128xf32>
    %c0_35 = arith.constant 0 : index
    %c0_36 = arith.constant 0 : index
    %26 = vector.load %arg5[%c0_35, %c0_36] : memref<1x128xf32, #tpu.memory_space<vmem>>, vector<1x128xf32>
    %27 = vector.broadcast %26 : vector<1x128xf32> to vector<256x128xf32>
    %28 = arith.mulf %25, %27 : vector<256x128xf32>
    %c0_37 = arith.constant 0 : index
    %c0_38 = arith.constant 0 : index
    %29 = vector.load %arg6[%c0_37, %c0_38] : memref<1x128xf32, #tpu.memory_space<vmem>>, vector<1x128xf32>
    %30 = vector.broadcast %29 : vector<1x128xf32> to vector<256x128xf32>
    %31 = arith.addf %28, %30 : vector<256x128xf32>
    %cst_39 = arith.constant 0.000000e+00 : f32
    %32 = vector.broadcast %cst_39 : f32 to vector<256x128xf32>
    %33 = arith.maximumf %31, %32 : vector<256x128xf32>
    %34 = vector.shape_cast %33 : vector<256x128xf32> to vector<16x16x128xf32>
    %35 = arith.truncf %34 : vector<16x16x128xf32> to vector<16x16x128xbf16>
    %c0_40 = arith.constant 0 : index
    %c0_41 = arith.constant 0 : index
    %c0_42 = arith.constant 0 : index
    %c0_43 = arith.constant 0 : index
    %36 = vector.load %arg7[%c0_40, %c0_41, %c0_42, %c0_43] : memref<1x16x16x128xbf16, #tpu.memory_space<vmem>>, vector<1x16x16x128xbf16>
    %37 = vector.shape_cast %36 : vector<1x16x16x128xbf16> to vector<16x16x128xbf16>
    %38 = vector.shape_cast %35 : vector<16x16x128xbf16> to vector<1x16x16x128xbf16>
    tpu.vector_store %arg7[%c0_40, %c0_41, %c0_42, %c0_43], %38 {strides = array<i32>} : memref<1x16x16x128xbf16, #tpu.memory_space<vmem>>, vector<1x16x16x128xbf16>,
    return
  }
  func.func @transform_0(%arg0: i32, %arg1: i32, %arg2: i32) -> (i32, i32, i32, i32, i32) {
    %c0_i32 = arith.constant 0 : i32
    %c0_i32_0 = arith.constant 0 : i32
    %c0_i32_1 = arith.constant 0 : i32
    %c0_i32_2 = arith.constant 0 : i32
    return %arg0, %arg2, %c0_i32, %c0_i32_0, %c0_i32_1 : i32, i32, i32, i32, i32
  }
  func.func @transform_1(%arg0: i32, %arg1: i32, %arg2: i32) -> (i32, i32, i32) {
    %c0_i32 = arith.constant 0 : i32
    %c0_i32_0 = arith.constant 0 : i32
    %c0_i32_1 = arith.constant 0 : i32
    return %c0_i32, %c0_i32_0, %arg1 : i32, i32, i32
  }
  func.func @transform_2(%arg0: i32, %arg1: i32, %arg2: i32) -> (i32, i32) {
    %c0_i32 = arith.constant 0 : i32
    %c0_i32_0 = arith.constant 0 : i32
    return %c0_i32, %arg1 : i32, i32
  }
  func.func @transform_3(%arg0: i32, %arg1: i32, %arg2: i32) -> (i32, i32) {
    %c0_i32 = arith.constant 0 : i32
    %c0_i32_0 = arith.constant 0 : i32
    return %c0_i32, %arg1 : i32, i32
  }
  func.func @transform_4(%arg0: i32, %arg1: i32, %arg2: i32) -> (i32, i32, i32, i32) {
    %c0_i32 = arith.constant 0 : i32
    %c0_i32_0 = arith.constant 0 : i32
    return %arg0, %arg2, %c0_i32, %arg1 : i32, i32, i32, i32
  }
}

module attributes {stable_mosaic.version = 11 : i64} {
  func.func @_conv3x3_rows_kernel(%arg0: i32, %arg1: i32, %arg2: i32, %arg3: memref<1x1x18x16x384xbf16, #tpu.memory_space<vmem>>, %arg4: memref<3x384x128xbf16, #tpu.memory_space<vmem>>, %arg5: memref<1x128xf32, #tpu.memory_space<vmem>>, %arg6: memref<1x128xf32, #tpu.memory_space<vmem>>, %arg7: memref<1x16x16x128xf32, #tpu.memory_space<vmem>>, %arg8: memref<256x128xf32, #tpu.memory_space<vmem>>) attributes {dimension_semantics = [#tpu.dimension_semantics<parallel>, #tpu.dimension_semantics<parallel>, #tpu.dimension_semantics<arbitrary>], iteration_bounds = array<i64: 2, 1, 1>, scalar_prefetch = 0 : i64, scratch_operands = 1 : i64, tpu.core_type = #tpu.core_type<tc>, window_params = [{transform_indices = @transform_0, window_bounds = array<i64: 1, 1, 18, 16, 384>}, {transform_indices = @transform_1, window_bounds = array<i64: 3, 384, 128>}, {transform_indices = @transform_2, window_bounds = array<i64: 1, 128>}, {transform_indices = @transform_3, window_bounds = array<i64: 1, 128>}, {transform_indices = @transform_4, window_bounds = array<i64: 1, 16, 16, 128>}]} {
    %c0 = arith.constant 0 : index
    %c0_0 = arith.constant 0 : index
    %c0_1 = arith.constant 0 : index
    %c0_2 = arith.constant 0 : index
    %c0_3 = arith.constant 0 : index
    %0 = vector.load %arg3[%c0, %c0_0, %c0_1, %c0_2, %c0_3] : memref<1x1x18x16x384xbf16, #tpu.memory_space<vmem>>, vector<1x1x16x16x384xbf16>
    %1 = vector.shape_cast %0 : vector<1x1x16x16x384xbf16> to vector<16x16x384xbf16>
    %2 = vector.shape_cast %1 : vector<16x16x384xbf16> to vector<256x384xbf16>
    %c0_4 = arith.constant 0 : index
    %c0_5 = arith.constant 0 : index
    %c0_6 = arith.constant 0 : index
    %3 = vector.load %arg4[%c0_4, %c0_5, %c0_6] : memref<3x384x128xbf16, #tpu.memory_space<vmem>>, vector<1x384x128xbf16>
    %4 = vector.shape_cast %3 : vector<1x384x128xbf16> to vector<384x128xbf16>
    %cst = arith.constant dense<0.000000e+00> : vector<256x128xf32>
    %5 = tpu.matmul %2, %4, %cst {dimension_numbers = #tpu.dot_dimension_numbers<[1], [0], [0], [1], [0, 0, 1, 1], [], []>} : vector<256x384xbf16>, vector<384x128xbf16>, vector<256x128xf32> -> vector<256x128xf32>
    %c0_7 = arith.constant 0 : index
    %c0_8 = arith.constant 0 : index
    %6 = vector.load %arg8[%c0_7, %c0_8] : memref<256x128xf32, #tpu.memory_space<vmem>>, vector<256x128xf32>
    tpu.vector_store %arg8[%c0_7, %c0_8], %5 {strides = array<i32>} : memref<256x128xf32, #tpu.memory_space<vmem>>, vector<256x128xf32>,
    %c0_9 = arith.constant 0 : index
    %c0_10 = arith.constant 0 : index
    %c1 = arith.constant 1 : index
    %c0_11 = arith.constant 0 : index
    %c0_12 = arith.constant 0 : index
    %7 = vector.load %arg3[%c0_9, %c0_10, %c1, %c0_11, %c0_12] : memref<1x1x18x16x384xbf16, #tpu.memory_space<vmem>>, vector<1x1x16x16x384xbf16>
    %8 = vector.shape_cast %7 : vector<1x1x16x16x384xbf16> to vector<16x16x384xbf16>
    %9 = vector.shape_cast %8 : vector<16x16x384xbf16> to vector<256x384xbf16>
    %c0_13 = arith.constant 0 : index
    %c0_14 = arith.constant 0 : index
    %10 = vector.load %arg8[%c0_13, %c0_14] : memref<256x128xf32, #tpu.memory_space<vmem>>, vector<256x128xf32>
    %c1_15 = arith.constant 1 : index
    %c0_16 = arith.constant 0 : index
    %c0_17 = arith.constant 0 : index
    %11 = vector.load %arg4[%c1_15, %c0_16, %c0_17] : memref<3x384x128xbf16, #tpu.memory_space<vmem>>, vector<1x384x128xbf16>
    %12 = vector.shape_cast %11 : vector<1x384x128xbf16> to vector<384x128xbf16>
    %cst_18 = arith.constant dense<0.000000e+00> : vector<256x128xf32>
    %13 = tpu.matmul %9, %12, %cst_18 {dimension_numbers = #tpu.dot_dimension_numbers<[1], [0], [0], [1], [0, 0, 1, 1], [], []>} : vector<256x384xbf16>, vector<384x128xbf16>, vector<256x128xf32> -> vector<256x128xf32>
    %14 = arith.addf %10, %13 : vector<256x128xf32>
    %c0_19 = arith.constant 0 : index
    %c0_20 = arith.constant 0 : index
    %15 = vector.load %arg8[%c0_19, %c0_20] : memref<256x128xf32, #tpu.memory_space<vmem>>, vector<256x128xf32>
    tpu.vector_store %arg8[%c0_19, %c0_20], %14 {strides = array<i32>} : memref<256x128xf32, #tpu.memory_space<vmem>>, vector<256x128xf32>,
    %c0_21 = arith.constant 0 : index
    %c0_22 = arith.constant 0 : index
    %c2 = arith.constant 2 : index
    %c0_23 = arith.constant 0 : index
    %c0_24 = arith.constant 0 : index
    %16 = vector.load %arg3[%c0_21, %c0_22, %c2, %c0_23, %c0_24] : memref<1x1x18x16x384xbf16, #tpu.memory_space<vmem>>, vector<1x1x16x16x384xbf16>
    %17 = vector.shape_cast %16 : vector<1x1x16x16x384xbf16> to vector<16x16x384xbf16>
    %18 = vector.shape_cast %17 : vector<16x16x384xbf16> to vector<256x384xbf16>
    %c0_25 = arith.constant 0 : index
    %c0_26 = arith.constant 0 : index
    %19 = vector.load %arg8[%c0_25, %c0_26] : memref<256x128xf32, #tpu.memory_space<vmem>>, vector<256x128xf32>
    %c2_27 = arith.constant 2 : index
    %c0_28 = arith.constant 0 : index
    %c0_29 = arith.constant 0 : index
    %20 = vector.load %arg4[%c2_27, %c0_28, %c0_29] : memref<3x384x128xbf16, #tpu.memory_space<vmem>>, vector<1x384x128xbf16>
    %21 = vector.shape_cast %20 : vector<1x384x128xbf16> to vector<384x128xbf16>
    %cst_30 = arith.constant dense<0.000000e+00> : vector<256x128xf32>
    %22 = tpu.matmul %18, %21, %cst_30 {dimension_numbers = #tpu.dot_dimension_numbers<[1], [0], [0], [1], [0, 0, 1, 1], [], []>} : vector<256x384xbf16>, vector<384x128xbf16>, vector<256x128xf32> -> vector<256x128xf32>
    %23 = arith.addf %19, %22 : vector<256x128xf32>
    %c0_31 = arith.constant 0 : index
    %c0_32 = arith.constant 0 : index
    %24 = vector.load %arg8[%c0_31, %c0_32] : memref<256x128xf32, #tpu.memory_space<vmem>>, vector<256x128xf32>
    tpu.vector_store %arg8[%c0_31, %c0_32], %23 {strides = array<i32>} : memref<256x128xf32, #tpu.memory_space<vmem>>, vector<256x128xf32>,
    %c0_33 = arith.constant 0 : index
    %c0_34 = arith.constant 0 : index
    %25 = vector.load %arg8[%c0_33, %c0_34] : memref<256x128xf32, #tpu.memory_space<vmem>>, vector<256x128xf32>
    %c0_35 = arith.constant 0 : index
    %c0_36 = arith.constant 0 : index
    %26 = vector.load %arg5[%c0_35, %c0_36] : memref<1x128xf32, #tpu.memory_space<vmem>>, vector<1x128xf32>
    %27 = vector.broadcast %26 : vector<1x128xf32> to vector<256x128xf32>
    %28 = arith.mulf %25, %27 : vector<256x128xf32>
    %c0_37 = arith.constant 0 : index
    %c0_38 = arith.constant 0 : index
    %29 = vector.load %arg6[%c0_37, %c0_38] : memref<1x128xf32, #tpu.memory_space<vmem>>, vector<1x128xf32>
    %30 = vector.broadcast %29 : vector<1x128xf32> to vector<256x128xf32>
    %31 = arith.addf %28, %30 : vector<256x128xf32>
    %cst_39 = arith.constant 0.000000e+00 : f32
    %32 = vector.broadcast %cst_39 : f32 to vector<256x128xf32>
    %33 = arith.maximumf %31, %32 : vector<256x128xf32>
    %34 = vector.shape_cast %33 : vector<256x128xf32> to vector<16x16x128xf32>
    %c0_40 = arith.constant 0 : index
    %c0_41 = arith.constant 0 : index
    %c0_42 = arith.constant 0 : index
    %c0_43 = arith.constant 0 : index
    %35 = vector.load %arg7[%c0_40, %c0_41, %c0_42, %c0_43] : memref<1x16x16x128xf32, #tpu.memory_space<vmem>>, vector<1x16x16x128xf32>
    %36 = vector.shape_cast %35 : vector<1x16x16x128xf32> to vector<16x16x128xf32>
    %37 = vector.shape_cast %34 : vector<16x16x128xf32> to vector<1x16x16x128xf32>
    tpu.vector_store %arg7[%c0_40, %c0_41, %c0_42, %c0_43], %37 {strides = array<i32>} : memref<1x16x16x128xf32, #tpu.memory_space<vmem>>, vector<1x16x16x128xf32>,
    return
  }
  func.func @transform_0(%arg0: i32, %arg1: i32, %arg2: i32) -> (i32, i32, i32, i32, i32) {
    %c0_i32 = arith.constant 0 : i32
    %c0_i32_0 = arith.constant 0 : i32
    %c0_i32_1 = arith.constant 0 : i32
    %c0_i32_2 = arith.constant 0 : i32
    return %arg0, %arg2, %c0_i32, %c0_i32_0, %c0_i32_1 : i32, i32, i32, i32, i32
  }
  func.func @transform_1(%arg0: i32, %arg1: i32, %arg2: i32) -> (i32, i32, i32) {
    %c0_i32 = arith.constant 0 : i32
    %c0_i32_0 = arith.constant 0 : i32
    %c0_i32_1 = arith.constant 0 : i32
    return %c0_i32, %c0_i32_0, %arg1 : i32, i32, i32
  }
  func.func @transform_2(%arg0: i32, %arg1: i32, %arg2: i32) -> (i32, i32) {
    %c0_i32 = arith.constant 0 : i32
    %c0_i32_0 = arith.constant 0 : i32
    return %c0_i32, %arg1 : i32, i32
  }
  func.func @transform_3(%arg0: i32, %arg1: i32, %arg2: i32) -> (i32, i32) {
    %c0_i32 = arith.constant 0 : i32
    %c0_i32_0 = arith.constant 0 : i32
    return %c0_i32, %arg1 : i32, i32
  }
  func.func @transform_4(%arg0: i32, %arg1: i32, %arg2: i32) -> (i32, i32, i32, i32) {
    %c0_i32 = arith.constant 0 : i32
    %c0_i32_0 = arith.constant 0 : i32
    return %arg0, %arg2, %c0_i32, %arg1 : i32, i32, i32, i32
  }
}

</mosaic_0001>

<llo_original>
// kernel: _lambda_.3
$region0: #{_lambda_.3}
  #allocation0 [shape = 'u32[]', space=smem, size = 0x4, offset = 0x4, fixed_abs, tag = 'smem constant byte address 0x4 - core index']
  #allocation1 [shape = 'u32[72,128]{1,0:T(1,128)}', space=vmem, size = 0x9000, scoped, tag = 'internal scratch']
  #allocation2 [shape = 'f32[128,512]{1,0:T(8,128)}', space=vmem, size = 0x40000, scoped, tag = 'scratch operand']
  %s0 = inlined_call_operand.vmem [shape: bf16[128,256], index: 0, kind: input, shape index: {}]
  %s1 = inlined_call_operand.hbm [shape: bf16[256,512], index: 1, kind: input, shape index: {}]
  %s2 = inlined_call_operand.vmem [shape: f32[1,512], index: 2, kind: input, shape index: {}]
  %s3 = inlined_call_operand.vmem [shape: f32[1,512], index: 3, kind: input, shape index: {}]
  %s4 = inlined_call_operand.vmem [shape: bf16[128,512], index: 4, kind: output, shape index: {}]
  %s5 = sld [smem:[#allocation0]]
  $region38: #{_lambda_.3} parent=0
    _
  %s7 = ssub.s32 1, %s5
  %s8 = scalar_select 0, %s7, %s5
  $region1: #{_lambda_.3} parent=0
    #allocation3 [shape = 'u8[262144]{0}', space=vmem, size = 0x40000, scoped, tag = 'input window, operand 1, single buffered']
    #allocation4 [shape = 's32[1]{0}', space=sflag, size = 0x4, scoped, tag = 'scoped memory for _lambda_.3']
    %9 = vsyncpa [#allocation4], 0
    // Predicated region
    $region2: #{_lambda_.3} parent=1 // pred_check
      _
    $region3: #{_lambda_.3} parent=1 // pred_check_branch
      %11 = sbr.rel (0) target = $region5
    $region4: #{_lambda_.3} parent=1 // pred_region
      _
    $region5: #{_lambda_.3} parent=1 // pred_fallthru
      _
    // Predicated region
    $region6: #{_lambda_.3} parent=1 // pred_check
      _
    $region7: #{_lambda_.3} parent=1 // pred_check_branch
      %13 = sbr.rel (0) target = $region9
    $region8: #{_lambda_.3} parent=1 // pred_region
      %15 = vsyncadd [#allocation4], 0
      %s16 = sshll.u32 %s1, 4
      %s17 = int_to_ptr.hbm [resolvable:$true] %s16
      %s18 = sshll.u32 [#allocation3], 4
      %s19 = int_to_ptr.vmem [resolvable:$true] %s18
      %24 = dma.hbm_to_vmem [thread:$0]  %s17, 8192, %s19, [#allocation4], 256, 256, 16
    $region9: #{_lambda_.3} parent=1 // pred_fallthru
      _
    // Predicated region
    $region10: #{_lambda_.3} parent=1 // pred_check
      _
    $region11: #{_lambda_.3} parent=1 // pred_check_branch
      %26 = sbr.rel (0) target = $region13
    $region12: #{_lambda_.3} parent=1 // pred_region
      _
    $region13: #{_lambda_.3} parent=1 // pred_fallthru
      _
    // Predicated region
    $region14: #{_lambda_.3} parent=1 // pred_check
      _
    $region15: #{_lambda_.3} parent=1 // pred_check_branch
      %28 = sbr.rel (0) target = $region17
    $region16: #{_lambda_.3} parent=1 // pred_region
      _
    $region17: #{_lambda_.3} parent=1 // pred_fallthru
      _
    // Predicated region
    $region18: #{_lambda_.3} parent=1 // pred_check
      _
    $region19: #{_lambda_.3} parent=1 // pred_check_branch
      %30 = sbr.rel (0) target = $region21
    $region20: #{_lambda_.3} parent=1 // pred_region
      %32 = dma.done [#allocation4], 8192
    $region21: #{_lambda_.3} parent=1 // pred_fallthru
      _
    %p33 = scmp.eq.s32.totalorder 0, 0
    // Predicated region
    $region22: #{_lambda_.3} parent=1 // pred_check
      %p34 = pneg %p33
    $region23: #{_lambda_.3} parent=1 // pred_check_branch
      %36 = sbr.rel (%p34) target = $region25
    $region24: #{_lambda_.3} parent=1 // pred_region
      %37 = vst [vmem:[#allocation2] sm:$0xff] 0.0
      %38 = vst [vmem:[#allocation2 + $0x8] sm:$0xff] 0.0
      %39 = vst [vmem:[#allocation2 + $0x10] sm:$0xff] 0.0
      %40 = vst [vmem:[#allocation2 + $0x18] sm:$0xff] 0.0
      %41 = vst [vmem:[#allocation2 + $0x20] sm:$0xff] 0.0
      %42 = vst [vmem:[#allocation2 + $0x28] sm:$0xff] 0.0
      %43 = vst [vmem:[#allocation2 + $0x30] sm:$0xff] 0.0
      %44 = vst [vmem:[#allocation2 + $0x38] sm:$0xff] 0.0
      %45 = vst [vmem:[#allocation2 + $0x40] sm:$0xff] 0.0
      %46 = vst [vmem:[#allocation2 + $0x48] sm:$0xff] 0.0
      %47 = vst [vmem:[#allocation2 + $0x50] sm:$0xff] 0.0
      %48 = vst [vmem:[#allocation2 + $0x58] sm:$0xff] 0.0
      %49 = vst [vmem:[#allocation2 + $0x60] sm:$0xff] 0.0
      %50 = vst [vmem:[#allocation2 + $0x68] sm:$0xff] 0.0
      %51 = vst [vmem:[#allocation2 + $0x70] sm:$0xff] 0.0
      %52 = vst [vmem:[#allocation2 + $0x78] sm:$0xff] 0.0
      %53 = vst [vmem:[#allocation2 + $0x80] sm:$0xff] 0.0
      %54 = vst [vmem:[#allocation2 + $0x88] sm:$0xff] 0.0
      %55 = vst [vmem:[#allocation2 + $0x90] sm:$0xff] 0.0
      %56 = vst [vmem:[#allocation2 + $0x98] sm:$0xff] 0.0
      %57 = vst [vmem:[#allocation2 + $0xa0] sm:$0xff] 0.0
      %58 = vst [vmem:[#allocation2 + $0xa8] sm:$0xff] 0.0
      %59 = vst [vmem:[#allocation2 + $0xb0] sm:$0xff] 0.0
      %60 = vst [vmem:[#allocation2 + $0xb8] sm:$0xff] 0.0
      %61 = vst [vmem:[#allocation2 + $0xc0] sm:$0xff] 0.0
      %62 = vst [vmem:[#allocation2 + $0xc8] sm:$0xff] 0.0
      %63 = vst [vmem:[#allocation2 + $0xd0] sm:$0xff] 0.0
      %64 = vst [vmem:[#allocation2 + $0xd8] sm:$0xff] 0.0
      %65 = vst [vmem:[#allocation2 + $0xe0] sm:$0xff] 0.0
      %66 = vst [vmem:[#allocation2 + $0xe8] sm:$0xff] 0.0
      %67 = vst [vmem:[#allocation2 + $0xf0] sm:$0xff] 0.0
      %68 = vst [vmem:[#allocation2 + $0xf8] sm:$0xff] 0.0
      %69 = vst [vmem:[#allocation2 + $0x100] sm:$0xff] 0.0
      %70 = vst [vmem:[#allocation2 + $0x108] sm:$0xff] 0.0
      %71 = vst [vmem:[#allocation2 + $0x110] sm:$0xff] 0.0
      %72 = vst [vmem:[#allocation2 + $0x118] sm:$0xff] 0.0
      %73 = vst [vmem:[#allocation2 + $0x120] sm:$0xff] 0.0
      %74 = vst [vmem:[#allocation2 + $0x128] sm:$0xff] 0.0
      %75 = vst [vmem:[#allocation2 + $0x130] sm:$0xff] 0.0
      %76 = vst [vmem:[#allocation2 + $0x138] sm:$0xff] 0.0
      %77 = vst [vmem:[#allocation2 + $0x140] sm:$0xff] 0.0
      %78 = vst [vmem:[#allocation2 + $0x148] sm:$0xff] 0.0
      %79 = vst [vmem:[#allocation2 + $0x150] sm:$0xff] 0.0
      %80 = vst [vmem:[#allocation2 + $0x158] sm:$0xff] 0.0
      %81 = vst [vmem:[#allocation2 + $0x160] sm:$0xff] 0.0
      %82 = vst [vmem:[#allocation2 + $0x168] sm:$0xff] 0.0
      %83 = vst [vmem:[#allocation2 + $0x170] sm:$0xff] 0.0
      %84 = vst [vmem:[#allocation2 + $0x178] sm:$0xff] 0.0
      %85 = vst [vmem:[#allocation2 + $0x180] sm:$0xff] 0.0
      %86 = vst [vmem:[#allocation2 + $0x188] sm:$0xff] 0.0
      %87 = vst [vmem:[#allocation2 + $0x190] sm:$0xff] 0.0
      %88 = vst [vmem:[#allocation2 + $0x198] sm:$0xff] 0.0
      %89 = vst [vmem:[#allocation2 + $0x1a0] sm:$0xff] 0.0
      %90 = vst [vmem:[#allocation2 + $0x1a8] sm:$0xff] 0.0
      %91 = vst [vmem:[#allocation2 + $0x1b0] sm:$0xff] 0.0
      %92 = vst [vmem:[#allocation2 + $0x1b8] sm:$0xff] 0.0
      %93 = vst [vmem:[#allocation2 + $0x1c0] sm:$0xff] 0.0
      %94 = vst [vmem:[#allocation2 + $0x1c8] sm:$0xff] 0.0
      %95 = vst [vmem:[#allocation2 + $0x1d0] sm:$0xff] 0.0
      %96 = vst [vmem:[#allocation2 + $0x1d8] sm:$0xff] 0.0
      %97 = vst [vmem:[#allocation2 + $0x1e0] sm:$0xff] 0.0
      %98 = vst [vmem:[#allocation2 + $0x1e8] sm:$0xff] 0.0
      %99 = vst [vmem:[#allocation2 + $0x1f0] sm:$0xff] 0.0
      %100 = vst [vmem:[#allocation2 + $0x1f8] sm:$0xff] 0.0
    $region25: #{_lambda_.3} parent=1 // pred_fallthru
      _
    %v101 = vld [vmem:[#allocation2] sm:$0xff]
    %v102 = vld [vmem:[#allocation2 + $0x8] sm:$0xff]
    %v103 = vld [vmem:[#allocation2 + $0x10] sm:$0xff]
    %v104 = vld [vmem:[#allocation2 + $0x18] sm:$0xff]
    %v105 = vld [vmem:[#allocation2 + $0x20] sm:$0xff]
    %v106 = vld [vmem:[#allocation2 + $0x28] sm:$0xff]
    %v107 = vld [vmem:[#allocation2 + $0x30] sm:$0xff]
    %v108 = vld [vmem:[#allocation2 + $0x38] sm:$0xff]
    %v109 = vld [vmem:[#allocation2 + $0x40] sm:$0xff]
    %v110 = vld [vmem:[#allocation2 + $0x48] sm:$0xff]
    %v111 = vld [vmem:[#allocation2 + $0x50] sm:$0xff]
    %v112 = vld [vmem:[#allocation2 + $0x58] sm:$0xff]
    %v113 = vld [vmem:[#allocation2 + $0x60] sm:$0xff]
    %v114 = vld [vmem:[#allocation2 + $0x68] sm:$0xff]
    %v115 = vld [vmem:[#allocation2 + $0x70] sm:$0xff]
    %v116 = vld [vmem:[#allocation2 + $0x78] sm:$0xff]
    %v117 = vld [vmem:[#allocation2 + $0x80] sm:$0xff]
    %v118 = vld [vmem:[#allocation2 + $0x88] sm:$0xff]
    %v119 = vld [vmem:[#allocation2 + $0x90] sm:$0xff]
    %v120 = vld [vmem:[#allocation2 + $0x98] sm:$0xff]
    %v121 = vld [vmem:[#allocation2 + $0xa0] sm:$0xff]
    %v122 = vld [vmem:[#allocation2 + $0xa8] sm:$0xff]
    %v123 = vld [vmem:[#allocation2 + $0xb0] sm:$0xff]
    %v124 = vld [vmem:[#allocation2 + $0xb8] sm:$0xff]
    %v125 = vld [vmem:[#allocation2 + $0xc0] sm:$0xff]
    %v126 = vld [vmem:[#allocation2 + $0xc8] sm:$0xff]
    %v127 = vld [vmem:[#allocation2 + $0xd0] sm:$0xff]
    %v128 = vld [vmem:[#allocation2 + $0xd8] sm:$0xff]
    %v129 = vld [vmem:[#allocation2 + $0xe0] sm:$0xff]
    %v130 = vld [vmem:[#allocation2 + $0xe8] sm:$0xff]
    %v131 = vld [vmem:[#allocation2 + $0xf0] sm:$0xff]
    %v132 = vld [vmem:[#allocation2 + $0xf8] sm:$0xff]
    %v133 = vld [vmem:[#allocation2 + $0x100] sm:$0xff]
    %v134 = vld [vmem:[#allocation2 + $0x108] sm:$0xff]
    %v135 = vld [vmem:[#allocation2 + $0x110] sm:$0xff]
    %v136 = vld [vmem:[#allocation2 + $0x118] sm:$0xff]
    %v137 = vld [vmem:[#allocation2 + $0x120] sm:$0xff]
    %v138 = vld [vmem:[#allocation2 + $0x128] sm:$0xff]
    %v139 = vld [vmem:[#allocation2 + $0x130] sm:$0xff]
    %v140 = vld [vmem:[#allocation2 + $0x138] sm:$0xff]
    %v141 = vld [vmem:[#allocation2 + $0x140] sm:$0xff]
    %v142 = vld [vmem:[#allocation2 + $0x148] sm:$0xff]
    %v143 = vld [vmem:[#allocation2 + $0x150] sm:$0xff]
    %v144 = vld [vmem:[#allocation2 + $0x158] sm:$0xff]
    %v145 = vld [vmem:[#allocation2 + $0x160] sm:$0xff]
    %v146 = vld [vmem:[#allocation2 + $0x168] sm:$0xff]
    %v147 = vld [vmem:[#allocation2 + $0x170] sm:$0xff]
    %v148 = vld [vmem:[#allocation2 + $0x178] sm:$0xff]
    %v149 = vld [vmem:[#allocation2 + $0x180] sm:$0xff]
    %v150 = vld [vmem:[#allocation2 + $0x188] sm:$0xff]
    %v151 = vld [vmem:[#allocation2 + $0x190] sm:$0xff]
    %v152 = vld [vmem:[#allocation2 + $0x198] sm:$0xff]
    %v153 = vld [vmem:[#allocation2 + $0x1a0] sm:$0xff]
    %v154 = vld [vmem:[#allocation2 + $0x1a8] sm:$0xff]
    %v155 = vld [vmem:[#allocation2 + $0x1b0] sm:$0xff]
    %v156 = vld [vmem:[#allocation2 + $0x1b8] sm:$0xff]
    %v157 = vld [vmem:[#allocation2 + $0x1c0] sm:$0xff]
    %v158 = vld [vmem:[#allocation2 + $0x1c8] sm:$0xff]
    %v159 = vld [vmem:[#allocation2 + $0x1d0] sm:$0xff]
    %v160 = vld [vmem:[#allocation2 + $0x1d8] sm:$0xff]
    %v161 = vld [vmem:[#allocation2 + $0x1e0] sm:$0xff]
    %v162 = vld [vmem:[#allocation2 + $0x1e8] sm:$0xff]
    %v163 = vld [vmem:[#allocation2 + $0x1f0] sm:$0xff]
    %v164 = vld [vmem:[#allocation2 + $0x1f8] sm:$0xff]
    %v165 = vld [vmem:[%s0] sm:$0xff]
    %v166 = vld [vmem:[%s0 + $0x8] sm:$0xff]
    %v167 = vld [vmem:[%s0 + $0x10] sm:$0xff]
    %v168 = vld [vmem:[%s0 + $0x18] sm:$0xff]
    %v169 = vld [vmem:[%s0 + $0x20] sm:$0xff]
    %v170 = vld [vmem:[%s0 + $0x28] sm:$0xff]
    %v171 = vld [vmem:[%s0 + $0x30] sm:$0xff]
    %v172 = vld [vmem:[%s0 + $0x38] sm:$0xff]
    %v173 = vld [vmem:[%s0 + $0x40] sm:$0xff]
    %v174 = vld [vmem:[%s0 + $0x48] sm:$0xff]
    %v175 = vld [vmem:[%s0 + $0x50] sm:$0xff]
    %v176 = vld [vmem:[%s0 + $0x58] sm:$0xff]
    %v177 = vld [vmem:[%s0 + $0x60] sm:$0xff]
    %v178 = vld [vmem:[%s0 + $0x68] sm:$0xff]
    %v179 = vld [vmem:[%s0 + $0x70] sm:$0xff]
    %v180 = vld [vmem:[%s0 + $0x78] sm:$0xff]
    %v181 = vld [vmem:[#allocation3] sm:$0xff]
    %v182 = vld [vmem:[#allocation3 + $0x8] sm:$0xff]
    %v183 = vld [vmem:[#allocation3 + $0x10] sm:$0xff]
    %v184 = vld [vmem:[#allocation3 + $0x18] sm:$0xff]
    %v185 = vld [vmem:[#allocation3 + $0x20] sm:$0xff]
    %v186 = vld [vmem:[#allocation3 + $0x28] sm:$0xff]
    %v187 = vld [vmem:[#allocation3 + $0x30] sm:$0xff]
    %v188 = vld [vmem:[#allocation3 + $0x38] sm:$0xff]
    %v189 = vld [vmem:[#allocation3 + $0x40] sm:$0xff]
    %v190 = vld [vmem:[#allocation3 + $0x48] sm:$0xff]
    %v191 = vld [vmem:[#allocation3 + $0x50] sm:$0xff]
    %v192 = vld [vmem:[#allocation3 + $0x58] sm:$0xff]
    %v193 = vld [vmem:[#allocation3 + $0x60] sm:$0xff]
    %v194 = vld [vmem:[#allocation3 + $0x68] sm:$0xff]
    %v195 = vld [vmem:[#allocation3 + $0x70] sm:$0xff]
    %v196 = vld [vmem:[#allocation3 + $0x78] sm:$0xff]
    %v197 = vld [vmem:[#allocation3 + $0x80] sm:$0xff]
    %v198 = vld [vmem:[#allocation3 + $0x88] sm:$0xff]
    %v199 = vld [vmem:[#allocation3 + $0x90] sm:$0xff]
    %v200 = vld [vmem:[#allocation3 + $0x98] sm:$0xff]
    %v201 = vld [vmem:[#allocation3 + $0xa0] sm:$0xff]
    %v202 = vld [vmem:[#allocation3 + $0xa8] sm:$0xff]
    %v203 = vld [vmem:[#allocation3 + $0xb0] sm:$0xff]
    %v204 = vld [vmem:[#allocation3 + $0xb8] sm:$0xff]
    %v205 = vld [vmem:[#allocation3 + $0xc0] sm:$0xff]
    %v206 = vld [vmem:[#allocation3 + $0xc8] sm:$0xff]
    %v207 = vld [vmem:[#allocation3 + $0xd0] sm:$0xff]
    %v208 = vld [vmem:[#allocation3 + $0xd8] sm:$0xff]
    %v209 = vld [vmem:[#allocation3 + $0xe0] sm:$0xff]
    %v210 = vld [vmem:[#allocation3 + $0xe8] sm:$0xff]
    %v211 = vld [vmem:[#allocation3 + $0xf0] sm:$0xff]
    %v212 = vld [vmem:[#allocation3 + $0xf8] sm:$0xff]
    %v213 = vld [vmem:[#allocation3 + $0x100] sm:$0xff]
    %v214 = vld [vmem:[#allocation3 + $0x108] sm:$0xff]
    %v215 = vld [vmem:[#allocation3 + $0x110] sm:$0xff]
    %v216 = vld [vmem:[#allocation3 + $0x118] sm:$0xff]
    %v217 = vld [vmem:[#allocation3 + $0x120] sm:$0xff]
    %v218 = vld [vmem:[#allocation3 + $0x128] sm:$0xff]
    %v219 = vld [vmem:[#allocation3 + $0x130] sm:$0xff]
    %v220 = vld [vmem:[#allocation3 + $0x138] sm:$0xff]
    %v221 = vld [vmem:[#allocation3 + $0x140] sm:$0xff]
    %v222 = vld [vmem:[#allocation3 + $0x148] sm:$0xff]
    %v223 = vld [vmem:[#allocation3 + $0x150] sm:$0xff]
    %v224 = vld [vmem:[#allocation3 + $0x158] sm:$0xff]
    %v225 = vld [vmem:[#allocation3 + $0x160] sm:$0xff]
    %v226 = vld [vmem:[#allocation3 + $0x168] sm:$0xff]
    %v227 = vld [vmem:[#allocation3 + $0x170] sm:$0xff]
    %v228 = vld [vmem:[#allocation3 + $0x178] sm:$0xff]
    %v229 = vld [vmem:[#allocation3 + $0x180] sm:$0xff]
    %v230 = vld [vmem:[#allocation3 + $0x188] sm:$0xff]
    %v231 = vld [vmem:[#allocation3 + $0x190] sm:$0xff]
    %v232 = vld [vmem:[#allocation3 + $0x198] sm:$0xff]
    %v233 = vld [vmem:[#allocation3 + $0x1a0] sm:$0xff]
    %v234 = vld [vmem:[#allocation3 + $0x1a8] sm:$0xff]
    %v235 = vld [vmem:[#allocation3 + $0x1b0] sm:$0xff]
    %v236 = vld [vmem:[#allocation3 + $0x1b8] sm:$0xff]
    %v237 = vld [vmem:[#allocation3 + $0x1c0] sm:$0xff]
    %v238 = vld [vmem:[#allocation3 + $0x1c8] sm:$0xff]
    %v239 = vld [vmem:[#allocation3 + $0x1d0] sm:$0xff]
    %v240 = vld [vmem:[#allocation3 + $0x1d8] sm:$0xff]
    %v241 = vld [vmem:[#allocation3 + $0x1e0] sm:$0xff]
    %v242 = vld [vmem:[#allocation3 + $0x1e8] sm:$0xff]
    %v243 = vld [vmem:[#allocation3 + $0x1f0] sm:$0xff]
    %v244 = vld [vmem:[#allocation3 + $0x1f8] sm:$0xff]
    %v261 = vunpack.c.l.b16 %v165
    %v262 = vunpack.c.h.b16 %v165
    %v263 = vunpack.c.l.b16 %v166
    %v264 = vunpack.c.h.b16 %v166
    %v265 = vunpack.c.l.b16 %v167
    %v266 = vunpack.c.h.b16 %v167
    %v267 = vunpack.c.l.b16 %v168
    %v268 = vunpack.c.h.b16 %v168
    %v269 = vunpack.c.l.b16 %v169
    %v270 = vunpack.c.h.b16 %v169
    %v271 = vunpack.c.l.b16 %v170
    %v272 = vunpack.c.h.b16 %v170
    %v273 = vunpack.c.l.b16 %v171
    %v274 = vunpack.c.h.b16 %v171
    %v275 = vunpack.c.l.b16 %v172
    %v276 = vunpack.c.h.b16 %v172
    %v277 = vunpack.c.l.b16 %v173
    %v278 = vunpack.c.h.b16 %v173
    %v279 = vunpack.c.l.b16 %v174
    %v280 = vunpack.c.h.b16 %v174
    %v281 = vunpack.c.l.b16 %v175
    %v282 = vunpack.c.h.b16 %v175
    %v283 = vunpack.c.l.b16 %v176
    %v284 = vunpack.c.h.b16 %v176
    %v285 = vunpack.c.l.b16 %v177
    %v286 = vunpack.c.h.b16 %v177
    %v287 = vunpack.c.l.b16 %v178
    %v288 = vunpack.c.h.b16 %v178
    %v289 = vunpack.c.l.b16 %v179
    %v290 = vunpack.c.h.b16 %v179
    %v291 = vunpack.c.l.b16 %v180
    %v292 = vunpack.c.h.b16 %v180
    %v293 = vpack.c.b16 %v263, %v261
    %v294 = vpack.c.b16 %v264, %v262
    %v295 = vpack.c.b16 %v267, %v265
    %v296 = vpack.c.b16 %v268, %v266
    %v297 = vpack.c.b16 %v271, %v269
    %v298 = vpack.c.b16 %v272, %v270
    %v299 = vpack.c.b16 %v275, %v273
    %v300 = vpack.c.b16 %v276, %v274
    %v301 = vpack.c.b16 %v279, %v277
    %v302 = vpack.c.b16 %v280, %v278
    %v303 = vpack.c.b16 %v283, %v281
    %v304 = vpack.c.b16 %v284, %v282
    %v305 = vpack.c.b16 %v287, %v285
    %v306 = vpack.c.b16 %v288, %v286
    %v307 = vpack.c.b16 %v291, %v289
    %v308 = vpack.c.b16 %v292, %v290
    %v389 = vunpack.c.l.b16 %v181
    %v390 = vunpack.c.h.b16 %v181
    %v391 = vunpack.c.l.b16 %v182
    %v392 = vunpack.c.h.b16 %v182
    %v393 = vunpack.c.l.b16 %v183
    %v394 = vunpack.c.h.b16 %v183
    %v395 = vunpack.c.l.b16 %v184
    %v396 = vunpack.c.h.b16 %v184
    %v397 = vunpack.c.l.b16 %v185
    %v398 = vunpack.c.h.b16 %v185
    %v399 = vunpack.c.l.b16 %v186
    %v400 = vunpack.c.h.b16 %v186
    %v401 = vunpack.c.l.b16 %v187
    %v402 = vunpack.c.h.b16 %v187
    %v403 = vunpack.c.l.b16 %v188
    %v404 = vunpack.c.h.b16 %v188
    %v405 = vunpack.c.l.b16 %v189
    %v406 = vunpack.c.h.b16 %v189
    %v407 = vunpack.c.l.b16 %v190
    %v408 = vunpack.c.h.b16 %v190
    %v409 = vunpack.c.l.b16 %v191
    %v410 = vunpack.c.h.b16 %v191
    %v411 = vunpack.c.l.b16 %v192
    %v412 = vunpack.c.h.b16 %v192
    %v413 = vunpack.c.l.b16 %v193
    %v414 = vunpack.c.h.b16 %v193
    %v415 = vunpack.c.l.b16 %v194
    %v416 = vunpack.c.h.b16 %v194
    %v417 = vunpack.c.l.b16 %v195
    %v418 = vunpack.c.h.b16 %v195
    %v419 = vunpack.c.l.b16 %v196
    %v420 = vunpack.c.h.b16 %v196
    %v421 = vunpack.c.l.b16 %v197
    %v422 = vunpack.c.h.b16 %v197
    %v423 = vunpack.c.l.b16 %v198
    %v424 = vunpack.c.h.b16 %v198
    %v425 = vunpack.c.l.b16 %v199
    %v426 = vunpack.c.h.b16 %v199
    %v427 = vunpack.c.l.b16 %v200
    %v428 = vunpack.c.h.b16 %v200
    %v429 = vunpack.c.l.b16 %v201
    %v430 = vunpack.c.h.b16 %v201
    %v431 = vunpack.c.l.b16 %v202
    %v432 = vunpack.c.h.b16 %v202
    %v433 = vunpack.c.l.b16 %v203
    %v434 = vunpack.c.h.b16 %v203
    %v435 = vunpack.c.l.b16 %v204
    %v436 = vunpack.c.h.b16 %v204
    %v437 = vunpack.c.l.b16 %v205
    %v438 = vunpack.c.h.b16 %v205
    %v439 = vunpack.c.l.b16 %v206
    %v440 = vunpack.c.h.b16 %v206
    %v441 = vunpack.c.l.b16 %v207
    %v442 = vunpack.c.h.b16 %v207
    %v443 = vunpack.c.l.b16 %v208
    %v444 = vunpack.c.h.b16 %v208
    %v445 = vunpack.c.l.b16 %v209
    %v446 = vunpack.c.h.b16 %v209
    %v447 = vunpack.c.l.b16 %v210
    %v448 = vunpack.c.h.b16 %v210
    %v449 = vunpack.c.l.b16 %v211
    %v450 = vunpack.c.h.b16 %v211
    %v451 = vunpack.c.l.b16 %v212
    %v452 = vunpack.c.h.b16 %v212
    %v453 = vunpack.c.l.b16 %v213
    %v454 = vunpack.c.h.b16 %v213
    %v455 = vunpack.c.l.b16 %v214
    %v456 = vunpack.c.h.b16 %v214
    %v457 = vunpack.c.l.b16 %v215
    %v458 = vunpack.c.h.b16 %v215
    %v459 = vunpack.c.l.b16 %v216
    %v460 = vunpack.c.h.b16 %v216
    %v461 = vunpack.c.l.b16 %v217
    %v462 = vunpack.c.h.b16 %v217
    %v463 = vunpack.c.l.b16 %v218
    %v464 = vunpack.c.h.b16 %v218
    %v465 = vunpack.c.l.b16 %v219
    %v466 = vunpack.c.h.b16 %v219
    %v467 = vunpack.c.l.b16 %v220
    %v468 = vunpack.c.h.b16 %v220
    %v469 = vunpack.c.l.b16 %v221
    %v470 = vunpack.c.h.b16 %v221
    %v471 = vunpack.c.l.b16 %v222
    %v472 = vunpack.c.h.b16 %v222
    %v473 = vunpack.c.l.b16 %v223
    %v474 = vunpack.c.h.b16 %v223
    %v475 = vunpack.c.l.b16 %v224
    %v476 = vunpack.c.h.b16 %v224
    %v477 = vunpack.c.l.b16 %v225
    %v478 = vunpack.c.h.b16 %v225
    %v479 = vunpack.c.l.b16 %v226
    %v480 = vunpack.c.h.b16 %v226
    %v481 = vunpack.c.l.b16 %v227
    %v482 = vunpack.c.h.b16 %v227
    %v483 = vunpack.c.l.b16 %v228
    %v484 = vunpack.c.h.b16 %v228
    %v485 = vunpack.c.l.b16 %v229
    %v486 = vunpack.c.h.b16 %v229
    %v487 = vunpack.c.l.b16 %v230
    %v488 = vunpack.c.h.b16 %v230
    %v489 = vunpack.c.l.b16 %v231
    %v490 = vunpack.c.h.b16 %v231
    %v491 = vunpack.c.l.b16 %v232
    %v492 = vunpack.c.h.b16 %v232
    %v493 = vunpack.c.l.b16 %v233
    %v494 = vunpack.c.h.b16 %v233
    %v495 = vunpack.c.l.b16 %v234
    %v496 = vunpack.c.h.b16 %v234
    %v497 = vunpack.c.l.b16 %v235
    %v498 = vunpack.c.h.b16 %v235
    %v499 = vunpack.c.l.b16 %v236
    %v500 = vunpack.c.h.b16 %v236
    %v501 = vunpack.c.l.b16 %v237
    %v502 = vunpack.c.h.b16 %v237
    %v503 = vunpack.c.l.b16 %v238
    %v504 = vunpack.c.h.b16 %v238
    %v505 = vunpack.c.l.b16 %v239
    %v506 = vunpack.c.h.b16 %v239
    %v507 = vunpack.c.l.b16 %v240
    %v508 = vunpack.c.h.b16 %v240
    %v509 = vunpack.c.l.b16 %v241
    %v510 = vunpack.c.h.b16 %v241
    %v511 = vunpack.c.l.b16 %v242
    %v512 = vunpack.c.h.b16 %v242
    %v513 = vunpack.c.l.b16 %v243
    %v514 = vunpack.c.h.b16 %v243
    %v515 = vunpack.c.l.b16 %v244
    %v516 = vunpack.c.h.b16 %v244
    %v517 = vpack.c.b16 %v393, %v389
    %v518 = vpack.c.b16 %v394, %v390
    %v519 = vpack.c.b16 %v395, %v391
    %v520 = vpack.c.b16 %v396, %v392
    %v521 = vpack.c.b16 %v401, %v397
    %v522 = vpack.c.b16 %v402, %v398
    %v523 = vpack.c.b16 %v403, %v399
    %v524 = vpack.c.b16 %v404, %v400
    %v525 = vpack.c.b16 %v409, %v405
    %v526 = vpack.c.b16 %v410, %v406
    %v527 = vpack.c.b16 %v411, %v407
    %v528 = vpack.c.b16 %v412, %v408
    %v529 = vpack.c.b16 %v417, %v413
    %v530 = vpack.c.b16 %v418, %v414
    %v531 = vpack.c.b16 %v419, %v415
    %v532 = vpack.c.b16 %v420, %v416
    %v533 = vpack.c.b16 %v425, %v421
    %v534 = vpack.c.b16 %v426, %v422
    %v535 = vpack.c.b16 %v427, %v423
    %v536 = vpack.c.b16 %v428, %v424
    %v537 = vpack.c.b16 %v433, %v429
    %v538 = vpack.c.b16 %v434, %v430
    %v539 = vpack.c.b16 %v435, %v431
    %v540 = vpack.c.b16 %v436, %v432
    %v541 = vpack.c.b16 %v441, %v437
    %v542 = vpack.c.b16 %v442, %v438
    %v543 = vpack.c.b16 %v443, %v439
    %v544 = vpack.c.b16 %v444, %v440
    %v545 = vpack.c.b16 %v449, %v445
    %v546 = vpack.c.b16 %v450, %v446
    %v547 = vpack.c.b16 %v451, %v447
    %v548 = vpack.c.b16 %v452, %v448
    %v549 = vpack.c.b16 %v457, %v453
    %v550 = vpack.c.b16 %v458, %v454
    %v551 = vpack.c.b16 %v459, %v455
    %v552 = vpack.c.b16 %v460, %v456
    %v553 = vpack.c.b16 %v465, %v461
    %v554 = vpack.c.b16 %v466, %v462
    %v555 = vpack.c.b16 %v467, %v463
    %v556 = vpack.c.b16 %v468, %v464
    %v557 = vpack.c.b16 %v473, %v469
    %v558 = vpack.c.b16 %v474, %v470
    %v559 = vpack.c.b16 %v475, %v471
    %v560 = vpack.c.b16 %v476, %v472
    %v561 = vpack.c.b16 %v481, %v477
    %v562 = vpack.c.b16 %v482, %v478
    %v563 = vpack.c.b16 %v483, %v479
    %v564 = vpack.c.b16 %v484, %v480
    %v565 = vpack.c.b16 %v489, %v485
    %v566 = vpack.c.b16 %v490, %v486
    %v567 = vpack.c.b16 %v491, %v487
    %v568 = vpack.c.b16 %v492, %v488
    %v569 = vpack.c.b16 %v497, %v493
    %v570 = vpack.c.b16 %v498, %v494
    %v571 = vpack.c.b16 %v499, %v495
    %v572 = vpack.c.b16 %v500, %v496
    %v573 = vpack.c.b16 %v505, %v501
    %v574 = vpack.c.b16 %v506, %v502
    %v575 = vpack.c.b16 %v507, %v503
    %v576 = vpack.c.b16 %v508, %v504
    %v577 = vpack.c.b16 %v513, %v509
    %v578 = vpack.c.b16 %v514, %v510
    %v579 = vpack.c.b16 %v515, %v511
    %v580 = vpack.c.b16 %v516, %v512
    %645 = vmatpush.bf16.msra.mxu0 %v545
    %646 = vmatpush.bf16.msra.mxu0 %v541
    %647 = vmatpush.bf16.msra.mxu0 %v537
    %648 = vmatpush.bf16.msra.mxu0 %v533
    %649 = vmatpush.bf16.msra.mxu0 %v529
    %650 = vmatpush.bf16.msra.mxu0 %v525
    %651 = vmatpush.bf16.msra.mxu0 %v521
    %652 = vmatpush.bf16.msra.mxu0 %v517
    %653 = vmatmul.bf16.gmra.mxu0 %v293
    %v654 = vpop.f32.mrf.mxu0
    %v655 = vadd.f32 0.0, %v654
    %v656 = vpop.f32.mrf.mxu0
    %v657 = vadd.f32 0.0, %v656
    %658 = vmatmul.bf16.gmra.mxu0 %v295
    %v659 = vpop.f32.mrf.mxu0
    %v660 = vadd.f32 0.0, %v659
    %v661 = vpop.f32.mrf.mxu0
    %v662 = vadd.f32 0.0, %v661
    %663 = vmatmul.bf16.gmra.mxu0 %v297
    %v664 = vpop.f32.mrf.mxu0
    %v665 = vadd.f32 0.0, %v664
    %v666 = vpop.f32.mrf.mxu0
    %v667 = vadd.f32 0.0, %v666
    %668 = vmatmul.bf16.gmra.mxu0 %v299
    %v669 = vpop.f32.mrf.mxu0
    %v670 = vadd.f32 0.0, %v669
    %v671 = vpop.f32.mrf.mxu0
    %v672 = vadd.f32 0.0, %v671
    %673 = vmatmul.bf16.gmra.mxu0 %v301
    %v674 = vpop.f32.mrf.mxu0
    %v675 = vadd.f32 0.0, %v674
    %v676 = vpop.f32.mrf.mxu0
    %v677 = vadd.f32 0.0, %v676
    %678 = vmatmul.bf16.gmra.mxu0 %v303
    %v679 = vpop.f32.mrf.mxu0
    %v680 = vadd.f32 0.0, %v679
    %v681 = vpop.f32.mrf.mxu0
    %v682 = vadd.f32 0.0, %v681
    %683 = vmatmul.bf16.gmra.mxu0 %v305
    %v684 = vpop.f32.mrf.mxu0
    %v685 = vadd.f32 0.0, %v684
    %v686 = vpop.f32.mrf.mxu0
    %v687 = vadd.f32 0.0, %v686
    %688 = vmatmul.bf16.gmra.mxu0 %v307
    %v689 = vpop.f32.mrf.mxu0
    %v690 = vadd.f32 0.0, %v689
    %v691 = vpop.f32.mrf.mxu0
    %v692 = vadd.f32 0.0, %v691
    %693 = vdwg.mxu0
    %694 = vmatpush.bf16.msra.mxu0 %v577
    %695 = vmatpush.bf16.msra.mxu0 %v573
    %696 = vmatpush.bf16.msra.mxu0 %v569
    %697 = vmatpush.bf16.msra.mxu0 %v565
    %698 = vmatpush.bf16.msra.mxu0 %v561
    %699 = vmatpush.bf16.msra.mxu0 %v557
    %700 = vmatpush.bf16.msra.mxu0 %v553
    %701 = vmatpush.bf16.msra.mxu0 %v549
    %702 = vmatmul.bf16.gmra.mxu0 %v294
    %v703 = vpop.f32.mrf.mxu0
    %v704 = vadd.f32 %v655, %v703
    %v705 = vpop.f32.mrf.mxu0
    %v706 = vadd.f32 %v657, %v705
    %707 = vmatmul.bf16.gmra.mxu0 %v296
    %v708 = vpop.f32.mrf.mxu0
    %v709 = vadd.f32 %v660, %v708
    %v710 = vpop.f32.mrf.mxu0
    %v711 = vadd.f32 %v662, %v710
    %712 = vmatmul.bf16.gmra.mxu0 %v298
    %v713 = vpop.f32.mrf.mxu0
    %v714 = vadd.f32 %v665, %v713
    %v715 = vpop.f32.mrf.mxu0
    %v716 = vadd.f32 %v667, %v715
    %717 = vmatmul.bf16.gmra.mxu0 %v300
    %v718 = vpop.f32.mrf.mxu0
    %v719 = vadd.f32 %v670, %v718
    %v720 = vpop.f32.mrf.mxu0
    %v721 = vadd.f32 %v672, %v720
    %722 = vmatmul.bf16.gmra.mxu0 %v302
    %v723 = vpop.f32.mrf.mxu0
    %v724 = vadd.f32 %v675, %v723
    %v725 = vpop.f32.mrf.mxu0
    %v726 = vadd.f32 %v677, %v725
    %727 = vmatmul.bf16.gmra.mxu0 %v304
    %v728 = vpop.f32.mrf.mxu0
    %v729 = vadd.f32 %v680, %v728
    %v730 = vpop.f32.mrf.mxu0
    %v731 = vadd.f32 %v682, %v730
    %732 = vmatmul.bf16.gmra.mxu0 %v306
    %v733 = vpop.f32.mrf.mxu0
    %v734 = vadd.f32 %v685, %v733
    %v735 = vpop.f32.mrf.mxu0
    %v736 = vadd.f32 %v687, %v735
    %737 = vmatmul.bf16.gmra.mxu0 %v308
    %v738 = vpop.f32.mrf.mxu0
    %v739 = vadd.f32 %v690, %v738
    %v740 = vpop.f32.mrf.mxu0
    %v741 = vadd.f32 %v692, %v740
    %742 = vdwg.mxu0
    %743 = vmatpush.bf16.msra.mxu0 %v546
    %744 = vmatpush.bf16.msra.mxu0 %v542
    %745 = vmatpush.bf16.msra.mxu0 %v538
    %746 = vmatpush.bf16.msra.mxu0 %v534
    %747 = vmatpush.bf16.msra.mxu0 %v530
    %748 = vmatpush.bf16.msra.mxu0 %v526
    %749 = vmatpush.bf16.msra.mxu0 %v522
    %750 = vmatpush.bf16.msra.mxu0 %v518
    %751 = vmatmul.bf16.gmra.mxu0 %v293
    %v752 = vpop.f32.mrf.mxu0
    %v753 = vadd.f32 0.0, %v752
    %v754 = vpop.f32.mrf.mxu0
    %v755 = vadd.f32 0.0, %v754
    %756 = vmatmul.bf16.gmra.mxu0 %v295
    %v757 = vpop.f32.mrf.mxu0
    %v758 = vadd.f32 0.0, %v757
    %v759 = vpop.f32.mrf.mxu0
    %v760 = vadd.f32 0.0, %v759
    %761 = vmatmul.bf16.gmra.mxu0 %v297
    %v762 = vpop.f32.mrf.mxu0
    %v763 = vadd.f32 0.0, %v762
    %v764 = vpop.f32.mrf.mxu0
    %v765 = vadd.f32 0.0, %v764
    %766 = vmatmul.bf16.gmra.mxu0 %v299
    %v767 = vpop.f32.mrf.mxu0
    %v768 = vadd.f32 0.0, %v767
    %v769 = vpop.f32.mrf.mxu0
    %v770 = vadd.f32 0.0, %v769
    %771 = vmatmul.bf16.gmra.mxu0 %v301
    %v772 = vpop.f32.mrf.mxu0
    %v773 = vadd.f32 0.0, %v772
    %v774 = vpop.f32.mrf.mxu0
    %v775 = vadd.f32 0.0, %v774
    %776 = vmatmul.bf16.gmra.mxu0 %v303
    %v777 = vpop.f32.mrf.mxu0
    %v778 = vadd.f32 0.0, %v777
    %v779 = vpop.f32.mrf.mxu0
    %v780 = vadd.f32 0.0, %v779
    %781 = vmatmul.bf16.gmra.mxu0 %v305
    %v782 = vpop.f32.mrf.mxu0
    %v783 = vadd.f32 0.0, %v782
    %v784 = vpop.f32.mrf.mxu0
    %v785 = vadd.f32 0.0, %v784
    %786 = vmatmul.bf16.gmra.mxu0 %v307
    %v787 = vpop.f32.mrf.mxu0
    %v788 = vadd.f32 0.0, %v787
    %v789 = vpop.f32.mrf.mxu0
    %v790 = vadd.f32 0.0, %v789
    %791 = vdwg.mxu0
    %792 = vmatpush.bf16.msra.mxu0 %v578
    %793 = vmatpush.bf16.msra.mxu0 %v574
    %794 = vmatpush.bf16.msra.mxu0 %v570
    %795 = vmatpush.bf16.msra.mxu0 %v566
    %796 = vmatpush.bf16.msra.mxu0 %v562
    %797 = vmatpush.bf16.msra.mxu0 %v558
    %798 = vmatpush.bf16.msra.mxu0 %v554
    %799 = vmatpush.bf16.msra.mxu0 %v550
    %800 = vmatmul.bf16.gmra.mxu0 %v294
    %v801 = vpop.f32.mrf.mxu0
    %v802 = vadd.f32 %v753, %v801
    %v803 = vpop.f32.mrf.mxu0
    %v804 = vadd.f32 %v755, %v803
    %805 = vmatmul.bf16.gmra.mxu0 %v296
    %v806 = vpop.f32.mrf.mxu0
    %v807 = vadd.f32 %v758, %v806
    %v808 = vpop.f32.mrf.mxu0
    %v809 = vadd.f32 %v760, %v808
    %810 = vmatmul.bf16.gmra.mxu0 %v298
    %v811 = vpop.f32.mrf.mxu0
    %v812 = vadd.f32 %v763, %v811
    %v813 = vpop.f32.mrf.mxu0
    %v814 = vadd.f32 %v765, %v813
    %815 = vmatmul.bf16.gmra.mxu0 %v300
    %v816 = vpop.f32.mrf.mxu0
    %v817 = vadd.f32 %v768, %v816
    %v818 = vpop.f32.mrf.mxu0
    %v819 = vadd.f32 %v770, %v818
    %820 = vmatmul.bf16.gmra.mxu0 %v302
    %v821 = vpop.f32.mrf.mxu0
    %v822 = vadd.f32 %v773, %v821
    %v823 = vpop.f32.mrf.mxu0
    %v824 = vadd.f32 %v775, %v823
    %825 = vmatmul.bf16.gmra.mxu0 %v304
    %v826 = vpop.f32.mrf.mxu0
    %v827 = vadd.f32 %v778, %v826
    %v828 = vpop.f32.mrf.mxu0
    %v829 = vadd.f32 %v780, %v828
    %830 = vmatmul.bf16.gmra.mxu0 %v306
    %v831 = vpop.f32.mrf.mxu0
    %v832 = vadd.f32 %v783, %v831
    %v833 = vpop.f32.mrf.mxu0
    %v834 = vadd.f32 %v785, %v833
    %835 = vmatmul.bf16.gmra.mxu0 %v308
    %v836 = vpop.f32.mrf.mxu0
    %v837 = vadd.f32 %v788, %v836
    %v838 = vpop.f32.mrf.mxu0
    %v839 = vadd.f32 %v790, %v838
    %840 = vdwg.mxu0
    %841 = vmatpush.bf16.msra.mxu0 %v547
    %842 = vmatpush.bf16.msra.mxu0 %v543
    %843 = vmatpush.bf16.msra.mxu0 %v539
    %844 = vmatpush.bf16.msra.mxu0 %v535
    %845 = vmatpush.bf16.msra.mxu0 %v531
    %846 = vmatpush.bf16.msra.mxu0 %v527
    %847 = vmatpush.bf16.msra.mxu0 %v523
    %848 = vmatpush.bf16.msra.mxu0 %v519
    %849 = vmatmul.bf16.gmra.mxu0 %v293
    %v850 = vpop.f32.mrf.mxu0
    %v851 = vadd.f32 0.0, %v850
    %v852 = vpop.f32.mrf.mxu0
    %v853 = vadd.f32 0.0, %v852
    %854 = vmatmul.bf16.gmra.mxu0 %v295
    %v855 = vpop.f32.mrf.mxu0
    %v856 = vadd.f32 0.0, %v855
    %v857 = vpop.f32.mrf.mxu0
    %v858 = vadd.f32 0.0, %v857
    %859 = vmatmul.bf16.gmra.mxu0 %v297
    %v860 = vpop.f32.mrf.mxu0
    %v861 = vadd.f32 0.0, %v860
    %v862 = vpop.f32.mrf.mxu0
    %v863 = vadd.f32 0.0, %v862
    %864 = vmatmul.bf16.gmra.mxu0 %v299
    %v865 = vpop.f32.mrf.mxu0
    %v866 = vadd.f32 0.0, %v865
    %v867 = vpop.f32.mrf.mxu0
    %v868 = vadd.f32 0.0, %v867
    %869 = vmatmul.bf16.gmra.mxu0 %v301
    %v870 = vpop.f32.mrf.mxu0
    %v871 = vadd.f32 0.0, %v870
    %v872 = vpop.f32.mrf.mxu0
    %v873 = vadd.f32 0.0, %v872
    %874 = vmatmul.bf16.gmra.mxu0 %v303
    %v875 = vpop.f32.mrf.mxu0
    %v876 = vadd.f32 0.0, %v875
    %v877 = vpop.f32.mrf.mxu0
    %v878 = vadd.f32 0.0, %v877
    %879 = vmatmul.bf16.gmra.mxu0 %v305
    %v880 = vpop.f32.mrf.mxu0
    %v881 = vadd.f32 0.0, %v880
    %v882 = vpop.f32.mrf.mxu0
    %v883 = vadd.f32 0.0, %v882
    %884 = vmatmul.bf16.gmra.mxu0 %v307
    %v885 = vpop.f32.mrf.mxu0
    %v886 = vadd.f32 0.0, %v885
    %v887 = vpop.f32.mrf.mxu0
    %v888 = vadd.f32 0.0, %v887
    %889 = vdwg.mxu0
    %890 = vmatpush.bf16.msra.mxu0 %v579
    %891 = vmatpush.bf16.msra.mxu0 %v575
    %892 = vmatpush.bf16.msra.mxu0 %v571
    %893 = vmatpush.bf16.msra.mxu0 %v567
    %894 = vmatpush.bf16.msra.mxu0 %v563
    %895 = vmatpush.bf16.msra.mxu0 %v559
    %896 = vmatpush.bf16.msra.mxu0 %v555
    %897 = vmatpush.bf16.msra.mxu0 %v551
    %898 = vmatmul.bf16.gmra.mxu0 %v294
    %v899 = vpop.f32.mrf.mxu0
    %v900 = vadd.f32 %v851, %v899
    %v901 = vpop.f32.mrf.mxu0
    %v902 = vadd.f32 %v853, %v901
    %903 = vmatmul.bf16.gmra.mxu0 %v296
    %v904 = vpop.f32.mrf.mxu0
    %v905 = vadd.f32 %v856, %v904
    %v906 = vpop.f32.mrf.mxu0
    %v907 = vadd.f32 %v858, %v906
    %908 = vmatmul.bf16.gmra.mxu0 %v298
    %v909 = vpop.f32.mrf.mxu0
    %v910 = vadd.f32 %v861, %v909
    %v911 = vpop.f32.mrf.mxu0
    %v912 = vadd.f32 %v863, %v911
    %913 = vmatmul.bf16.gmra.mxu0 %v300
    %v914 = vpop.f32.mrf.mxu0
    %v915 = vadd.f32 %v866, %v914
    %v916 = vpop.f32.mrf.mxu0
    %v917 = vadd.f32 %v868, %v916
    %918 = vmatmul.bf16.gmra.mxu0 %v302
    %v919 = vpop.f32.mrf.mxu0
    %v920 = vadd.f32 %v871, %v919
    %v921 = vpop.f32.mrf.mxu0
    %v922 = vadd.f32 %v873, %v921
    %923 = vmatmul.bf16.gmra.mxu0 %v304
    %v924 = vpop.f32.mrf.mxu0
    %v925 = vadd.f32 %v876, %v924
    %v926 = vpop.f32.mrf.mxu0
    %v927 = vadd.f32 %v878, %v926
    %928 = vmatmul.bf16.gmra.mxu0 %v306
    %v929 = vpop.f32.mrf.mxu0
    %v930 = vadd.f32 %v881, %v929
    %v931 = vpop.f32.mrf.mxu0
    %v932 = vadd.f32 %v883, %v931
    %933 = vmatmul.bf16.gmra.mxu0 %v308
    %v934 = vpop.f32.mrf.mxu0
    %v935 = vadd.f32 %v886, %v934
    %v936 = vpop.f32.mrf.mxu0
    %v937 = vadd.f32 %v888, %v936
    %938 = vdwg.mxu0
    %939 = vmatpush.bf16.msra.mxu0 %v548
    %940 = vmatpush.bf16.msra.mxu0 %v544
    %941 = vmatpush.bf16.msra.mxu0 %v540
    %942 = vmatpush.bf16.msra.mxu0 %v536
    %943 = vmatpush.bf16.msra.mxu0 %v532
    %944 = vmatpush.bf16.msra.mxu0 %v528
    %945 = vmatpush.bf16.msra.mxu0 %v524
    %946 = vmatpush.bf16.msra.mxu0 %v520
    %947 = vmatmul.bf16.gmra.mxu0 %v293
    %v948 = vpop.f32.mrf.mxu0
    %v949 = vadd.f32 0.0, %v948
    %v950 = vpop.f32.mrf.mxu0
    %v951 = vadd.f32 0.0, %v950
    %952 = vmatmul.bf16.gmra.mxu0 %v295
    %v953 = vpop.f32.mrf.mxu0
    %v954 = vadd.f32 0.0, %v953
    %v955 = vpop.f32.mrf.mxu0
    %v956 = vadd.f32 0.0, %v955
    %957 = vmatmul.bf16.gmra.mxu0 %v297
    %v958 = vpop.f32.mrf.mxu0
    %v959 = vadd.f32 0.0, %v958
    %v960 = vpop.f32.mrf.mxu0
    %v961 = vadd.f32 0.0, %v960
    %962 = vmatmul.bf16.gmra.mxu0 %v299
    %v963 = vpop.f32.mrf.mxu0
    %v964 = vadd.f32 0.0, %v963
    %v965 = vpop.f32.mrf.mxu0
    %v966 = vadd.f32 0.0, %v965
    %967 = vmatmul.bf16.gmra.mxu0 %v301
    %v968 = vpop.f32.mrf.mxu0
    %v969 = vadd.f32 0.0, %v968
    %v970 = vpop.f32.mrf.mxu0
    %v971 = vadd.f32 0.0, %v970
    %972 = vmatmul.bf16.gmra.mxu0 %v303
    %v973 = vpop.f32.mrf.mxu0
    %v974 = vadd.f32 0.0, %v973
    %v975 = vpop.f32.mrf.mxu0
    %v976 = vadd.f32 0.0, %v975
    %977 = vmatmul.bf16.gmra.mxu0 %v305
    %v978 = vpop.f32.mrf.mxu0
    %v979 = vadd.f32 0.0, %v978
    %v980 = vpop.f32.mrf.mxu0
    %v981 = vadd.f32 0.0, %v980
    %982 = vmatmul.bf16.gmra.mxu0 %v307
    %v983 = vpop.f32.mrf.mxu0
    %v984 = vadd.f32 0.0, %v983
    %v985 = vpop.f32.mrf.mxu0
    %v986 = vadd.f32 0.0, %v985
    %987 = vdwg.mxu0
    %988 = vmatpush.bf16.msra.mxu0 %v580
    %989 = vmatpush.bf16.msra.mxu0 %v576
    %990 = vmatpush.bf16.msra.mxu0 %v572
    %991 = vmatpush.bf16.msra.mxu0 %v568
    %992 = vmatpush.bf16.msra.mxu0 %v564
    %993 = vmatpush.bf16.msra.mxu0 %v560
    %994 = vmatpush.bf16.msra.mxu0 %v556
    %995 = vmatpush.bf16.msra.mxu0 %v552
    %996 = vmatmul.bf16.gmra.mxu0 %v294
    %v997 = vpop.f32.mrf.mxu0
    %v998 = vadd.f32 %v949, %v997
    %v999 = vpop.f32.mrf.mxu0
    %v1000 = vadd.f32 %v951, %v999
    %1001 = vmatmul.bf16.gmra.mxu0 %v296
    %v1002 = vpop.f32.mrf.mxu0
    %v1003 = vadd.f32 %v954, %v1002
    %v1004 = vpop.f32.mrf.mxu0
    %v1005 = vadd.f32 %v956, %v1004
    %1006 = vmatmul.bf16.gmra.mxu0 %v298
    %v1007 = vpop.f32.mrf.mxu0
    %v1008 = vadd.f32 %v959, %v1007
    %v1009 = vpop.f32.mrf.mxu0
    %v1010 = vadd.f32 %v961, %v1009
    %1011 = vmatmul.bf16.gmra.mxu0 %v300
    %v1012 = vpop.f32.mrf.mxu0
    %v1013 = vadd.f32 %v964, %v1012
    %v1014 = vpop.f32.mrf.mxu0
    %v1015 = vadd.f32 %v966, %v1014
    %1016 = vmatmul.bf16.gmra.mxu0 %v302
    %v1017 = vpop.f32.mrf.mxu0
    %v1018 = vadd.f32 %v969, %v1017
    %v1019 = vpop.f32.mrf.mxu0
    %v1020 = vadd.f32 %v971, %v1019
    %1021 = vmatmul.bf16.gmra.mxu0 %v304
    %v1022 = vpop.f32.mrf.mxu0
    %v1023 = vadd.f32 %v974, %v1022
    %v1024 = vpop.f32.mrf.mxu0
    %v1025 = vadd.f32 %v976, %v1024
    %1026 = vmatmul.bf16.gmra.mxu0 %v306
    %v1027 = vpop.f32.mrf.mxu0
    %v1028 = vadd.f32 %v979, %v1027
    %v1029 = vpop.f32.mrf.mxu0
    %v1030 = vadd.f32 %v981, %v1029
    %1031 = vmatmul.bf16.gmra.mxu0 %v308
    %v1032 = vpop.f32.mrf.mxu0
    %v1033 = vadd.f32 %v984, %v1032
    %v1034 = vpop.f32.mrf.mxu0
    %v1035 = vadd.f32 %v986, %v1034
    %1036 = vdwg.mxu0
    %v1037 = vadd.f32 %v101, %v704
    %v1038 = vadd.f32 %v102, %v802
    %v1039 = vadd.f32 %v103, %v900
    %v1040 = vadd.f32 %v104, %v998
    %v1041 = vadd.f32 %v105, %v706
    %v1042 = vadd.f32 %v106, %v804
    %v1043 = vadd.f32 %v107, %v902
    %v1044 = vadd.f32 %v108, %v1000
    %v1045 = vadd.f32 %v109, %v709
    %v1046 = vadd.f32 %v110, %v807
    %v1047 = vadd.f32 %v111, %v905
    %v1048 = vadd.f32 %v112, %v1003
    %v1049 = vadd.f32 %v113, %v711
    %v1050 = vadd.f32 %v114, %v809
    %v1051 = vadd.f32 %v115, %v907
    %v1052 = vadd.f32 %v116, %v1005
    %v1053 = vadd.f32 %v117, %v714
    %v1054 = vadd.f32 %v118, %v812
    %v1055 = vadd.f32 %v119, %v910
    %v1056 = vadd.f32 %v120, %v1008
    %v1057 = vadd.f32 %v121, %v716
    %v1058 = vadd.f32 %v122, %v814
    %v1059 = vadd.f32 %v123, %v912
    %v1060 = vadd.f32 %v124, %v1010
    %v1061 = vadd.f32 %v125, %v719
    %v1062 = vadd.f32 %v126, %v817
    %v1063 = vadd.f32 %v127, %v915
    %v1064 = vadd.f32 %v128, %v1013
    %v1065 = vadd.f32 %v129, %v721
    %v1066 = vadd.f32 %v130, %v819
    %v1067 = vadd.f32 %v131, %v917
    %v1068 = vadd.f32 %v132, %v1015
    %v1069 = vadd.f32 %v133, %v724
    %v1070 = vadd.f32 %v134, %v822
    %v1071 = vadd.f32 %v135, %v920
    %v1072 = vadd.f32 %v136, %v1018
    %v1073 = vadd.f32 %v137, %v726
    %v1074 = vadd.f32 %v138, %v824
    %v1075 = vadd.f32 %v139, %v922
    %v1076 = vadd.f32 %v140, %v1020
    %v1077 = vadd.f32 %v141, %v729
    %v1078 = vadd.f32 %v142, %v827
    %v1079 = vadd.f32 %v143, %v925
    %v1080 = vadd.f32 %v144, %v1023
    %v1081 = vadd.f32 %v145, %v731
    %v1082 = vadd.f32 %v146, %v829
    %v1083 = vadd.f32 %v147, %v927
    %v1084 = vadd.f32 %v148, %v1025
    %v1085 = vadd.f32 %v149, %v734
    %v1086 = vadd.f32 %v150, %v832
    %v1087 = vadd.f32 %v151, %v930
    %v1088 = vadd.f32 %v152, %v1028
    %v1089 = vadd.f32 %v153, %v736
    %v1090 = vadd.f32 %v154, %v834
    %v1091 = vadd.f32 %v155, %v932
    %v1092 = vadd.f32 %v156, %v1030
    %v1093 = vadd.f32 %v157, %v739
    %v1094 = vadd.f32 %v158, %v837
    %v1095 = vadd.f32 %v159, %v935
    %v1096 = vadd.f32 %v160, %v1033
    %v1097 = vadd.f32 %v161, %v741
    %v1098 = vadd.f32 %v162, %v839
    %v1099 = vadd.f32 %v163, %v937
    %v1100 = vadd.f32 %v164, %v1035
    %1101 = vst [vmem:[#allocation2] sm:$0xff] %v1037
    %1102 = vst [vmem:[#allocation2 + $0x8] sm:$0xff] %v1038
    %1103 = vst [vmem:[#allocation2 + $0x10] sm:$0xff] %v1039
    %1104 = vst [vmem:[#allocation2 + $0x18] sm:$0xff] %v1040
    %1105 = vst [vmem:[#allocation2 + $0x20] sm:$0xff] %v1041
    %1106 = vst [vmem:[#allocation2 + $0x28] sm:$0xff] %v1042
    %1107 = vst [vmem:[#allocation2 + $0x30] sm:$0xff] %v1043
    %1108 = vst [vmem:[#allocation2 + $0x38] sm:$0xff] %v1044
    %1109 = vst [vmem:[#allocation2 + $0x40] sm:$0xff] %v1045
    %1110 = vst [vmem:[#allocation2 + $0x48] sm:$0xff] %v1046
    %1111 = vst [vmem:[#allocation2 + $0x50] sm:$0xff] %v1047
    %1112 = vst [vmem:[#allocation2 + $0x58] sm:$0xff] %v1048
    %1113 = vst [vmem:[#allocation2 + $0x60] sm:$0xff] %v1049
    %1114 = vst [vmem:[#allocation2 + $0x68] sm:$0xff] %v1050
    %1115 = vst [vmem:[#allocation2 + $0x70] sm:$0xff] %v1051
    %1116 = vst [vmem:[#allocation2 + $0x78] sm:$0xff] %v1052
    %1117 = vst [vmem:[#allocation2 + $0x80] sm:$0xff] %v1053
    %1118 = vst [vmem:[#allocation2 + $0x88] sm:$0xff] %v1054
    %1119 = vst [vmem:[#allocation2 + $0x90] sm:$0xff] %v1055
    %1120 = vst [vmem:[#allocation2 + $0x98] sm:$0xff] %v1056
    %1121 = vst [vmem:[#allocation2 + $0xa0] sm:$0xff] %v1057
    %1122 = vst [vmem:[#allocation2 + $0xa8] sm:$0xff] %v1058
    %1123 = vst [vmem:[#allocation2 + $0xb0] sm:$0xff] %v1059
    %1124 = vst [vmem:[#allocation2 + $0xb8] sm:$0xff] %v1060
    %1125 = vst [vmem:[#allocation2 + $0xc0] sm:$0xff] %v1061
    %1126 = vst [vmem:[#allocation2 + $0xc8] sm:$0xff] %v1062
    %1127 = vst [vmem:[#allocation2 + $0xd0] sm:$0xff] %v1063
    %1128 = vst [vmem:[#allocation2 + $0xd8] sm:$0xff] %v1064
    %1129 = vst [vmem:[#allocation2 + $0xe0] sm:$0xff] %v1065
    %1130 = vst [vmem:[#allocation2 + $0xe8] sm:$0xff] %v1066
    %1131 = vst [vmem:[#allocation2 + $0xf0] sm:$0xff] %v1067
    %1132 = vst [vmem:[#allocation2 + $0xf8] sm:$0xff] %v1068
    %1133 = vst [vmem:[#allocation2 + $0x100] sm:$0xff] %v1069
    %1134 = vst [vmem:[#allocation2 + $0x108] sm:$0xff] %v1070
    %1135 = vst [vmem:[#allocation2 + $0x110] sm:$0xff] %v1071
    %1136 = vst [vmem:[#allocation2 + $0x118] sm:$0xff] %v1072
    %1137 = vst [vmem:[#allocation2 + $0x120] sm:$0xff] %v1073
    %1138 = vst [vmem:[#allocation2 + $0x128] sm:$0xff] %v1074
    %1139 = vst [vmem:[#allocation2 + $0x130] sm:$0xff] %v1075
    %1140 = vst [vmem:[#allocation2 + $0x138] sm:$0xff] %v1076
    %1141 = vst [vmem:[#allocation2 + $0x140] sm:$0xff] %v1077
    %1142 = vst [vmem:[#allocation2 + $0x148] sm:$0xff] %v1078
    %1143 = vst [vmem:[#allocation2 + $0x150] sm:$0xff] %v1079
    %1144 = vst [vmem:[#allocation2 + $0x158] sm:$0xff] %v1080
    %1145 = vst [vmem:[#allocation2 + $0x160] sm:$0xff] %v1081
    %1146 = vst [vmem:[#allocation2 + $0x168] sm:$0xff] %v1082
    %1147 = vst [vmem:[#allocation2 + $0x170] sm:$0xff] %v1083
    %1148 = vst [vmem:[#allocation2 + $0x178] sm:$0xff] %v1084
    %1149 = vst [vmem:[#allocation2 + $0x180] sm:$0xff] %v1085
    %1150 = vst [vmem:[#allocation2 + $0x188] sm:$0xff] %v1086
    %1151 = vst [vmem:[#allocation2 + $0x190] sm:$0xff] %v1087
    %1152 = vst [vmem:[#allocation2 + $0x198] sm:$0xff] %v1088
    %1153 = vst [vmem:[#allocation2 + $0x1a0] sm:$0xff] %v1089
    %1154 = vst [vmem:[#allocation2 + $0x1a8] sm:$0xff] %v1090
    %1155 = vst [vmem:[#allocation2 + $0x1b0] sm:$0xff] %v1091
    %1156 = vst [vmem:[#allocation2 + $0x1b8] sm:$0xff] %v1092
    %1157 = vst [vmem:[#allocation2 + $0x1c0] sm:$0xff] %v1093
    %1158 = vst [vmem:[#allocation2 + $0x1c8] sm:$0xff] %v1094
    %1159 = vst [vmem:[#allocation2 + $0x1d0] sm:$0xff] %v1095
    %1160 = vst [vmem:[#allocation2 + $0x1d8] sm:$0xff] %v1096
    %1161 = vst [vmem:[#allocation2 + $0x1e0] sm:$0xff] %v1097
    %1162 = vst [vmem:[#allocation2 + $0x1e8] sm:$0xff] %v1098
    %1163 = vst [vmem:[#allocation2 + $0x1f0] sm:$0xff] %v1099
    %1164 = vst [vmem:[#allocation2 + $0x1f8] sm:$0xff] %v1100
    // Predicated region
    $region26: #{_lambda_.3} parent=1 // pred_check
      %p1165 = pneg %p33
    $region27: #{_lambda_.3} parent=1 // pred_check_branch
      %1167 = sbr.rel (%p1165) target = $region29
    $region28: #{_lambda_.3} parent=1 // pred_region
      %v1168 = vld [vmem:[#allocation2] sm:$0xff]
      %v1169 = vld [vmem:[#allocation2 + $0x8] sm:$0xff]
      %v1170 = vld [vmem:[#allocation2 + $0x10] sm:$0xff]
      %v1171 = vld [vmem:[#allocation2 + $0x18] sm:$0xff]
      %v1172 = vld [vmem:[#allocation2 + $0x20] sm:$0xff]
      %v1173 = vld [vmem:[#allocation2 + $0x28] sm:$0xff]
      %v1174 = vld [vmem:[#allocation2 + $0x30] sm:$0xff]
      %v1175 = vld [vmem:[#allocation2 + $0x38] sm:$0xff]
      %v1176 = vld [vmem:[#allocation2 + $0x40] sm:$0xff]
      %v1177 = vld [vmem:[#allocation2 + $0x48] sm:$0xff]
      %v1178 = vld [vmem:[#allocation2 + $0x50] sm:$0xff]
      %v1179 = vld [vmem:[#allocation2 + $0x58] sm:$0xff]
      %v1180 = vld [vmem:[#allocation2 + $0x60] sm:$0xff]
      %v1181 = vld [vmem:[#allocation2 + $0x68] sm:$0xff]
      %v1182 = vld [vmem:[#allocation2 + $0x70] sm:$0xff]
      %v1183 = vld [vmem:[#allocation2 + $0x78] sm:$0xff]
      %v1184 = vld [vmem:[#allocation2 + $0x80] sm:$0xff]
      %v1185 = vld [vmem:[#allocation2 + $0x88] sm:$0xff]
      %v1186 = vld [vmem:[#allocation2 + $0x90] sm:$0xff]
      %v1187 = vld [vmem:[#allocation2 + $0x98] sm:$0xff]
      %v1188 = vld [vmem:[#allocation2 + $0xa0] sm:$0xff]
      %v1189 = vld [vmem:[#allocation2 + $0xa8] sm:$0xff]
      %v1190 = vld [vmem:[#allocation2 + $0xb0] sm:$0xff]
      %v1191 = vld [vmem:[#allocation2 + $0xb8] sm:$0xff]
      %v1192 = vld [vmem:[#allocation2 + $0xc0] sm:$0xff]
      %v1193 = vld [vmem:[#allocation2 + $0xc8] sm:$0xff]
      %v1194 = vld [vmem:[#allocation2 + $0xd0] sm:$0xff]
      %v1195 = vld [vmem:[#allocation2 + $0xd8] sm:$0xff]
      %v1196 = vld [vmem:[#allocation2 + $0xe0] sm:$0xff]
      %v1197 = vld [vmem:[#allocation2 + $0xe8] sm:$0xff]
      %v1198 = vld [vmem:[#allocation2 + $0xf0] sm:$0xff]
      %v1199 = vld [vmem:[#allocation2 + $0xf8] sm:$0xff]
      %v1200 = vld [vmem:[#allocation2 + $0x100] sm:$0xff]
      %v1201 = vld [vmem:[#allocation2 + $0x108] sm:$0xff]
      %v1202 = vld [vmem:[#allocation2 + $0x110] sm:$0xff]
      %v1203 = vld [vmem:[#allocation2 + $0x118] sm:$0xff]
      %v1204 = vld [vmem:[#allocation2 + $0x120] sm:$0xff]
      %v1205 = vld [vmem:[#allocation2 + $0x128] sm:$0xff]
      %v1206 = vld [vmem:[#allocation2 + $0x130] sm:$0xff]
      %v1207 = vld [vmem:[#allocation2 + $0x138] sm:$0xff]
      %v1208 = vld [vmem:[#allocation2 + $0x140] sm:$0xff]
      %v1209 = vld [vmem:[#allocation2 + $0x148] sm:$0xff]
      %v1210 = vld [vmem:[#allocation2 + $0x150] sm:$0xff]
      %v1211 = vld [vmem:[#allocation2 + $0x158] sm:$0xff]
      %v1212 = vld [vmem:[#allocation2 + $0x160] sm:$0xff]
      %v1213 = vld [vmem:[#allocation2 + $0x168] sm:$0xff]
      %v1214 = vld [vmem:[#allocation2 + $0x170] sm:$0xff]
      %v1215 = vld [vmem:[#allocation2 + $0x178] sm:$0xff]
      %v1216 = vld [vmem:[#allocation2 + $0x180] sm:$0xff]
      %v1217 = vld [vmem:[#allocation2 + $0x188] sm:$0xff]
      %v1218 = vld [vmem:[#allocation2 + $0x190] sm:$0xff]
      %v1219 = vld [vmem:[#allocation2 + $0x198] sm:$0xff]
      %v1220 = vld [vmem:[#allocation2 + $0x1a0] sm:$0xff]
      %v1221 = vld [vmem:[#allocation2 + $0x1a8] sm:$0xff]
      %v1222 = vld [vmem:[#allocation2 + $0x1b0] sm:$0xff]
      %v1223 = vld [vmem:[#allocation2 + $0x1b8] sm:$0xff]
      %v1224 = vld [vmem:[#allocation2 + $0x1c0] sm:$0xff]
      %v1225 = vld [vmem:[#allocation2 + $0x1c8] sm:$0xff]
      %v1226 = vld [vmem:[#allocation2 + $0x1d0] sm:$0xff]
      %v1227 = vld [vmem:[#allocation2 + $0x1d8] sm:$0xff]
      %v1228 = vld [vmem:[#allocation2 + $0x1e0] sm:$0xff]
      %v1229 = vld [vmem:[#allocation2 + $0x1e8] sm:$0xff]
      %v1230 = vld [vmem:[#allocation2 + $0x1f0] sm:$0xff]
      %v1231 = vld [vmem:[#allocation2 + $0x1f8] sm:$0xff]
      %v1232 = vld [vmem:[%s2] sm:$0xf]
      %v1234 = vperm.slane %v1232, 0
      %v1235 = vperm.slane %v1232, 1
      %v1236 = vperm.slane %v1232, 2
      %v1237 = vperm.slane %v1232, 3
      %v1242 = vmul.f32 %v1168, %v1234
      %v1243 = vmul.f32 %v1169, %v1235
      %v1244 = vmul.f32 %v1170, %v1236
      %v1245 = vmul.f32 %v1171, %v1237
      %v1246 = vmul.f32 %v1172, %v1234
      %v1247 = vmul.f32 %v1173, %v1235
      %v1248 = vmul.f32 %v1174, %v1236
      %v1249 = vmul.f32 %v1175, %v1237
      %v1250 = vmul.f32 %v1176, %v1234
      %v1251 = vmul.f32 %v1177, %v1235
      %v1252 = vmul.f32 %v1178, %v1236
      %v1253 = vmul.f32 %v1179, %v1237
      %v1254 = vmul.f32 %v1180, %v1234
      %v1255 = vmul.f32 %v1181, %v1235
      %v1256 = vmul.f32 %v1182, %v1236
      %v1257 = vmul.f32 %v1183, %v1237
      %v1258 = vmul.f32 %v1184, %v1234
      %v1259 = vmul.f32 %v1185, %v1235
      %v1260 = vmul.f32 %v1186, %v1236
      %v1261 = vmul.f32 %v1187, %v1237
      %v1262 = vmul.f32 %v1188, %v1234
      %v1263 = vmul.f32 %v1189, %v1235
      %v1264 = vmul.f32 %v1190, %v1236
      %v1265 = vmul.f32 %v1191, %v1237
      %v1266 = vmul.f32 %v1192, %v1234
      %v1267 = vmul.f32 %v1193, %v1235
      %v1268 = vmul.f32 %v1194, %v1236
      %v1269 = vmul.f32 %v1195, %v1237
      %v1270 = vmul.f32 %v1196, %v1234
      %v1271 = vmul.f32 %v1197, %v1235
      %v1272 = vmul.f32 %v1198, %v1236
      %v1273 = vmul.f32 %v1199, %v1237
      %v1274 = vmul.f32 %v1200, %v1234
      %v1275 = vmul.f32 %v1201, %v1235
      %v1276 = vmul.f32 %v1202, %v1236
      %v1277 = vmul.f32 %v1203, %v1237
      %v1278 = vmul.f32 %v1204, %v1234
      %v1279 = vmul.f32 %v1205, %v1235
      %v1280 = vmul.f32 %v1206, %v1236
      %v1281 = vmul.f32 %v1207, %v1237
      %v1282 = vmul.f32 %v1208, %v1234
      %v1283 = vmul.f32 %v1209, %v1235
      %v1284 = vmul.f32 %v1210, %v1236
      %v1285 = vmul.f32 %v1211, %v1237
      %v1286 = vmul.f32 %v1212, %v1234
      %v1287 = vmul.f32 %v1213, %v1235
      %v1288 = vmul.f32 %v1214, %v1236
      %v1289 = vmul.f32 %v1215, %v1237
      %v1290 = vmul.f32 %v1216, %v1234
      %v1291 = vmul.f32 %v1217, %v1235
      %v1292 = vmul.f32 %v1218, %v1236
      %v1293 = vmul.f32 %v1219, %v1237
      %v1294 = vmul.f32 %v1220, %v1234
      %v1295 = vmul.f32 %v1221, %v1235
      %v1296 = vmul.f32 %v1222, %v1236
      %v1297 = vmul.f32 %v1223, %v1237
      %v1298 = vmul.f32 %v1224, %v1234
      %v1299 = vmul.f32 %v1225, %v1235
      %v1300 = vmul.f32 %v1226, %v1236
      %v1301 = vmul.f32 %v1227, %v1237
      %v1302 = vmul.f32 %v1228, %v1234
      %v1303 = vmul.f32 %v1229, %v1235
      %v1304 = vmul.f32 %v1230, %v1236
      %v1305 = vmul.f32 %v1231, %v1237
      %v1306 = vld [vmem:[%s3] sm:$0xf]
      %v1308 = vperm.slane %v1306, 0
      %v1309 = vperm.slane %v1306, 1
      %v1310 = vperm.slane %v1306, 2
      %v1311 = vperm.slane %v1306, 3
      %v1316 = vadd.f32 %v1242, %v1308
      %v1317 = vadd.f32 %v1243, %v1309
      %v1318 = vadd.f32 %v1244, %v1310
      %v1319 = vadd.f32 %v1245, %v1311
      %v1320 = vadd.f32 %v1246, %v1308
      %v1321 = vadd.f32 %v1247, %v1309
      %v1322 = vadd.f32 %v1248, %v1310
      %v1323 = vadd.f32 %v1249, %v1311
      %v1324 = vadd.f32 %v1250, %v1308
      %v1325 = vadd.f32 %v1251, %v1309
      %v1326 = vadd.f32 %v1252, %v1310
      %v1327 = vadd.f32 %v1253, %v1311
      %v1328 = vadd.f32 %v1254, %v1308
      %v1329 = vadd.f32 %v1255, %v1309
      %v1330 = vadd.f32 %v1256, %v1310
      %v1331 = vadd.f32 %v1257, %v1311
      %v1332 = vadd.f32 %v1258, %v1308
      %v1333 = vadd.f32 %v1259, %v1309
      %v1334 = vadd.f32 %v1260, %v1310
      %v1335 = vadd.f32 %v1261, %v1311
      %v1336 = vadd.f32 %v1262, %v1308
      %v1337 = vadd.f32 %v1263, %v1309
      %v1338 = vadd.f32 %v1264, %v1310
      %v1339 = vadd.f32 %v1265, %v1311
      %v1340 = vadd.f32 %v1266, %v1308
      %v1341 = vadd.f32 %v1267, %v1309
      %v1342 = vadd.f32 %v1268, %v1310
      %v1343 = vadd.f32 %v1269, %v1311
      %v1344 = vadd.f32 %v1270, %v1308
      %v1345 = vadd.f32 %v1271, %v1309
      %v1346 = vadd.f32 %v1272, %v1310
      %v1347 = vadd.f32 %v1273, %v1311
      %v1348 = vadd.f32 %v1274, %v1308
      %v1349 = vadd.f32 %v1275, %v1309
      %v1350 = vadd.f32 %v1276, %v1310
      %v1351 = vadd.f32 %v1277, %v1311
      %v1352 = vadd.f32 %v1278, %v1308
      %v1353 = vadd.f32 %v1279, %v1309
      %v1354 = vadd.f32 %v1280, %v1310
      %v1355 = vadd.f32 %v1281, %v1311
      %v1356 = vadd.f32 %v1282, %v1308
      %v1357 = vadd.f32 %v1283, %v1309
      %v1358 = vadd.f32 %v1284, %v1310
      %v1359 = vadd.f32 %v1285, %v1311
      %v1360 = vadd.f32 %v1286, %v1308
      %v1361 = vadd.f32 %v1287, %v1309
      %v1362 = vadd.f32 %v1288, %v1310
      %v1363 = vadd.f32 %v1289, %v1311
      %v1364 = vadd.f32 %v1290, %v1308
      %v1365 = vadd.f32 %v1291, %v1309
      %v1366 = vadd.f32 %v1292, %v1310
      %v1367 = vadd.f32 %v1293, %v1311
      %v1368 = vadd.f32 %v1294, %v1308
      %v1369 = vadd.f32 %v1295, %v1309
      %v1370 = vadd.f32 %v1296, %v1310
      %v1371 = vadd.f32 %v1297, %v1311
      %v1372 = vadd.f32 %v1298, %v1308
      %v1373 = vadd.f32 %v1299, %v1309
      %v1374 = vadd.f32 %v1300, %v1310
      %v1375 = vadd.f32 %v1301, %v1311
      %v1376 = vadd.f32 %v1302, %v1308
      %v1377 = vadd.f32 %v1303, %v1309
      %v1378 = vadd.f32 %v1304, %v1310
      %v1379 = vadd.f32 %v1305, %v1311
      %v1380 = vpack.c.bf16 %v1317, %v1316
      %v1381 = vpack.c.bf16 %v1319, %v1318
      %v1382 = vpack.c.bf16 %v1321, %v1320
      %v1383 = vpack.c.bf16 %v1323, %v1322
      %v1384 = vpack.c.bf16 %v1325, %v1324
      %v1385 = vpack.c.bf16 %v1327, %v1326
      %v1386 = vpack.c.bf16 %v1329, %v1328
      %v1387 = vpack.c.bf16 %v1331, %v1330
      %v1388 = vpack.c.bf16 %v1333, %v1332
      %v1389 = vpack.c.bf16 %v1335, %v1334
      %v1390 = vpack.c.bf16 %v1337, %v1336
      %v1391 = vpack.c.bf16 %v1339, %v1338
      %v1392 = vpack.c.bf16 %v1341, %v1340
      %v1393 = vpack.c.bf16 %v1343, %v1342
      %v1394 = vpack.c.bf16 %v1345, %v1344
      %v1395 = vpack.c.bf16 %v1347, %v1346
      %v1396 = vpack.c.bf16 %v1349, %v1348
      %v1397 = vpack.c.bf16 %v1351, %v1350
      %v1398 = vpack.c.bf16 %v1353, %v1352
      %v1399 = vpack.c.bf16 %v1355, %v1354
      %v1400 = vpack.c.bf16 %v1357, %v1356
      %v1401 = vpack.c.bf16 %v1359, %v1358
      %v1402 = vpack.c.bf16 %v1361, %v1360
      %v1403 = vpack.c.bf16 %v1363, %v1362
      %v1404 = vpack.c.bf16 %v1365, %v1364
      %v1405 = vpack.c.bf16 %v1367, %v1366
      %v1406 = vpack.c.bf16 %v1369, %v1368
      %v1407 = vpack.c.bf16 %v1371, %v1370
      %v1408 = vpack.c.bf16 %v1373, %v1372
      %v1409 = vpack.c.bf16 %v1375, %v1374
      %v1410 = vpack.c.bf16 %v1377, %v1376
      %v1411 = vpack.c.bf16 %v1379, %v1378
      %1412 = vst [vmem:[%s4] sm:$0xff] %v1380
      %1413 = vst [vmem:[%s4 + $0x8] sm:$0xff] %v1381
      %1414 = vst [vmem:[%s4 + $0x10] sm:$0xff] %v1382
      %1415 = vst [vmem:[%s4 + $0x18] sm:$0xff] %v1383
      %1416 = vst [vmem:[%s4 + $0x20] sm:$0xff] %v1384
      %1417 = vst [vmem:[%s4 + $0x28] sm:$0xff] %v1385
      %1418 = vst [vmem:[%s4 + $0x30] sm:$0xff] %v1386
      %1419 = vst [vmem:[%s4 + $0x38] sm:$0xff] %v1387
      %1420 = vst [vmem:[%s4 + $0x40] sm:$0xff] %v1388
      %1421 = vst [vmem:[%s4 + $0x48] sm:$0xff] %v1389
      %1422 = vst [vmem:[%s4 + $0x50] sm:$0xff] %v1390
      %1423 = vst [vmem:[%s4 + $0x58] sm:$0xff] %v1391
      %1424 = vst [vmem:[%s4 + $0x60] sm:$0xff] %v1392
      %1425 = vst [vmem:[%s4 + $0x68] sm:$0xff] %v1393
      %1426 = vst [vmem:[%s4 + $0x70] sm:$0xff] %v1394
      %1427 = vst [vmem:[%s4 + $0x78] sm:$0xff] %v1395
      %1428 = vst [vmem:[%s4 + $0x80] sm:$0xff] %v1396
      %1429 = vst [vmem:[%s4 + $0x88] sm:$0xff] %v1397
      %1430 = vst [vmem:[%s4 + $0x90] sm:$0xff] %v1398
      %1431 = vst [vmem:[%s4 + $0x98] sm:$0xff] %v1399
      %1432 = vst [vmem:[%s4 + $0xa0] sm:$0xff] %v1400
      %1433 = vst [vmem:[%s4 + $0xa8] sm:$0xff] %v1401
      %1434 = vst [vmem:[%s4 + $0xb0] sm:$0xff] %v1402
      %1435 = vst [vmem:[%s4 + $0xb8] sm:$0xff] %v1403
      %1436 = vst [vmem:[%s4 + $0xc0] sm:$0xff] %v1404
      %1437 = vst [vmem:[%s4 + $0xc8] sm:$0xff] %v1405
      %1438 = vst [vmem:[%s4 + $0xd0] sm:$0xff] %v1406
      %1439 = vst [vmem:[%s4 + $0xd8] sm:$0xff] %v1407
      %1440 = vst [vmem:[%s4 + $0xe0] sm:$0xff] %v1408
      %1441 = vst [vmem:[%s4 + $0xe8] sm:$0xff] %v1409
      %1442 = vst [vmem:[%s4 + $0xf0] sm:$0xff] %v1410
      %1443 = vst [vmem:[%s4 + $0xf8] sm:$0xff] %v1411
    $region29: #{_lambda_.3} parent=1 // pred_fallthru
      _
    // Predicated region
    $region30: #{_lambda_.3} parent=1 // pred_check
      _
    $region31: #{_lambda_.3} parent=1 // pred_check_branch
      %1445 = sbr.rel (0) target = $region33
    $region32: #{_lambda_.3} parent=1 // pred_region
      _
    $region33: #{_lambda_.3} parent=1 // pred_fallthru
      _
    // Predicated region
    $region34: #{_lambda_.3} parent=1 // pred_check
      _
    $region35: #{_lambda_.3} parent=1 // pred_check_branch
      %1447 = sbr.rel (0) target = $region37
    $region36: #{_lambda_.3} parent=1 // pred_region
      _
    $region37: #{_lambda_.3} parent=1 // pred_fallthru
      _
    %1448 = vsyncpa [#allocation4], 1

// kernel: _lambda_.5
$region0: #{_lambda_.5}
  #allocation0 [shape = 'u32[]', space=smem, size = 0x4, offset = 0x4, fixed_abs, tag = 'smem constant byte address 0x4 - core index']
  #allocation1 [shape = 'u32[72,128]{1,0:T(1,128)}', space=vmem, size = 0x9000, scoped, tag = 'internal scratch']
  #allocation2 [shape = 'f32[256,128]{1,0:T(8,128)}', space=vmem, size = 0x20000, scoped, tag = 'scratch operand']
  %s0 = inlined_call_operand.vmem [shape: bf16[2,1,18,16,384], index: 0, kind: input, shape index: {}]
  %s1 = inlined_call_operand.vmem [shape: bf16[3,384,128], index: 1, kind: input, shape index: {}]
  %s2 = inlined_call_operand.vmem [shape: f32[1,128], index: 2, kind: input, shape index: {}]
  %s3 = inlined_call_operand.vmem [shape: f32[1,128], index: 3, kind: input, shape index: {}]
  %s4 = inlined_call_operand.hbm [shape: f32[2,16,16,128], index: 4, kind: output, shape index: {}]
  %s5 = sld [smem:[#allocation0]]
  $region49: #{_lambda_.5} parent=0
    _
  %s7 = ssub.s32 1, %s5
  %s8 = scalar_select 0, %s7, %s5
  $region1: #{_lambda_.5} parent=0
    #allocation3 [shape = 'u8[262144]{0}', space=vmem, size = 0x40000, scoped, tag = 'output window, operand 0']
    #allocation4 [shape = 's32[2]{0}', space=sflag, size = 0x8, scoped, tag = 'scoped memory for _lambda_.5']
    %9 = vsyncpa [#allocation4], 0
    %s10 = scalar_lea.sflag [#allocation4], 1
    %11 = vsyncpa %s10, 0
    loop: start=0, step=1, limit=4
    $region2: #{_lambda_.5} parent=1 // loop_pre_header
      _
    $region3: #{_lambda_.5} parent=1 // loop_header
      %s13 = sphi 0, %s17
      %p14 = scmp.ge.s32.totalorder %s13, 4
      %s20 = sphi 0, %s39
      %s21 = sphi 0, %s35
      %s22 = sphi 0, %s31
      %s23 = sphi 0, %s20
      %s24 = sphi 0, %s21
      %s25 = sphi 0, %s22
      %s26 = sphi 0, %s23
      %s27 = sphi 0, %s24
      %s28 = sphi 0, %s25
      %s44 = sphi 0, %s46
      %s47 = sphi 0, %s44
      %s48 = sphi 0, %s47
      %s64 = sphi 0, %s48
      %s70 = sphi 0, %s72
      %s73 = sphi 0, %s70
      %s74 = sphi 0, %s73
      %s90 = sphi 0, %s74
      %s96 = sphi 0, %s98
      %s99 = sphi 0, %s96
      %s100 = sphi 0, %s99
      %s116 = sphi 0, %s100
      %s122 = sphi 0, %s124
      %s125 = sphi 0, %s122
      %s126 = sphi 0, %s125
      %s142 = sphi 0, %s126
      %s152 = sphi 0, %s154
      %s155 = sphi 0, %s152
      %s156 = sphi 0, %s155
      %s172 = sphi 0, %s156
    $region4: #{_lambda_.5} parent=1 // loop_header_branch
      %16 = sbr.rel (%p14) target = $region8
    $region5: #{_lambda_.5} parent=1 // loop_body
      %s18 = ssub.s32 %s13, 1
      %s19 = ssub.s32 %s13, 2
      %s29 = sadd.s32 1, %s22
      %p30 = scmp.ge.s32.totalorder %s29, 1
      %s31 = scalar_select %p30, 0, %s29
      %s32 = sadd.s32 1, %s21
      %s33 = scalar_select %p30, %s32, %s21
      %p34 = scmp.ge.s32.totalorder %s33, 1
      %s35 = scalar_select %p34, 0, %s33
      %s36 = sadd.s32 1, %s20
      %s37 = scalar_select %p34, %s36, %s20
      %p38 = scmp.ge.s32.totalorder %s37, 2
      %s39 = scalar_select %p38, 0, %s37
      %s40 = ssub.s32 %s20, %s39
      %s41 = ssub.s32 %s22, %s31
      %s42 = sor.u32 %s40, %s41
      %p43 = scmp.eq.s32.totalorder %s42, 0
      %s45 = sadd.s32 %s44, 1
      %s46 = scalar_select %p43, %s44, %s45
      %p49 = pneg %p43
      %p50 = scmp.eq.s32.totalorder %s13, 1
      %p51 = por %p49, %p50
      %p52 = scmp.ne.s32.totalorder %s44, %s47
      %p53 = scmp.eq.s32.totalorder %s13, 0
      %p54 = por %p52, %p53
      %p55 = scmp.ne.s32.totalorder %s44, %s47
      %p56 = scmp.eq.s32.totalorder %s18, 1
      %p57 = por %p55, %p56
      %p58 = scmp.ne.s32.totalorder %s47, %s48
      %p59 = scmp.eq.s32.totalorder %s18, 0
      %p60 = por %p58, %p59
      %p61 = scmp.ne.s32.totalorder %s47, %s48
      %p62 = scmp.eq.s32.totalorder %s19, 1
      %p63 = por %p61, %p62
      %p65 = scmp.ne.s32.totalorder %s48, %s64
      %p66 = scmp.eq.s32.totalorder %s19, 0
      %p67 = por %p65, %p66
      %s68 = ssub.s32 %s21, %s35
      %p69 = scmp.eq.s32.totalorder %s68, 0
      %s71 = sadd.s32 %s70, 1
      %s72 = scalar_select %p69, %s70, %s71
      %p75 = pneg %p69
      %p76 = scmp.eq.s32.totalorder %s13, 1
      %p77 = por %p75, %p76
      %p78 = scmp.ne.s32.totalorder %s70, %s73
      %p79 = scmp.eq.s32.totalorder %s13, 0
      %p80 = por %p78, %p79
      %p81 = scmp.ne.s32.totalorder %s70, %s73
      %p82 = scmp.eq.s32.totalorder %s18, 1
      %p83 = por %p81, %p82
      %p84 = scmp.ne.s32.totalorder %s73, %s74
      %p85 = scmp.eq.s32.totalorder %s18, 0
      %p86 = por %p84, %p85
      %p87 = scmp.ne.s32.totalorder %s73, %s74
      %p88 = scmp.eq.s32.totalorder %s19, 1
      %p89 = por %p87, %p88
      %p91 = scmp.ne.s32.totalorder %s74, %s90
      %p92 = scmp.eq.s32.totalorder %s19, 0
      %p93 = por %p91, %p92
      %s94 = ssub.s32 %s21, %s35
      %p95 = scmp.eq.s32.totalorder %s94, 0
      %s97 = sadd.s32 %s96, 1
      %s98 = scalar_select %p95, %s96, %s97
      %p101 = pneg %p95
      %p102 = scmp.eq.s32.totalorder %s13, 1
      %p103 = por %p101, %p102
      %p104 = scmp.ne.s32.totalorder %s96, %s99
      %p105 = scmp.eq.s32.totalorder %s13, 0
      %p106 = por %p104, %p105
      %p107 = scmp.ne.s32.totalorder %s96, %s99
      %p108 = scmp.eq.s32.totalorder %s18, 1
      %p109 = por %p107, %p108
      %p110 = scmp.ne.s32.totalorder %s99, %s100
      %p111 = scmp.eq.s32.totalorder %s18, 0
      %p112 = por %p110, %p111
      %p113 = scmp.ne.s32.totalorder %s99, %s100
      %p114 = scmp.eq.s32.totalorder %s19, 1
      %p115 = por %p113, %p114
      %p117 = scmp.ne.s32.totalorder %s100, %s116
      %p118 = scmp.eq.s32.totalorder %s19, 0
      %p119 = por %p117, %p118
      %s120 = ssub.s32 %s21, %s35
      %p121 = scmp.eq.s32.totalorder %s120, 0
      %s123 = sadd.s32 %s122, 1
      %s124 = scalar_select %p121, %s122, %s123
      %p127 = pneg %p121
      %p128 = scmp.eq.s32.totalorder %s13, 1
      %p129 = por %p127, %p128
      %p130 = scmp.ne.s32.totalorder %s122, %s125
      %p131 = scmp.eq.s32.totalorder %s13, 0
      %p132 = por %p130, %p131
      %p133 = scmp.ne.s32.totalorder %s122, %s125
      %p134 = scmp.eq.s32.totalorder %s18, 1
      %p135 = por %p133, %p134
      %p136 = scmp.ne.s32.totalorder %s125, %s126
      %p137 = scmp.eq.s32.totalorder %s18, 0
      %p138 = por %p136, %p137
      %p139 = scmp.ne.s32.totalorder %s125, %s126
      %p140 = scmp.eq.s32.totalorder %s19, 1
      %p141 = por %p139, %p140
      %p143 = scmp.ne.s32.totalorder %s126, %s142
      %p144 = scmp.eq.s32.totalorder %s19, 0
      %p145 = por %p143, %p144
      %s146 = ssub.s32 %s20, %s39
      %s147 = ssub.s32 %s22, %s31
      %s148 = sor.u32 %s146, %s147
      %s149 = ssub.s32 %s21, %s35
      %s150 = sor.u32 %s148, %s149
      %p151 = scmp.eq.s32.totalorder %s150, 0
      %s153 = sadd.s32 %s152, 1
      %s154 = scalar_select %p151, %s152, %s153
      %p157 = pneg %p151
      %p158 = scmp.eq.s32.totalorder %s13, 1
      %p159 = por %p157, %p158
      %p160 = scmp.ne.s32.totalorder %s152, %s155
      %p161 = scmp.eq.s32.totalorder %s13, 0
      %p162 = por %p160, %p161
      %p163 = scmp.ne.s32.totalorder %s152, %s155
      %p164 = scmp.eq.s32.totalorder %s18, 1
      %p165 = por %p163, %p164
      %p166 = scmp.ne.s32.totalorder %s155, %s156
      %p167 = scmp.eq.s32.totalorder %s18, 0
      %p168 = por %p166, %p167
      %p169 = scmp.ne.s32.totalorder %s155, %s156
      %p170 = scmp.eq.s32.totalorder %s19, 1
      %p171 = por %p169, %p170
      %p173 = scmp.ne.s32.totalorder %s156, %s172
      %p174 = scmp.eq.s32.totalorder %s19, 0
      %p175 = por %p173, %p174
      %p176 = scmp.le.s32.totalorder 1, %s13
      %p177 = scmp.lt.s32.totalorder %s13, 3
      %p178 = pnand %p176, %p177
      %p179 = pneg %p178
      // Predicated region
      $region9: #{_lambda_.5} parent=5 // pred_check
        _
      $region10: #{_lambda_.5} parent=5 // pred_check_branch
        %181 = sbr.rel (%p178) target = $region12
      $region11: #{_lambda_.5} parent=5 // pred_region
        %s182 = ssub.s32 %s13, 1
        // Predicated region
        $region13: #{_lambda_.5} parent=11 // pred_check
          %p183 = pneg %p86
        $region14: #{_lambda_.5} parent=11 // pred_check_branch
          %185 = sbr.rel (%p183) target = $region16
        $region15: #{_lambda_.5} parent=11 // pred_region
          %p186 = scmp.lt.s32.totalorder %s24, 0
          %s187 = scalar_select %p186, %s24, 0
          %s188 = smul.addr %s187, 4
          %s189 = scalar_lea.vmem %s1, %s188
        $region16: #{_lambda_.5} parent=11 // pred_fallthru
          _
        // Predicated region
        $region17: #{_lambda_.5} parent=11 // pred_check
          %p190 = pneg %p112
        $region18: #{_lambda_.5} parent=11 // pred_check_branch
          %192 = sbr.rel (%p190) target = $region20
        $region19: #{_lambda_.5} parent=11 // pred_region
          %p193 = scmp.lt.s32.totalorder %s24, 0
          %s194 = scalar_select %p193, %s24, 0
          %s195 = scalar_lea.vmem %s2, %s194
        $region20: #{_lambda_.5} parent=11 // pred_fallthru
          _
        // Predicated region
        $region21: #{_lambda_.5} parent=11 // pred_check
          %p196 = pneg %p138
        $region22: #{_lambda_.5} parent=11 // pred_check_branch
          %198 = sbr.rel (%p196) target = $region24
        $region23: #{_lambda_.5} parent=11 // pred_region
          %p199 = scmp.lt.s32.totalorder %s24, 0
          %s200 = scalar_select %p199, %s24, 0
          %s201 = scalar_lea.vmem %s3, %s200
        $region24: #{_lambda_.5} parent=11 // pred_fallthru
          _
      $region12: #{_lambda_.5} parent=5 // pred_fallthru
        _
      %p202 = scmp.lt.s32.totalorder %s13, 2
      // Predicated region
      $region25: #{_lambda_.5} parent=5 // pred_check
        %p203 = pneg %p202
      $region26: #{_lambda_.5} parent=5 // pred_check_branch
        %205 = sbr.rel (%p203) target = $region28
      $region27: #{_lambda_.5} parent=5 // pred_region
        // Predicated region
        $region29: #{_lambda_.5} parent=27 // pred_check
          %p206 = pneg %p54
        $region30: #{_lambda_.5} parent=27 // pred_check_branch
          %208 = sbr.rel (%p206) target = $region32
        $region31: #{_lambda_.5} parent=27 // pred_region
          %p209 = scmp.lt.s32.totalorder %s20, 1
          %s210 = scalar_select %p209, %s20, 1
          %p211 = scmp.lt.s32.totalorder %s22, 0
          %s212 = scalar_select %p211, %s22, 0
          %s213 = smul.addr %s212, 108
          %s214 = smul.addr %s210, 108
          %s215 = sadd.s32 %s213, %s214
          %s216 = smul.addr %s215, 4
          %s217 = scalar_lea.vmem %s0, %s216
        $region32: #{_lambda_.5} parent=27 // pred_fallthru
          _
      $region28: #{_lambda_.5} parent=5 // pred_fallthru
        _
      %p218 = scmp.le.s32.totalorder 1, %s13
      %p219 = scmp.lt.s32.totalorder %s13, 3
      %p220 = pnand %p218, %p219
      %p221 = pneg %p220
      // Predicated region
      $region33: #{_lambda_.5} parent=5 // pred_check
        _
      $region34: #{_lambda_.5} parent=5 // pred_check_branch
        %223 = sbr.rel (%p220) target = $region36
      $region35: #{_lambda_.5} parent=5 // pred_region
        %s224 = ssub.s32 %s13, 1
        %p225 = scmp.lt.s32.totalorder %s23, 1
        %s226 = scalar_select %p225, %s23, 1
        %p227 = scmp.lt.s32.totalorder %s25, 0
        %s228 = scalar_select %p227, %s25, 0
        %s229 = smul.addr %s228, 108
        %s230 = smul.addr %s226, 108
        %s231 = sadd.s32 %s229, %s230
        %s232 = smul.addr %s231, 4
        %s233 = scalar_lea.vmem %s0, %s232
        %p234 = pneg %p60
        %p235 = pneg %p57
        %p236 = scmp.lt.s32.totalorder %s24, 0
        %s237 = scalar_select %p236, %s24, 0
        %s238 = smul.addr %s237, 4
        %s239 = scalar_lea.vmem %s1, %s238
        %p240 = pneg %p86
        %p241 = pneg %p83
        %p242 = scmp.lt.s32.totalorder %s24, 0
        %s243 = scalar_select %p242, %s24, 0
        %s244 = scalar_lea.vmem %s2, %s243
        %p245 = pneg %p112
        %p246 = pneg %p109
        %p247 = scmp.lt.s32.totalorder %s24, 0
        %s248 = scalar_select %p247, %s24, 0
        %s249 = scalar_lea.vmem %s3, %s248
        %p250 = pneg %p138
        %p251 = pneg %p135
        %p252 = pneg %p168
        %p253 = pneg %p165
        %s254 = sand.u32 %s155, 1
        %s255 = scalar_lea.sflag [#allocation4], %s254
        %s256 = sand.u32 %s155, 1
        %s257 = smul.addr %s256, 256
        %s258 = scalar_lea.vmem [#allocation3], %s257
        %p259 = scmp.lt.s32.totalorder %s23, 1
        %s260 = scalar_select %p259, %s23, 1
        %p261 = scmp.lt.s32.totalorder %s25, 0
        %s262 = scalar_select %p261, %s25, 0
        %s263 = smul.addr %s262, 108
        %s264 = smul.addr %s260, 108
        %s265 = sadd.s32 %s263, %s264
        %s266 = smul.addr %s265, 4
        %s267 = scalar_lea.vmem %s0, %s266
        %p268 = scmp.lt.s32.totalorder %s24, 0
        %s269 = scalar_select %p268, %s24, 0
        %s270 = smul.addr %s269, 4
        %s271 = scalar_lea.vmem %s1, %s270
        %p272 = scmp.lt.s32.totalorder %s24, 0
        %s273 = scalar_select %p272, %s24, 0
        %s274 = scalar_lea.vmem %s2, %s273
        %p275 = scmp.lt.s32.totalorder %s24, 0
        %s276 = scalar_select %p275, %s24, 0
        %s277 = scalar_lea.vmem %s3, %s276
        %s278 = smul.u32 16, %s25
        %v279 = vld [vmem:[%s267] sm:$0xff]
        %v280 = vld [vmem:[%s267 + $0x8] sm:$0xf]
        %v281 = vld [vmem:[%s267 + $0xc] sm:$0xff]
        %v282 = vld [vmem:[%s267 + $0x14] sm:$0xf]
        %v283 = vld [vmem:[%s267 + $0x18] sm:$0xff]
        %v284 = vld [vmem:[%s267 + $0x20] sm:$0xf]
        %v285 = vld [vmem:[%s267 + $0x24] sm:$0xff]
        %v286 = vld [vmem:[%s267 + $0x2c] sm:$0xf]
        %v287 = vld [vmem:[%s267 + $0x30] sm:$0xff]
        %v288 = vld [vmem:[%s267 + $0x38] sm:$0xf]
        %v289 = vld [vmem:[%s267 + $0x3c] sm:$0xff]
        %v290 = vld [vmem:[%s267 + $0x44] sm:$0xf]
        %v291 = vld [vmem:[%s267 + $0x48] sm:$0xff]
        %v292 = vld [vmem:[%s267 + $0x50] sm:$0xf]
        %v293 = vld [vmem:[%s267 + $0x54] sm:$0xff]
        %v294 = vld [vmem:[%s267 + $0x5c] sm:$0xf]
        %v295 = vld [vmem:[%s267 + $0x60] sm:$0xff]
        %v296 = vld [vmem:[%s267 + $0x68] sm:$0xf]
        %v297 = vld [vmem:[%s267 + $0x6c] sm:$0xff]
        %v298 = vld [vmem:[%s267 + $0x74] sm:$0xf]
        %v299 = vld [vmem:[%s267 + $0x78] sm:$0xff]
        %v300 = vld [vmem:[%s267 + $0x80] sm:$0xf]
        %v301 = vld [vmem:[%s267 + $0x84] sm:$0xff]
        %v302 = vld [vmem:[%s267 + $0x8c] sm:$0xf]
        %v303 = vld [vmem:[%s267 + $0x90] sm:$0xff]
        %v304 = vld [vmem:[%s267 + $0x98] sm:$0xf]
        %v305 = vld [vmem:[%s267 + $0x9c] sm:$0xff]
        %v306 = vld [vmem:[%s267 + $0xa4] sm:$0xf]
        %v307 = vld [vmem:[%s267 + $0xa8] sm:$0xff]
        %v308 = vld [vmem:[%s267 + $0xb0] sm:$0xf]
        %v309 = vld [vmem:[%s267 + $0xb4] sm:$0xff]
        %v310 = vld [vmem:[%s267 + $0xbc] sm:$0xf]
        %v311 = vld [vmem:[%s267 + $0xc0] sm:$0xff]
        %v312 = vld [vmem:[%s267 + $0xc8] sm:$0xf]
        %v313 = vld [vmem:[%s267 + $0xcc] sm:$0xff]
        %v314 = vld [vmem:[%s267 + $0xd4] sm:$0xf]
        %v315 = vld [vmem:[%s267 + $0xd8] sm:$0xff]
        %v316 = vld [vmem:[%s267 + $0xe0] sm:$0xf]
        %v317 = vld [vmem:[%s267 + $0xe4] sm:$0xff]
        %v318 = vld [vmem:[%s267 + $0xec] sm:$0xf]
        %v319 = vld [vmem:[%s267 + $0xf0] sm:$0xff]
        %v320 = vld [vmem:[%s267 + $0xf8] sm:$0xf]
        %v321 = vld [vmem:[%s267 + $0xfc] sm:$0xff]
        %v322 = vld [vmem:[%s267 + $0x104] sm:$0xf]
        %v323 = vld [vmem:[%s267 + $0x108] sm:$0xff]
        %v324 = vld [vmem:[%s267 + $0x110] sm:$0xf]
        %v325 = vld [vmem:[%s267 + $0x114] sm:$0xff]
        %v326 = vld [vmem:[%s267 + $0x11c] sm:$0xf]
        %v327 = vld [vmem:[%s267 + $0x120] sm:$0xff]
        %v328 = vld [vmem:[%s267 + $0x128] sm:$0xf]
        %v329 = vld [vmem:[%s267 + $0x12c] sm:$0xff]
        %v330 = vld [vmem:[%s267 + $0x134] sm:$0xf]
        %v331 = vld [vmem:[%s267 + $0x138] sm:$0xff]
        %v332 = vld [vmem:[%s267 + $0x140] sm:$0xf]
        %v333 = vld [vmem:[%s267 + $0x144] sm:$0xff]
        %v334 = vld [vmem:[%s267 + $0x14c] sm:$0xf]
        %v335 = vld [vmem:[%s267 + $0x150] sm:$0xff]
        %v336 = vld [vmem:[%s267 + $0x158] sm:$0xf]
        %v337 = vld [vmem:[%s267 + $0x15c] sm:$0xff]
        %v338 = vld [vmem:[%s267 + $0x164] sm:$0xf]
        %v339 = vld [vmem:[%s267 + $0x168] sm:$0xff]
        %v340 = vld [vmem:[%s267 + $0x170] sm:$0xf]
        %v341 = vld [vmem:[%s267 + $0x174] sm:$0xff]
        %v342 = vld [vmem:[%s267 + $0x17c] sm:$0xf]
        %v343 = vld [vmem:[%s271] sm:$0xf]
        %v344 = vld [vmem:[%s271 + $0x4] sm:$0xf]
        %v345 = vld [vmem:[%s271 + $0x8] sm:$0xf]
        %v346 = vld [vmem:[%s271 + $0xc] sm:$0xf]
        %v347 = vld [vmem:[%s271 + $0x10] sm:$0xf]
        %v348 = vld [vmem:[%s271 + $0x14] sm:$0xf]
        %v349 = vld [vmem:[%s271 + $0x18] sm:$0xf]
        %v350 = vld [vmem:[%s271 + $0x1c] sm:$0xf]
        %v351 = vld [vmem:[%s271 + $0x20] sm:$0xf]
        %v352 = vld [vmem:[%s271 + $0x24] sm:$0xf]
        %v353 = vld [vmem:[%s271 + $0x28] sm:$0xf]
        %v354 = vld [vmem:[%s271 + $0x2c] sm:$0xf]
        %v355 = vld [vmem:[%s271 + $0x30] sm:$0xf]
        %v356 = vld [vmem:[%s271 + $0x34] sm:$0xf]
        %v357 = vld [vmem:[%s271 + $0x38] sm:$0xf]
        %v358 = vld [vmem:[%s271 + $0x3c] sm:$0xf]
        %v359 = vld [vmem:[%s271 + $0x40] sm:$0xf]
        %v360 = vld [vmem:[%s271 + $0x44] sm:$0xf]
        %v361 = vld [vmem:[%s271 + $0x48] sm:$0xf]
        %v362 = vld [vmem:[%s271 + $0x4c] sm:$0xf]
        %v363 = vld [vmem:[%s271 + $0x50] sm:$0xf]
        %v364 = vld [vmem:[%s271 + $0x54] sm:$0xf]
        %v365 = vld [vmem:[%s271 + $0x58] sm:$0xf]
        %v366 = vld [vmem:[%s271 + $0x5c] sm:$0xf]
        %v367 = vld [vmem:[%s271 + $0x60] sm:$0xf]
        %v368 = vld [vmem:[%s271 + $0x64] sm:$0xf]
        %v369 = vld [vmem:[%s271 + $0x68] sm:$0xf]
        %v370 = vld [vmem:[%s271 + $0x6c] sm:$0xf]
        %v371 = vld [vmem:[%s271 + $0x70] sm:$0xf]
        %v372 = vld [vmem:[%s271 + $0x74] sm:$0xf]
        %v373 = vld [vmem:[%s271 + $0x78] sm:$0xf]
        %v374 = vld [vmem:[%s271 + $0x7c] sm:$0xf]
        %v375 = vld [vmem:[%s271 + $0x80] sm:$0xf]
        %v376 = vld [vmem:[%s271 + $0x84] sm:$0xf]
        %v377 = vld [vmem:[%s271 + $0x88] sm:$0xf]
        %v378 = vld [vmem:[%s271 + $0x8c] sm:$0xf]
        %v379 = vld [vmem:[%s271 + $0x90] sm:$0xf]
        %v380 = vld [vmem:[%s271 + $0x94] sm:$0xf]
        %v381 = vld [vmem:[%s271 + $0x98] sm:$0xf]
        %v382 = vld [vmem:[%s271 + $0x9c] sm:$0xf]
        %v383 = vld [vmem:[%s271 + $0xa0] sm:$0xf]
        %v384 = vld [vmem:[%s271 + $0xa4] sm:$0xf]
        %v385 = vld [vmem:[%s271 + $0xa8] sm:$0xf]
        %v386 = vld [vmem:[%s271 + $0xac] sm:$0xf]
        %v387 = vld [vmem:[%s271 + $0xb0] sm:$0xf]
        %v388 = vld [vmem:[%s271 + $0xb4] sm:$0xf]
        %v389 = vld [vmem:[%s271 + $0xb8] sm:$0xf]
        %v390 = vld [vmem:[%s271 + $0xbc] sm:$0xf]
        %v455 = vunpack.c.l.b16 %v279
        %v456 = vunpack.c.h.b16 %v279
        %v457 = vunpack.c.l.b16 %v280
        %v458 = vunpack.c.l.b16 %v281
        %v459 = vunpack.c.h.b16 %v281
        %v460 = vunpack.c.l.b16 %v282
        %v461 = vunpack.c.l.b16 %v283
        %v462 = vunpack.c.h.b16 %v283
        %v463 = vunpack.c.l.b16 %v284
        %v464 = vunpack.c.l.b16 %v285
        %v465 = vunpack.c.h.b16 %v285
        %v466 = vunpack.c.l.b16 %v286
        %v467 = vunpack.c.l.b16 %v287
        %v468 = vunpack.c.h.b16 %v287
        %v469 = vunpack.c.l.b16 %v288
        %v470 = vunpack.c.l.b16 %v289
        %v471 = vunpack.c.h.b16 %v289
        %v472 = vunpack.c.l.b16 %v290
        %v473 = vunpack.c.l.b16 %v291
        %v474 = vunpack.c.h.b16 %v291
        %v475 = vunpack.c.l.b16 %v292
        %v476 = vunpack.c.l.b16 %v293
        %v477 = vunpack.c.h.b16 %v293
        %v478 = vunpack.c.l.b16 %v294
        %v479 = vunpack.c.l.b16 %v295
        %v480 = vunpack.c.h.b16 %v295
        %v481 = vunpack.c.l.b16 %v296
        %v482 = vunpack.c.l.b16 %v297
        %v483 = vunpack.c.h.b16 %v297
        %v484 = vunpack.c.l.b16 %v298
        %v485 = vunpack.c.l.b16 %v299
        %v486 = vunpack.c.h.b16 %v299
        %v487 = vunpack.c.l.b16 %v300
        %v488 = vunpack.c.l.b16 %v301
        %v489 = vunpack.c.h.b16 %v301
        %v490 = vunpack.c.l.b16 %v302
        %v491 = vunpack.c.l.b16 %v303
        %v492 = vunpack.c.h.b16 %v303
        %v493 = vunpack.c.l.b16 %v304
        %v494 = vunpack.c.l.b16 %v305
        %v495 = vunpack.c.h.b16 %v305
        %v496 = vunpack.c.l.b16 %v306
        %v497 = vunpack.c.l.b16 %v307
        %v498 = vunpack.c.h.b16 %v307
        %v499 = vunpack.c.l.b16 %v308
        %v500 = vunpack.c.l.b16 %v309
        %v501 = vunpack.c.h.b16 %v309
        %v502 = vunpack.c.l.b16 %v310
        %v503 = vunpack.c.l.b16 %v311
        %v504 = vunpack.c.h.b16 %v311
        %v505 = vunpack.c.l.b16 %v312
        %v506 = vunpack.c.l.b16 %v313
        %v507 = vunpack.c.h.b16 %v313
        %v508 = vunpack.c.l.b16 %v314
        %v509 = vunpack.c.l.b16 %v315
        %v510 = vunpack.c.h.b16 %v315
        %v511 = vunpack.c.l.b16 %v316
        %v512 = vunpack.c.l.b16 %v317
        %v513 = vunpack.c.h.b16 %v317
        %v514 = vunpack.c.l.b16 %v318
        %v515 = vunpack.c.l.b16 %v319
        %v516 = vunpack.c.h.b16 %v319
        %v517 = vunpack.c.l.b16 %v320
        %v518 = vunpack.c.l.b16 %v321
        %v519 = vunpack.c.h.b16 %v321
        %v520 = vunpack.c.l.b16 %v322
        %v521 = vunpack.c.l.b16 %v323
        %v522 = vunpack.c.h.b16 %v323
        %v523 = vunpack.c.l.b16 %v324
        %v524 = vunpack.c.l.b16 %v325
        %v525 = vunpack.c.h.b16 %v325
        %v526 = vunpack.c.l.b16 %v326
        %v527 = vunpack.c.l.b16 %v327
        %v528 = vunpack.c.h.b16 %v327
        %v529 = vunpack.c.l.b16 %v328
        %v530 = vunpack.c.l.b16 %v329
        %v531 = vunpack.c.h.b16 %v329
        %v532 = vunpack.c.l.b16 %v330
        %v533 = vunpack.c.l.b16 %v331
        %v534 = vunpack.c.h.b16 %v331
        %v535 = vunpack.c.l.b16 %v332
        %v536 = vunpack.c.l.b16 %v333
        %v537 = vunpack.c.h.b16 %v333
        %v538 = vunpack.c.l.b16 %v334
        %v539 = vunpack.c.l.b16 %v335
        %v540 = vunpack.c.h.b16 %v335
        %v541 = vunpack.c.l.b16 %v336
        %v542 = vunpack.c.l.b16 %v337
        %v543 = vunpack.c.h.b16 %v337
        %v544 = vunpack.c.l.b16 %v338
        %v545 = vunpack.c.l.b16 %v339
        %v546 = vunpack.c.h.b16 %v339
        %v547 = vunpack.c.l.b16 %v340
        %v548 = vunpack.c.l.b16 %v341
        %v549 = vunpack.c.h.b16 %v341
        %v550 = vunpack.c.l.b16 %v342
        %v551 = vpack.c.b16 %v458, %v455
        %v552 = vpack.c.b16 %v459, %v456
        %v553 = vpack.c.b16 %v460, %v457
        %v554 = vpack.c.b16 %v464, %v461
        %v555 = vpack.c.b16 %v465, %v462
        %v556 = vpack.c.b16 %v466, %v463
        %v557 = vpack.c.b16 %v470, %v467
        %v558 = vpack.c.b16 %v471, %v468
        %v559 = vpack.c.b16 %v472, %v469
        %v560 = vpack.c.b16 %v476, %v473
        %v561 = vpack.c.b16 %v477, %v474
        %v562 = vpack.c.b16 %v478, %v475
        %v563 = vpack.c.b16 %v482, %v479
        %v564 = vpack.c.b16 %v483, %v480
        %v565 = vpack.c.b16 %v484, %v481
        %v566 = vpack.c.b16 %v488, %v485
        %v567 = vpack.c.b16 %v489, %v486
        %v568 = vpack.c.b16 %v490, %v487
        %v569 = vpack.c.b16 %v494, %v491
        %v570 = vpack.c.b16 %v495, %v492
        %v571 = vpack.c.b16 %v496, %v493
        %v572 = vpack.c.b16 %v500, %v497
        %v573 = vpack.c.b16 %v501, %v498
        %v574 = vpack.c.b16 %v502, %v499
        %v575 = vpack.c.b16 %v506, %v503
        %v576 = vpack.c.b16 %v507, %v504
        %v577 = vpack.c.b16 %v508, %v505
        %v578 = vpack.c.b16 %v512, %v509
        %v579 = vpack.c.b16 %v513, %v510
        %v580 = vpack.c.b16 %v514, %v511
        %v581 = vpack.c.b16 %v518, %v515
        %v582 = vpack.c.b16 %v519, %v516
        %v583 = vpack.c.b16 %v520, %v517
        %v584 = vpack.c.b16 %v524, %v521
        %v585 = vpack.c.b16 %v525, %v522
        %v586 = vpack.c.b16 %v526, %v523
        %v587 = vpack.c.b16 %v530, %v527
        %v588 = vpack.c.b16 %v531, %v528
        %v589 = vpack.c.b16 %v532, %v529
        %v590 = vpack.c.b16 %v536, %v533
        %v591 = vpack.c.b16 %v537, %v534
        %v592 = vpack.c.b16 %v538, %v535
        %v593 = vpack.c.b16 %v542, %v539
        %v594 = vpack.c.b16 %v543, %v540
        %v595 = vpack.c.b16 %v544, %v541
        %v596 = vpack.c.b16 %v548, %v545
        %v597 = vpack.c.b16 %v549, %v546
        %v598 = vpack.c.b16 %v550, %v547
        %v695 = vunpack.c.l.b16 %v343
        %v696 = vunpack.c.l.b16 %v344
        %v697 = vunpack.c.l.b16 %v345
        %v698 = vunpack.c.l.b16 %v346
        %v699 = vunpack.c.l.b16 %v347
        %v700 = vunpack.c.l.b16 %v348
        %v701 = vunpack.c.l.b16 %v349
        %v702 = vunpack.c.l.b16 %v350
        %v703 = vunpack.c.l.b16 %v351
        %v704 = vunpack.c.l.b16 %v352
        %v705 = vunpack.c.l.b16 %v353
        %v706 = vunpack.c.l.b16 %v354
        %v707 = vunpack.c.l.b16 %v355
        %v708 = vunpack.c.l.b16 %v356
        %v709 = vunpack.c.l.b16 %v357
        %v710 = vunpack.c.l.b16 %v358
        %v711 = vunpack.c.l.b16 %v359
        %v712 = vunpack.c.l.b16 %v360
        %v713 = vunpack.c.l.b16 %v361
        %v714 = vunpack.c.l.b16 %v362
        %v715 = vunpack.c.l.b16 %v363
        %v716 = vunpack.c.l.b16 %v364
        %v717 = vunpack.c.l.b16 %v365
        %v718 = vunpack.c.l.b16 %v366
        %v719 = vunpack.c.l.b16 %v367
        %v720 = vunpack.c.l.b16 %v368
        %v721 = vunpack.c.l.b16 %v369
        %v722 = vunpack.c.l.b16 %v370
        %v723 = vunpack.c.l.b16 %v371
        %v724 = vunpack.c.l.b16 %v372
        %v725 = vunpack.c.l.b16 %v373
        %v726 = vunpack.c.l.b16 %v374
        %v727 = vunpack.c.l.b16 %v375
        %v728 = vunpack.c.l.b16 %v376
        %v729 = vunpack.c.l.b16 %v377
        %v730 = vunpack.c.l.b16 %v378
        %v731 = vunpack.c.l.b16 %v379
        %v732 = vunpack.c.l.b16 %v380
        %v733 = vunpack.c.l.b16 %v381
        %v734 = vunpack.c.l.b16 %v382
        %v735 = vunpack.c.l.b16 %v383
        %v736 = vunpack.c.l.b16 %v384
        %v737 = vunpack.c.l.b16 %v385
        %v738 = vunpack.c.l.b16 %v386
        %v739 = vunpack.c.l.b16 %v387
        %v740 = vunpack.c.l.b16 %v388
        %v741 = vunpack.c.l.b16 %v389
        %v742 = vunpack.c.l.b16 %v390
        %v743 = vpack.c.b16 %v696, %v695
        %v744 = vpack.c.b16 %v698, %v697
        %v745 = vpack.c.b16 %v700, %v699
        %v746 = vpack.c.b16 %v702, %v701
        %v747 = vpack.c.b16 %v704, %v703
        %v748 = vpack.c.b16 %v706, %v705
        %v749 = vpack.c.b16 %v708, %v707
        %v750 = vpack.c.b16 %v710, %v709
        %v751 = vpack.c.b16 %v712, %v711
        %v752 = vpack.c.b16 %v714, %v713
        %v753 = vpack.c.b16 %v716, %v715
        %v754 = vpack.c.b16 %v718, %v717
        %v755 = vpack.c.b16 %v720, %v719
        %v756 = vpack.c.b16 %v722, %v721
        %v757 = vpack.c.b16 %v724, %v723
        %v758 = vpack.c.b16 %v726, %v725
        %v759 = vpack.c.b16 %v728, %v727
        %v760 = vpack.c.b16 %v730, %v729
        %v761 = vpack.c.b16 %v732, %v731
        %v762 = vpack.c.b16 %v734, %v733
        %v763 = vpack.c.b16 %v736, %v735
        %v764 = vpack.c.b16 %v738, %v737
        %v765 = vpack.c.b16 %v740, %v739
        %v766 = vpack.c.b16 %v742, %v741
        %791 = vmatpush.bf16.msra.mxu0 %v750
        %792 = vmatpush.bf16.msra.mxu0 %v749
        %793 = vmatpush.bf16.msra.mxu0 %v748
        %794 = vmatpush.bf16.msra.mxu0 %v747
        %795 = vmatpush.bf16.msra.mxu0 %v746
        %796 = vmatpush.bf16.msra.mxu0 %v745
        %797 = vmatpush.bf16.msra.mxu0 %v744
        %798 = vmatpush.bf16.msra.mxu0 %v743
        %799 = vmatmul.bf16.gmra.mxu0 %v551
        %v800 = vpop.f32.mrf.mxu0
        %v801 = vadd.f32 0.0, %v800
        %v802 = vpop.f32.mrf.mxu0
        %v803 = vadd.f32 0.0, %v802
        %804 = vmatmul.bf16.gmra.mxu0 %v554
        %v805 = vpop.f32.mrf.mxu0
        %v806 = vadd.f32 0.0, %v805
        %v807 = vpop.f32.mrf.mxu0
        %v808 = vadd.f32 0.0, %v807
        %809 = vmatmul.bf16.gmra.mxu0 %v557
        %v810 = vpop.f32.mrf.mxu0
        %v811 = vadd.f32 0.0, %v810
        %v812 = vpop.f32.mrf.mxu0
        %v813 = vadd.f32 0.0, %v812
        %814 = vmatmul.bf16.gmra.mxu0 %v560
        %v815 = vpop.f32.mrf.mxu0
        %v816 = vadd.f32 0.0, %v815
        %v817 = vpop.f32.mrf.mxu0
        %v818 = vadd.f32 0.0, %v817
        %819 = vmatmul.bf16.gmra.mxu0 %v563
        %v820 = vpop.f32.mrf.mxu0
        %v821 = vadd.f32 0.0, %v820
        %v822 = vpop.f32.mrf.mxu0
        %v823 = vadd.f32 0.0, %v822
        %824 = vmatmul.bf16.gmra.mxu0 %v566
        %v825 = vpop.f32.mrf.mxu0
        %v826 = vadd.f32 0.0, %v825
        %v827 = vpop.f32.mrf.mxu0
        %v828 = vadd.f32 0.0, %v827
        %829 = vmatmul.bf16.gmra.mxu0 %v569
        %v830 = vpop.f32.mrf.mxu0
        %v831 = vadd.f32 0.0, %v830
        %v832 = vpop.f32.mrf.mxu0
        %v833 = vadd.f32 0.0, %v832
        %834 = vmatmul.bf16.gmra.mxu0 %v572
        %v835 = vpop.f32.mrf.mxu0
        %v836 = vadd.f32 0.0, %v835
        %v837 = vpop.f32.mrf.mxu0
        %v838 = vadd.f32 0.0, %v837
        %839 = vmatmul.bf16.gmra.mxu0 %v575
        %v840 = vpop.f32.mrf.mxu0
        %v841 = vadd.f32 0.0, %v840
        %v842 = vpop.f32.mrf.mxu0
        %v843 = vadd.f32 0.0, %v842
        %844 = vmatmul.bf16.gmra.mxu0 %v578
        %v845 = vpop.f32.mrf.mxu0
        %v846 = vadd.f32 0.0, %v845
        %v847 = vpop.f32.mrf.mxu0
        %v848 = vadd.f32 0.0, %v847
        %849 = vmatmul.bf16.gmra.mxu0 %v581
        %v850 = vpop.f32.mrf.mxu0
        %v851 = vadd.f32 0.0, %v850
        %v852 = vpop.f32.mrf.mxu0
        %v853 = vadd.f32 0.0, %v852
        %854 = vmatmul.bf16.gmra.mxu0 %v584
        %v855 = vpop.f32.mrf.mxu0
        %v856 = vadd.f32 0.0, %v855
        %v857 = vpop.f32.mrf.mxu0
        %v858 = vadd.f32 0.0, %v857
        %859 = vmatmul.bf16.gmra.mxu0 %v587
        %v860 = vpop.f32.mrf.mxu0
        %v861 = vadd.f32 0.0, %v860
        %v862 = vpop.f32.mrf.mxu0
        %v863 = vadd.f32 0.0, %v862
        %864 = vmatmul.bf16.gmra.mxu0 %v590
        %v865 = vpop.f32.mrf.mxu0
        %v866 = vadd.f32 0.0, %v865
        %v867 = vpop.f32.mrf.mxu0
        %v868 = vadd.f32 0.0, %v867
        %869 = vmatmul.bf16.gmra.mxu0 %v593
        %v870 = vpop.f32.mrf.mxu0
        %v871 = vadd.f32 0.0, %v870
        %v872 = vpop.f32.mrf.mxu0
        %v873 = vadd.f32 0.0, %v872
        %874 = vmatmul.bf16.gmra.mxu0 %v596
        %v875 = vpop.f32.mrf.mxu0
        %v876 = vadd.f32 0.0, %v875
        %v877 = vpop.f32.mrf.mxu0
        %v878 = vadd.f32 0.0, %v877
        %879 = vdwg.mxu0
        %880 = vmatpush.bf16.msra.mxu0 %v758
        %881 = vmatpush.bf16.msra.mxu0 %v757
        %882 = vmatpush.bf16.msra.mxu0 %v756
        %883 = vmatpush.bf16.msra.mxu0 %v755
        %884 = vmatpush.bf16.msra.mxu0 %v754
        %885 = vmatpush.bf16.msra.mxu0 %v753
        %886 = vmatpush.bf16.msra.mxu0 %v752
        %887 = vmatpush.bf16.msra.mxu0 %v751
        %888 = vmatmul.bf16.gmra.mxu0 %v552
        %v889 = vpop.f32.mrf.mxu0
        %v890 = vadd.f32 %v801, %v889
        %v891 = vpop.f32.mrf.mxu0
        %v892 = vadd.f32 %v803, %v891
        %893 = vmatmul.bf16.gmra.mxu0 %v555
        %v894 = vpop.f32.mrf.mxu0
        %v895 = vadd.f32 %v806, %v894
        %v896 = vpop.f32.mrf.mxu0
        %v897 = vadd.f32 %v808, %v896
        %898 = vmatmul.bf16.gmra.mxu0 %v558
        %v899 = vpop.f32.mrf.mxu0
        %v900 = vadd.f32 %v811, %v899
        %v901 = vpop.f32.mrf.mxu0
        %v902 = vadd.f32 %v813, %v901
        %903 = vmatmul.bf16.gmra.mxu0 %v561
        %v904 = vpop.f32.mrf.mxu0
        %v905 = vadd.f32 %v816, %v904
        %v906 = vpop.f32.mrf.mxu0
        %v907 = vadd.f32 %v818, %v906
        %908 = vmatmul.bf16.gmra.mxu0 %v564
        %v909 = vpop.f32.mrf.mxu0
        %v910 = vadd.f32 %v821, %v909
        %v911 = vpop.f32.mrf.mxu0
        %v912 = vadd.f32 %v823, %v911
        %913 = vmatmul.bf16.gmra.mxu0 %v567
        %v914 = vpop.f32.mrf.mxu0
        %v915 = vadd.f32 %v826, %v914
        %v916 = vpop.f32.mrf.mxu0
        %v917 = vadd.f32 %v828, %v916
        %918 = vmatmul.bf16.gmra.mxu0 %v570
        %v919 = vpop.f32.mrf.mxu0
        %v920 = vadd.f32 %v831, %v919
        %v921 = vpop.f32.mrf.mxu0
        %v922 = vadd.f32 %v833, %v921
        %923 = vmatmul.bf16.gmra.mxu0 %v573
        %v924 = vpop.f32.mrf.mxu0
        %v925 = vadd.f32 %v836, %v924
        %v926 = vpop.f32.mrf.mxu0
        %v927 = vadd.f32 %v838, %v926
        %928 = vmatmul.bf16.gmra.mxu0 %v576
        %v929 = vpop.f32.mrf.mxu0
        %v930 = vadd.f32 %v841, %v929
        %v931 = vpop.f32.mrf.mxu0
        %v932 = vadd.f32 %v843, %v931
        %933 = vmatmul.bf16.gmra.mxu0 %v579
        %v934 = vpop.f32.mrf.mxu0
        %v935 = vadd.f32 %v846, %v934
        %v936 = vpop.f32.mrf.mxu0
        %v937 = vadd.f32 %v848, %v936
        %938 = vmatmul.bf16.gmra.mxu0 %v582
        %v939 = vpop.f32.mrf.mxu0
        %v940 = vadd.f32 %v851, %v939
        %v941 = vpop.f32.mrf.mxu0
        %v942 = vadd.f32 %v853, %v941
        %943 = vmatmul.bf16.gmra.mxu0 %v585
        %v944 = vpop.f32.mrf.mxu0
        %v945 = vadd.f32 %v856, %v944
        %v946 = vpop.f32.mrf.mxu0
        %v947 = vadd.f32 %v858, %v946
        %948 = vmatmul.bf16.gmra.mxu0 %v588
        %v949 = vpop.f32.mrf.mxu0
        %v950 = vadd.f32 %v861, %v949
        %v951 = vpop.f32.mrf.mxu0
        %v952 = vadd.f32 %v863, %v951
        %953 = vmatmul.bf16.gmra.mxu0 %v591
        %v954 = vpop.f32.mrf.mxu0
        %v955 = vadd.f32 %v866, %v954
        %v956 = vpop.f32.mrf.mxu0
        %v957 = vadd.f32 %v868, %v956
        %958 = vmatmul.bf16.gmra.mxu0 %v594
        %v959 = vpop.f32.mrf.mxu0
        %v960 = vadd.f32 %v871, %v959
        %v961 = vpop.f32.mrf.mxu0
        %v962 = vadd.f32 %v873, %v961
        %963 = vmatmul.bf16.gmra.mxu0 %v597
        %v964 = vpop.f32.mrf.mxu0
        %v965 = vadd.f32 %v876, %v964
        %v966 = vpop.f32.mrf.mxu0
        %v967 = vadd.f32 %v878, %v966
        %968 = vdwg.mxu0
        %969 = vmatpush.bf16.msra.mxu0 %v766
        %970 = vmatpush.bf16.msra.mxu0 %v765
        %971 = vmatpush.bf16.msra.mxu0 %v764
        %972 = vmatpush.bf16.msra.mxu0 %v763
        %973 = vmatpush.bf16.msra.mxu0 %v762
        %974 = vmatpush.bf16.msra.mxu0 %v761
        %975 = vmatpush.bf16.msra.mxu0 %v760
        %976 = vmatpush.bf16.msra.mxu0 %v759
        %977 = vmatmul.bf16.gmra.mxu0 %v553
        %v978 = vpop.f32.mrf.mxu0
        %v979 = vadd.f32 %v890, %v978
        %v980 = vpop.f32.mrf.mxu0
        %v981 = vadd.f32 %v892, %v980
        %982 = vmatmul.bf16.gmra.mxu0 %v556
        %v983 = vpop.f32.mrf.mxu0
        %v984 = vadd.f32 %v895, %v983
        %v985 = vpop.f32.mrf.mxu0
        %v986 = vadd.f32 %v897, %v985
        %987 = vmatmul.bf16.gmra.mxu0 %v559
        %v988 = vpop.f32.mrf.mxu0
        %v989 = vadd.f32 %v900, %v988
        %v990 = vpop.f32.mrf.mxu0
        %v991 = vadd.f32 %v902, %v990
        %992 = vmatmul.bf16.gmra.mxu0 %v562
        %v993 = vpop.f32.mrf.mxu0
        %v994 = vadd.f32 %v905, %v993
        %v995 = vpop.f32.mrf.mxu0
        %v996 = vadd.f32 %v907, %v995
        %997 = vmatmul.bf16.gmra.mxu0 %v565
        %v998 = vpop.f32.mrf.mxu0
        %v999 = vadd.f32 %v910, %v998
        %v1000 = vpop.f32.mrf.mxu0
        %v1001 = vadd.f32 %v912, %v1000
        %1002 = vmatmul.bf16.gmra.mxu0 %v568
        %v1003 = vpop.f32.mrf.mxu0
        %v1004 = vadd.f32 %v915, %v1003
        %v1005 = vpop.f32.mrf.mxu0
        %v1006 = vadd.f32 %v917, %v1005
        %1007 = vmatmul.bf16.gmra.mxu0 %v571
        %v1008 = vpop.f32.mrf.mxu0
        %v1009 = vadd.f32 %v920, %v1008
        %v1010 = vpop.f32.mrf.mxu0
        %v1011 = vadd.f32 %v922, %v1010
        %1012 = vmatmul.bf16.gmra.mxu0 %v574
        %v1013 = vpop.f32.mrf.mxu0
        %v1014 = vadd.f32 %v925, %v1013
        %v1015 = vpop.f32.mrf.mxu0
        %v1016 = vadd.f32 %v927, %v1015
        %1017 = vmatmul.bf16.gmra.mxu0 %v577
        %v1018 = vpop.f32.mrf.mxu0
        %v1019 = vadd.f32 %v930, %v1018
        %v1020 = vpop.f32.mrf.mxu0
        %v1021 = vadd.f32 %v932, %v1020
        %1022 = vmatmul.bf16.gmra.mxu0 %v580
        %v1023 = vpop.f32.mrf.mxu0
        %v1024 = vadd.f32 %v935, %v1023
        %v1025 = vpop.f32.mrf.mxu0
        %v1026 = vadd.f32 %v937, %v1025
        %1027 = vmatmul.bf16.gmra.mxu0 %v583
        %v1028 = vpop.f32.mrf.mxu0
        %v1029 = vadd.f32 %v940, %v1028
        %v1030 = vpop.f32.mrf.mxu0
        %v1031 = vadd.f32 %v942, %v1030
        %1032 = vmatmul.bf16.gmra.mxu0 %v586
        %v1033 = vpop.f32.mrf.mxu0
        %v1034 = vadd.f32 %v945, %v1033
        %v1035 = vpop.f32.mrf.mxu0
        %v1036 = vadd.f32 %v947, %v1035
        %1037 = vmatmul.bf16.gmra.mxu0 %v589
        %v1038 = vpop.f32.mrf.mxu0
        %v1039 = vadd.f32 %v950, %v1038
        %v1040 = vpop.f32.mrf.mxu0
        %v1041 = vadd.f32 %v952, %v1040
        %1042 = vmatmul.bf16.gmra.mxu0 %v592
        %v1043 = vpop.f32.mrf.mxu0
        %v1044 = vadd.f32 %v955, %v1043
        %v1045 = vpop.f32.mrf.mxu0
        %v1046 = vadd.f32 %v957, %v1045
        %1047 = vmatmul.bf16.gmra.mxu0 %v595
        %v1048 = vpop.f32.mrf.mxu0
        %v1049 = vadd.f32 %v960, %v1048
        %v1050 = vpop.f32.mrf.mxu0
        %v1051 = vadd.f32 %v962, %v1050
        %1052 = vmatmul.bf16.gmra.mxu0 %v598
        %v1053 = vpop.f32.mrf.mxu0
        %v1054 = vadd.f32 %v965, %v1053
        %v1055 = vpop.f32.mrf.mxu0
        %v1056 = vadd.f32 %v967, %v1055
        %1057 = vdwg.mxu0
        %1058 = vst [vmem:[#allocation2] sm:$0xff] %v979
        %1059 = vst [vmem:[#allocation2 + $0x8] sm:$0xff] %v981
        %1060 = vst [vmem:[#allocation2 + $0x10] sm:$0xff] %v984
        %1061 = vst [vmem:[#allocation2 + $0x18] sm:$0xff] %v986
        %1062 = vst [vmem:[#allocation2 + $0x20] sm:$0xff] %v989
        %1063 = vst [vmem:[#allocation2 + $0x28] sm:$0xff] %v991
        %1064 = vst [vmem:[#allocation2 + $0x30] sm:$0xff] %v994
        %1065 = vst [vmem:[#allocation2 + $0x38] sm:$0xff] %v996
        %1066 = vst [vmem:[#allocation2 + $0x40] sm:$0xff] %v999
        %1067 = vst [vmem:[#allocation2 + $0x48] sm:$0xff] %v1001
        %1068 = vst [vmem:[#allocation2 + $0x50] sm:$0xff] %v1004
        %1069 = vst [vmem:[#allocation2 + $0x58] sm:$0xff] %v1006
        %1070 = vst [vmem:[#allocation2 + $0x60] sm:$0xff] %v1009
        %1071 = vst [vmem:[#allocation2 + $0x68] sm:$0xff] %v1011
        %1072 = vst [vmem:[#allocation2 + $0x70] sm:$0xff] %v1014
        %1073 = vst [vmem:[#allocation2 + $0x78] sm:$0xff] %v1016
        %1074 = vst [vmem:[#allocation2 + $0x80] sm:$0xff] %v1019
        %1075 = vst [vmem:[#allocation2 + $0x88] sm:$0xff] %v1021
        %1076 = vst [vmem:[#allocation2 + $0x90] sm:$0xff] %v1024
        %1077 = vst [vmem:[#allocation2 + $0x98] sm:$0xff] %v1026
        %1078 = vst [vmem:[#allocation2 + $0xa0] sm:$0xff] %v1029
        %1079 = vst [vmem:[#allocation2 + $0xa8] sm:$0xff] %v1031
        %1080 = vst [vmem:[#allocation2 + $0xb0] sm:$0xff] %v1034
        %1081 = vst [vmem:[#allocation2 + $0xb8] sm:$0xff] %v1036
        %1082 = vst [vmem:[#allocation2 + $0xc0] sm:$0xff] %v1039
        %1083 = vst [vmem:[#allocation2 + $0xc8] sm:$0xff] %v1041
        %1084 = vst [vmem:[#allocation2 + $0xd0] sm:$0xff] %v1044
        %1085 = vst [vmem:[#allocation2 + $0xd8] sm:$0xff] %v1046
        %1086 = vst [vmem:[#allocation2 + $0xe0] sm:$0xff] %v1049
        %1087 = vst [vmem:[#allocation2 + $0xe8] sm:$0xff] %v1051
        %1088 = vst [vmem:[#allocation2 + $0xf0] sm:$0xff] %v1054
        %1089 = vst [vmem:[#allocation2 + $0xf8] sm:$0xff] %v1056
        %s1090 = scalar_lea.vmem %s267, 24
        %v1091 = vld [vmem:[%s1090] sm:$0xff]
        %v1092 = vld [vmem:[%s1090 + $0x8] sm:$0xf]
        %v1093 = vld [vmem:[%s1090 + $0xc] sm:$0xff]
        %v1094 = vld [vmem:[%s1090 + $0x14] sm:$0xf]
        %v1095 = vld [vmem:[%s1090 + $0x18] sm:$0xff]
        %v1096 = vld [vmem:[%s1090 + $0x20] sm:$0xf]
        %v1097 = vld [vmem:[%s1090 + $0x24] sm:$0xff]
        %v1098 = vld [vmem:[%s1090 + $0x2c] sm:$0xf]
        %v1099 = vld [vmem:[%s1090 + $0x30] sm:$0xff]
        %v1100 = vld [vmem:[%s1090 + $0x38] sm:$0xf]
        %v1101 = vld [vmem:[%s1090 + $0x3c] sm:$0xff]
        %v1102 = vld [vmem:[%s1090 + $0x44] sm:$0xf]
        %v1103 = vld [vmem:[%s1090 + $0x48] sm:$0xff]
        %v1104 = vld [vmem:[%s1090 + $0x50] sm:$0xf]
        %v1105 = vld [vmem:[%s1090 + $0x54] sm:$0xff]
        %v1106 = vld [vmem:[%s1090 + $0x5c] sm:$0xf]
        %v1107 = vld [vmem:[%s1090 + $0x60] sm:$0xff]
        %v1108 = vld [vmem:[%s1090 + $0x68] sm:$0xf]
        %v1109 = vld [vmem:[%s1090 + $0x6c] sm:$0xff]
        %v1110 = vld [vmem:[%s1090 + $0x74] sm:$0xf]
        %v1111 = vld [vmem:[%s1090 + $0x78] sm:$0xff]
        %v1112 = vld [vmem:[%s1090 + $0x80] sm:$0xf]
        %v1113 = vld [vmem:[%s1090 + $0x84] sm:$0xff]
        %v1114 = vld [vmem:[%s1090 + $0x8c] sm:$0xf]
        %v1115 = vld [vmem:[%s1090 + $0x90] sm:$0xff]
        %v1116 = vld [vmem:[%s1090 + $0x98] sm:$0xf]
        %v1117 = vld [vmem:[%s1090 + $0x9c] sm:$0xff]
        %v1118 = vld [vmem:[%s1090 + $0xa4] sm:$0xf]
        %v1119 = vld [vmem:[%s1090 + $0xa8] sm:$0xff]
        %v1120 = vld [vmem:[%s1090 + $0xb0] sm:$0xf]
        %v1121 = vld [vmem:[%s1090 + $0xb4] sm:$0xff]
        %v1122 = vld [vmem:[%s1090 + $0xbc] sm:$0xf]
        %v1123 = vld [vmem:[%s1090 + $0xc0] sm:$0xff]
        %v1124 = vld [vmem:[%s1090 + $0xc8] sm:$0xf]
        %v1125 = vld [vmem:[%s1090 + $0xcc] sm:$0xff]
        %v1126 = vld [vmem:[%s1090 + $0xd4] sm:$0xf]
        %v1127 = vld [vmem:[%s1090 + $0xd8] sm:$0xff]
        %v1128 = vld [vmem:[%s1090 + $0xe0] sm:$0xf]
        %v1129 = vld [vmem:[%s1090 + $0xe4] sm:$0xff]
        %v1130 = vld [vmem:[%s1090 + $0xec] sm:$0xf]
        %v1131 = vld [vmem:[%s1090 + $0xf0] sm:$0xff]
        %v1132 = vld [vmem:[%s1090 + $0xf8] sm:$0xf]
        %v1133 = vld [vmem:[%s1090 + $0xfc] sm:$0xff]
        %v1134 = vld [vmem:[%s1090 + $0x104] sm:$0xf]
        %v1135 = vld [vmem:[%s1090 + $0x108] sm:$0xff]
        %v1136 = vld [vmem:[%s1090 + $0x110] sm:$0xf]
        %v1137 = vld [vmem:[%s1090 + $0x114] sm:$0xff]
        %v1138 = vld [vmem:[%s1090 + $0x11c] sm:$0xf]
        %v1139 = vld [vmem:[%s1090 + $0x120] sm:$0xff]
        %v1140 = vld [vmem:[%s1090 + $0x128] sm:$0xf]
        %v1141 = vld [vmem:[%s1090 + $0x12c] sm:$0xff]
        %v1142 = vld [vmem:[%s1090 + $0x134] sm:$0xf]
        %v1143 = vld [vmem:[%s1090 + $0x138] sm:$0xff]
        %v1144 = vld [vmem:[%s1090 + $0x140] sm:$0xf]
        %v1145 = vld [vmem:[%s1090 + $0x144] sm:$0xff]
        %v1146 = vld [vmem:[%s1090 + $0x14c] sm:$0xf]
        %v1147 = vld [vmem:[%s1090 + $0x150] sm:$0xff]
        %v1148 = vld [vmem:[%s1090 + $0x158] sm:$0xf]
        %v1149 = vld [vmem:[%s1090 + $0x15c] sm:$0xff]
        %v1150 = vld [vmem:[%s1090 + $0x164] sm:$0xf]
        %v1151 = vld [vmem:[%s1090 + $0x168] sm:$0xff]
        %v1152 = vld [vmem:[%s1090 + $0x170] sm:$0xf]
        %v1153 = vld [vmem:[%s1090 + $0x174] sm:$0xff]
        %v1154 = vld [vmem:[%s1090 + $0x17c] sm:$0xf]
        %v1155 = vld [vmem:[#allocation2] sm:$0xff]
        %v1156 = vld [vmem:[#allocation2 + $0x8] sm:$0xff]
        %v1157 = vld [vmem:[#allocation2 + $0x10] sm:$0xff]
        %v1158 = vld [vmem:[#allocation2 + $0x18] sm:$0xff]
        %v1159 = vld [vmem:[#allocation2 + $0x20] sm:$0xff]
        %v1160 = vld [vmem:[#allocation2 + $0x28] sm:$0xff]
        %v1161 = vld [vmem:[#allocation2 + $0x30] sm:$0xff]
        %v1162 = vld [vmem:[#allocation2 + $0x38] sm:$0xff]
        %v1163 = vld [vmem:[#allocation2 + $0x40] sm:$0xff]
        %v1164 = vld [vmem:[#allocation2 + $0x48] sm:$0xff]
        %v1165 = vld [vmem:[#allocation2 + $0x50] sm:$0xff]
        %v1166 = vld [vmem:[#allocation2 + $0x58] sm:$0xff]
        %v1167 = vld [vmem:[#allocation2 + $0x60] sm:$0xff]
        %v1168 = vld [vmem:[#allocation2 + $0x68] sm:$0xff]
        %v1169 = vld [vmem:[#allocation2 + $0x70] sm:$0xff]
        %v1170 = vld [vmem:[#allocation2 + $0x78] sm:$0xff]
        %v1171 = vld [vmem:[#allocation2 + $0x80] sm:$0xff]
        %v1172 = vld [vmem:[#allocation2 + $0x88] sm:$0xff]
        %v1173 = vld [vmem:[#allocation2 + $0x90] sm:$0xff]
        %v1174 = vld [vmem:[#allocation2 + $0x98] sm:$0xff]
        %v1175 = vld [vmem:[#allocation2 + $0xa0] sm:$0xff]
        %v1176 = vld [vmem:[#allocation2 + $0xa8] sm:$0xff]
        %v1177 = vld [vmem:[#allocation2 + $0xb0] sm:$0xff]
        %v1178 = vld [vmem:[#allocation2 + $0xb8] sm:$0xff]
        %v1179 = vld [vmem:[#allocation2 + $0xc0] sm:$0xff]
        %v1180 = vld [vmem:[#allocation2 + $0xc8] sm:$0xff]
        %v1181 = vld [vmem:[#allocation2 + $0xd0] sm:$0xff]
        %v1182 = vld [vmem:[#allocation2 + $0xd8] sm:$0xff]
        %v1183 = vld [vmem:[#allocation2 + $0xe0] sm:$0xff]
        %v1184 = vld [vmem:[#allocation2 + $0xe8] sm:$0xff]
        %v1185 = vld [vmem:[#allocation2 + $0xf0] sm:$0xff]
        %v1186 = vld [vmem:[#allocation2 + $0xf8] sm:$0xff]
        %s1187 = scalar_lea.vmem %s271, 192
        %v1188 = vld [vmem:[%s1187] sm:$0xf]
        %v1189 = vld [vmem:[%s1187 + $0x4] sm:$0xf]
        %v1190 = vld [vmem:[%s1187 + $0x8] sm:$0xf]
        %v1191 = vld [vmem:[%s1187 + $0xc] sm:$0xf]
        %v1192 = vld [vmem:[%s1187 + $0x10] sm:$0xf]
        %v1193 = vld [vmem:[%s1187 + $0x14] sm:$0xf]
        %v1194 = vld [vmem:[%s1187 + $0x18] sm:$0xf]
        %v1195 = vld [vmem:[%s1187 + $0x1c] sm:$0xf]
        %v1196 = vld [vmem:[%s1187 + $0x20] sm:$0xf]
        %v1197 = vld [vmem:[%s1187 + $0x24] sm:$0xf]
        %v1198 = vld [vmem:[%s1187 + $0x28] sm:$0xf]
        %v1199 = vld [vmem:[%s1187 + $0x2c] sm:$0xf]
        %v1200 = vld [vmem:[%s1187 + $0x30] sm:$0xf]
        %v1201 = vld [vmem:[%s1187 + $0x34] sm:$0xf]
        %v1202 = vld [vmem:[%s1187 + $0x38] sm:$0xf]
        %v1203 = vld [vmem:[%s1187 + $0x3c] sm:$0xf]
        %v1204 = vld [vmem:[%s1187 + $0x40] sm:$0xf]
        %v1205 = vld [vmem:[%s1187 + $0x44] sm:$0xf]
        %v1206 = vld [vmem:[%s1187 + $0x48] sm:$0xf]
        %v1207 = vld [vmem:[%s1187 + $0x4c] sm:$0xf]
        %v1208 = vld [vmem:[%s1187 + $0x50] sm:$0xf]
        %v1209 = vld [vmem:[%s1187 + $0x54] sm:$0xf]
        %v1210 = vld [vmem:[%s1187 + $0x58] sm:$0xf]
        %v1211 = vld [vmem:[%s1187 + $0x5c] sm:$0xf]
        %v1212 = vld [vmem:[%s1187 + $0x60] sm:$0xf]
        %v1213 = vld [vmem:[%s1187 + $0x64] sm:$0xf]
        %v1214 = vld [vmem:[%s1187 + $0x68] sm:$0xf]
        %v1215 = vld [vmem:[%s1187 + $0x6c] sm:$0xf]
        %v1216 = vld [vmem:[%s1187 + $0x70] sm:$0xf]
        %v1217 = vld [vmem:[%s1187 + $0x74] sm:$0xf]
        %v1218 = vld [vmem:[%s1187 + $0x78] sm:$0xf]
        %v1219 = vld [vmem:[%s1187 + $0x7c] sm:$0xf]
        %v1220 = vld [vmem:[%s1187 + $0x80] sm:$0xf]
        %v1221 = vld [vmem:[%s1187 + $0x84] sm:$0xf]
        %v1222 = vld [vmem:[%s1187 + $0x88] sm:$0xf]
        %v1223 = vld [vmem:[%s1187 + $0x8c] sm:$0xf]
        %v1224 = vld [vmem:[%s1187 + $0x90] sm:$0xf]
        %v1225 = vld [vmem:[%s1187 + $0x94] sm:$0xf]
        %v1226 = vld [vmem:[%s1187 + $0x98] sm:$0xf]
        %v1227 = vld [vmem:[%s1187 + $0x9c] sm:$0xf]
        %v1228 = vld [vmem:[%s1187 + $0xa0] sm:$0xf]
        %v1229 = vld [vmem:[%s1187 + $0xa4] sm:$0xf]
        %v1230 = vld [vmem:[%s1187 + $0xa8] sm:$0xf]
        %v1231 = vld [vmem:[%s1187 + $0xac] sm:$0xf]
        %v1232 = vld [vmem:[%s1187 + $0xb0] sm:$0xf]
        %v1233 = vld [vmem:[%s1187 + $0xb4] sm:$0xf]
        %v1234 = vld [vmem:[%s1187 + $0xb8] sm:$0xf]
        %v1235 = vld [vmem:[%s1187 + $0xbc] sm:$0xf]
        %v1300 = vunpack.c.l.b16 %v1091
        %v1301 = vunpack.c.h.b16 %v1091
        %v1302 = vunpack.c.l.b16 %v1092
        %v1303 = vunpack.c.l.b16 %v1093
        %v1304 = vunpack.c.h.b16 %v1093
        %v1305 = vunpack.c.l.b16 %v1094
        %v1306 = vunpack.c.l.b16 %v1095
        %v1307 = vunpack.c.h.b16 %v1095
        %v1308 = vunpack.c.l.b16 %v1096
        %v1309 = vunpack.c.l.b16 %v1097
        %v1310 = vunpack.c.h.b16 %v1097
        %v1311 = vunpack.c.l.b16 %v1098
        %v1312 = vunpack.c.l.b16 %v1099
        %v1313 = vunpack.c.h.b16 %v1099
        %v1314 = vunpack.c.l.b16 %v1100
        %v1315 = vunpack.c.l.b16 %v1101
        %v1316 = vunpack.c.h.b16 %v1101
        %v1317 = vunpack.c.l.b16 %v1102
        %v1318 = vunpack.c.l.b16 %v1103
        %v1319 = vunpack.c.h.b16 %v1103
        %v1320 = vunpack.c.l.b16 %v1104
        %v1321 = vunpack.c.l.b16 %v1105
        %v1322 = vunpack.c.h.b16 %v1105
        %v1323 = vunpack.c.l.b16 %v1106
        %v1324 = vunpack.c.l.b16 %v1107
        %v1325 = vunpack.c.h.b16 %v1107
        %v1326 = vunpack.c.l.b16 %v1108
        %v1327 = vunpack.c.l.b16 %v1109
        %v1328 = vunpack.c.h.b16 %v1109
        %v1329 = vunpack.c.l.b16 %v1110
        %v1330 = vunpack.c.l.b16 %v1111
        %v1331 = vunpack.c.h.b16 %v1111
        %v1332 = vunpack.c.l.b16 %v1112
        %v1333 = vunpack.c.l.b16 %v1113
        %v1334 = vunpack.c.h.b16 %v1113
        %v1335 = vunpack.c.l.b16 %v1114
        %v1336 = vunpack.c.l.b16 %v1115
        %v1337 = vunpack.c.h.b16 %v1115
        %v1338 = vunpack.c.l.b16 %v1116
        %v1339 = vunpack.c.l.b16 %v1117
        %v1340 = vunpack.c.h.b16 %v1117
        %v1341 = vunpack.c.l.b16 %v1118
        %v1342 = vunpack.c.l.b16 %v1119
        %v1343 = vunpack.c.h.b16 %v1119
        %v1344 = vunpack.c.l.b16 %v1120
        %v1345 = vunpack.c.l.b16 %v1121
        %v1346 = vunpack.c.h.b16 %v1121
        %v1347 = vunpack.c.l.b16 %v1122
        %v1348 = vunpack.c.l.b16 %v1123
        %v1349 = vunpack.c.h.b16 %v1123
        %v1350 = vunpack.c.l.b16 %v1124
        %v1351 = vunpack.c.l.b16 %v1125
        %v1352 = vunpack.c.h.b16 %v1125
        %v1353 = vunpack.c.l.b16 %v1126
        %v1354 = vunpack.c.l.b16 %v1127
        %v1355 = vunpack.c.h.b16 %v1127
        %v1356 = vunpack.c.l.b16 %v1128
        %v1357 = vunpack.c.l.b16 %v1129
        %v1358 = vunpack.c.h.b16 %v1129
        %v1359 = vunpack.c.l.b16 %v1130
        %v1360 = vunpack.c.l.b16 %v1131
        %v1361 = vunpack.c.h.b16 %v1131
        %v1362 = vunpack.c.l.b16 %v1132
        %v1363 = vunpack.c.l.b16 %v1133
        %v1364 = vunpack.c.h.b16 %v1133
        %v1365 = vunpack.c.l.b16 %v1134
        %v1366 = vunpack.c.l.b16 %v1135
        %v1367 = vunpack.c.h.b16 %v1135
        %v1368 = vunpack.c.l.b16 %v1136
        %v1369 = vunpack.c.l.b16 %v1137
        %v1370 = vunpack.c.h.b16 %v1137
        %v1371 = vunpack.c.l.b16 %v1138
        %v1372 = vunpack.c.l.b16 %v1139
        %v1373 = vunpack.c.h.b16 %v1139
        %v1374 = vunpack.c.l.b16 %v1140
        %v1375 = vunpack.c.l.b16 %v1141
        %v1376 = vunpack.c.h.b16 %v1141
        %v1377 = vunpack.c.l.b16 %v1142
        %v1378 = vunpack.c.l.b16 %v1143
        %v1379 = vunpack.c.h.b16 %v1143
        %v1380 = vunpack.c.l.b16 %v1144
        %v1381 = vunpack.c.l.b16 %v1145
        %v1382 = vunpack.c.h.b16 %v1145
        %v1383 = vunpack.c.l.b16 %v1146
        %v1384 = vunpack.c.l.b16 %v1147
        %v1385 = vunpack.c.h.b16 %v1147
        %v1386 = vunpack.c.l.b16 %v1148
        %v1387 = vunpack.c.l.b16 %v1149
        %v1388 = vunpack.c.h.b16 %v1149
        %v1389 = vunpack.c.l.b16 %v1150
        %v1390 = vunpack.c.l.b16 %v1151
        %v1391 = vunpack.c.h.b16 %v1151
        %v1392 = vunpack.c.l.b16 %v1152
        %v1393 = vunpack.c.l.b16 %v1153
        %v1394 = vunpack.c.h.b16 %v1153
        %v1395 = vunpack.c.l.b16 %v1154
        %v1396 = vpack.c.b16 %v1303, %v1300
        %v1397 = vpack.c.b16 %v1304, %v1301
        %v1398 = vpack.c.b16 %v1305, %v1302
        %v1399 = vpack.c.b16 %v1309, %v1306
        %v1400 = vpack.c.b16 %v1310, %v1307
        %v1401 = vpack.c.b16 %v1311, %v1308
        %v1402 = vpack.c.b16 %v1315, %v1312
        %v1403 = vpack.c.b16 %v1316, %v1313
        %v1404 = vpack.c.b16 %v1317, %v1314
        %v1405 = vpack.c.b16 %v1321, %v1318
        %v1406 = vpack.c.b16 %v1322, %v1319
        %v1407 = vpack.c.b16 %v1323, %v1320
        %v1408 = vpack.c.b16 %v1327, %v1324
        %v1409 = vpack.c.b16 %v1328, %v1325
        %v1410 = vpack.c.b16 %v1329, %v1326
        %v1411 = vpack.c.b16 %v1333, %v1330
        %v1412 = vpack.c.b16 %v1334, %v1331
        %v1413 = vpack.c.b16 %v1335, %v1332
        %v1414 = vpack.c.b16 %v1339, %v1336
        %v1415 = vpack.c.b16 %v1340, %v1337
        %v1416 = vpack.c.b16 %v1341, %v1338
        %v1417 = vpack.c.b16 %v1345, %v1342
        %v1418 = vpack.c.b16 %v1346, %v1343
        %v1419 = vpack.c.b16 %v1347, %v1344
        %v1420 = vpack.c.b16 %v1351, %v1348
        %v1421 = vpack.c.b16 %v1352, %v1349
        %v1422 = vpack.c.b16 %v1353, %v1350
        %v1423 = vpack.c.b16 %v1357, %v1354
        %v1424 = vpack.c.b16 %v1358, %v1355
        %v1425 = vpack.c.b16 %v1359, %v1356
        %v1426 = vpack.c.b16 %v1363, %v1360
        %v1427 = vpack.c.b16 %v1364, %v1361
        %v1428 = vpack.c.b16 %v1365, %v1362
        %v1429 = vpack.c.b16 %v1369, %v1366
        %v1430 = vpack.c.b16 %v1370, %v1367
        %v1431 = vpack.c.b16 %v1371, %v1368
        %v1432 = vpack.c.b16 %v1375, %v1372
        %v1433 = vpack.c.b16 %v1376, %v1373
        %v1434 = vpack.c.b16 %v1377, %v1374
        %v1435 = vpack.c.b16 %v1381, %v1378
        %v1436 = vpack.c.b16 %v1382, %v1379
        %v1437 = vpack.c.b16 %v1383, %v1380
        %v1438 = vpack.c.b16 %v1387, %v1384
        %v1439 = vpack.c.b16 %v1388, %v1385
        %v1440 = vpack.c.b16 %v1389, %v1386
        %v1441 = vpack.c.b16 %v1393, %v1390
        %v1442 = vpack.c.b16 %v1394, %v1391
        %v1443 = vpack.c.b16 %v1395, %v1392
        %v1540 = vunpack.c.l.b16 %v1188
        %v1541 = vunpack.c.l.b16 %v1189
        %v1542 = vunpack.c.l.b16 %v1190
        %v1543 = vunpack.c.l.b16 %v1191
        %v1544 = vunpack.c.l.b16 %v1192
        %v1545 = vunpack.c.l.b16 %v1193
        %v1546 = vunpack.c.l.b16 %v1194
        %v1547 = vunpack.c.l.b16 %v1195
        %v1548 = vunpack.c.l.b16 %v1196
        %v1549 = vunpack.c.l.b16 %v1197
        %v1550 = vunpack.c.l.b16 %v1198
        %v1551 = vunpack.c.l.b16 %v1199
        %v1552 = vunpack.c.l.b16 %v1200
        %v1553 = vunpack.c.l.b16 %v1201
        %v1554 = vunpack.c.l.b16 %v1202
        %v1555 = vunpack.c.l.b16 %v1203
        %v1556 = vunpack.c.l.b16 %v1204
        %v1557 = vunpack.c.l.b16 %v1205
        %v1558 = vunpack.c.l.b16 %v1206
        %v1559 = vunpack.c.l.b16 %v1207
        %v1560 = vunpack.c.l.b16 %v1208
        %v1561 = vunpack.c.l.b16 %v1209
        %v1562 = vunpack.c.l.b16 %v1210
        %v1563 = vunpack.c.l.b16 %v1211
        %v1564 = vunpack.c.l.b16 %v1212
        %v1565 = vunpack.c.l.b16 %v1213
        %v1566 = vunpack.c.l.b16 %v1214
        %v1567 = vunpack.c.l.b16 %v1215
        %v1568 = vunpack.c.l.b16 %v1216
        %v1569 = vunpack.c.l.b16 %v1217
        %v1570 = vunpack.c.l.b16 %v1218
        %v1571 = vunpack.c.l.b16 %v1219
        %v1572 = vunpack.c.l.b16 %v1220
        %v1573 = vunpack.c.l.b16 %v1221
        %v1574 = vunpack.c.l.b16 %v1222
        %v1575 = vunpack.c.l.b16 %v1223
        %v1576 = vunpack.c.l.b16 %v1224
        %v1577 = vunpack.c.l.b16 %v1225
        %v1578 = vunpack.c.l.b16 %v1226
        %v1579 = vunpack.c.l.b16 %v1227
        %v1580 = vunpack.c.l.b16 %v1228
        %v1581 = vunpack.c.l.b16 %v1229
        %v1582 = vunpack.c.l.b16 %v1230
        %v1583 = vunpack.c.l.b16 %v1231
        %v1584 = vunpack.c.l.b16 %v1232
        %v1585 = vunpack.c.l.b16 %v1233
        %v1586 = vunpack.c.l.b16 %v1234
        %v1587 = vunpack.c.l.b16 %v1235
        %v1588 = vpack.c.b16 %v1541, %v1540
        %v1589 = vpack.c.b16 %v1543, %v1542
        %v1590 = vpack.c.b16 %v1545, %v1544
        %v1591 = vpack.c.b16 %v1547, %v1546
        %v1592 = vpack.c.b16 %v1549, %v1548
        %v1593 = vpack.c.b16 %v1551, %v1550
        %v1594 = vpack.c.b16 %v1553, %v1552
        %v1595 = vpack.c.b16 %v1555, %v1554
        %v1596 = vpack.c.b16 %v1557, %v1556
        %v1597 = vpack.c.b16 %v1559, %v1558
        %v1598 = vpack.c.b16 %v1561, %v1560
        %v1599 = vpack.c.b16 %v1563, %v1562
        %v1600 = vpack.c.b16 %v1565, %v1564
        %v1601 = vpack.c.b16 %v1567, %v1566
        %v1602 = vpack.c.b16 %v1569, %v1568
        %v1603 = vpack.c.b16 %v1571, %v1570
        %v1604 = vpack.c.b16 %v1573, %v1572
        %v1605 = vpack.c.b16 %v1575, %v1574
        %v1606 = vpack.c.b16 %v1577, %v1576
        %v1607 = vpack.c.b16 %v1579, %v1578
        %v1608 = vpack.c.b16 %v1581, %v1580
        %v1609 = vpack.c.b16 %v1583, %v1582
        %v1610 = vpack.c.b16 %v1585, %v1584
        %v1611 = vpack.c.b16 %v1587, %v1586
        %1636 = vmatpush.bf16.msra.mxu0 %v1595
        %1637 = vmatpush.bf16.msra.mxu0 %v1594
        %1638 = vmatpush.bf16.msra.mxu0 %v1593
        %1639 = vmatpush.bf16.msra.mxu0 %v1592
        %1640 = vmatpush.bf16.msra.mxu0 %v1591
        %1641 = vmatpush.bf16.msra.mxu0 %v1590
        %1642 = vmatpush.bf16.msra.mxu0 %v1589
        %1643 = vmatpush.bf16.msra.mxu0 %v1588
        %1644 = vmatmul.bf16.gmra.mxu0 %v1396
        %v1645 = vpop.f32.mrf.mxu0
        %v1646 = vadd.f32 0.0, %v1645
        %v1647 = vpop.f32.mrf.mxu0
        %v1648 = vadd.f32 0.0, %v1647
        %1649 = vmatmul.bf16.gmra.mxu0 %v1399
        %v1650 = vpop.f32.mrf.mxu0
        %v1651 = vadd.f32 0.0, %v1650
        %v1652 = vpop.f32.mrf.mxu0
        %v1653 = vadd.f32 0.0, %v1652
        %1654 = vmatmul.bf16.gmra.mxu0 %v1402
        %v1655 = vpop.f32.mrf.mxu0
        %v1656 = vadd.f32 0.0, %v1655
        %v1657 = vpop.f32.mrf.mxu0
        %v1658 = vadd.f32 0.0, %v1657
        %1659 = vmatmul.bf16.gmra.mxu0 %v1405
        %v1660 = vpop.f32.mrf.mxu0
        %v1661 = vadd.f32 0.0, %v1660
        %v1662 = vpop.f32.mrf.mxu0
        %v1663 = vadd.f32 0.0, %v1662
        %1664 = vmatmul.bf16.gmra.mxu0 %v1408
        %v1665 = vpop.f32.mrf.mxu0
        %v1666 = vadd.f32 0.0, %v1665
        %v1667 = vpop.f32.mrf.mxu0
        %v1668 = vadd.f32 0.0, %v1667
        %1669 = vmatmul.bf16.gmra.mxu0 %v1411
        %v1670 = vpop.f32.mrf.mxu0
        %v1671 = vadd.f32 0.0, %v1670
        %v1672 = vpop.f32.mrf.mxu0
        %v1673 = vadd.f32 0.0, %v1672
        %1674 = vmatmul.bf16.gmra.mxu0 %v1414
        %v1675 = vpop.f32.mrf.mxu0
        %v1676 = vadd.f32 0.0, %v1675
        %v1677 = vpop.f32.mrf.mxu0
        %v1678 = vadd.f32 0.0, %v1677
        %1679 = vmatmul.bf16.gmra.mxu0 %v1417
        %v1680 = vpop.f32.mrf.mxu0
        %v1681 = vadd.f32 0.0, %v1680
        %v1682 = vpop.f32.mrf.mxu0
        %v1683 = vadd.f32 0.0, %v1682
        %1684 = vmatmul.bf16.gmra.mxu0 %v1420
        %v1685 = vpop.f32.mrf.mxu0
        %v1686 = vadd.f32 0.0, %v1685
        %v1687 = vpop.f32.mrf.mxu0
        %v1688 = vadd.f32 0.0, %v1687
        %1689 = vmatmul.bf16.gmra.mxu0 %v1423
        %v1690 = vpop.f32.mrf.mxu0
        %v1691 = vadd.f32 0.0, %v1690
        %v1692 = vpop.f32.mrf.mxu0
        %v1693 = vadd.f32 0.0, %v1692
        %1694 = vmatmul.bf16.gmra.mxu0 %v1426
        %v1695 = vpop.f32.mrf.mxu0
        %v1696 = vadd.f32 0.0, %v1695
        %v1697 = vpop.f32.mrf.mxu0
        %v1698 = vadd.f32 0.0, %v1697
        %1699 = vmatmul.bf16.gmra.mxu0 %v1429
        %v1700 = vpop.f32.mrf.mxu0
        %v1701 = vadd.f32 0.0, %v1700
        %v1702 = vpop.f32.mrf.mxu0
        %v1703 = vadd.f32 0.0, %v1702
        %1704 = vmatmul.bf16.gmra.mxu0 %v1432
        %v1705 = vpop.f32.mrf.mxu0
        %v1706 = vadd.f32 0.0, %v1705
        %v1707 = vpop.f32.mrf.mxu0
        %v1708 = vadd.f32 0.0, %v1707
        %1709 = vmatmul.bf16.gmra.mxu0 %v1435
        %v1710 = vpop.f32.mrf.mxu0
        %v1711 = vadd.f32 0.0, %v1710
        %v1712 = vpop.f32.mrf.mxu0
        %v1713 = vadd.f32 0.0, %v1712
        %1714 = vmatmul.bf16.gmra.mxu0 %v1438
        %v1715 = vpop.f32.mrf.mxu0
        %v1716 = vadd.f32 0.0, %v1715
        %v1717 = vpop.f32.mrf.mxu0
        %v1718 = vadd.f32 0.0, %v1717
        %1719 = vmatmul.bf16.gmra.mxu0 %v1441
        %v1720 = vpop.f32.mrf.mxu0
        %v1721 = vadd.f32 0.0, %v1720
        %v1722 = vpop.f32.mrf.mxu0
        %v1723 = vadd.f32 0.0, %v1722
        %1724 = vdwg.mxu0
        %1725 = vmatpush.bf16.msra.mxu0 %v1603
        %1726 = vmatpush.bf16.msra.mxu0 %v1602
        %1727 = vmatpush.bf16.msra.mxu0 %v1601
        %1728 = vmatpush.bf16.msra.mxu0 %v1600
        %1729 = vmatpush.bf16.msra.mxu0 %v1599
        %1730 = vmatpush.bf16.msra.mxu0 %v1598
        %1731 = vmatpush.bf16.msra.mxu0 %v1597
        %1732 = vmatpush.bf16.msra.mxu0 %v1596
        %1733 = vmatmul.bf16.gmra.mxu0 %v1397
        %v1734 = vpop.f32.mrf.mxu0
        %v1735 = vadd.f32 %v1646, %v1734
        %v1736 = vpop.f32.mrf.mxu0
        %v1737 = vadd.f32 %v1648, %v1736
        %1738 = vmatmul.bf16.gmra.mxu0 %v1400
        %v1739 = vpop.f32.mrf.mxu0
        %v1740 = vadd.f32 %v1651, %v1739
        %v1741 = vpop.f32.mrf.mxu0
        %v1742 = vadd.f32 %v1653, %v1741
        %1743 = vmatmul.bf16.gmra.mxu0 %v1403
        %v1744 = vpop.f32.mrf.mxu0
        %v1745 = vadd.f32 %v1656, %v1744
        %v1746 = vpop.f32.mrf.mxu0
        %v1747 = vadd.f32 %v1658, %v1746
        %1748 = vmatmul.bf16.gmra.mxu0 %v1406
        %v1749 = vpop.f32.mrf.mxu0
        %v1750 = vadd.f32 %v1661, %v1749
        %v1751 = vpop.f32.mrf.mxu0
        %v1752 = vadd.f32 %v1663, %v1751
        %1753 = vmatmul.bf16.gmra.mxu0 %v1409
        %v1754 = vpop.f32.mrf.mxu0
        %v1755 = vadd.f32 %v1666, %v1754
        %v1756 = vpop.f32.mrf.mxu0
        %v1757 = vadd.f32 %v1668, %v1756
        %1758 = vmatmul.bf16.gmra.mxu0 %v1412
        %v1759 = vpop.f32.mrf.mxu0
        %v1760 = vadd.f32 %v1671, %v1759
        %v1761 = vpop.f32.mrf.mxu0
        %v1762 = vadd.f32 %v1673, %v1761
        %1763 = vmatmul.bf16.gmra.mxu0 %v1415
        %v1764 = vpop.f32.mrf.mxu0
        %v1765 = vadd.f32 %v1676, %v1764
        %v1766 = vpop.f32.mrf.mxu0
        %v1767 = vadd.f32 %v1678, %v1766
        %1768 = vmatmul.bf16.gmra.mxu0 %v1418
        %v1769 = vpop.f32.mrf.mxu0
        %v1770 = vadd.f32 %v1681, %v1769
        %v1771 = vpop.f32.mrf.mxu0
        %v1772 = vadd.f32 %v1683, %v1771
        %1773 = vmatmul.bf16.gmra.mxu0 %v1421
        %v1774 = vpop.f32.mrf.mxu0
        %v1775 = vadd.f32 %v1686, %v1774
        %v1776 = vpop.f32.mrf.mxu0
        %v1777 = vadd.f32 %v1688, %v1776
        %1778 = vmatmul.bf16.gmra.mxu0 %v1424
        %v1779 = vpop.f32.mrf.mxu0
        %v1780 = vadd.f32 %v1691, %v1779
        %v1781 = vpop.f32.mrf.mxu0
        %v1782 = vadd.f32 %v1693, %v1781
        %1783 = vmatmul.bf16.gmra.mxu0 %v1427
        %v1784 = vpop.f32.mrf.mxu0
        %v1785 = vadd.f32 %v1696, %v1784
        %v1786 = vpop.f32.mrf.mxu0
        %v1787 = vadd.f32 %v1698, %v1786
        %1788 = vmatmul.bf16.gmra.mxu0 %v1430
        %v1789 = vpop.f32.mrf.mxu0
        %v1790 = vadd.f32 %v1701, %v1789
        %v1791 = vpop.f32.mrf.mxu0
        %v1792 = vadd.f32 %v1703, %v1791
        %1793 = vmatmul.bf16.gmra.mxu0 %v1433
        %v1794 = vpop.f32.mrf.mxu0
        %v1795 = vadd.f32 %v1706, %v1794
        %v1796 = vpop.f32.mrf.mxu0
        %v1797 = vadd.f32 %v1708, %v1796
        %1798 = vmatmul.bf16.gmra.mxu0 %v1436
        %v1799 = vpop.f32.mrf.mxu0
        %v1800 = vadd.f32 %v1711, %v1799
        %v1801 = vpop.f32.mrf.mxu0
        %v1802 = vadd.f32 %v1713, %v1801
        %1803 = vmatmul.bf16.gmra.mxu0 %v1439
        %v1804 = vpop.f32.mrf.mxu0
        %v1805 = vadd.f32 %v1716, %v1804
        %v1806 = vpop.f32.mrf.mxu0
        %v1807 = vadd.f32 %v1718, %v1806
        %1808 = vmatmul.bf16.gmra.mxu0 %v1442
        %v1809 = vpop.f32.mrf.mxu0
        %v1810 = vadd.f32 %v1721, %v1809
        %v1811 = vpop.f32.mrf.mxu0
        %v1812 = vadd.f32 %v1723, %v1811
        %1813 = vdwg.mxu0
        %1814 = vmatpush.bf16.msra.mxu0 %v1611
        %1815 = vmatpush.bf16.msra.mxu0 %v1610
        %1816 = vmatpush.bf16.msra.mxu0 %v1609
        %1817 = vmatpush.bf16.msra.mxu0 %v1608
        %1818 = vmatpush.bf16.msra.mxu0 %v1607
        %1819 = vmatpush.bf16.msra.mxu0 %v1606
        %1820 = vmatpush.bf16.msra.mxu0 %v1605
        %1821 = vmatpush.bf16.msra.mxu0 %v1604
        %1822 = vmatmul.bf16.gmra.mxu0 %v1398
        %v1823 = vpop.f32.mrf.mxu0
        %v1824 = vadd.f32 %v1735, %v1823
        %v1825 = vpop.f32.mrf.mxu0
        %v1826 = vadd.f32 %v1737, %v1825
        %1827 = vmatmul.bf16.gmra.mxu0 %v1401
        %v1828 = vpop.f32.mrf.mxu0
        %v1829 = vadd.f32 %v1740, %v1828
        %v1830 = vpop.f32.mrf.mxu0
        %v1831 = vadd.f32 %v1742, %v1830
        %1832 = vmatmul.bf16.gmra.mxu0 %v1404
        %v1833 = vpop.f32.mrf.mxu0
        %v1834 = vadd.f32 %v1745, %v1833
        %v1835 = vpop.f32.mrf.mxu0
        %v1836 = vadd.f32 %v1747, %v1835
        %1837 = vmatmul.bf16.gmra.mxu0 %v1407
        %v1838 = vpop.f32.mrf.mxu0
        %v1839 = vadd.f32 %v1750, %v1838
        %v1840 = vpop.f32.mrf.mxu0
        %v1841 = vadd.f32 %v1752, %v1840
        %1842 = vmatmul.bf16.gmra.mxu0 %v1410
        %v1843 = vpop.f32.mrf.mxu0
        %v1844 = vadd.f32 %v1755, %v1843
        %v1845 = vpop.f32.mrf.mxu0
        %v1846 = vadd.f32 %v1757, %v1845
        %1847 = vmatmul.bf16.gmra.mxu0 %v1413
        %v1848 = vpop.f32.mrf.mxu0
        %v1849 = vadd.f32 %v1760, %v1848
        %v1850 = vpop.f32.mrf.mxu0
        %v1851 = vadd.f32 %v1762, %v1850
        %1852 = vmatmul.bf16.gmra.mxu0 %v1416
        %v1853 = vpop.f32.mrf.mxu0
        %v1854 = vadd.f32 %v1765, %v1853
        %v1855 = vpop.f32.mrf.mxu0
        %v1856 = vadd.f32 %v1767, %v1855
        %1857 = vmatmul.bf16.gmra.mxu0 %v1419
        %v1858 = vpop.f32.mrf.mxu0
        %v1859 = vadd.f32 %v1770, %v1858
        %v1860 = vpop.f32.mrf.mxu0
        %v1861 = vadd.f32 %v1772, %v1860
        %1862 = vmatmul.bf16.gmra.mxu0 %v1422
        %v1863 = vpop.f32.mrf.mxu0
        %v1864 = vadd.f32 %v1775, %v1863
        %v1865 = vpop.f32.mrf.mxu0
        %v1866 = vadd.f32 %v1777, %v1865
        %1867 = vmatmul.bf16.gmra.mxu0 %v1425
        %v1868 = vpop.f32.mrf.mxu0
        %v1869 = vadd.f32 %v1780, %v1868
        %v1870 = vpop.f32.mrf.mxu0
        %v1871 = vadd.f32 %v1782, %v1870
        %1872 = vmatmul.bf16.gmra.mxu0 %v1428
        %v1873 = vpop.f32.mrf.mxu0
        %v1874 = vadd.f32 %v1785, %v1873
        %v1875 = vpop.f32.mrf.mxu0
        %v1876 = vadd.f32 %v1787, %v1875
        %1877 = vmatmul.bf16.gmra.mxu0 %v1431
        %v1878 = vpop.f32.mrf.mxu0
        %v1879 = vadd.f32 %v1790, %v1878
        %v1880 = vpop.f32.mrf.mxu0
        %v1881 = vadd.f32 %v1792, %v1880
        %1882 = vmatmul.bf16.gmra.mxu0 %v1434
        %v1883 = vpop.f32.mrf.mxu0
        %v1884 = vadd.f32 %v1795, %v1883
        %v1885 = vpop.f32.mrf.mxu0
        %v1886 = vadd.f32 %v1797, %v1885
        %1887 = vmatmul.bf16.gmra.mxu0 %v1437
        %v1888 = vpop.f32.mrf.mxu0
        %v1889 = vadd.f32 %v1800, %v1888
        %v1890 = vpop.f32.mrf.mxu0
        %v1891 = vadd.f32 %v1802, %v1890
        %1892 = vmatmul.bf16.gmra.mxu0 %v1440
        %v1893 = vpop.f32.mrf.mxu0
        %v1894 = vadd.f32 %v1805, %v1893
        %v1895 = vpop.f32.mrf.mxu0
        %v1896 = vadd.f32 %v1807, %v1895
        %1897 = vmatmul.bf16.gmra.mxu0 %v1443
        %v1898 = vpop.f32.mrf.mxu0
        %v1899 = vadd.f32 %v1810, %v1898
        %v1900 = vpop.f32.mrf.mxu0
        %v1901 = vadd.f32 %v1812, %v1900
        %1902 = vdwg.mxu0
        %v1903 = vadd.f32 %v1155, %v1824
        %v1904 = vadd.f32 %v1156, %v1826
        %v1905 = vadd.f32 %v1157, %v1829
        %v1906 = vadd.f32 %v1158, %v1831
        %v1907 = vadd.f32 %v1159, %v1834
        %v1908 = vadd.f32 %v1160, %v1836
        %v1909 = vadd.f32 %v1161, %v1839
        %v1910 = vadd.f32 %v1162, %v1841
        %v1911 = vadd.f32 %v1163, %v1844
        %v1912 = vadd.f32 %v1164, %v1846
        %v1913 = vadd.f32 %v1165, %v1849
        %v1914 = vadd.f32 %v1166, %v1851
        %v1915 = vadd.f32 %v1167, %v1854
        %v1916 = vadd.f32 %v1168, %v1856
        %v1917 = vadd.f32 %v1169, %v1859
        %v1918 = vadd.f32 %v1170, %v1861
        %v1919 = vadd.f32 %v1171, %v1864
        %v1920 = vadd.f32 %v1172, %v1866
        %v1921 = vadd.f32 %v1173, %v1869
        %v1922 = vadd.f32 %v1174, %v1871
        %v1923 = vadd.f32 %v1175, %v1874
        %v1924 = vadd.f32 %v1176, %v1876
        %v1925 = vadd.f32 %v1177, %v1879
        %v1926 = vadd.f32 %v1178, %v1881
        %v1927 = vadd.f32 %v1179, %v1884
        %v1928 = vadd.f32 %v1180, %v1886
        %v1929 = vadd.f32 %v1181, %v1889
        %v1930 = vadd.f32 %v1182, %v1891
        %v1931 = vadd.f32 %v1183, %v1894
        %v1932 = vadd.f32 %v1184, %v1896
        %v1933 = vadd.f32 %v1185, %v1899
        %v1934 = vadd.f32 %v1186, %v1901
        %1935 = vst [vmem:[#allocation2] sm:$0xff] %v1903
        %1936 = vst [vmem:[#allocation2 + $0x8] sm:$0xff] %v1904
        %1937 = vst [vmem:[#allocation2 + $0x10] sm:$0xff] %v1905
        %1938 = vst [vmem:[#allocation2 + $0x18] sm:$0xff] %v1906
        %1939 = vst [vmem:[#allocation2 + $0x20] sm:$0xff] %v1907
        %1940 = vst [vmem:[#allocation2 + $0x28] sm:$0xff] %v1908
        %1941 = vst [vmem:[#allocation2 + $0x30] sm:$0xff] %v1909
        %1942 = vst [vmem:[#allocation2 + $0x38] sm:$0xff] %v1910
        %1943 = vst [vmem:[#allocation2 + $0x40] sm:$0xff] %v1911
        %1944 = vst [vmem:[#allocation2 + $0x48] sm:$0xff] %v1912
        %1945 = vst [vmem:[#allocation2 + $0x50] sm:$0xff] %v1913
        %1946 = vst [vmem:[#allocation2 + $0x58] sm:$0xff] %v1914
        %1947 = vst [vmem:[#allocation2 + $0x60] sm:$0xff] %v1915
        %1948 = vst [vmem:[#allocation2 + $0x68] sm:$0xff] %v1916
        %1949 = vst [vmem:[#allocation2 + $0x70] sm:$0xff] %v1917
        %1950 = vst [vmem:[#allocation2 + $0x78] sm:$0xff] %v1918
        %1951 = vst [vmem:[#allocation2 + $0x80] sm:$0xff] %v1919
        %1952 = vst [vmem:[#allocation2 + $0x88] sm:$0xff] %v1920
        %1953 = vst [vmem:[#allocation2 + $0x90] sm:$0xff] %v1921
        %1954 = vst [vmem:[#allocation2 + $0x98] sm:$0xff] %v1922
        %1955 = vst [vmem:[#allocation2 + $0xa0] sm:$0xff] %v1923
        %1956 = vst [vmem:[#allocation2 + $0xa8] sm:$0xff] %v1924
        %1957 = vst [vmem:[#allocation2 + $0xb0] sm:$0xff] %v1925
        %1958 = vst [vmem:[#allocation2 + $0xb8] sm:$0xff] %v1926
        %1959 = vst [vmem:[#allocation2 + $0xc0] sm:$0xff] %v1927
        %1960 = vst [vmem:[#allocation2 + $0xc8] sm:$0xff] %v1928
        %1961 = vst [vmem:[#allocation2 + $0xd0] sm:$0xff] %v1929
        %1962 = vst [vmem:[#allocation2 + $0xd8] sm:$0xff] %v1930
        %1963 = vst [vmem:[#allocation2 + $0xe0] sm:$0xff] %v1931
        %1964 = vst [vmem:[#allocation2 + $0xe8] sm:$0xff] %v1932
        %1965 = vst [vmem:[#allocation2 + $0xf0] sm:$0xff] %v1933
        %1966 = vst [vmem:[#allocation2 + $0xf8] sm:$0xff] %v1934
        %s1967 = scalar_lea.vmem %s267, 48
        %v1968 = vld [vmem:[%s1967] sm:$0xff]
        %v1969 = vld [vmem:[%s1967 + $0x8] sm:$0xf]
        %v1970 = vld [vmem:[%s1967 + $0xc] sm:$0xff]
        %v1971 = vld [vmem:[%s1967 + $0x14] sm:$0xf]
        %v1972 = vld [vmem:[%s1967 + $0x18] sm:$0xff]
        %v1973 = vld [vmem:[%s1967 + $0x20] sm:$0xf]
        %v1974 = vld [vmem:[%s1967 + $0x24] sm:$0xff]
        %v1975 = vld [vmem:[%s1967 + $0x2c] sm:$0xf]
        %v1976 = vld [vmem:[%s1967 + $0x30] sm:$0xff]
        %v1977 = vld [vmem:[%s1967 + $0x38] sm:$0xf]
        %v1978 = vld [vmem:[%s1967 + $0x3c] sm:$0xff]
        %v1979 = vld [vmem:[%s1967 + $0x44] sm:$0xf]
        %v1980 = vld [vmem:[%s1967 + $0x48] sm:$0xff]
        %v1981 = vld [vmem:[%s1967 + $0x50] sm:$0xf]
        %v1982 = vld [vmem:[%s1967 + $0x54] sm:$0xff]
        %v1983 = vld [vmem:[%s1967 + $0x5c] sm:$0xf]
        %v1984 = vld [vmem:[%s1967 + $0x60] sm:$0xff]
        %v1985 = vld [vmem:[%s1967 + $0x68] sm:$0xf]
        %v1986 = vld [vmem:[%s1967 + $0x6c] sm:$0xff]
        %v1987 = vld [vmem:[%s1967 + $0x74] sm:$0xf]
        %v1988 = vld [vmem:[%s1967 + $0x78] sm:$0xff]
        %v1989 = vld [vmem:[%s1967 + $0x80] sm:$0xf]
        %v1990 = vld [vmem:[%s1967 + $0x84] sm:$0xff]
        %v1991 = vld [vmem:[%s1967 + $0x8c] sm:$0xf]
        %v1992 = vld [vmem:[%s1967 + $0x90] sm:$0xff]
        %v1993 = vld [vmem:[%s1967 + $0x98] sm:$0xf]
        %v1994 = vld [vmem:[%s1967 + $0x9c] sm:$0xff]
        %v1995 = vld [vmem:[%s1967 + $0xa4] sm:$0xf]
        %v1996 = vld [vmem:[%s1967 + $0xa8] sm:$0xff]
        %v1997 = vld [vmem:[%s1967 + $0xb0] sm:$0xf]
        %v1998 = vld [vmem:[%s1967 + $0xb4] sm:$0xff]
        %v1999 = vld [vmem:[%s1967 + $0xbc] sm:$0xf]
        %v2000 = vld [vmem:[%s1967 + $0xc0] sm:$0xff]
        %v2001 = vld [vmem:[%s1967 + $0xc8] sm:$0xf]
        %v2002 = vld [vmem:[%s1967 + $0xcc] sm:$0xff]
        %v2003 = vld [vmem:[%s1967 + $0xd4] sm:$0xf]
        %v2004 = vld [vmem:[%s1967 + $0xd8] sm:$0xff]
        %v2005 = vld [vmem:[%s1967 + $0xe0] sm:$0xf]
        %v2006 = vld [vmem:[%s1967 + $0xe4] sm:$0xff]
        %v2007 = vld [vmem:[%s1967 + $0xec] sm:$0xf]
        %v2008 = vld [vmem:[%s1967 + $0xf0] sm:$0xff]
        %v2009 = vld [vmem:[%s1967 + $0xf8] sm:$0xf]
        %v2010 = vld [vmem:[%s1967 + $0xfc] sm:$0xff]
        %v2011 = vld [vmem:[%s1967 + $0x104] sm:$0xf]
        %v2012 = vld [vmem:[%s1967 + $0x108] sm:$0xff]
        %v2013 = vld [vmem:[%s1967 + $0x110] sm:$0xf]
        %v2014 = vld [vmem:[%s1967 + $0x114] sm:$0xff]
        %v2015 = vld [vmem:[%s1967 + $0x11c] sm:$0xf]
        %v2016 = vld [vmem:[%s1967 + $0x120] sm:$0xff]
        %v2017 = vld [vmem:[%s1967 + $0x128] sm:$0xf]
        %v2018 = vld [vmem:[%s1967 + $0x12c] sm:$0xff]
        %v2019 = vld [vmem:[%s1967 + $0x134] sm:$0xf]
        %v2020 = vld [vmem:[%s1967 + $0x138] sm:$0xff]
        %v2021 = vld [vmem:[%s1967 + $0x140] sm:$0xf]
        %v2022 = vld [vmem:[%s1967 + $0x144] sm:$0xff]
        %v2023 = vld [vmem:[%s1967 + $0x14c] sm:$0xf]
        %v2024 = vld [vmem:[%s1967 + $0x150] sm:$0xff]
        %v2025 = vld [vmem:[%s1967 + $0x158] sm:$0xf]
        %v2026 = vld [vmem:[%s1967 + $0x15c] sm:$0xff]
        %v2027 = vld [vmem:[%s1967 + $0x164] sm:$0xf]
        %v2028 = vld [vmem:[%s1967 + $0x168] sm:$0xff]
        %v2029 = vld [vmem:[%s1967 + $0x170] sm:$0xf]
        %v2030 = vld [vmem:[%s1967 + $0x174] sm:$0xff]
        %v2031 = vld [vmem:[%s1967 + $0x17c] sm:$0xf]
        %v2032 = vld [vmem:[#allocation2] sm:$0xff]
        %v2033 = vld [vmem:[#allocation2 + $0x8] sm:$0xff]
        %v2034 = vld [vmem:[#allocation2 + $0x10] sm:$0xff]
        %v2035 = vld [vmem:[#allocation2 + $0x18] sm:$0xff]
        %v2036 = vld [vmem:[#allocation2 + $0x20] sm:$0xff]
        %v2037 = vld [vmem:[#allocation2 + $0x28] sm:$0xff]
        %v2038 = vld [vmem:[#allocation2 + $0x30] sm:$0xff]
        %v2039 = vld [vmem:[#allocation2 + $0x38] sm:$0xff]
        %v2040 = vld [vmem:[#allocation2 + $0x40] sm:$0xff]
        %v2041 = vld [vmem:[#allocation2 + $0x48] sm:$0xff]
        %v2042 = vld [vmem:[#allocation2 + $0x50] sm:$0xff]
        %v2043 = vld [vmem:[#allocation2 + $0x58] sm:$0xff]
        %v2044 = vld [vmem:[#allocation2 + $0x60] sm:$0xff]
        %v2045 = vld [vmem:[#allocation2 + $0x68] sm:$0xff]
        %v2046 = vld [vmem:[#allocation2 + $0x70] sm:$0xff]
        %v2047 = vld [vmem:[#allocation2 + $0x78] sm:$0xff]
        %v2048 = vld [vmem:[#allocation2 + $0x80] sm:$0xff]
        %v2049 = vld [vmem:[#allocation2 + $0x88] sm:$0xff]
        %v2050 = vld [vmem:[#allocation2 + $0x90] sm:$0xff]
        %v2051 = vld [vmem:[#allocation2 + $0x98] sm:$0xff]
        %v2052 = vld [vmem:[#allocation2 + $0xa0] sm:$0xff]
        %v2053 = vld [vmem:[#allocation2 + $0xa8] sm:$0xff]
        %v2054 = vld [vmem:[#allocation2 + $0xb0] sm:$0xff]
        %v2055 = vld [vmem:[#allocation2 + $0xb8] sm:$0xff]
        %v2056 = vld [vmem:[#allocation2 + $0xc0] sm:$0xff]
        %v2057 = vld [vmem:[#allocation2 + $0xc8] sm:$0xff]
        %v2058 = vld [vmem:[#allocation2 + $0xd0] sm:$0xff]
        %v2059 = vld [vmem:[#allocation2 + $0xd8] sm:$0xff]
        %v2060 = vld [vmem:[#allocation2 + $0xe0] sm:$0xff]
        %v2061 = vld [vmem:[#allocation2 + $0xe8] sm:$0xff]
        %v2062 = vld [vmem:[#allocation2 + $0xf0] sm:$0xff]
        %v2063 = vld [vmem:[#allocation2 + $0xf8] sm:$0xff]
        %s2064 = scalar_lea.vmem %s271, 384
        %v2065 = vld [vmem:[%s2064] sm:$0xf]
        %v2066 = vld [vmem:[%s2064 + $0x4] sm:$0xf]
        %v2067 = vld [vmem:[%s2064 + $0x8] sm:$0xf]
        %v2068 = vld [vmem:[%s2064 + $0xc] sm:$0xf]
        %v2069 = vld [vmem:[%s2064 + $0x10] sm:$0xf]
        %v2070 = vld [vmem:[%s2064 + $0x14] sm:$0xf]
        %v2071 = vld [vmem:[%s2064 + $0x18] sm:$0xf]
        %v2072 = vld [vmem:[%s2064 + $0x1c] sm:$0xf]
        %v2073 = vld [vmem:[%s2064 + $0x20] sm:$0xf]
        %v2074 = vld [vmem:[%s2064 + $0x24] sm:$0xf]
        %v2075 = vld [vmem:[%s2064 + $0x28] sm:$0xf]
        %v2076 = vld [vmem:[%s2064 + $0x2c] sm:$0xf]
        %v2077 = vld [vmem:[%s2064 + $0x30] sm:$0xf]
        %v2078 = vld [vmem:[%s2064 + $0x34] sm:$0xf]
        %v2079 = vld [vmem:[%s2064 + $0x38] sm:$0xf]
        %v2080 = vld [vmem:[%s2064 + $0x3c] sm:$0xf]
        %v2081 = vld [vmem:[%s2064 + $0x40] sm:$0xf]
        %v2082 = vld [vmem:[%s2064 + $0x44] sm:$0xf]
        %v2083 = vld [vmem:[%s2064 + $0x48] sm:$0xf]
        %v2084 = vld [vmem:[%s2064 + $0x4c] sm:$0xf]
        %v2085 = vld [vmem:[%s2064 + $0x50] sm:$0xf]
        %v2086 = vld [vmem:[%s2064 + $0x54] sm:$0xf]
        %v2087 = vld [vmem:[%s2064 + $0x58] sm:$0xf]
        %v2088 = vld [vmem:[%s2064 + $0x5c] sm:$0xf]
        %v2089 = vld [vmem:[%s2064 + $0x60] sm:$0xf]
        %v2090 = vld [vmem:[%s2064 + $0x64] sm:$0xf]
        %v2091 = vld [vmem:[%s2064 + $0x68] sm:$0xf]
        %v2092 = vld [vmem:[%s2064 + $0x6c] sm:$0xf]
        %v2093 = vld [vmem:[%s2064 + $0x70] sm:$0xf]
        %v2094 = vld [vmem:[%s2064 + $0x74] sm:$0xf]
        %v2095 = vld [vmem:[%s2064 + $0x78] sm:$0xf]
        %v2096 = vld [vmem:[%s2064 + $0x7c] sm:$0xf]
        %v2097 = vld [vmem:[%s2064 + $0x80] sm:$0xf]
        %v2098 = vld [vmem:[%s2064 + $0x84] sm:$0xf]
        %v2099 = vld [vmem:[%s2064 + $0x88] sm:$0xf]
        %v2100 = vld [vmem:[%s2064 + $0x8c] sm:$0xf]
        %v2101 = vld [vmem:[%s2064 + $0x90] sm:$0xf]
        %v2102 = vld [vmem:[%s2064 + $0x94] sm:$0xf]
        %v2103 = vld [vmem:[%s2064 + $0x98] sm:$0xf]
        %v2104 = vld [vmem:[%s2064 + $0x9c] sm:$0xf]
        %v2105 = vld [vmem:[%s2064 + $0xa0] sm:$0xf]
        %v2106 = vld [vmem:[%s2064 + $0xa4] sm:$0xf]
        %v2107 = vld [vmem:[%s2064 + $0xa8] sm:$0xf]
        %v2108 = vld [vmem:[%s2064 + $0xac] sm:$0xf]
        %v2109 = vld [vmem:[%s2064 + $0xb0] sm:$0xf]
        %v2110 = vld [vmem:[%s2064 + $0xb4] sm:$0xf]
        %v2111 = vld [vmem:[%s2064 + $0xb8] sm:$0xf]
        %v2112 = vld [vmem:[%s2064 + $0xbc] sm:$0xf]
        %v2177 = vunpack.c.l.b16 %v1968
        %v2178 = vunpack.c.h.b16 %v1968
        %v2179 = vunpack.c.l.b16 %v1969
        %v2180 = vunpack.c.l.b16 %v1970
        %v2181 = vunpack.c.h.b16 %v1970
        %v2182 = vunpack.c.l.b16 %v1971
        %v2183 = vunpack.c.l.b16 %v1972
        %v2184 = vunpack.c.h.b16 %v1972
        %v2185 = vunpack.c.l.b16 %v1973
        %v2186 = vunpack.c.l.b16 %v1974
        %v2187 = vunpack.c.h.b16 %v1974
        %v2188 = vunpack.c.l.b16 %v1975
        %v2189 = vunpack.c.l.b16 %v1976
        %v2190 = vunpack.c.h.b16 %v1976
        %v2191 = vunpack.c.l.b16 %v1977
        %v2192 = vunpack.c.l.b16 %v1978
        %v2193 = vunpack.c.h.b16 %v1978
        %v2194 = vunpack.c.l.b16 %v1979
        %v2195 = vunpack.c.l.b16 %v1980
        %v2196 = vunpack.c.h.b16 %v1980
        %v2197 = vunpack.c.l.b16 %v1981
        %v2198 = vunpack.c.l.b16 %v1982
        %v2199 = vunpack.c.h.b16 %v1982
        %v2200 = vunpack.c.l.b16 %v1983
        %v2201 = vunpack.c.l.b16 %v1984
        %v2202 = vunpack.c.h.b16 %v1984
        %v2203 = vunpack.c.l.b16 %v1985
        %v2204 = vunpack.c.l.b16 %v1986
        %v2205 = vunpack.c.h.b16 %v1986
        %v2206 = vunpack.c.l.b16 %v1987
        %v2207 = vunpack.c.l.b16 %v1988
        %v2208 = vunpack.c.h.b16 %v1988
        %v2209 = vunpack.c.l.b16 %v1989
        %v2210 = vunpack.c.l.b16 %v1990
        %v2211 = vunpack.c.h.b16 %v1990
        %v2212 = vunpack.c.l.b16 %v1991
        %v2213 = vunpack.c.l.b16 %v1992
        %v2214 = vunpack.c.h.b16 %v1992
        %v2215 = vunpack.c.l.b16 %v1993
        %v2216 = vunpack.c.l.b16 %v1994
        %v2217 = vunpack.c.h.b16 %v1994
        %v2218 = vunpack.c.l.b16 %v1995
        %v2219 = vunpack.c.l.b16 %v1996
        %v2220 = vunpack.c.h.b16 %v1996
        %v2221 = vunpack.c.l.b16 %v1997
        %v2222 = vunpack.c.l.b16 %v1998
        %v2223 = vunpack.c.h.b16 %v1998
        %v2224 = vunpack.c.l.b16 %v1999
        %v2225 = vunpack.c.l.b16 %v2000
        %v2226 = vunpack.c.h.b16 %v2000
        %v2227 = vunpack.c.l.b16 %v2001
        %v2228 = vunpack.c.l.b16 %v2002
        %v2229 = vunpack.c.h.b16 %v2002
        %v2230 = vunpack.c.l.b16 %v2003
        %v2231 = vunpack.c.l.b16 %v2004
        %v2232 = vunpack.c.h.b16 %v2004
        %v2233 = vunpack.c.l.b16 %v2005
        %v2234 = vunpack.c.l.b16 %v2006
        %v2235 = vunpack.c.h.b16 %v2006
        %v2236 = vunpack.c.l.b16 %v2007
        %v2237 = vunpack.c.l.b16 %v2008
        %v2238 = vunpack.c.h.b16 %v2008
        %v2239 = vunpack.c.l.b16 %v2009
        %v2240 = vunpack.c.l.b16 %v2010
        %v2241 = vunpack.c.h.b16 %v2010
        %v2242 = vunpack.c.l.b16 %v2011
        %v2243 = vunpack.c.l.b16 %v2012
        %v2244 = vunpack.c.h.b16 %v2012
        %v2245 = vunpack.c.l.b16 %v2013
        %v2246 = vunpack.c.l.b16 %v2014
        %v2247 = vunpack.c.h.b16 %v2014
        %v2248 = vunpack.c.l.b16 %v2015
        %v2249 = vunpack.c.l.b16 %v2016
        %v2250 = vunpack.c.h.b16 %v2016
        %v2251 = vunpack.c.l.b16 %v2017
        %v2252 = vunpack.c.l.b16 %v2018
        %v2253 = vunpack.c.h.b16 %v2018
        %v2254 = vunpack.c.l.b16 %v2019
        %v2255 = vunpack.c.l.b16 %v2020
        %v2256 = vunpack.c.h.b16 %v2020
        %v2257 = vunpack.c.l.b16 %v2021
        %v2258 = vunpack.c.l.b16 %v2022
        %v2259 = vunpack.c.h.b16 %v2022
        %v2260 = vunpack.c.l.b16 %v2023
        %v2261 = vunpack.c.l.b16 %v2024
        %v2262 = vunpack.c.h.b16 %v2024
        %v2263 = vunpack.c.l.b16 %v2025
        %v2264 = vunpack.c.l.b16 %v2026
        %v2265 = vunpack.c.h.b16 %v2026
        %v2266 = vunpack.c.l.b16 %v2027
        %v2267 = vunpack.c.l.b16 %v2028
        %v2268 = vunpack.c.h.b16 %v2028
        %v2269 = vunpack.c.l.b16 %v2029
        %v2270 = vunpack.c.l.b16 %v2030
        %v2271 = vunpack.c.h.b16 %v2030
        %v2272 = vunpack.c.l.b16 %v2031
        %v2273 = vpack.c.b16 %v2180, %v2177
        %v2274 = vpack.c.b16 %v2181, %v2178
        %v2275 = vpack.c.b16 %v2182, %v2179
        %v2276 = vpack.c.b16 %v2186, %v2183
        %v2277 = vpack.c.b16 %v2187, %v2184
        %v2278 = vpack.c.b16 %v2188, %v2185
        %v2279 = vpack.c.b16 %v2192, %v2189
        %v2280 = vpack.c.b16 %v2193, %v2190
        %v2281 = vpack.c.b16 %v2194, %v2191
        %v2282 = vpack.c.b16 %v2198, %v2195
        %v2283 = vpack.c.b16 %v2199, %v2196
        %v2284 = vpack.c.b16 %v2200, %v2197
        %v2285 = vpack.c.b16 %v2204, %v2201
        %v2286 = vpack.c.b16 %v2205, %v2202
        %v2287 = vpack.c.b16 %v2206, %v2203
        %v2288 = vpack.c.b16 %v2210, %v2207
        %v2289 = vpack.c.b16 %v2211, %v2208
        %v2290 = vpack.c.b16 %v2212, %v2209
        %v2291 = vpack.c.b16 %v2216, %v2213
        %v2292 = vpack.c.b16 %v2217, %v2214
        %v2293 = vpack.c.b16 %v2218, %v2215
        %v2294 = vpack.c.b16 %v2222, %v2219
        %v2295 = vpack.c.b16 %v2223, %v2220
        %v2296 = vpack.c.b16 %v2224, %v2221
        %v2297 = vpack.c.b16 %v2228, %v2225
        %v2298 = vpack.c.b16 %v2229, %v2226
        %v2299 = vpack.c.b16 %v2230, %v2227
        %v2300 = vpack.c.b16 %v2234, %v2231
        %v2301 = vpack.c.b16 %v2235, %v2232
        %v2302 = vpack.c.b16 %v2236, %v2233
        %v2303 = vpack.c.b16 %v2240, %v2237
        %v2304 = vpack.c.b16 %v2241, %v2238
        %v2305 = vpack.c.b16 %v2242, %v2239
        %v2306 = vpack.c.b16 %v2246, %v2243
        %v2307 = vpack.c.b16 %v2247, %v2244
        %v2308 = vpack.c.b16 %v2248, %v2245
        %v2309 = vpack.c.b16 %v2252, %v2249
        %v2310 = vpack.c.b16 %v2253, %v2250
        %v2311 = vpack.c.b16 %v2254, %v2251
        %v2312 = vpack.c.b16 %v2258, %v2255
        %v2313 = vpack.c.b16 %v2259, %v2256
        %v2314 = vpack.c.b16 %v2260, %v2257
        %v2315 = vpack.c.b16 %v2264, %v2261
        %v2316 = vpack.c.b16 %v2265, %v2262
        %v2317 = vpack.c.b16 %v2266, %v2263
        %v2318 = vpack.c.b16 %v2270, %v2267
        %v2319 = vpack.c.b16 %v2271, %v2268
        %v2320 = vpack.c.b16 %v2272, %v2269
        %v2417 = vunpack.c.l.b16 %v2065
        %v2418 = vunpack.c.l.b16 %v2066
        %v2419 = vunpack.c.l.b16 %v2067
        %v2420 = vunpack.c.l.b16 %v2068
        %v2421 = vunpack.c.l.b16 %v2069
        %v2422 = vunpack.c.l.b16 %v2070
        %v2423 = vunpack.c.l.b16 %v2071
        %v2424 = vunpack.c.l.b16 %v2072
        %v2425 = vunpack.c.l.b16 %v2073
        %v2426 = vunpack.c.l.b16 %v2074
        %v2427 = vunpack.c.l.b16 %v2075
        %v2428 = vunpack.c.l.b16 %v2076
        %v2429 = vunpack.c.l.b16 %v2077
        %v2430 = vunpack.c.l.b16 %v2078
        %v2431 = vunpack.c.l.b16 %v2079
        %v2432 = vunpack.c.l.b16 %v2080
        %v2433 = vunpack.c.l.b16 %v2081
        %v2434 = vunpack.c.l.b16 %v2082
        %v2435 = vunpack.c.l.b16 %v2083
        %v2436 = vunpack.c.l.b16 %v2084
        %v2437 = vunpack.c.l.b16 %v2085
        %v2438 = vunpack.c.l.b16 %v2086
        %v2439 = vunpack.c.l.b16 %v2087
        %v2440 = vunpack.c.l.b16 %v2088
        %v2441 = vunpack.c.l.b16 %v2089
        %v2442 = vunpack.c.l.b16 %v2090
        %v2443 = vunpack.c.l.b16 %v2091
        %v2444 = vunpack.c.l.b16 %v2092
        %v2445 = vunpack.c.l.b16 %v2093
        %v2446 = vunpack.c.l.b16 %v2094
        %v2447 = vunpack.c.l.b16 %v2095
        %v2448 = vunpack.c.l.b16 %v2096
        %v2449 = vunpack.c.l.b16 %v2097
        %v2450 = vunpack.c.l.b16 %v2098
        %v2451 = vunpack.c.l.b16 %v2099
        %v2452 = vunpack.c.l.b16 %v2100
        %v2453 = vunpack.c.l.b16 %v2101
        %v2454 = vunpack.c.l.b16 %v2102
        %v2455 = vunpack.c.l.b16 %v2103
        %v2456 = vunpack.c.l.b16 %v2104
        %v2457 = vunpack.c.l.b16 %v2105
        %v2458 = vunpack.c.l.b16 %v2106
        %v2459 = vunpack.c.l.b16 %v2107
        %v2460 = vunpack.c.l.b16 %v2108
        %v2461 = vunpack.c.l.b16 %v2109
        %v2462 = vunpack.c.l.b16 %v2110
        %v2463 = vunpack.c.l.b16 %v2111
        %v2464 = vunpack.c.l.b16 %v2112
        %v2465 = vpack.c.b16 %v2418, %v2417
        %v2466 = vpack.c.b16 %v2420, %v2419
        %v2467 = vpack.c.b16 %v2422, %v2421
        %v2468 = vpack.c.b16 %v2424, %v2423
        %v2469 = vpack.c.b16 %v2426, %v2425
        %v2470 = vpack.c.b16 %v2428, %v2427
        %v2471 = vpack.c.b16 %v2430, %v2429
        %v2472 = vpack.c.b16 %v2432, %v2431
        %v2473 = vpack.c.b16 %v2434, %v2433
        %v2474 = vpack.c.b16 %v2436, %v2435
        %v2475 = vpack.c.b16 %v2438, %v2437
        %v2476 = vpack.c.b16 %v2440, %v2439
        %v2477 = vpack.c.b16 %v2442, %v2441
        %v2478 = vpack.c.b16 %v2444, %v2443
        %v2479 = vpack.c.b16 %v2446, %v2445
        %v2480 = vpack.c.b16 %v2448, %v2447
        %v2481 = vpack.c.b16 %v2450, %v2449
        %v2482 = vpack.c.b16 %v2452, %v2451
        %v2483 = vpack.c.b16 %v2454, %v2453
        %v2484 = vpack.c.b16 %v2456, %v2455
        %v2485 = vpack.c.b16 %v2458, %v2457
        %v2486 = vpack.c.b16 %v2460, %v2459
        %v2487 = vpack.c.b16 %v2462, %v2461
        %v2488 = vpack.c.b16 %v2464, %v2463
        %2513 = vmatpush.bf16.msra.mxu0 %v2472
        %2514 = vmatpush.bf16.msra.mxu0 %v2471
        %2515 = vmatpush.bf16.msra.mxu0 %v2470
        %2516 = vmatpush.bf16.msra.mxu0 %v2469
        %2517 = vmatpush.bf16.msra.mxu0 %v2468
        %2518 = vmatpush.bf16.msra.mxu0 %v2467
        %2519 = vmatpush.bf16.msra.mxu0 %v2466
        %2520 = vmatpush.bf16.msra.mxu0 %v2465
        %2521 = vmatmul.bf16.gmra.mxu0 %v2273
        %v2522 = vpop.f32.mrf.mxu0
        %v2523 = vadd.f32 0.0, %v2522
        %v2524 = vpop.f32.mrf.mxu0
        %v2525 = vadd.f32 0.0, %v2524
        %2526 = vmatmul.bf16.gmra.mxu0 %v2276
        %v2527 = vpop.f32.mrf.mxu0
        %v2528 = vadd.f32 0.0, %v2527
        %v2529 = vpop.f32.mrf.mxu0
        %v2530 = vadd.f32 0.0, %v2529
        %2531 = vmatmul.bf16.gmra.mxu0 %v2279
        %v2532 = vpop.f32.mrf.mxu0
        %v2533 = vadd.f32 0.0, %v2532
        %v2534 = vpop.f32.mrf.mxu0
        %v2535 = vadd.f32 0.0, %v2534
        %2536 = vmatmul.bf16.gmra.mxu0 %v2282
        %v2537 = vpop.f32.mrf.mxu0
        %v2538 = vadd.f32 0.0, %v2537
        %v2539 = vpop.f32.mrf.mxu0
        %v2540 = vadd.f32 0.0, %v2539
        %2541 = vmatmul.bf16.gmra.mxu0 %v2285
        %v2542 = vpop.f32.mrf.mxu0
        %v2543 = vadd.f32 0.0, %v2542
        %v2544 = vpop.f32.mrf.mxu0
        %v2545 = vadd.f32 0.0, %v2544
        %2546 = vmatmul.bf16.gmra.mxu0 %v2288
        %v2547 = vpop.f32.mrf.mxu0
        %v2548 = vadd.f32 0.0, %v2547
        %v2549 = vpop.f32.mrf.mxu0
        %v2550 = vadd.f32 0.0, %v2549
        %2551 = vmatmul.bf16.gmra.mxu0 %v2291
        %v2552 = vpop.f32.mrf.mxu0
        %v2553 = vadd.f32 0.0, %v2552
        %v2554 = vpop.f32.mrf.mxu0
        %v2555 = vadd.f32 0.0, %v2554
        %2556 = vmatmul.bf16.gmra.mxu0 %v2294
        %v2557 = vpop.f32.mrf.mxu0
        %v2558 = vadd.f32 0.0, %v2557
        %v2559 = vpop.f32.mrf.mxu0
        %v2560 = vadd.f32 0.0, %v2559
        %2561 = vmatmul.bf16.gmra.mxu0 %v2297
        %v2562 = vpop.f32.mrf.mxu0
        %v2563 = vadd.f32 0.0, %v2562
        %v2564 = vpop.f32.mrf.mxu0
        %v2565 = vadd.f32 0.0, %v2564
        %2566 = vmatmul.bf16.gmra.mxu0 %v2300
        %v2567 = vpop.f32.mrf.mxu0
        %v2568 = vadd.f32 0.0, %v2567
        %v2569 = vpop.f32.mrf.mxu0
        %v2570 = vadd.f32 0.0, %v2569
        %2571 = vmatmul.bf16.gmra.mxu0 %v2303
        %v2572 = vpop.f32.mrf.mxu0
        %v2573 = vadd.f32 0.0, %v2572
        %v2574 = vpop.f32.mrf.mxu0
        %v2575 = vadd.f32 0.0, %v2574
        %2576 = vmatmul.bf16.gmra.mxu0 %v2306
        %v2577 = vpop.f32.mrf.mxu0
        %v2578 = vadd.f32 0.0, %v2577
        %v2579 = vpop.f32.mrf.mxu0
        %v2580 = vadd.f32 0.0, %v2579
        %2581 = vmatmul.bf16.gmra.mxu0 %v2309
        %v2582 = vpop.f32.mrf.mxu0
        %v2583 = vadd.f32 0.0, %v2582
        %v2584 = vpop.f32.mrf.mxu0
        %v2585 = vadd.f32 0.0, %v2584
        %2586 = vmatmul.bf16.gmra.mxu0 %v2312
        %v2587 = vpop.f32.mrf.mxu0
        %v2588 = vadd.f32 0.0, %v2587
        %v2589 = vpop.f32.mrf.mxu0
        %v2590 = vadd.f32 0.0, %v2589
        %2591 = vmatmul.bf16.gmra.mxu0 %v2315
        %v2592 = vpop.f32.mrf.mxu0
        %v2593 = vadd.f32 0.0, %v2592
        %v2594 = vpop.f32.mrf.mxu0
        %v2595 = vadd.f32 0.0, %v2594
        %2596 = vmatmul.bf16.gmra.mxu0 %v2318
        %v2597 = vpop.f32.mrf.mxu0
        %v2598 = vadd.f32 0.0, %v2597
        %v2599 = vpop.f32.mrf.mxu0
        %v2600 = vadd.f32 0.0, %v2599
        %2601 = vdwg.mxu0
        %2602 = vmatpush.bf16.msra.mxu0 %v2480
        %2603 = vmatpush.bf16.msra.mxu0 %v2479
        %2604 = vmatpush.bf16.msra.mxu0 %v2478
        %2605 = vmatpush.bf16.msra.mxu0 %v2477
        %2606 = vmatpush.bf16.msra.mxu0 %v2476
        %2607 = vmatpush.bf16.msra.mxu0 %v2475
        %2608 = vmatpush.bf16.msra.mxu0 %v2474
        %2609 = vmatpush.bf16.msra.mxu0 %v2473
        %2610 = vmatmul.bf16.gmra.mxu0 %v2274
        %v2611 = vpop.f32.mrf.mxu0
        %v2612 = vadd.f32 %v2523, %v2611
        %v2613 = vpop.f32.mrf.mxu0
        %v2614 = vadd.f32 %v2525, %v2613
        %2615 = vmatmul.bf16.gmra.mxu0 %v2277
        %v2616 = vpop.f32.mrf.mxu0
        %v2617 = vadd.f32 %v2528, %v2616
        %v2618 = vpop.f32.mrf.mxu0
        %v2619 = vadd.f32 %v2530, %v2618
        %2620 = vmatmul.bf16.gmra.mxu0 %v2280
        %v2621 = vpop.f32.mrf.mxu0
        %v2622 = vadd.f32 %v2533, %v2621
        %v2623 = vpop.f32.mrf.mxu0
        %v2624 = vadd.f32 %v2535, %v2623
        %2625 = vmatmul.bf16.gmra.mxu0 %v2283
        %v2626 = vpop.f32.mrf.mxu0
        %v2627 = vadd.f32 %v2538, %v2626
        %v2628 = vpop.f32.mrf.mxu0
        %v2629 = vadd.f32 %v2540, %v2628
        %2630 = vmatmul.bf16.gmra.mxu0 %v2286
        %v2631 = vpop.f32.mrf.mxu0
        %v2632 = vadd.f32 %v2543, %v2631
        %v2633 = vpop.f32.mrf.mxu0
        %v2634 = vadd.f32 %v2545, %v2633
        %2635 = vmatmul.bf16.gmra.mxu0 %v2289
        %v2636 = vpop.f32.mrf.mxu0
        %v2637 = vadd.f32 %v2548, %v2636
        %v2638 = vpop.f32.mrf.mxu0
        %v2639 = vadd.f32 %v2550, %v2638
        %2640 = vmatmul.bf16.gmra.mxu0 %v2292
        %v2641 = vpop.f32.mrf.mxu0
        %v2642 = vadd.f32 %v2553, %v2641
        %v2643 = vpop.f32.mrf.mxu0
        %v2644 = vadd.f32 %v2555, %v2643
        %2645 = vmatmul.bf16.gmra.mxu0 %v2295
        %v2646 = vpop.f32.mrf.mxu0
        %v2647 = vadd.f32 %v2558, %v2646
        %v2648 = vpop.f32.mrf.mxu0
        %v2649 = vadd.f32 %v2560, %v2648
        %2650 = vmatmul.bf16.gmra.mxu0 %v2298
        %v2651 = vpop.f32.mrf.mxu0
        %v2652 = vadd.f32 %v2563, %v2651
        %v2653 = vpop.f32.mrf.mxu0
        %v2654 = vadd.f32 %v2565, %v2653
        %2655 = vmatmul.bf16.gmra.mxu0 %v2301
        %v2656 = vpop.f32.mrf.mxu0
        %v2657 = vadd.f32 %v2568, %v2656
        %v2658 = vpop.f32.mrf.mxu0
        %v2659 = vadd.f32 %v2570, %v2658
        %2660 = vmatmul.bf16.gmra.mxu0 %v2304
        %v2661 = vpop.f32.mrf.mxu0
        %v2662 = vadd.f32 %v2573, %v2661
        %v2663 = vpop.f32.mrf.mxu0
        %v2664 = vadd.f32 %v2575, %v2663
        %2665 = vmatmul.bf16.gmra.mxu0 %v2307
        %v2666 = vpop.f32.mrf.mxu0
        %v2667 = vadd.f32 %v2578, %v2666
        %v2668 = vpop.f32.mrf.mxu0
        %v2669 = vadd.f32 %v2580, %v2668
        %2670 = vmatmul.bf16.gmra.mxu0 %v2310
        %v2671 = vpop.f32.mrf.mxu0
        %v2672 = vadd.f32 %v2583, %v2671
        %v2673 = vpop.f32.mrf.mxu0
        %v2674 = vadd.f32 %v2585, %v2673
        %2675 = vmatmul.bf16.gmra.mxu0 %v2313
        %v2676 = vpop.f32.mrf.mxu0
        %v2677 = vadd.f32 %v2588, %v2676
        %v2678 = vpop.f32.mrf.mxu0
        %v2679 = vadd.f32 %v2590, %v2678
        %2680 = vmatmul.bf16.gmra.mxu0 %v2316
        %v2681 = vpop.f32.mrf.mxu0
        %v2682 = vadd.f32 %v2593, %v2681
        %v2683 = vpop.f32.mrf.mxu0
        %v2684 = vadd.f32 %v2595, %v2683
        %2685 = vmatmul.bf16.gmra.mxu0 %v2319
        %v2686 = vpop.f32.mrf.mxu0
        %v2687 = vadd.f32 %v2598, %v2686
        %v2688 = vpop.f32.mrf.mxu0
        %v2689 = vadd.f32 %v2600, %v2688
        %2690 = vdwg.mxu0
        %2691 = vmatpush.bf16.msra.mxu0 %v2488
        %2692 = vmatpush.bf16.msra.mxu0 %v2487
        %2693 = vmatpush.bf16.msra.mxu0 %v2486
        %2694 = vmatpush.bf16.msra.mxu0 %v2485
        %2695 = vmatpush.bf16.msra.mxu0 %v2484
        %2696 = vmatpush.bf16.msra.mxu0 %v2483
        %2697 = vmatpush.bf16.msra.mxu0 %v2482
        %2698 = vmatpush.bf16.msra.mxu0 %v2481
        %2699 = vmatmul.bf16.gmra.mxu0 %v2275
        %v2700 = vpop.f32.mrf.mxu0
        %v2701 = vadd.f32 %v2612, %v2700
        %v2702 = vpop.f32.mrf.mxu0
        %v2703 = vadd.f32 %v2614, %v2702
        %2704 = vmatmul.bf16.gmra.mxu0 %v2278
        %v2705 = vpop.f32.mrf.mxu0
        %v2706 = vadd.f32 %v2617, %v2705
        %v2707 = vpop.f32.mrf.mxu0
        %v2708 = vadd.f32 %v2619, %v2707
        %2709 = vmatmul.bf16.gmra.mxu0 %v2281
        %v2710 = vpop.f32.mrf.mxu0
        %v2711 = vadd.f32 %v2622, %v2710
        %v2712 = vpop.f32.mrf.mxu0
        %v2713 = vadd.f32 %v2624, %v2712
        %2714 = vmatmul.bf16.gmra.mxu0 %v2284
        %v2715 = vpop.f32.mrf.mxu0
        %v2716 = vadd.f32 %v2627, %v2715
        %v2717 = vpop.f32.mrf.mxu0
        %v2718 = vadd.f32 %v2629, %v2717
        %2719 = vmatmul.bf16.gmra.mxu0 %v2287
        %v2720 = vpop.f32.mrf.mxu0
        %v2721 = vadd.f32 %v2632, %v2720
        %v2722 = vpop.f32.mrf.mxu0
        %v2723 = vadd.f32 %v2634, %v2722
        %2724 = vmatmul.bf16.gmra.mxu0 %v2290
        %v2725 = vpop.f32.mrf.mxu0
        %v2726 = vadd.f32 %v2637, %v2725
        %v2727 = vpop.f32.mrf.mxu0
        %v2728 = vadd.f32 %v2639, %v2727
        %2729 = vmatmul.bf16.gmra.mxu0 %v2293
        %v2730 = vpop.f32.mrf.mxu0
        %v2731 = vadd.f32 %v2642, %v2730
        %v2732 = vpop.f32.mrf.mxu0
        %v2733 = vadd.f32 %v2644, %v2732
        %2734 = vmatmul.bf16.gmra.mxu0 %v2296
        %v2735 = vpop.f32.mrf.mxu0
        %v2736 = vadd.f32 %v2647, %v2735
        %v2737 = vpop.f32.mrf.mxu0
        %v2738 = vadd.f32 %v2649, %v2737
        %2739 = vmatmul.bf16.gmra.mxu0 %v2299
        %v2740 = vpop.f32.mrf.mxu0
        %v2741 = vadd.f32 %v2652, %v2740
        %v2742 = vpop.f32.mrf.mxu0
        %v2743 = vadd.f32 %v2654, %v2742
        %2744 = vmatmul.bf16.gmra.mxu0 %v2302
        %v2745 = vpop.f32.mrf.mxu0
        %v2746 = vadd.f32 %v2657, %v2745
        %v2747 = vpop.f32.mrf.mxu0
        %v2748 = vadd.f32 %v2659, %v2747
        %2749 = vmatmul.bf16.gmra.mxu0 %v2305
        %v2750 = vpop.f32.mrf.mxu0
        %v2751 = vadd.f32 %v2662, %v2750
        %v2752 = vpop.f32.mrf.mxu0
        %v2753 = vadd.f32 %v2664, %v2752
        %2754 = vmatmul.bf16.gmra.mxu0 %v2308
        %v2755 = vpop.f32.mrf.mxu0
        %v2756 = vadd.f32 %v2667, %v2755
        %v2757 = vpop.f32.mrf.mxu0
        %v2758 = vadd.f32 %v2669, %v2757
        %2759 = vmatmul.bf16.gmra.mxu0 %v2311
        %v2760 = vpop.f32.mrf.mxu0
        %v2761 = vadd.f32 %v2672, %v2760
        %v2762 = vpop.f32.mrf.mxu0
        %v2763 = vadd.f32 %v2674, %v2762
        %2764 = vmatmul.bf16.gmra.mxu0 %v2314
        %v2765 = vpop.f32.mrf.mxu0
        %v2766 = vadd.f32 %v2677, %v2765
        %v2767 = vpop.f32.mrf.mxu0
        %v2768 = vadd.f32 %v2679, %v2767
        %2769 = vmatmul.bf16.gmra.mxu0 %v2317
        %v2770 = vpop.f32.mrf.mxu0
        %v2771 = vadd.f32 %v2682, %v2770
        %v2772 = vpop.f32.mrf.mxu0
        %v2773 = vadd.f32 %v2684, %v2772
        %2774 = vmatmul.bf16.gmra.mxu0 %v2320
        %v2775 = vpop.f32.mrf.mxu0
        %v2776 = vadd.f32 %v2687, %v2775
        %v2777 = vpop.f32.mrf.mxu0
        %v2778 = vadd.f32 %v2689, %v2777
        %2779 = vdwg.mxu0
        %v2780 = vadd.f32 %v2032, %v2701
        %v2781 = vadd.f32 %v2033, %v2703
        %v2782 = vadd.f32 %v2034, %v2706
        %v2783 = vadd.f32 %v2035, %v2708
        %v2784 = vadd.f32 %v2036, %v2711
        %v2785 = vadd.f32 %v2037, %v2713
        %v2786 = vadd.f32 %v2038, %v2716
        %v2787 = vadd.f32 %v2039, %v2718
        %v2788 = vadd.f32 %v2040, %v2721
        %v2789 = vadd.f32 %v2041, %v2723
        %v2790 = vadd.f32 %v2042, %v2726
        %v2791 = vadd.f32 %v2043, %v2728
        %v2792 = vadd.f32 %v2044, %v2731
        %v2793 = vadd.f32 %v2045, %v2733
        %v2794 = vadd.f32 %v2046, %v2736
        %v2795 = vadd.f32 %v2047, %v2738
        %v2796 = vadd.f32 %v2048, %v2741
        %v2797 = vadd.f32 %v2049, %v2743
        %v2798 = vadd.f32 %v2050, %v2746
        %v2799 = vadd.f32 %v2051, %v2748
        %v2800 = vadd.f32 %v2052, %v2751
        %v2801 = vadd.f32 %v2053, %v2753
        %v2802 = vadd.f32 %v2054, %v2756
        %v2803 = vadd.f32 %v2055, %v2758
        %v2804 = vadd.f32 %v2056, %v2761
        %v2805 = vadd.f32 %v2057, %v2763
        %v2806 = vadd.f32 %v2058, %v2766
        %v2807 = vadd.f32 %v2059, %v2768
        %v2808 = vadd.f32 %v2060, %v2771
        %v2809 = vadd.f32 %v2061, %v2773
        %v2810 = vadd.f32 %v2062, %v2776
        %v2811 = vadd.f32 %v2063, %v2778
        %2812 = vst [vmem:[#allocation2] sm:$0xff] %v2780
        %2813 = vst [vmem:[#allocation2 + $0x8] sm:$0xff] %v2781
        %2814 = vst [vmem:[#allocation2 + $0x10] sm:$0xff] %v2782
        %2815 = vst [vmem:[#allocation2 + $0x18] sm:$0xff] %v2783
        %2816 = vst [vmem:[#allocation2 + $0x20] sm:$0xff] %v2784
        %2817 = vst [vmem:[#allocation2 + $0x28] sm:$0xff] %v2785
        %2818 = vst [vmem:[#allocation2 + $0x30] sm:$0xff] %v2786
        %2819 = vst [vmem:[#allocation2 + $0x38] sm:$0xff] %v2787
        %2820 = vst [vmem:[#allocation2 + $0x40] sm:$0xff] %v2788
        %2821 = vst [vmem:[#allocation2 + $0x48] sm:$0xff] %v2789
        %2822 = vst [vmem:[#allocation2 + $0x50] sm:$0xff] %v2790
        %2823 = vst [vmem:[#allocation2 + $0x58] sm:$0xff] %v2791
        %2824 = vst [vmem:[#allocation2 + $0x60] sm:$0xff] %v2792
        %2825 = vst [vmem:[#allocation2 + $0x68] sm:$0xff] %v2793
        %2826 = vst [vmem:[#allocation2 + $0x70] sm:$0xff] %v2794
        %2827 = vst [vmem:[#allocation2 + $0x78] sm:$0xff] %v2795
        %2828 = vst [vmem:[#allocation2 + $0x80] sm:$0xff] %v2796
        %2829 = vst [vmem:[#allocation2 + $0x88] sm:$0xff] %v2797
        %2830 = vst [vmem:[#allocation2 + $0x90] sm:$0xff] %v2798
        %2831 = vst [vmem:[#allocation2 + $0x98] sm:$0xff] %v2799
        %2832 = vst [vmem:[#allocation2 + $0xa0] sm:$0xff] %v2800
        %2833 = vst [vmem:[#allocation2 + $0xa8] sm:$0xff] %v2801
        %2834 = vst [vmem:[#allocation2 + $0xb0] sm:$0xff] %v2802
        %2835 = vst [vmem:[#allocation2 + $0xb8] sm:$0xff] %v2803
        %2836 = vst [vmem:[#allocation2 + $0xc0] sm:$0xff] %v2804
        %2837 = vst [vmem:[#allocation2 + $0xc8] sm:$0xff] %v2805
        %2838 = vst [vmem:[#allocation2 + $0xd0] sm:$0xff] %v2806
        %2839 = vst [vmem:[#allocation2 + $0xd8] sm:$0xff] %v2807
        %2840 = vst [vmem:[#allocation2 + $0xe0] sm:$0xff] %v2808
        %2841 = vst [vmem:[#allocation2 + $0xe8] sm:$0xff] %v2809
        %2842 = vst [vmem:[#allocation2 + $0xf0] sm:$0xff] %v2810
        %2843 = vst [vmem:[#allocation2 + $0xf8] sm:$0xff] %v2811
        %v2844 = vld [vmem:[#allocation2] sm:$0xff]
        %v2845 = vld [vmem:[#allocation2 + $0x8] sm:$0xff]
        %v2846 = vld [vmem:[#allocation2 + $0x10] sm:$0xff]
        %v2847 = vld [vmem:[#allocation2 + $0x18] sm:$0xff]
        %v2848 = vld [vmem:[#allocation2 + $0x20] sm:$0xff]
        %v2849 = vld [vmem:[#allocation2 + $0x28] sm:$0xff]
        %v2850 = vld [vmem:[#allocation2 + $0x30] sm:$0xff]
        %v2851 = vld [vmem:[#allocation2 + $0x38] sm:$0xff]
        %v2852 = vld [vmem:[#allocation2 + $0x40] sm:$0xff]
        %v2853 = vld [vmem:[#allocation2 + $0x48] sm:$0xff]
        %v2854 = vld [vmem:[#allocation2 + $0x50] sm:$0xff]
        %v2855 = vld [vmem:[#allocation2 + $0x58] sm:$0xff]
        %v2856 = vld [vmem:[#allocation2 + $0x60] sm:$0xff]
        %v2857 = vld [vmem:[#allocation2 + $0x68] sm:$0xff]
        %v2858 = vld [vmem:[#allocation2 + $0x70] sm:$0xff]
        %v2859 = vld [vmem:[#allocation2 + $0x78] sm:$0xff]
        %v2860 = vld [vmem:[#allocation2 + $0x80] sm:$0xff]
        %v2861 = vld [vmem:[#allocation2 + $0x88] sm:$0xff]
        %v2862 = vld [vmem:[#allocation2 + $0x90] sm:$0xff]
        %v2863 = vld [vmem:[#allocation2 + $0x98] sm:$0xff]
        %v2864 = vld [vmem:[#allocation2 + $0xa0] sm:$0xff]
        %v2865 = vld [vmem:[#allocation2 + $0xa8] sm:$0xff]
        %v2866 = vld [vmem:[#allocation2 + $0xb0] sm:$0xff]
        %v2867 = vld [vmem:[#allocation2 + $0xb8] sm:$0xff]
        %v2868 = vld [vmem:[#allocation2 + $0xc0] sm:$0xff]
        %v2869 = vld [vmem:[#allocation2 + $0xc8] sm:$0xff]
        %v2870 = vld [vmem:[#allocation2 + $0xd0] sm:$0xff]
        %v2871 = vld [vmem:[#allocation2 + $0xd8] sm:$0xff]
        %v2872 = vld [vmem:[#allocation2 + $0xe0] sm:$0xff]
        %v2873 = vld [vmem:[#allocation2 + $0xe8] sm:$0xff]
        %v2874 = vld [vmem:[#allocation2 + $0xf0] sm:$0xff]
        %v2875 = vld [vmem:[#allocation2 + $0xf8] sm:$0xff]
        %v2876 = vld [vmem:[%s274] sm:$0x1]
        %v2878 = vperm.slane %v2876, 0
        %v2880 = vmul.f32 %v2844, %v2878
        %v2881 = vmul.f32 %v2845, %v2878
        %v2882 = vmul.f32 %v2846, %v2878
        %v2883 = vmul.f32 %v2847, %v2878
        %v2884 = vmul.f32 %v2848, %v2878
        %v2885 = vmul.f32 %v2849, %v2878
        %v2886 = vmul.f32 %v2850, %v2878
        %v2887 = vmul.f32 %v2851, %v2878
        %v2888 = vmul.f32 %v2852, %v2878
        %v2889 = vmul.f32 %v2853, %v2878
        %v2890 = vmul.f32 %v2854, %v2878
        %v2891 = vmul.f32 %v2855, %v2878
        %v2892 = vmul.f32 %v2856, %v2878
        %v2893 = vmul.f32 %v2857, %v2878
        %v2894 = vmul.f32 %v2858, %v2878
        %v2895 = vmul.f32 %v2859, %v2878
        %v2896 = vmul.f32 %v2860, %v2878
        %v2897 = vmul.f32 %v2861, %v2878
        %v2898 = vmul.f32 %v2862, %v2878
        %v2899 = vmul.f32 %v2863, %v2878
        %v2900 = vmul.f32 %v2864, %v2878
        %v2901 = vmul.f32 %v2865, %v2878
        %v2902 = vmul.f32 %v2866, %v2878
        %v2903 = vmul.f32 %v2867, %v2878
        %v2904 = vmul.f32 %v2868, %v2878
        %v2905 = vmul.f32 %v2869, %v2878
        %v2906 = vmul.f32 %v2870, %v2878
        %v2907 = vmul.f32 %v2871, %v2878
        %v2908 = vmul.f32 %v2872, %v2878
        %v2909 = vmul.f32 %v2873, %v2878
        %v2910 = vmul.f32 %v2874, %v2878
        %v2911 = vmul.f32 %v2875, %v2878
        %v2912 = vld [vmem:[%s277] sm:$0x1]
        %v2914 = vperm.slane %v2912, 0
        %v2916 = vadd.f32 %v2880, %v2914
        %v2917 = vadd.f32 %v2881, %v2914
        %v2918 = vadd.f32 %v2882, %v2914
        %v2919 = vadd.f32 %v2883, %v2914
        %v2920 = vadd.f32 %v2884, %v2914
        %v2921 = vadd.f32 %v2885, %v2914
        %v2922 = vadd.f32 %v2886, %v2914
        %v2923 = vadd.f32 %v2887, %v2914
        %v2924 = vadd.f32 %v2888, %v2914
        %v2925 = vadd.f32 %v2889, %v2914
        %v2926 = vadd.f32 %v2890, %v2914
        %v2927 = vadd.f32 %v2891, %v2914
        %v2928 = vadd.f32 %v2892, %v2914
        %v2929 = vadd.f32 %v2893, %v2914
        %v2930 = vadd.f32 %v2894, %v2914
        %v2931 = vadd.f32 %v2895, %v2914
        %v2932 = vadd.f32 %v2896, %v2914
        %v2933 = vadd.f32 %v2897, %v2914
        %v2934 = vadd.f32 %v2898, %v2914
        %v2935 = vadd.f32 %v2899, %v2914
        %v2936 = vadd.f32 %v2900, %v2914
        %v2937 = vadd.f32 %v2901, %v2914
        %v2938 = vadd.f32 %v2902, %v2914
        %v2939 = vadd.f32 %v2903, %v2914
        %v2940 = vadd.f32 %v2904, %v2914
        %v2941 = vadd.f32 %v2905, %v2914
        %v2942 = vadd.f32 %v2906, %v2914
        %v2943 = vadd.f32 %v2907, %v2914
        %v2944 = vadd.f32 %v2908, %v2914
        %v2945 = vadd.f32 %v2909, %v2914
        %v2946 = vadd.f32 %v2910, %v2914
        %v2947 = vadd.f32 %v2911, %v2914
        %v2948 = vmax.f32 %v2916, 0.0
        %v2949 = vmax.f32 %v2917, 0.0
        %v2950 = vmax.f32 %v2918, 0.0
        %v2951 = vmax.f32 %v2919, 0.0
        %v2952 = vmax.f32 %v2920, 0.0
        %v2953 = vmax.f32 %v2921, 0.0
        %v2954 = vmax.f32 %v2922, 0.0
        %v2955 = vmax.f32 %v2923, 0.0
        %v2956 = vmax.f32 %v2924, 0.0
        %v2957 = vmax.f32 %v2925, 0.0
        %v2958 = vmax.f32 %v2926, 0.0
        %v2959 = vmax.f32 %v2927, 0.0
        %v2960 = vmax.f32 %v2928, 0.0
        %v2961 = vmax.f32 %v2929, 0.0
        %v2962 = vmax.f32 %v2930, 0.0
        %v2963 = vmax.f32 %v2931, 0.0
        %v2964 = vmax.f32 %v2932, 0.0
        %v2965 = vmax.f32 %v2933, 0.0
        %v2966 = vmax.f32 %v2934, 0.0
        %v2967 = vmax.f32 %v2935, 0.0
        %v2968 = vmax.f32 %v2936, 0.0
        %v2969 = vmax.f32 %v2937, 0.0
        %v2970 = vmax.f32 %v2938, 0.0
        %v2971 = vmax.f32 %v2939, 0.0
        %v2972 = vmax.f32 %v2940, 0.0
        %v2973 = vmax.f32 %v2941, 0.0
        %v2974 = vmax.f32 %v2942, 0.0
        %v2975 = vmax.f32 %v2943, 0.0
        %v2976 = vmax.f32 %v2944, 0.0
        %v2977 = vmax.f32 %v2945, 0.0
        %v2978 = vmax.f32 %v2946, 0.0
        %v2979 = vmax.f32 %v2947, 0.0
        %2980 = vst [vmem:[%s258] sm:$0xff] %v2948
        %2981 = vst [vmem:[%s258 + $0x8] sm:$0xff] %v2949
        %2982 = vst [vmem:[%s258 + $0x10] sm:$0xff] %v2950
        %2983 = vst [vmem:[%s258 + $0x18] sm:$0xff] %v2951
        %2984 = vst [vmem:[%s258 + $0x20] sm:$0xff] %v2952
        %2985 = vst [vmem:[%s258 + $0x28] sm:$0xff] %v2953
        %2986 = vst [vmem:[%s258 + $0x30] sm:$0xff] %v2954
        %2987 = vst [vmem:[%s258 + $0x38] sm:$0xff] %v2955
        %2988 = vst [vmem:[%s258 + $0x40] sm:$0xff] %v2956
        %2989 = vst [vmem:[%s258 + $0x48] sm:$0xff] %v2957
        %2990 = vst [vmem:[%s258 + $0x50] sm:$0xff] %v2958
        %2991 = vst [vmem:[%s258 + $0x58] sm:$0xff] %v2959
        %2992 = vst [vmem:[%s258 + $0x60] sm:$0xff] %v2960
        %2993 = vst [vmem:[%s258 + $0x68] sm:$0xff] %v2961
        %2994 = vst [vmem:[%s258 + $0x70] sm:$0xff] %v2962
        %2995 = vst [vmem:[%s258 + $0x78] sm:$0xff] %v2963
        %2996 = vst [vmem:[%s258 + $0x80] sm:$0xff] %v2964
        %2997 = vst [vmem:[%s258 + $0x88] sm:$0xff] %v2965
        %2998 = vst [vmem:[%s258 + $0x90] sm:$0xff] %v2966
        %2999 = vst [vmem:[%s258 + $0x98] sm:$0xff] %v2967
        %3000 = vst [vmem:[%s258 + $0xa0] sm:$0xff] %v2968
        %3001 = vst [vmem:[%s258 + $0xa8] sm:$0xff] %v2969
        %3002 = vst [vmem:[%s258 + $0xb0] sm:$0xff] %v2970
        %3003 = vst [vmem:[%s258 + $0xb8] sm:$0xff] %v2971
        %3004 = vst [vmem:[%s258 + $0xc0] sm:$0xff] %v2972
        %3005 = vst [vmem:[%s258 + $0xc8] sm:$0xff] %v2973
        %3006 = vst [vmem:[%s258 + $0xd0] sm:$0xff] %v2974
        %3007 = vst [vmem:[%s258 + $0xd8] sm:$0xff] %v2975
        %3008 = vst [vmem:[%s258 + $0xe0] sm:$0xff] %v2976
        %3009 = vst [vmem:[%s258 + $0xe8] sm:$0xff] %v2977
        %3010 = vst [vmem:[%s258 + $0xf0] sm:$0xff] %v2978
        %3011 = vst [vmem:[%s258 + $0xf8] sm:$0xff] %v2979
        %s3012 = sand.u32 %s155, 1
        %s3013 = scalar_lea.sflag [#allocation4], %s3012
        %s3014 = sand.u32 %s155, 1
        %s3015 = smul.addr %s3014, 256
        %s3016 = scalar_lea.vmem [#allocation3], %s3015
        // Predicated region
        $region37: #{_lambda_.5} parent=35 // pred_check
          %p3017 = pneg %p165
        $region38: #{_lambda_.5} parent=35 // pred_check_branch
          %3019 = sbr.rel (%p3017) target = $region40
        $region39: #{_lambda_.5} parent=35 // pred_region
          %s3020 = smul.u32 16, %s25
          %3022 = vsyncadd %s3013, 0
          %s3023 = smul.addr %s3020, 2
          %s3024 = sadd.s32 %s24, %s3023
          %s3025 = smul.addr %s23, 32
          %s3026 = sadd.s32 %s3024, %s3025
          %s3027 = smul.addr %s3026, 8
          %s3028 = scalar_lea.hbm %s4, %s3027
          %s3029 = sshll.u32 %s3016, 4
          %s3030 = int_to_ptr.vmem [resolvable:$true] %s3029
          %s3031 = sshll.u32 %s3028, 4
          %s3032 = int_to_ptr.hbm [resolvable:$true] %s3031
          %3037 = dma.vmem_to_hbm [thread:$0]  %s3030, 4096, %s3032, %s3013, 128, 128, 8
        $region40: #{_lambda_.5} parent=35 // pred_fallthru
          _
      $region36: #{_lambda_.5} parent=5 // pred_fallthru
        _
      %p3038 = scmp.le.s32.totalorder 2, %s13
      // Predicated region
      $region41: #{_lambda_.5} parent=5 // pred_check
        %p3039 = pneg %p3038
      $region42: #{_lambda_.5} parent=5 // pred_check_branch
        %3041 = sbr.rel (%p3039) target = $region44
      $region43: #{_lambda_.5} parent=5 // pred_region
        %s3042 = ssub.s32 %s13, 2
        // Predicated region
        $region45: #{_lambda_.5} parent=43 // pred_check
          %p3043 = pneg %p171
        $region46: #{_lambda_.5} parent=43 // pred_check_branch
          %3045 = sbr.rel (%p3043) target = $region48
        $region47: #{_lambda_.5} parent=43 // pred_region
          %s3046 = sand.u32 %s156, 1
          %s3047 = scalar_lea.sflag [#allocation4], %s3046
          %s3048 = sand.u32 %s156, 1
          %s3049 = smul.addr %s3048, 256
          %s3050 = scalar_lea.vmem [#allocation3], %s3049
          %3052 = dma.done %s3047, 4096
        $region48: #{_lambda_.5} parent=43 // pred_fallthru
          _
      $region44: #{_lambda_.5} parent=5 // pred_fallthru
        _
    $region6: #{_lambda_.5} parent=1 // loop_footer
      %s17 = sadd.s32 1, %s13
    $region7: #{_lambda_.5} parent=1 // loop_footer_branch
      %12 = sbr.rel target = $region3
    $region8: #{_lambda_.5} parent=1 // loop_exit
      _
    %3053 = vsyncpa [#allocation4], 1
    %s3054 = scalar_lea.sflag [#allocation4], 1
    %3055 = vsyncpa %s3054, 1

// kernel: _lambda_.4
$region0: #{_lambda_.4}
  #allocation0 [shape = 'u32[]', space=smem, size = 0x4, offset = 0x4, fixed_abs, tag = 'smem constant byte address 0x4 - core index']
  #allocation1 [shape = 'u32[72,128]{1,0:T(1,128)}', space=vmem, size = 0x9000, scoped, tag = 'internal scratch']
  #allocation2 [shape = 'f32[256,128]{1,0:T(8,128)}', space=vmem, size = 0x20000, scoped, tag = 'scratch operand']
  %s0 = inlined_call_operand.vmem [shape: bf16[2,1,18,16,768], index: 0, kind: input, shape index: {}]
  %s1 = inlined_call_operand.vmem [shape: bf16[3,768,128], index: 1, kind: input, shape index: {}]
  %s2 = inlined_call_operand.vmem [shape: f32[1,128], index: 2, kind: input, shape index: {}]
  %s3 = inlined_call_operand.vmem [shape: f32[1,128], index: 3, kind: input, shape index: {}]
  %s4 = inlined_call_operand.vmem [shape: bf16[2,16,16,128], index: 4, kind: output, shape index: {}]
  %s5 = sld [smem:[#allocation0]]
  $region49: #{_lambda_.4} parent=0
    _
  %s7 = ssub.s32 1, %s5
  %s8 = scalar_select 0, %s7, %s5
  loop: start=0, step=1, limit=4
  $region2: #{_lambda_.4} parent=0 // loop_pre_header
    _
  $region3: #{_lambda_.4} parent=0 // loop_header
    %s10 = sphi 0, %s14
    %p11 = scmp.ge.s32.totalorder %s10, 4
    %s17 = sphi 0, %s36
    %s18 = sphi 0, %s32
    %s19 = sphi 0, %s28
    %s20 = sphi 0, %s17
    %s21 = sphi 0, %s18
    %s22 = sphi 0, %s19
    %s23 = sphi 0, %s20
    %s24 = sphi 0, %s21
    %s25 = sphi 0, %s22
    %s41 = sphi 0, %s43
    %s44 = sphi 0, %s41
    %s45 = sphi 0, %s44
    %s61 = sphi 0, %s45
    %s67 = sphi 0, %s69
    %s70 = sphi 0, %s67
    %s71 = sphi 0, %s70
    %s87 = sphi 0, %s71
    %s93 = sphi 0, %s95
    %s96 = sphi 0, %s93
    %s97 = sphi 0, %s96
    %s113 = sphi 0, %s97
    %s119 = sphi 0, %s121
    %s122 = sphi 0, %s119
    %s123 = sphi 0, %s122
    %s139 = sphi 0, %s123
    %s149 = sphi 0, %s151
    %s152 = sphi 0, %s149
    %s153 = sphi 0, %s152
    %s169 = sphi 0, %s153
  $region4: #{_lambda_.4} parent=0 // loop_header_branch
    %13 = sbr.rel (%p11) target = $region8
  $region5: #{_lambda_.4} parent=0 // loop_body
    %s15 = ssub.s32 %s10, 1
    %s16 = ssub.s32 %s10, 2
    %s26 = sadd.s32 1, %s19
    %p27 = scmp.ge.s32.totalorder %s26, 1
    %s28 = scalar_select %p27, 0, %s26
    %s29 = sadd.s32 1, %s18
    %s30 = scalar_select %p27, %s29, %s18
    %p31 = scmp.ge.s32.totalorder %s30, 1
    %s32 = scalar_select %p31, 0, %s30
    %s33 = sadd.s32 1, %s17
    %s34 = scalar_select %p31, %s33, %s17
    %p35 = scmp.ge.s32.totalorder %s34, 2
    %s36 = scalar_select %p35, 0, %s34
    %s37 = ssub.s32 %s17, %s36
    %s38 = ssub.s32 %s19, %s28
    %s39 = sor.u32 %s37, %s38
    %p40 = scmp.eq.s32.totalorder %s39, 0
    %s42 = sadd.s32 %s41, 1
    %s43 = scalar_select %p40, %s41, %s42
    %p46 = pneg %p40
    %p47 = scmp.eq.s32.totalorder %s10, 1
    %p48 = por %p46, %p47
    %p49 = scmp.ne.s32.totalorder %s41, %s44
    %p50 = scmp.eq.s32.totalorder %s10, 0
    %p51 = por %p49, %p50
    %p52 = scmp.ne.s32.totalorder %s41, %s44
    %p53 = scmp.eq.s32.totalorder %s15, 1
    %p54 = por %p52, %p53
    %p55 = scmp.ne.s32.totalorder %s44, %s45
    %p56 = scmp.eq.s32.totalorder %s15, 0
    %p57 = por %p55, %p56
    %p58 = scmp.ne.s32.totalorder %s44, %s45
    %p59 = scmp.eq.s32.totalorder %s16, 1
    %p60 = por %p58, %p59
    %p62 = scmp.ne.s32.totalorder %s45, %s61
    %p63 = scmp.eq.s32.totalorder %s16, 0
    %p64 = por %p62, %p63
    %s65 = ssub.s32 %s18, %s32
    %p66 = scmp.eq.s32.totalorder %s65, 0
    %s68 = sadd.s32 %s67, 1
    %s69 = scalar_select %p66, %s67, %s68
    %p72 = pneg %p66
    %p73 = scmp.eq.s32.totalorder %s10, 1
    %p74 = por %p72, %p73
    %p75 = scmp.ne.s32.totalorder %s67, %s70
    %p76 = scmp.eq.s32.totalorder %s10, 0
    %p77 = por %p75, %p76
    %p78 = scmp.ne.s32.totalorder %s67, %s70
    %p79 = scmp.eq.s32.totalorder %s15, 1
    %p80 = por %p78, %p79
    %p81 = scmp.ne.s32.totalorder %s70, %s71
    %p82 = scmp.eq.s32.totalorder %s15, 0
    %p83 = por %p81, %p82
    %p84 = scmp.ne.s32.totalorder %s70, %s71
    %p85 = scmp.eq.s32.totalorder %s16, 1
    %p86 = por %p84, %p85
    %p88 = scmp.ne.s32.totalorder %s71, %s87
    %p89 = scmp.eq.s32.totalorder %s16, 0
    %p90 = por %p88, %p89
    %s91 = ssub.s32 %s18, %s32
    %p92 = scmp.eq.s32.totalorder %s91, 0
    %s94 = sadd.s32 %s93, 1
    %s95 = scalar_select %p92, %s93, %s94
    %p98 = pneg %p92
    %p99 = scmp.eq.s32.totalorder %s10, 1
    %p100 = por %p98, %p99
    %p101 = scmp.ne.s32.totalorder %s93, %s96
    %p102 = scmp.eq.s32.totalorder %s10, 0
    %p103 = por %p101, %p102
    %p104 = scmp.ne.s32.totalorder %s93, %s96
    %p105 = scmp.eq.s32.totalorder %s15, 1
    %p106 = por %p104, %p105
    %p107 = scmp.ne.s32.totalorder %s96, %s97
    %p108 = scmp.eq.s32.totalorder %s15, 0
    %p109 = por %p107, %p108
    %p110 = scmp.ne.s32.totalorder %s96, %s97
    %p111 = scmp.eq.s32.totalorder %s16, 1
    %p112 = por %p110, %p111
    %p114 = scmp.ne.s32.totalorder %s97, %s113
    %p115 = scmp.eq.s32.totalorder %s16, 0
    %p116 = por %p114, %p115
    %s117 = ssub.s32 %s18, %s32
    %p118 = scmp.eq.s32.totalorder %s117, 0
    %s120 = sadd.s32 %s119, 1
    %s121 = scalar_select %p118, %s119, %s120
    %p124 = pneg %p118
    %p125 = scmp.eq.s32.totalorder %s10, 1
    %p126 = por %p124, %p125
    %p127 = scmp.ne.s32.totalorder %s119, %s122
    %p128 = scmp.eq.s32.totalorder %s10, 0
    %p129 = por %p127, %p128
    %p130 = scmp.ne.s32.totalorder %s119, %s122
    %p131 = scmp.eq.s32.totalorder %s15, 1
    %p132 = por %p130, %p131
    %p133 = scmp.ne.s32.totalorder %s122, %s123
    %p134 = scmp.eq.s32.totalorder %s15, 0
    %p135 = por %p133, %p134
    %p136 = scmp.ne.s32.totalorder %s122, %s123
    %p137 = scmp.eq.s32.totalorder %s16, 1
    %p138 = por %p136, %p137
    %p140 = scmp.ne.s32.totalorder %s123, %s139
    %p141 = scmp.eq.s32.totalorder %s16, 0
    %p142 = por %p140, %p141
    %s143 = ssub.s32 %s17, %s36
    %s144 = ssub.s32 %s19, %s28
    %s145 = sor.u32 %s143, %s144
    %s146 = ssub.s32 %s18, %s32
    %s147 = sor.u32 %s145, %s146
    %p148 = scmp.eq.s32.totalorder %s147, 0
    %s150 = sadd.s32 %s149, 1
    %s151 = scalar_select %p148, %s149, %s150
    %p154 = pneg %p148
    %p155 = scmp.eq.s32.totalorder %s10, 1
    %p156 = por %p154, %p155
    %p157 = scmp.ne.s32.totalorder %s149, %s152
    %p158 = scmp.eq.s32.totalorder %s10, 0
    %p159 = por %p157, %p158
    %p160 = scmp.ne.s32.totalorder %s149, %s152
    %p161 = scmp.eq.s32.totalorder %s15, 1
    %p162 = por %p160, %p161
    %p163 = scmp.ne.s32.totalorder %s152, %s153
    %p164 = scmp.eq.s32.totalorder %s15, 0
    %p165 = por %p163, %p164
    %p166 = scmp.ne.s32.totalorder %s152, %s153
    %p167 = scmp.eq.s32.totalorder %s16, 1
    %p168 = por %p166, %p167
    %p170 = scmp.ne.s32.totalorder %s153, %s169
    %p171 = scmp.eq.s32.totalorder %s16, 0
    %p172 = por %p170, %p171
    %p173 = scmp.le.s32.totalorder 1, %s10
    %p174 = scmp.lt.s32.totalorder %s10, 3
    %p175 = pnand %p173, %p174
    %p176 = pneg %p175
    // Predicated region
    $region9: #{_lambda_.4} parent=5 // pred_check
      _
    $region10: #{_lambda_.4} parent=5 // pred_check_branch
      %178 = sbr.rel (%p175) target = $region12
    $region11: #{_lambda_.4} parent=5 // pred_region
      %s179 = ssub.s32 %s10, 1
      // Predicated region
      $region13: #{_lambda_.4} parent=11 // pred_check
        %p180 = pneg %p83
      $region14: #{_lambda_.4} parent=11 // pred_check_branch
        %182 = sbr.rel (%p180) target = $region16
      $region15: #{_lambda_.4} parent=11 // pred_region
        %p183 = scmp.lt.s32.totalorder %s21, 0
        %s184 = scalar_select %p183, %s21, 0
        %s185 = smul.addr %s184, 4
        %s186 = scalar_lea.vmem %s1, %s185
      $region16: #{_lambda_.4} parent=11 // pred_fallthru
        _
      // Predicated region
      $region17: #{_lambda_.4} parent=11 // pred_check
        %p187 = pneg %p109
      $region18: #{_lambda_.4} parent=11 // pred_check_branch
        %189 = sbr.rel (%p187) target = $region20
      $region19: #{_lambda_.4} parent=11 // pred_region
        %p190 = scmp.lt.s32.totalorder %s21, 0
        %s191 = scalar_select %p190, %s21, 0
        %s192 = scalar_lea.vmem %s2, %s191
      $region20: #{_lambda_.4} parent=11 // pred_fallthru
        _
      // Predicated region
      $region21: #{_lambda_.4} parent=11 // pred_check
        %p193 = pneg %p135
      $region22: #{_lambda_.4} parent=11 // pred_check_branch
        %195 = sbr.rel (%p193) target = $region24
      $region23: #{_lambda_.4} parent=11 // pred_region
        %p196 = scmp.lt.s32.totalorder %s21, 0
        %s197 = scalar_select %p196, %s21, 0
        %s198 = scalar_lea.vmem %s3, %s197
      $region24: #{_lambda_.4} parent=11 // pred_fallthru
        _
    $region12: #{_lambda_.4} parent=5 // pred_fallthru
      _
    %p199 = scmp.lt.s32.totalorder %s10, 2
    // Predicated region
    $region25: #{_lambda_.4} parent=5 // pred_check
      %p200 = pneg %p199
    $region26: #{_lambda_.4} parent=5 // pred_check_branch
      %202 = sbr.rel (%p200) target = $region28
    $region27: #{_lambda_.4} parent=5 // pred_region
      // Predicated region
      $region29: #{_lambda_.4} parent=27 // pred_check
        %p203 = pneg %p51
      $region30: #{_lambda_.4} parent=27 // pred_check_branch
        %205 = sbr.rel (%p203) target = $region32
      $region31: #{_lambda_.4} parent=27 // pred_region
        %p206 = scmp.lt.s32.totalorder %s17, 1
        %s207 = scalar_select %p206, %s17, 1
        %p208 = scmp.lt.s32.totalorder %s19, 0
        %s209 = scalar_select %p208, %s19, 0
        %s210 = smul.addr %s209, 216
        %s211 = smul.addr %s207, 216
        %s212 = sadd.s32 %s210, %s211
        %s213 = smul.addr %s212, 4
        %s214 = scalar_lea.vmem %s0, %s213
      $region32: #{_lambda_.4} parent=27 // pred_fallthru
        _
    $region28: #{_lambda_.4} parent=5 // pred_fallthru
      _
    %p215 = scmp.le.s32.totalorder 1, %s10
    %p216 = scmp.lt.s32.totalorder %s10, 3
    %p217 = pnand %p215, %p216
    %p218 = pneg %p217
    // Predicated region
    $region33: #{_lambda_.4} parent=5 // pred_check
      _
    $region34: #{_lambda_.4} parent=5 // pred_check_branch
      %220 = sbr.rel (%p217) target = $region36
    $region35: #{_lambda_.4} parent=5 // pred_region
      %s221 = ssub.s32 %s10, 1
      %p222 = scmp.lt.s32.totalorder %s20, 1
      %s223 = scalar_select %p222, %s20, 1
      %p224 = scmp.lt.s32.totalorder %s22, 0
      %s225 = scalar_select %p224, %s22, 0
      %s226 = smul.addr %s225, 216
      %s227 = smul.addr %s223, 216
      %s228 = sadd.s32 %s226, %s227
      %s229 = smul.addr %s228, 4
      %s230 = scalar_lea.vmem %s0, %s229
      %p231 = pneg %p57
      %p232 = pneg %p54
      %p233 = scmp.lt.s32.totalorder %s21, 0
      %s234 = scalar_select %p233, %s21, 0
      %s235 = smul.addr %s234, 4
      %s236 = scalar_lea.vmem %s1, %s235
      %p237 = pneg %p83
      %p238 = pneg %p80
      %p239 = scmp.lt.s32.totalorder %s21, 0
      %s240 = scalar_select %p239, %s21, 0
      %s241 = scalar_lea.vmem %s2, %s240
      %p242 = pneg %p109
      %p243 = pneg %p106
      %p244 = scmp.lt.s32.totalorder %s21, 0
      %s245 = scalar_select %p244, %s21, 0
      %s246 = scalar_lea.vmem %s3, %s245
      %p247 = pneg %p135
      %p248 = pneg %p132
      %p249 = pneg %p165
      %p250 = pneg %p162
      %s251 = smul.u32 16, %s22
      %p252 = scmp.lt.s32.totalorder %s20, 1
      %s253 = scalar_select %p252, %s20, 1
      %p254 = scmp.lt.s32.totalorder %s251, 15
      %s255 = scalar_select %p254, %s251, 15
      %p256 = scmp.lt.s32.totalorder %s21, 0
      %s257 = scalar_select %p256, %s21, 0
      %s258 = smul.addr %s255, 2
      %s259 = sadd.s32 %s257, %s258
      %s260 = smul.addr %s253, 32
      %s261 = sadd.s32 %s259, %s260
      %s262 = smul.addr %s261, 4
      %s263 = scalar_lea.vmem %s4, %s262
      %p264 = scmp.lt.s32.totalorder %s20, 1
      %s265 = scalar_select %p264, %s20, 1
      %p266 = scmp.lt.s32.totalorder %s22, 0
      %s267 = scalar_select %p266, %s22, 0
      %s268 = smul.addr %s267, 216
      %s269 = smul.addr %s265, 216
      %s270 = sadd.s32 %s268, %s269
      %s271 = smul.addr %s270, 4
      %s272 = scalar_lea.vmem %s0, %s271
      %p273 = scmp.lt.s32.totalorder %s21, 0
      %s274 = scalar_select %p273, %s21, 0
      %s275 = smul.addr %s274, 4
      %s276 = scalar_lea.vmem %s1, %s275
      %p277 = scmp.lt.s32.totalorder %s21, 0
      %s278 = scalar_select %p277, %s21, 0
      %s279 = scalar_lea.vmem %s2, %s278
      %p280 = scmp.lt.s32.totalorder %s21, 0
      %s281 = scalar_select %p280, %s21, 0
      %s282 = scalar_lea.vmem %s3, %s281
      %s283 = smul.u32 16, %s22
      %p284 = scmp.lt.s32.totalorder %s20, 1
      %s285 = scalar_select %p284, %s20, 1
      %p286 = scmp.lt.s32.totalorder %s283, 15
      %s287 = scalar_select %p286, %s283, 15
      %p288 = scmp.lt.s32.totalorder %s21, 0
      %s289 = scalar_select %p288, %s21, 0
      %s290 = smul.addr %s287, 2
      %s291 = sadd.s32 %s289, %s290
      %s292 = smul.addr %s285, 32
      %s293 = sadd.s32 %s291, %s292
      %s294 = smul.addr %s293, 4
      %s295 = scalar_lea.vmem %s4, %s294
      %s296 = smul.u32 16, %s22
      %v297 = vld [vmem:[%s272] sm:$0xff]
      %v298 = vld [vmem:[%s272 + $0x8] sm:$0xff]
      %v299 = vld [vmem:[%s272 + $0x10] sm:$0xff]
      %v300 = vld [vmem:[%s272 + $0x18] sm:$0xff]
      %v301 = vld [vmem:[%s272 + $0x20] sm:$0xff]
      %v302 = vld [vmem:[%s272 + $0x28] sm:$0xff]
      %v303 = vld [vmem:[%s272 + $0x30] sm:$0xff]
      %v304 = vld [vmem:[%s272 + $0x38] sm:$0xff]
      %v305 = vld [vmem:[%s272 + $0x40] sm:$0xff]
      %v306 = vld [vmem:[%s272 + $0x48] sm:$0xff]
      %v307 = vld [vmem:[%s272 + $0x50] sm:$0xff]
      %v308 = vld [vmem:[%s272 + $0x58] sm:$0xff]
      %v309 = vld [vmem:[%s272 + $0x60] sm:$0xff]
      %v310 = vld [vmem:[%s272 + $0x68] sm:$0xff]
      %v311 = vld [vmem:[%s272 + $0x70] sm:$0xff]
      %v312 = vld [vmem:[%s272 + $0x78] sm:$0xff]
      %v313 = vld [vmem:[%s272 + $0x80] sm:$0xff]
      %v314 = vld [vmem:[%s272 + $0x88] sm:$0xff]
      %v315 = vld [vmem:[%s272 + $0x90] sm:$0xff]
      %v316 = vld [vmem:[%s272 + $0x98] sm:$0xff]
      %v317 = vld [vmem:[%s272 + $0xa0] sm:$0xff]
      %v318 = vld [vmem:[%s272 + $0xa8] sm:$0xff]
      %v319 = vld [vmem:[%s272 + $0xb0] sm:$0xff]
      %v320 = vld [vmem:[%s272 + $0xb8] sm:$0xff]
      %v321 = vld [vmem:[%s272 + $0xc0] sm:$0xff]
      %v322 = vld [vmem:[%s272 + $0xc8] sm:$0xff]
      %v323 = vld [vmem:[%s272 + $0xd0] sm:$0xff]
      %v324 = vld [vmem:[%s272 + $0xd8] sm:$0xff]
      %v325 = vld [vmem:[%s272 + $0xe0] sm:$0xff]
      %v326 = vld [vmem:[%s272 + $0xe8] sm:$0xff]
      %v327 = vld [vmem:[%s272 + $0xf0] sm:$0xff]
      %v328 = vld [vmem:[%s272 + $0xf8] sm:$0xff]
      %v329 = vld [vmem:[%s272 + $0x100] sm:$0xff]
      %v330 = vld [vmem:[%s272 + $0x108] sm:$0xff]
      %v331 = vld [vmem:[%s272 + $0x110] sm:$0xff]
      %v332 = vld [vmem:[%s272 + $0x118] sm:$0xff]
      %v333 = vld [vmem:[%s272 + $0x120] sm:$0xff]
      %v334 = vld [vmem:[%s272 + $0x128] sm:$0xff]
      %v335 = vld [vmem:[%s272 + $0x130] sm:$0xff]
      %v336 = vld [vmem:[%s272 + $0x138] sm:$0xff]
      %v337 = vld [vmem:[%s272 + $0x140] sm:$0xff]
      %v338 = vld [vmem:[%s272 + $0x148] sm:$0xff]
      %v339 = vld [vmem:[%s272 + $0x150] sm:$0xff]
      %v340 = vld [vmem:[%s272 + $0x158] sm:$0xff]
      %v341 = vld [vmem:[%s272 + $0x160] sm:$0xff]
      %v342 = vld [vmem:[%s272 + $0x168] sm:$0xff]
      %v343 = vld [vmem:[%s272 + $0x170] sm:$0xff]
      %v344 = vld [vmem:[%s272 + $0x178] sm:$0xff]
      %v345 = vld [vmem:[%s272 + $0x180] sm:$0xff]
      %v346 = vld [vmem:[%s272 + $0x188] sm:$0xff]
      %v347 = vld [vmem:[%s272 + $0x190] sm:$0xff]
      %v348 = vld [vmem:[%s272 + $0x198] sm:$0xff]
      %v349 = vld [vmem:[%s272 + $0x1a0] sm:$0xff]
      %v350 = vld [vmem:[%s272 + $0x1a8] sm:$0xff]
      %v351 = vld [vmem:[%s272 + $0x1b0] sm:$0xff]
      %v352 = vld [vmem:[%s272 + $0x1b8] sm:$0xff]
      %v353 = vld [vmem:[%s272 + $0x1c0] sm:$0xff]
      %v354 = vld [vmem:[%s272 + $0x1c8] sm:$0xff]
      %v355 = vld [vmem:[%s272 + $0x1d0] sm:$0xff]
      %v356 = vld [vmem:[%s272 + $0x1d8] sm:$0xff]
      %v357 = vld [vmem:[%s272 + $0x1e0] sm:$0xff]
      %v358 = vld [vmem:[%s272 + $0x1e8] sm:$0xff]
      %v359 = vld [vmem:[%s272 + $0x1f0] sm:$0xff]
      %v360 = vld [vmem:[%s272 + $0x1f8] sm:$0xff]
      %v361 = vld [vmem:[%s272 + $0x200] sm:$0xff]
      %v362 = vld [vmem:[%s272 + $0x208] sm:$0xff]
      %v363 = vld [vmem:[%s272 + $0x210] sm:$0xff]
      %v364 = vld [vmem:[%s272 + $0x218] sm:$0xff]
      %v365 = vld [vmem:[%s272 + $0x220] sm:$0xff]
      %v366 = vld [vmem:[%s272 + $0x228] sm:$0xff]
      %v367 = vld [vmem:[%s272 + $0x230] sm:$0xff]
      %v368 = vld [vmem:[%s272 + $0x238] sm:$0xff]
      %v369 = vld [vmem:[%s272 + $0x240] sm:$0xff]
      %v370 = vld [vmem:[%s272 + $0x248] sm:$0xff]
      %v371 = vld [vmem:[%s272 + $0x250] sm:$0xff]
      %v372 = vld [vmem:[%s272 + $0x258] sm:$0xff]
      %v373 = vld [vmem:[%s272 + $0x260] sm:$0xff]
      %v374 = vld [vmem:[%s272 + $0x268] sm:$0xff]
      %v375 = vld [vmem:[%s272 + $0x270] sm:$0xff]
      %v376 = vld [vmem:[%s272 + $0x278] sm:$0xff]
      %v377 = vld [vmem:[%s272 + $0x280] sm:$0xff]
      %v378 = vld [vmem:[%s272 + $0x288] sm:$0xff]
      %v379 = vld [vmem:[%s272 + $0x290] sm:$0xff]
      %v380 = vld [vmem:[%s272 + $0x298] sm:$0xff]
      %v381 = vld [vmem:[%s272 + $0x2a0] sm:$0xff]
      %v382 = vld [vmem:[%s272 + $0x2a8] sm:$0xff]
      %v383 = vld [vmem:[%s272 + $0x2b0] sm:$0xff]
      %v384 = vld [vmem:[%s272 + $0x2b8] sm:$0xff]
      %v385 = vld [vmem:[%s272 + $0x2c0] sm:$0xff]
      %v386 = vld [vmem:[%s272 + $0x2c8] sm:$0xff]
      %v387 = vld [vmem:[%s272 + $0x2d0] sm:$0xff]
      %v388 = vld [vmem:[%s272 + $0x2d8] sm:$0xff]
      %v389 = vld [vmem:[%s272 + $0x2e0] sm:$0xff]
      %v390 = vld [vmem:[%s272 + $0x2e8] sm:$0xff]
      %v391 = vld [vmem:[%s272 + $0x2f0] sm:$0xff]
      %v392 = vld [vmem:[%s272 + $0x2f8] sm:$0xff]
      %v393 = vld [vmem:[%s276] sm:$0xf]
      %v394 = vld [vmem:[%s276 + $0x4] sm:$0xf]
      %v395 = vld [vmem:[%s276 + $0x8] sm:$0xf]
      %v396 = vld [vmem:[%s276 + $0xc] sm:$0xf]
      %v397 = vld [vmem:[%s276 + $0x10] sm:$0xf]
      %v398 = vld [vmem:[%s276 + $0x14] sm:$0xf]
      %v399 = vld [vmem:[%s276 + $0x18] sm:$0xf]
      %v400 = vld [vmem:[%s276 + $0x1c] sm:$0xf]
      %v401 = vld [vmem:[%s276 + $0x20] sm:$0xf]
      %v402 = vld [vmem:[%s276 + $0x24] sm:$0xf]
      %v403 = vld [vmem:[%s276 + $0x28] sm:$0xf]
      %v404 = vld [vmem:[%s276 + $0x2c] sm:$0xf]
      %v405 = vld [vmem:[%s276 + $0x30] sm:$0xf]
      %v406 = vld [vmem:[%s276 + $0x34] sm:$0xf]
      %v407 = vld [vmem:[%s276 + $0x38] sm:$0xf]
      %v408 = vld [vmem:[%s276 + $0x3c] sm:$0xf]
      %v409 = vld [vmem:[%s276 + $0x40] sm:$0xf]
      %v410 = vld [vmem:[%s276 + $0x44] sm:$0xf]
      %v411 = vld [vmem:[%s276 + $0x48] sm:$0xf]
      %v412 = vld [vmem:[%s276 + $0x4c] sm:$0xf]
      %v413 = vld [vmem:[%s276 + $0x50] sm:$0xf]
      %v414 = vld [vmem:[%s276 + $0x54] sm:$0xf]
      %v415 = vld [vmem:[%s276 + $0x58] sm:$0xf]
      %v416 = vld [vmem:[%s276 + $0x5c] sm:$0xf]
      %v417 = vld [vmem:[%s276 + $0x60] sm:$0xf]
      %v418 = vld [vmem:[%s276 + $0x64] sm:$0xf]
      %v419 = vld [vmem:[%s276 + $0x68] sm:$0xf]
      %v420 = vld [vmem:[%s276 + $0x6c] sm:$0xf]
      %v421 = vld [vmem:[%s276 + $0x70] sm:$0xf]
      %v422 = vld [vmem:[%s276 + $0x74] sm:$0xf]
      %v423 = vld [vmem:[%s276 + $0x78] sm:$0xf]
      %v424 = vld [vmem:[%s276 + $0x7c] sm:$0xf]
      %v425 = vld [vmem:[%s276 + $0x80] sm:$0xf]
      %v426 = vld [vmem:[%s276 + $0x84] sm:$0xf]
      %v427 = vld [vmem:[%s276 + $0x88] sm:$0xf]
      %v428 = vld [vmem:[%s276 + $0x8c] sm:$0xf]
      %v429 = vld [vmem:[%s276 + $0x90] sm:$0xf]
      %v430 = vld [vmem:[%s276 + $0x94] sm:$0xf]
      %v431 = vld [vmem:[%s276 + $0x98] sm:$0xf]
      %v432 = vld [vmem:[%s276 + $0x9c] sm:$0xf]
      %v433 = vld [vmem:[%s276 + $0xa0] sm:$0xf]
      %v434 = vld [vmem:[%s276 + $0xa4] sm:$0xf]
      %v435 = vld [vmem:[%s276 + $0xa8] sm:$0xf]
      %v436 = vld [vmem:[%s276 + $0xac] sm:$0xf]
      %v437 = vld [vmem:[%s276 + $0xb0] sm:$0xf]
      %v438 = vld [vmem:[%s276 + $0xb4] sm:$0xf]
      %v439 = vld [vmem:[%s276 + $0xb8] sm:$0xf]
      %v440 = vld [vmem:[%s276 + $0xbc] sm:$0xf]
      %v441 = vld [vmem:[%s276 + $0xc0] sm:$0xf]
      %v442 = vld [vmem:[%s276 + $0xc4] sm:$0xf]
      %v443 = vld [vmem:[%s276 + $0xc8] sm:$0xf]
      %v444 = vld [vmem:[%s276 + $0xcc] sm:$0xf]
      %v445 = vld [vmem:[%s276 + $0xd0] sm:$0xf]
      %v446 = vld [vmem:[%s276 + $0xd4] sm:$0xf]
      %v447 = vld [vmem:[%s276 + $0xd8] sm:$0xf]
      %v448 = vld [vmem:[%s276 + $0xdc] sm:$0xf]
      %v449 = vld [vmem:[%s276 + $0xe0] sm:$0xf]
      %v450 = vld [vmem:[%s276 + $0xe4] sm:$0xf]
      %v451 = vld [vmem:[%s276 + $0xe8] sm:$0xf]
      %v452 = vld [vmem:[%s276 + $0xec] sm:$0xf]
      %v453 = vld [vmem:[%s276 + $0xf0] sm:$0xf]
      %v454 = vld [vmem:[%s276 + $0xf4] sm:$0xf]
      %v455 = vld [vmem:[%s276 + $0xf8] sm:$0xf]
      %v456 = vld [vmem:[%s276 + $0xfc] sm:$0xf]
      %v457 = vld [vmem:[%s276 + $0x100] sm:$0xf]
      %v458 = vld [vmem:[%s276 + $0x104] sm:$0xf]
      %v459 = vld [vmem:[%s276 + $0x108] sm:$0xf]
      %v460 = vld [vmem:[%s276 + $0x10c] sm:$0xf]
      %v461 = vld [vmem:[%s276 + $0x110] sm:$0xf]
      %v462 = vld [vmem:[%s276 + $0x114] sm:$0xf]
      %v463 = vld [vmem:[%s276 + $0x118] sm:$0xf]
      %v464 = vld [vmem:[%s276 + $0x11c] sm:$0xf]
      %v465 = vld [vmem:[%s276 + $0x120] sm:$0xf]
      %v466 = vld [vmem:[%s276 + $0x124] sm:$0xf]
      %v467 = vld [vmem:[%s276 + $0x128] sm:$0xf]
      %v468 = vld [vmem:[%s276 + $0x12c] sm:$0xf]
      %v469 = vld [vmem:[%s276 + $0x130] sm:$0xf]
      %v470 = vld [vmem:[%s276 + $0x134] sm:$0xf]
      %v471 = vld [vmem:[%s276 + $0x138] sm:$0xf]
      %v472 = vld [vmem:[%s276 + $0x13c] sm:$0xf]
      %v473 = vld [vmem:[%s276 + $0x140] sm:$0xf]
      %v474 = vld [vmem:[%s276 + $0x144] sm:$0xf]
      %v475 = vld [vmem:[%s276 + $0x148] sm:$0xf]
      %v476 = vld [vmem:[%s276 + $0x14c] sm:$0xf]
      %v477 = vld [vmem:[%s276 + $0x150] sm:$0xf]
      %v478 = vld [vmem:[%s276 + $0x154] sm:$0xf]
      %v479 = vld [vmem:[%s276 + $0x158] sm:$0xf]
      %v480 = vld [vmem:[%s276 + $0x15c] sm:$0xf]
      %v481 = vld [vmem:[%s276 + $0x160] sm:$0xf]
      %v482 = vld [vmem:[%s276 + $0x164] sm:$0xf]
      %v483 = vld [vmem:[%s276 + $0x168] sm:$0xf]
      %v484 = vld [vmem:[%s276 + $0x16c] sm:$0xf]
      %v485 = vld [vmem:[%s276 + $0x170] sm:$0xf]
      %v486 = vld [vmem:[%s276 + $0x174] sm:$0xf]
      %v487 = vld [vmem:[%s276 + $0x178] sm:$0xf]
      %v488 = vld [vmem:[%s276 + $0x17c] sm:$0xf]
      %v585 = vunpack.c.l.b16 %v297
      %v586 = vunpack.c.h.b16 %v297
      %v587 = vunpack.c.l.b16 %v298
      %v588 = vunpack.c.h.b16 %v298
      %v589 = vunpack.c.l.b16 %v299
      %v590 = vunpack.c.h.b16 %v299
      %v591 = vunpack.c.l.b16 %v300
      %v592 = vunpack.c.h.b16 %v300
      %v593 = vunpack.c.l.b16 %v301
      %v594 = vunpack.c.h.b16 %v301
      %v595 = vunpack.c.l.b16 %v302
      %v596 = vunpack.c.h.b16 %v302
      %v597 = vunpack.c.l.b16 %v303
      %v598 = vunpack.c.h.b16 %v303
      %v599 = vunpack.c.l.b16 %v304
      %v600 = vunpack.c.h.b16 %v304
      %v601 = vunpack.c.l.b16 %v305
      %v602 = vunpack.c.h.b16 %v305
      %v603 = vunpack.c.l.b16 %v306
      %v604 = vunpack.c.h.b16 %v306
      %v605 = vunpack.c.l.b16 %v307
      %v606 = vunpack.c.h.b16 %v307
      %v607 = vunpack.c.l.b16 %v308
      %v608 = vunpack.c.h.b16 %v308
      %v609 = vunpack.c.l.b16 %v309
      %v610 = vunpack.c.h.b16 %v309
      %v611 = vunpack.c.l.b16 %v310
      %v612 = vunpack.c.h.b16 %v310
      %v613 = vunpack.c.l.b16 %v311
      %v614 = vunpack.c.h.b16 %v311
      %v615 = vunpack.c.l.b16 %v312
      %v616 = vunpack.c.h.b16 %v312
      %v617 = vunpack.c.l.b16 %v313
      %v618 = vunpack.c.h.b16 %v313
      %v619 = vunpack.c.l.b16 %v314
      %v620 = vunpack.c.h.b16 %v314
      %v621 = vunpack.c.l.b16 %v315
      %v622 = vunpack.c.h.b16 %v315
      %v623 = vunpack.c.l.b16 %v316
      %v624 = vunpack.c.h.b16 %v316
      %v625 = vunpack.c.l.b16 %v317
      %v626 = vunpack.c.h.b16 %v317
      %v627 = vunpack.c.l.b16 %v318
      %v628 = vunpack.c.h.b16 %v318
      %v629 = vunpack.c.l.b16 %v319
      %v630 = vunpack.c.h.b16 %v319
      %v631 = vunpack.c.l.b16 %v320
      %v632 = vunpack.c.h.b16 %v320
      %v633 = vunpack.c.l.b16 %v321
      %v634 = vunpack.c.h.b16 %v321
      %v635 = vunpack.c.l.b16 %v322
      %v636 = vunpack.c.h.b16 %v322
      %v637 = vunpack.c.l.b16 %v323
      %v638 = vunpack.c.h.b16 %v323
      %v639 = vunpack.c.l.b16 %v324
      %v640 = vunpack.c.h.b16 %v324
      %v641 = vunpack.c.l.b16 %v325
      %v642 = vunpack.c.h.b16 %v325
      %v643 = vunpack.c.l.b16 %v326
      %v644 = vunpack.c.h.b16 %v326
      %v645 = vunpack.c.l.b16 %v327
      %v646 = vunpack.c.h.b16 %v327
      %v647 = vunpack.c.l.b16 %v328
      %v648 = vunpack.c.h.b16 %v328
      %v649 = vunpack.c.l.b16 %v329
      %v650 = vunpack.c.h.b16 %v329
      %v651 = vunpack.c.l.b16 %v330
      %v652 = vunpack.c.h.b16 %v330
      %v653 = vunpack.c.l.b16 %v331
      %v654 = vunpack.c.h.b16 %v331
      %v655 = vunpack.c.l.b16 %v332
      %v656 = vunpack.c.h.b16 %v332
      %v657 = vunpack.c.l.b16 %v333
      %v658 = vunpack.c.h.b16 %v333
      %v659 = vunpack.c.l.b16 %v334
      %v660 = vunpack.c.h.b16 %v334
      %v661 = vunpack.c.l.b16 %v335
      %v662 = vunpack.c.h.b16 %v335
      %v663 = vunpack.c.l.b16 %v336
      %v664 = vunpack.c.h.b16 %v336
      %v665 = vunpack.c.l.b16 %v337
      %v666 = vunpack.c.h.b16 %v337
      %v667 = vunpack.c.l.b16 %v338
      %v668 = vunpack.c.h.b16 %v338
      %v669 = vunpack.c.l.b16 %v339
      %v670 = vunpack.c.h.b16 %v339
      %v671 = vunpack.c.l.b16 %v340
      %v672 = vunpack.c.h.b16 %v340
      %v673 = vunpack.c.l.b16 %v341
      %v674 = vunpack.c.h.b16 %v341
      %v675 = vunpack.c.l.b16 %v342
      %v676 = vunpack.c.h.b16 %v342
      %v677 = vunpack.c.l.b16 %v343
      %v678 = vunpack.c.h.b16 %v343
      %v679 = vunpack.c.l.b16 %v344
      %v680 = vunpack.c.h.b16 %v344
      %v681 = vunpack.c.l.b16 %v345
      %v682 = vunpack.c.h.b16 %v345
      %v683 = vunpack.c.l.b16 %v346
      %v684 = vunpack.c.h.b16 %v346
      %v685 = vunpack.c.l.b16 %v347
      %v686 = vunpack.c.h.b16 %v347
      %v687 = vunpack.c.l.b16 %v348
      %v688 = vunpack.c.h.b16 %v348
      %v689 = vunpack.c.l.b16 %v349
      %v690 = vunpack.c.h.b16 %v349
      %v691 = vunpack.c.l.b16 %v350
      %v692 = vunpack.c.h.b16 %v350
      %v693 = vunpack.c.l.b16 %v351
      %v694 = vunpack.c.h.b16 %v351
      %v695 = vunpack.c.l.b16 %v352
      %v696 = vunpack.c.h.b16 %v352
      %v697 = vunpack.c.l.b16 %v353
      %v698 = vunpack.c.h.b16 %v353
      %v699 = vunpack.c.l.b16 %v354
      %v700 = vunpack.c.h.b16 %v354
      %v701 = vunpack.c.l.b16 %v355
      %v702 = vunpack.c.h.b16 %v355
      %v703 = vunpack.c.l.b16 %v356
      %v704 = vunpack.c.h.b16 %v356
      %v705 = vunpack.c.l.b16 %v357
      %v706 = vunpack.c.h.b16 %v357
      %v707 = vunpack.c.l.b16 %v358
      %v708 = vunpack.c.h.b16 %v358
      %v709 = vunpack.c.l.b16 %v359
      %v710 = vunpack.c.h.b16 %v359
      %v711 = vunpack.c.l.b16 %v360
      %v712 = vunpack.c.h.b16 %v360
      %v713 = vunpack.c.l.b16 %v361
      %v714 = vunpack.c.h.b16 %v361
      %v715 = vunpack.c.l.b16 %v362
      %v716 = vunpack.c.h.b16 %v362
      %v717 = vunpack.c.l.b16 %v363
      %v718 = vunpack.c.h.b16 %v363
      %v719 = vunpack.c.l.b16 %v364
      %v720 = vunpack.c.h.b16 %v364
      %v721 = vunpack.c.l.b16 %v365
      %v722 = vunpack.c.h.b16 %v365
      %v723 = vunpack.c.l.b16 %v366
      %v724 = vunpack.c.h.b16 %v366
      %v725 = vunpack.c.l.b16 %v367
      %v726 = vunpack.c.h.b16 %v367
      %v727 = vunpack.c.l.b16 %v368
      %v728 = vunpack.c.h.b16 %v368
      %v729 = vunpack.c.l.b16 %v369
      %v730 = vunpack.c.h.b16 %v369
      %v731 = vunpack.c.l.b16 %v370
      %v732 = vunpack.c.h.b16 %v370
      %v733 = vunpack.c.l.b16 %v371
      %v734 = vunpack.c.h.b16 %v371
      %v735 = vunpack.c.l.b16 %v372
      %v736 = vunpack.c.h.b16 %v372
      %v737 = vunpack.c.l.b16 %v373
      %v738 = vunpack.c.h.b16 %v373
      %v739 = vunpack.c.l.b16 %v374
      %v740 = vunpack.c.h.b16 %v374
      %v741 = vunpack.c.l.b16 %v375
      %v742 = vunpack.c.h.b16 %v375
      %v743 = vunpack.c.l.b16 %v376
      %v744 = vunpack.c.h.b16 %v376
      %v745 = vunpack.c.l.b16 %v377
      %v746 = vunpack.c.h.b16 %v377
      %v747 = vunpack.c.l.b16 %v378
      %v748 = vunpack.c.h.b16 %v378
      %v749 = vunpack.c.l.b16 %v379
      %v750 = vunpack.c.h.b16 %v379
      %v751 = vunpack.c.l.b16 %v380
      %v752 = vunpack.c.h.b16 %v380
      %v753 = vunpack.c.l.b16 %v381
      %v754 = vunpack.c.h.b16 %v381
      %v755 = vunpack.c.l.b16 %v382
      %v756 = vunpack.c.h.b16 %v382
      %v757 = vunpack.c.l.b16 %v383
      %v758 = vunpack.c.h.b16 %v383
      %v759 = vunpack.c.l.b16 %v384
      %v760 = vunpack.c.h.b16 %v384
      %v761 = vunpack.c.l.b16 %v385
      %v762 = vunpack.c.h.b16 %v385
      %v763 = vunpack.c.l.b16 %v386
      %v764 = vunpack.c.h.b16 %v386
      %v765 = vunpack.c.l.b16 %v387
      %v766 = vunpack.c.h.b16 %v387
      %v767 = vunpack.c.l.b16 %v388
      %v768 = vunpack.c.h.b16 %v388
      %v769 = vunpack.c.l.b16 %v389
      %v770 = vunpack.c.h.b16 %v389
      %v771 = vunpack.c.l.b16 %v390
      %v772 = vunpack.c.h.b16 %v390
      %v773 = vunpack.c.l.b16 %v391
      %v774 = vunpack.c.h.b16 %v391
      %v775 = vunpack.c.l.b16 %v392
      %v776 = vunpack.c.h.b16 %v392
      %v777 = vpack.c.b16 %v591, %v585
      %v778 = vpack.c.b16 %v592, %v586
      %v779 = vpack.c.b16 %v593, %v587
      %v780 = vpack.c.b16 %v594, %v588
      %v781 = vpack.c.b16 %v595, %v589
      %v782 = vpack.c.b16 %v596, %v590
      %v783 = vpack.c.b16 %v603, %v597
      %v784 = vpack.c.b16 %v604, %v598
      %v785 = vpack.c.b16 %v605, %v599
      %v786 = vpack.c.b16 %v606, %v600
      %v787 = vpack.c.b16 %v607, %v601
      %v788 = vpack.c.b16 %v608, %v602
      %v789 = vpack.c.b16 %v615, %v609
      %v790 = vpack.c.b16 %v616, %v610
      %v791 = vpack.c.b16 %v617, %v611
      %v792 = vpack.c.b16 %v618, %v612
      %v793 = vpack.c.b16 %v619, %v613
      %v794 = vpack.c.b16 %v620, %v614
      %v795 = vpack.c.b16 %v627, %v621
      %v796 = vpack.c.b16 %v628, %v622
      %v797 = vpack.c.b16 %v629, %v623
      %v798 = vpack.c.b16 %v630, %v624
      %v799 = vpack.c.b16 %v631, %v625
      %v800 = vpack.c.b16 %v632, %v626
      %v801 = vpack.c.b16 %v639, %v633
      %v802 = vpack.c.b16 %v640, %v634
      %v803 = vpack.c.b16 %v641, %v635
      %v804 = vpack.c.b16 %v642, %v636
      %v805 = vpack.c.b16 %v643, %v637
      %v806 = vpack.c.b16 %v644, %v638
      %v807 = vpack.c.b16 %v651, %v645
      %v808 = vpack.c.b16 %v652, %v646
      %v809 = vpack.c.b16 %v653, %v647
      %v810 = vpack.c.b16 %v654, %v648
      %v811 = vpack.c.b16 %v655, %v649
      %v812 = vpack.c.b16 %v656, %v650
      %v813 = vpack.c.b16 %v663, %v657
      %v814 = vpack.c.b16 %v664, %v658
      %v815 = vpack.c.b16 %v665, %v659
      %v816 = vpack.c.b16 %v666, %v660
      %v817 = vpack.c.b16 %v667, %v661
      %v818 = vpack.c.b16 %v668, %v662
      %v819 = vpack.c.b16 %v675, %v669
      %v820 = vpack.c.b16 %v676, %v670
      %v821 = vpack.c.b16 %v677, %v671
      %v822 = vpack.c.b16 %v678, %v672
      %v823 = vpack.c.b16 %v679, %v673
      %v824 = vpack.c.b16 %v680, %v674
      %v825 = vpack.c.b16 %v687, %v681
      %v826 = vpack.c.b16 %v688, %v682
      %v827 = vpack.c.b16 %v689, %v683
      %v828 = vpack.c.b16 %v690, %v684
      %v829 = vpack.c.b16 %v691, %v685
      %v830 = vpack.c.b16 %v692, %v686
      %v831 = vpack.c.b16 %v699, %v693
      %v832 = vpack.c.b16 %v700, %v694
      %v833 = vpack.c.b16 %v701, %v695
      %v834 = vpack.c.b16 %v702, %v696
      %v835 = vpack.c.b16 %v703, %v697
      %v836 = vpack.c.b16 %v704, %v698
      %v837 = vpack.c.b16 %v711, %v705
      %v838 = vpack.c.b16 %v712, %v706
      %v839 = vpack.c.b16 %v713, %v707
      %v840 = vpack.c.b16 %v714, %v708
      %v841 = vpack.c.b16 %v715, %v709
      %v842 = vpack.c.b16 %v716, %v710
      %v843 = vpack.c.b16 %v723, %v717
      %v844 = vpack.c.b16 %v724, %v718
      %v845 = vpack.c.b16 %v725, %v719
      %v846 = vpack.c.b16 %v726, %v720
      %v847 = vpack.c.b16 %v727, %v721
      %v848 = vpack.c.b16 %v728, %v722
      %v849 = vpack.c.b16 %v735, %v729
      %v850 = vpack.c.b16 %v736, %v730
      %v851 = vpack.c.b16 %v737, %v731
      %v852 = vpack.c.b16 %v738, %v732
      %v853 = vpack.c.b16 %v739, %v733
      %v854 = vpack.c.b16 %v740, %v734
      %v855 = vpack.c.b16 %v747, %v741
      %v856 = vpack.c.b16 %v748, %v742
      %v857 = vpack.c.b16 %v749, %v743
      %v858 = vpack.c.b16 %v750, %v744
      %v859 = vpack.c.b16 %v751, %v745
      %v860 = vpack.c.b16 %v752, %v746
      %v861 = vpack.c.b16 %v759, %v753
      %v862 = vpack.c.b16 %v760, %v754
      %v863 = vpack.c.b16 %v761, %v755
      %v864 = vpack.c.b16 %v762, %v756
      %v865 = vpack.c.b16 %v763, %v757
      %v866 = vpack.c.b16 %v764, %v758
      %v867 = vpack.c.b16 %v771, %v765
      %v868 = vpack.c.b16 %v772, %v766
      %v869 = vpack.c.b16 %v773, %v767
      %v870 = vpack.c.b16 %v774, %v768
      %v871 = vpack.c.b16 %v775, %v769
      %v872 = vpack.c.b16 %v776, %v770
      %v1065 = vunpack.c.l.b16 %v393
      %v1066 = vunpack.c.l.b16 %v394
      %v1067 = vunpack.c.l.b16 %v395
      %v1068 = vunpack.c.l.b16 %v396
      %v1069 = vunpack.c.l.b16 %v397
      %v1070 = vunpack.c.l.b16 %v398
      %v1071 = vunpack.c.l.b16 %v399
      %v1072 = vunpack.c.l.b16 %v400
      %v1073 = vunpack.c.l.b16 %v401
      %v1074 = vunpack.c.l.b16 %v402
      %v1075 = vunpack.c.l.b16 %v403
      %v1076 = vunpack.c.l.b16 %v404
      %v1077 = vunpack.c.l.b16 %v405
      %v1078 = vunpack.c.l.b16 %v406
      %v1079 = vunpack.c.l.b16 %v407
      %v1080 = vunpack.c.l.b16 %v408
      %v1081 = vunpack.c.l.b16 %v409
      %v1082 = vunpack.c.l.b16 %v410
      %v1083 = vunpack.c.l.b16 %v411
      %v1084 = vunpack.c.l.b16 %v412
      %v1085 = vunpack.c.l.b16 %v413
      %v1086 = vunpack.c.l.b16 %v414
      %v1087 = vunpack.c.l.b16 %v415
      %v1088 = vunpack.c.l.b16 %v416
      %v1089 = vunpack.c.l.b16 %v417
      %v1090 = vunpack.c.l.b16 %v418
      %v1091 = vunpack.c.l.b16 %v419
      %v1092 = vunpack.c.l.b16 %v420
      %v1093 = vunpack.c.l.b16 %v421
      %v1094 = vunpack.c.l.b16 %v422
      %v1095 = vunpack.c.l.b16 %v423
      %v1096 = vunpack.c.l.b16 %v424
      %v1097 = vunpack.c.l.b16 %v425
      %v1098 = vunpack.c.l.b16 %v426
      %v1099 = vunpack.c.l.b16 %v427
      %v1100 = vunpack.c.l.b16 %v428
      %v1101 = vunpack.c.l.b16 %v429
      %v1102 = vunpack.c.l.b16 %v430
      %v1103 = vunpack.c.l.b16 %v431
      %v1104 = vunpack.c.l.b16 %v432
      %v1105 = vunpack.c.l.b16 %v433
      %v1106 = vunpack.c.l.b16 %v434
      %v1107 = vunpack.c.l.b16 %v435
      %v1108 = vunpack.c.l.b16 %v436
      %v1109 = vunpack.c.l.b16 %v437
      %v1110 = vunpack.c.l.b16 %v438
      %v1111 = vunpack.c.l.b16 %v439
      %v1112 = vunpack.c.l.b16 %v440
      %v1113 = vunpack.c.l.b16 %v441
      %v1114 = vunpack.c.l.b16 %v442
      %v1115 = vunpack.c.l.b16 %v443
      %v1116 = vunpack.c.l.b16 %v444
      %v1117 = vunpack.c.l.b16 %v445
      %v1118 = vunpack.c.l.b16 %v446
      %v1119 = vunpack.c.l.b16 %v447
      %v1120 = vunpack.c.l.b16 %v448
      %v1121 = vunpack.c.l.b16 %v449
      %v1122 = vunpack.c.l.b16 %v450
      %v1123 = vunpack.c.l.b16 %v451
      %v1124 = vunpack.c.l.b16 %v452
      %v1125 = vunpack.c.l.b16 %v453
      %v1126 = vunpack.c.l.b16 %v454
      %v1127 = vunpack.c.l.b16 %v455
      %v1128 = vunpack.c.l.b16 %v456
      %v1129 = vunpack.c.l.b16 %v457
      %v1130 = vunpack.c.l.b16 %v458
      %v1131 = vunpack.c.l.b16 %v459
      %v1132 = vunpack.c.l.b16 %v460
      %v1133 = vunpack.c.l.b16 %v461
      %v1134 = vunpack.c.l.b16 %v462
      %v1135 = vunpack.c.l.b16 %v463
      %v1136 = vunpack.c.l.b16 %v464
      %v1137 = vunpack.c.l.b16 %v465
      %v1138 = vunpack.c.l.b16 %v466
      %v1139 = vunpack.c.l.b16 %v467
      %v1140 = vunpack.c.l.b16 %v468
      %v1141 = vunpack.c.l.b16 %v469
      %v1142 = vunpack.c.l.b16 %v470
      %v1143 = vunpack.c.l.b16 %v471
      %v1144 = vunpack.c.l.b16 %v472
      %v1145 = vunpack.c.l.b16 %v473
      %v1146 = vunpack.c.l.b16 %v474
      %v1147 = vunpack.c.l.b16 %v475
      %v1148 = vunpack.c.l.b16 %v476
      %v1149 = vunpack.c.l.b16 %v477
      %v1150 = vunpack.c.l.b16 %v478
      %v1151 = vunpack.c.l.b16 %v479
      %v1152 = vunpack.c.l.b16 %v480
      %v1153 = vunpack.c.l.b16 %v481
      %v1154 = vunpack.c.l.b16 %v482
      %v1155 = vunpack.c.l.b16 %v483
      %v1156 = vunpack.c.l.b16 %v484
      %v1157 = vunpack.c.l.b16 %v485
      %v1158 = vunpack.c.l.b16 %v486
      %v1159 = vunpack.c.l.b16 %v487
      %v1160 = vunpack.c.l.b16 %v488
      %v1161 = vpack.c.b16 %v1066, %v1065
      %v1162 = vpack.c.b16 %v1068, %v1067
      %v1163 = vpack.c.b16 %v1070, %v1069
      %v1164 = vpack.c.b16 %v1072, %v1071
      %v1165 = vpack.c.b16 %v1074, %v1073
      %v1166 = vpack.c.b16 %v1076, %v1075
      %v1167 = vpack.c.b16 %v1078, %v1077
      %v1168 = vpack.c.b16 %v1080, %v1079
      %v1169 = vpack.c.b16 %v1082, %v1081
      %v1170 = vpack.c.b16 %v1084, %v1083
      %v1171 = vpack.c.b16 %v1086, %v1085
      %v1172 = vpack.c.b16 %v1088, %v1087
      %v1173 = vpack.c.b16 %v1090, %v1089
      %v1174 = vpack.c.b16 %v1092, %v1091
      %v1175 = vpack.c.b16 %v1094, %v1093
      %v1176 = vpack.c.b16 %v1096, %v1095
      %v1177 = vpack.c.b16 %v1098, %v1097
      %v1178 = vpack.c.b16 %v1100, %v1099
      %v1179 = vpack.c.b16 %v1102, %v1101
      %v1180 = vpack.c.b16 %v1104, %v1103
      %v1181 = vpack.c.b16 %v1106, %v1105
      %v1182 = vpack.c.b16 %v1108, %v1107
      %v1183 = vpack.c.b16 %v1110, %v1109
      %v1184 = vpack.c.b16 %v1112, %v1111
      %v1185 = vpack.c.b16 %v1114, %v1113
      %v1186 = vpack.c.b16 %v1116, %v1115
      %v1187 = vpack.c.b16 %v1118, %v1117
      %v1188 = vpack.c.b16 %v1120, %v1119
      %v1189 = vpack.c.b16 %v1122, %v1121
      %v1190 = vpack.c.b16 %v1124, %v1123
      %v1191 = vpack.c.b16 %v1126, %v1125
      %v1192 = vpack.c.b16 %v1128, %v1127
      %v1193 = vpack.c.b16 %v1130, %v1129
      %v1194 = vpack.c.b16 %v1132, %v1131
      %v1195 = vpack.c.b16 %v1134, %v1133
      %v1196 = vpack.c.b16 %v1136, %v1135
      %v1197 = vpack.c.b16 %v1138, %v1137
      %v1198 = vpack.c.b16 %v1140, %v1139
      %v1199 = vpack.c.b16 %v1142, %v1141
      %v1200 = vpack.c.b16 %v1144, %v1143
      %v1201 = vpack.c.b16 %v1146, %v1145
      %v1202 = vpack.c.b16 %v1148, %v1147
      %v1203 = vpack.c.b16 %v1150, %v1149
      %v1204 = vpack.c.b16 %v1152, %v1151
      %v1205 = vpack.c.b16 %v1154, %v1153
      %v1206 = vpack.c.b16 %v1156, %v1155
      %v1207 = vpack.c.b16 %v1158, %v1157
      %v1208 = vpack.c.b16 %v1160, %v1159
      %1257 = vmatpush.bf16.msra.mxu0 %v1168
      %1258 = vmatpush.bf16.msra.mxu0 %v1167
      %1259 = vmatpush.bf16.msra.mxu0 %v1166
      %1260 = vmatpush.bf16.msra.mxu0 %v1165
      %1261 = vmatpush.bf16.msra.mxu0 %v1164
      %1262 = vmatpush.bf16.msra.mxu0 %v1163
      %1263 = vmatpush.bf16.msra.mxu0 %v1162
      %1264 = vmatpush.bf16.msra.mxu0 %v1161
      %1265 = vmatmul.bf16.gmra.mxu0 %v777
      %v1266 = vpop.f32.mrf.mxu0
      %v1267 = vadd.f32 0.0, %v1266
      %v1268 = vpop.f32.mrf.mxu0
      %v1269 = vadd.f32 0.0, %v1268
      %1270 = vmatmul.bf16.gmra.mxu0 %v783
      %v1271 = vpop.f32.mrf.mxu0
      %v1272 = vadd.f32 0.0, %v1271
      %v1273 = vpop.f32.mrf.mxu0
      %v1274 = vadd.f32 0.0, %v1273
      %1275 = vmatmul.bf16.gmra.mxu0 %v789
      %v1276 = vpop.f32.mrf.mxu0
      %v1277 = vadd.f32 0.0, %v1276
      %v1278 = vpop.f32.mrf.mxu0
      %v1279 = vadd.f32 0.0, %v1278
      %1280 = vmatmul.bf16.gmra.mxu0 %v795
      %v1281 = vpop.f32.mrf.mxu0
      %v1282 = vadd.f32 0.0, %v1281
      %v1283 = vpop.f32.mrf.mxu0
      %v1284 = vadd.f32 0.0, %v1283
      %1285 = vmatmul.bf16.gmra.mxu0 %v801
      %v1286 = vpop.f32.mrf.mxu0
      %v1287 = vadd.f32 0.0, %v1286
      %v1288 = vpop.f32.mrf.mxu0
      %v1289 = vadd.f32 0.0, %v1288
      %1290 = vmatmul.bf16.gmra.mxu0 %v807
      %v1291 = vpop.f32.mrf.mxu0
      %v1292 = vadd.f32 0.0, %v1291
      %v1293 = vpop.f32.mrf.mxu0
      %v1294 = vadd.f32 0.0, %v1293
      %1295 = vmatmul.bf16.gmra.mxu0 %v813
      %v1296 = vpop.f32.mrf.mxu0
      %v1297 = vadd.f32 0.0, %v1296
      %v1298 = vpop.f32.mrf.mxu0
      %v1299 = vadd.f32 0.0, %v1298
      %1300 = vmatmul.bf16.gmra.mxu0 %v819
      %v1301 = vpop.f32.mrf.mxu0
      %v1302 = vadd.f32 0.0, %v1301
      %v1303 = vpop.f32.mrf.mxu0
      %v1304 = vadd.f32 0.0, %v1303
      %1305 = vmatmul.bf16.gmra.mxu0 %v825
      %v1306 = vpop.f32.mrf.mxu0
      %v1307 = vadd.f32 0.0, %v1306
      %v1308 = vpop.f32.mrf.mxu0
      %v1309 = vadd.f32 0.0, %v1308
      %1310 = vmatmul.bf16.gmra.mxu0 %v831
      %v1311 = vpop.f32.mrf.mxu0
      %v1312 = vadd.f32 0.0, %v1311
      %v1313 = vpop.f32.mrf.mxu0
      %v1314 = vadd.f32 0.0, %v1313
      %1315 = vmatmul.bf16.gmra.mxu0 %v837
      %v1316 = vpop.f32.mrf.mxu0
      %v1317 = vadd.f32 0.0, %v1316
      %v1318 = vpop.f32.mrf.mxu0
      %v1319 = vadd.f32 0.0, %v1318
      %1320 = vmatmul.bf16.gmra.mxu0 %v843
      %v1321 = vpop.f32.mrf.mxu0
      %v1322 = vadd.f32 0.0, %v1321
      %v1323 = vpop.f32.mrf.mxu0
      %v1324 = vadd.f32 0.0, %v1323
      %1325 = vmatmul.bf16.gmra.mxu0 %v849
      %v1326 = vpop.f32.mrf.mxu0
      %v1327 = vadd.f32 0.0, %v1326
      %v1328 = vpop.f32.mrf.mxu0
      %v1329 = vadd.f32 0.0, %v1328
      %1330 = vmatmul.bf16.gmra.mxu0 %v855
      %v1331 = vpop.f32.mrf.mxu0
      %v1332 = vadd.f32 0.0, %v1331
      %v1333 = vpop.f32.mrf.mxu0
      %v1334 = vadd.f32 0.0, %v1333
      %1335 = vmatmul.bf16.gmra.mxu0 %v861
      %v1336 = vpop.f32.mrf.mxu0
      %v1337 = vadd.f32 0.0, %v1336
      %v1338 = vpop.f32.mrf.mxu0
      %v1339 = vadd.f32 0.0, %v1338
      %1340 = vmatmul.bf16.gmra.mxu0 %v867
      %v1341 = vpop.f32.mrf.mxu0
      %v1342 = vadd.f32 0.0, %v1341
      %v1343 = vpop.f32.mrf.mxu0
      %v1344 = vadd.f32 0.0, %v1343
      %1345 = vdwg.mxu0
      %1346 = vmatpush.bf16.msra.mxu0 %v1176
      %1347 = vmatpush.bf16.msra.mxu0 %v1175
      %1348 = vmatpush.bf16.msra.mxu0 %v1174
      %1349 = vmatpush.bf16.msra.mxu0 %v1173
      %1350 = vmatpush.bf16.msra.mxu0 %v1172
      %1351 = vmatpush.bf16.msra.mxu0 %v1171
      %1352 = vmatpush.bf16.msra.mxu0 %v1170
      %1353 = vmatpush.bf16.msra.mxu0 %v1169
      %1354 = vmatmul.bf16.gmra.mxu0 %v778
      %v1355 = vpop.f32.mrf.mxu0
      %v1356 = vadd.f32 %v1267, %v1355
      %v1357 = vpop.f32.mrf.mxu0
      %v1358 = vadd.f32 %v1269, %v1357
      %1359 = vmatmul.bf16.gmra.mxu0 %v784
      %v1360 = vpop.f32.mrf.mxu0
      %v1361 = vadd.f32 %v1272, %v1360
      %v1362 = vpop.f32.mrf.mxu0
      %v1363 = vadd.f32 %v1274, %v1362
      %1364 = vmatmul.bf16.gmra.mxu0 %v790
      %v1365 = vpop.f32.mrf.mxu0
      %v1366 = vadd.f32 %v1277, %v1365
      %v1367 = vpop.f32.mrf.mxu0
      %v1368 = vadd.f32 %v1279, %v1367
      %1369 = vmatmul.bf16.gmra.mxu0 %v796
      %v1370 = vpop.f32.mrf.mxu0
      %v1371 = vadd.f32 %v1282, %v1370
      %v1372 = vpop.f32.mrf.mxu0
      %v1373 = vadd.f32 %v1284, %v1372
      %1374 = vmatmul.bf16.gmra.mxu0 %v802
      %v1375 = vpop.f32.mrf.mxu0
      %v1376 = vadd.f32 %v1287, %v1375
      %v1377 = vpop.f32.mrf.mxu0
      %v1378 = vadd.f32 %v1289, %v1377
      %1379 = vmatmul.bf16.gmra.mxu0 %v808
      %v1380 = vpop.f32.mrf.mxu0
      %v1381 = vadd.f32 %v1292, %v1380
      %v1382 = vpop.f32.mrf.mxu0
      %v1383 = vadd.f32 %v1294, %v1382
      %1384 = vmatmul.bf16.gmra.mxu0 %v814
      %v1385 = vpop.f32.mrf.mxu0
      %v1386 = vadd.f32 %v1297, %v1385
      %v1387 = vpop.f32.mrf.mxu0
      %v1388 = vadd.f32 %v1299, %v1387
      %1389 = vmatmul.bf16.gmra.mxu0 %v820
      %v1390 = vpop.f32.mrf.mxu0
      %v1391 = vadd.f32 %v1302, %v1390
      %v1392 = vpop.f32.mrf.mxu0
      %v1393 = vadd.f32 %v1304, %v1392
      %1394 = vmatmul.bf16.gmra.mxu0 %v826
      %v1395 = vpop.f32.mrf.mxu0
      %v1396 = vadd.f32 %v1307, %v1395
      %v1397 = vpop.f32.mrf.mxu0
      %v1398 = vadd.f32 %v1309, %v1397
      %1399 = vmatmul.bf16.gmra.mxu0 %v832
      %v1400 = vpop.f32.mrf.mxu0
      %v1401 = vadd.f32 %v1312, %v1400
      %v1402 = vpop.f32.mrf.mxu0
      %v1403 = vadd.f32 %v1314, %v1402
      %1404 = vmatmul.bf16.gmra.mxu0 %v838
      %v1405 = vpop.f32.mrf.mxu0
      %v1406 = vadd.f32 %v1317, %v1405
      %v1407 = vpop.f32.mrf.mxu0
      %v1408 = vadd.f32 %v1319, %v1407
      %1409 = vmatmul.bf16.gmra.mxu0 %v844
      %v1410 = vpop.f32.mrf.mxu0
      %v1411 = vadd.f32 %v1322, %v1410
      %v1412 = vpop.f32.mrf.mxu0
      %v1413 = vadd.f32 %v1324, %v1412
      %1414 = vmatmul.bf16.gmra.mxu0 %v850
      %v1415 = vpop.f32.mrf.mxu0
      %v1416 = vadd.f32 %v1327, %v1415
      %v1417 = vpop.f32.mrf.mxu0
      %v1418 = vadd.f32 %v1329, %v1417
      %1419 = vmatmul.bf16.gmra.mxu0 %v856
      %v1420 = vpop.f32.mrf.mxu0
      %v1421 = vadd.f32 %v1332, %v1420
      %v1422 = vpop.f32.mrf.mxu0
      %v1423 = vadd.f32 %v1334, %v1422
      %1424 = vmatmul.bf16.gmra.mxu0 %v862
      %v1425 = vpop.f32.mrf.mxu0
      %v1426 = vadd.f32 %v1337, %v1425
      %v1427 = vpop.f32.mrf.mxu0
      %v1428 = vadd.f32 %v1339, %v1427
      %1429 = vmatmul.bf16.gmra.mxu0 %v868
      %v1430 = vpop.f32.mrf.mxu0
      %v1431 = vadd.f32 %v1342, %v1430
      %v1432 = vpop.f32.mrf.mxu0
      %v1433 = vadd.f32 %v1344, %v1432
      %1434 = vdwg.mxu0
      %1435 = vmatpush.bf16.msra.mxu0 %v1184
      %1436 = vmatpush.bf16.msra.mxu0 %v1183
      %1437 = vmatpush.bf16.msra.mxu0 %v1182
      %1438 = vmatpush.bf16.msra.mxu0 %v1181
      %1439 = vmatpush.bf16.msra.mxu0 %v1180
      %1440 = vmatpush.bf16.msra.mxu0 %v1179
      %1441 = vmatpush.bf16.msra.mxu0 %v1178
      %1442 = vmatpush.bf16.msra.mxu0 %v1177
      %1443 = vmatmul.bf16.gmra.mxu0 %v779
      %v1444 = vpop.f32.mrf.mxu0
      %v1445 = vadd.f32 %v1356, %v1444
      %v1446 = vpop.f32.mrf.mxu0
      %v1447 = vadd.f32 %v1358, %v1446
      %1448 = vmatmul.bf16.gmra.mxu0 %v785
      %v1449 = vpop.f32.mrf.mxu0
      %v1450 = vadd.f32 %v1361, %v1449
      %v1451 = vpop.f32.mrf.mxu0
      %v1452 = vadd.f32 %v1363, %v1451
      %1453 = vmatmul.bf16.gmra.mxu0 %v791
      %v1454 = vpop.f32.mrf.mxu0
      %v1455 = vadd.f32 %v1366, %v1454
      %v1456 = vpop.f32.mrf.mxu0
      %v1457 = vadd.f32 %v1368, %v1456
      %1458 = vmatmul.bf16.gmra.mxu0 %v797
      %v1459 = vpop.f32.mrf.mxu0
      %v1460 = vadd.f32 %v1371, %v1459
      %v1461 = vpop.f32.mrf.mxu0
      %v1462 = vadd.f32 %v1373, %v1461
      %1463 = vmatmul.bf16.gmra.mxu0 %v803
      %v1464 = vpop.f32.mrf.mxu0
      %v1465 = vadd.f32 %v1376, %v1464
      %v1466 = vpop.f32.mrf.mxu0
      %v1467 = vadd.f32 %v1378, %v1466
      %1468 = vmatmul.bf16.gmra.mxu0 %v809
      %v1469 = vpop.f32.mrf.mxu0
      %v1470 = vadd.f32 %v1381, %v1469
      %v1471 = vpop.f32.mrf.mxu0
      %v1472 = vadd.f32 %v1383, %v1471
      %1473 = vmatmul.bf16.gmra.mxu0 %v815
      %v1474 = vpop.f32.mrf.mxu0
      %v1475 = vadd.f32 %v1386, %v1474
      %v1476 = vpop.f32.mrf.mxu0
      %v1477 = vadd.f32 %v1388, %v1476
      %1478 = vmatmul.bf16.gmra.mxu0 %v821
      %v1479 = vpop.f32.mrf.mxu0
      %v1480 = vadd.f32 %v1391, %v1479
      %v1481 = vpop.f32.mrf.mxu0
      %v1482 = vadd.f32 %v1393, %v1481
      %1483 = vmatmul.bf16.gmra.mxu0 %v827
      %v1484 = vpop.f32.mrf.mxu0
      %v1485 = vadd.f32 %v1396, %v1484
      %v1486 = vpop.f32.mrf.mxu0
      %v1487 = vadd.f32 %v1398, %v1486
      %1488 = vmatmul.bf16.gmra.mxu0 %v833
      %v1489 = vpop.f32.mrf.mxu0
      %v1490 = vadd.f32 %v1401, %v1489
      %v1491 = vpop.f32.mrf.mxu0
      %v1492 = vadd.f32 %v1403, %v1491
      %1493 = vmatmul.bf16.gmra.mxu0 %v839
      %v1494 = vpop.f32.mrf.mxu0
      %v1495 = vadd.f32 %v1406, %v1494
      %v1496 = vpop.f32.mrf.mxu0
      %v1497 = vadd.f32 %v1408, %v1496
      %1498 = vmatmul.bf16.gmra.mxu0 %v845
      %v1499 = vpop.f32.mrf.mxu0
      %v1500 = vadd.f32 %v1411, %v1499
      %v1501 = vpop.f32.mrf.mxu0
      %v1502 = vadd.f32 %v1413, %v1501
      %1503 = vmatmul.bf16.gmra.mxu0 %v851
      %v1504 = vpop.f32.mrf.mxu0
      %v1505 = vadd.f32 %v1416, %v1504
      %v1506 = vpop.f32.mrf.mxu0
      %v1507 = vadd.f32 %v1418, %v1506
      %1508 = vmatmul.bf16.gmra.mxu0 %v857
      %v1509 = vpop.f32.mrf.mxu0
      %v1510 = vadd.f32 %v1421, %v1509
      %v1511 = vpop.f32.mrf.mxu0
      %v1512 = vadd.f32 %v1423, %v1511
      %1513 = vmatmul.bf16.gmra.mxu0 %v863
      %v1514 = vpop.f32.mrf.mxu0
      %v1515 = vadd.f32 %v1426, %v1514
      %v1516 = vpop.f32.mrf.mxu0
      %v1517 = vadd.f32 %v1428, %v1516
      %1518 = vmatmul.bf16.gmra.mxu0 %v869
      %v1519 = vpop.f32.mrf.mxu0
      %v1520 = vadd.f32 %v1431, %v1519
      %v1521 = vpop.f32.mrf.mxu0
      %v1522 = vadd.f32 %v1433, %v1521
      %1523 = vdwg.mxu0
      %1524 = vmatpush.bf16.msra.mxu0 %v1192
      %1525 = vmatpush.bf16.msra.mxu0 %v1191
      %1526 = vmatpush.bf16.msra.mxu0 %v1190
      %1527 = vmatpush.bf16.msra.mxu0 %v1189
      %1528 = vmatpush.bf16.msra.mxu0 %v1188
      %1529 = vmatpush.bf16.msra.mxu0 %v1187
      %1530 = vmatpush.bf16.msra.mxu0 %v1186
      %1531 = vmatpush.bf16.msra.mxu0 %v1185
      %1532 = vmatmul.bf16.gmra.mxu0 %v780
      %v1533 = vpop.f32.mrf.mxu0
      %v1534 = vadd.f32 %v1445, %v1533
      %v1535 = vpop.f32.mrf.mxu0
      %v1536 = vadd.f32 %v1447, %v1535
      %1537 = vmatmul.bf16.gmra.mxu0 %v786
      %v1538 = vpop.f32.mrf.mxu0
      %v1539 = vadd.f32 %v1450, %v1538
      %v1540 = vpop.f32.mrf.mxu0
      %v1541 = vadd.f32 %v1452, %v1540
      %1542 = vmatmul.bf16.gmra.mxu0 %v792
      %v1543 = vpop.f32.mrf.mxu0
      %v1544 = vadd.f32 %v1455, %v1543
      %v1545 = vpop.f32.mrf.mxu0
      %v1546 = vadd.f32 %v1457, %v1545
      %1547 = vmatmul.bf16.gmra.mxu0 %v798
      %v1548 = vpop.f32.mrf.mxu0
      %v1549 = vadd.f32 %v1460, %v1548
      %v1550 = vpop.f32.mrf.mxu0
      %v1551 = vadd.f32 %v1462, %v1550
      %1552 = vmatmul.bf16.gmra.mxu0 %v804
      %v1553 = vpop.f32.mrf.mxu0
      %v1554 = vadd.f32 %v1465, %v1553
      %v1555 = vpop.f32.mrf.mxu0
      %v1556 = vadd.f32 %v1467, %v1555
      %1557 = vmatmul.bf16.gmra.mxu0 %v810
      %v1558 = vpop.f32.mrf.mxu0
      %v1559 = vadd.f32 %v1470, %v1558
      %v1560 = vpop.f32.mrf.mxu0
      %v1561 = vadd.f32 %v1472, %v1560
      %1562 = vmatmul.bf16.gmra.mxu0 %v816
      %v1563 = vpop.f32.mrf.mxu0
      %v1564 = vadd.f32 %v1475, %v1563
      %v1565 = vpop.f32.mrf.mxu0
      %v1566 = vadd.f32 %v1477, %v1565
      %1567 = vmatmul.bf16.gmra.mxu0 %v822
      %v1568 = vpop.f32.mrf.mxu0
      %v1569 = vadd.f32 %v1480, %v1568
      %v1570 = vpop.f32.mrf.mxu0
      %v1571 = vadd.f32 %v1482, %v1570
      %1572 = vmatmul.bf16.gmra.mxu0 %v828
      %v1573 = vpop.f32.mrf.mxu0
      %v1574 = vadd.f32 %v1485, %v1573
      %v1575 = vpop.f32.mrf.mxu0
      %v1576 = vadd.f32 %v1487, %v1575
      %1577 = vmatmul.bf16.gmra.mxu0 %v834
      %v1578 = vpop.f32.mrf.mxu0
      %v1579 = vadd.f32 %v1490, %v1578
      %v1580 = vpop.f32.mrf.mxu0
      %v1581 = vadd.f32 %v1492, %v1580
      %1582 = vmatmul.bf16.gmra.mxu0 %v840
      %v1583 = vpop.f32.mrf.mxu0
      %v1584 = vadd.f32 %v1495, %v1583
      %v1585 = vpop.f32.mrf.mxu0
      %v1586 = vadd.f32 %v1497, %v1585
      %1587 = vmatmul.bf16.gmra.mxu0 %v846
      %v1588 = vpop.f32.mrf.mxu0
      %v1589 = vadd.f32 %v1500, %v1588
      %v1590 = vpop.f32.mrf.mxu0
      %v1591 = vadd.f32 %v1502, %v1590
      %1592 = vmatmul.bf16.gmra.mxu0 %v852
      %v1593 = vpop.f32.mrf.mxu0
      %v1594 = vadd.f32 %v1505, %v1593
      %v1595 = vpop.f32.mrf.mxu0
      %v1596 = vadd.f32 %v1507, %v1595
      %1597 = vmatmul.bf16.gmra.mxu0 %v858
      %v1598 = vpop.f32.mrf.mxu0
      %v1599 = vadd.f32 %v1510, %v1598
      %v1600 = vpop.f32.mrf.mxu0
      %v1601 = vadd.f32 %v1512, %v1600
      %1602 = vmatmul.bf16.gmra.mxu0 %v864
      %v1603 = vpop.f32.mrf.mxu0
      %v1604 = vadd.f32 %v1515, %v1603
      %v1605 = vpop.f32.mrf.mxu0
      %v1606 = vadd.f32 %v1517, %v1605
      %1607 = vmatmul.bf16.gmra.mxu0 %v870
      %v1608 = vpop.f32.mrf.mxu0
      %v1609 = vadd.f32 %v1520, %v1608
      %v1610 = vpop.f32.mrf.mxu0
      %v1611 = vadd.f32 %v1522, %v1610
      %1612 = vdwg.mxu0
      %1613 = vmatpush.bf16.msra.mxu0 %v1200
      %1614 = vmatpush.bf16.msra.mxu0 %v1199
      %1615 = vmatpush.bf16.msra.mxu0 %v1198
      %1616 = vmatpush.bf16.msra.mxu0 %v1197
      %1617 = vmatpush.bf16.msra.mxu0 %v1196
      %1618 = vmatpush.bf16.msra.mxu0 %v1195
      %1619 = vmatpush.bf16.msra.mxu0 %v1194
      %1620 = vmatpush.bf16.msra.mxu0 %v1193
      %1621 = vmatmul.bf16.gmra.mxu0 %v781
      %v1622 = vpop.f32.mrf.mxu0
      %v1623 = vadd.f32 %v1534, %v1622
      %v1624 = vpop.f32.mrf.mxu0
      %v1625 = vadd.f32 %v1536, %v1624
      %1626 = vmatmul.bf16.gmra.mxu0 %v787
      %v1627 = vpop.f32.mrf.mxu0
      %v1628 = vadd.f32 %v1539, %v1627
      %v1629 = vpop.f32.mrf.mxu0
      %v1630 = vadd.f32 %v1541, %v1629
      %1631 = vmatmul.bf16.gmra.mxu0 %v793
      %v1632 = vpop.f32.mrf.mxu0
      %v1633 = vadd.f32 %v1544, %v1632
      %v1634 = vpop.f32.mrf.mxu0
      %v1635 = vadd.f32 %v1546, %v1634
      %1636 = vmatmul.bf16.gmra.mxu0 %v799
      %v1637 = vpop.f32.mrf.mxu0
      %v1638 = vadd.f32 %v1549, %v1637
      %v1639 = vpop.f32.mrf.mxu0
      %v1640 = vadd.f32 %v1551, %v1639
      %1641 = vmatmul.bf16.gmra.mxu0 %v805
      %v1642 = vpop.f32.mrf.mxu0
      %v1643 = vadd.f32 %v1554, %v1642
      %v1644 = vpop.f32.mrf.mxu0
      %v1645 = vadd.f32 %v1556, %v1644
      %1646 = vmatmul.bf16.gmra.mxu0 %v811
      %v1647 = vpop.f32.mrf.mxu0
      %v1648 = vadd.f32 %v1559, %v1647
      %v1649 = vpop.f32.mrf.mxu0
      %v1650 = vadd.f32 %v1561, %v1649
      %1651 = vmatmul.bf16.gmra.mxu0 %v817
      %v1652 = vpop.f32.mrf.mxu0
      %v1653 = vadd.f32 %v1564, %v1652
      %v1654 = vpop.f32.mrf.mxu0
      %v1655 = vadd.f32 %v1566, %v1654
      %1656 = vmatmul.bf16.gmra.mxu0 %v823
      %v1657 = vpop.f32.mrf.mxu0
      %v1658 = vadd.f32 %v1569, %v1657
      %v1659 = vpop.f32.mrf.mxu0
      %v1660 = vadd.f32 %v1571, %v1659
      %1661 = vmatmul.bf16.gmra.mxu0 %v829
      %v1662 = vpop.f32.mrf.mxu0
      %v1663 = vadd.f32 %v1574, %v1662
      %v1664 = vpop.f32.mrf.mxu0
      %v1665 = vadd.f32 %v1576, %v1664
      %1666 = vmatmul.bf16.gmra.mxu0 %v835
      %v1667 = vpop.f32.mrf.mxu0
      %v1668 = vadd.f32 %v1579, %v1667
      %v1669 = vpop.f32.mrf.mxu0
      %v1670 = vadd.f32 %v1581, %v1669
      %1671 = vmatmul.bf16.gmra.mxu0 %v841
      %v1672 = vpop.f32.mrf.mxu0
      %v1673 = vadd.f32 %v1584, %v1672
      %v1674 = vpop.f32.mrf.mxu0
      %v1675 = vadd.f32 %v1586, %v1674
      %1676 = vmatmul.bf16.gmra.mxu0 %v847
      %v1677 = vpop.f32.mrf.mxu0
      %v1678 = vadd.f32 %v1589, %v1677
      %v1679 = vpop.f32.mrf.mxu0
      %v1680 = vadd.f32 %v1591, %v1679
      %1681 = vmatmul.bf16.gmra.mxu0 %v853
      %v1682 = vpop.f32.mrf.mxu0
      %v1683 = vadd.f32 %v1594, %v1682
      %v1684 = vpop.f32.mrf.mxu0
      %v1685 = vadd.f32 %v1596, %v1684
      %1686 = vmatmul.bf16.gmra.mxu0 %v859
      %v1687 = vpop.f32.mrf.mxu0
      %v1688 = vadd.f32 %v1599, %v1687
      %v1689 = vpop.f32.mrf.mxu0
      %v1690 = vadd.f32 %v1601, %v1689
      %1691 = vmatmul.bf16.gmra.mxu0 %v865
      %v1692 = vpop.f32.mrf.mxu0
      %v1693 = vadd.f32 %v1604, %v1692
      %v1694 = vpop.f32.mrf.mxu0
      %v1695 = vadd.f32 %v1606, %v1694
      %1696 = vmatmul.bf16.gmra.mxu0 %v871
      %v1697 = vpop.f32.mrf.mxu0
      %v1698 = vadd.f32 %v1609, %v1697
      %v1699 = vpop.f32.mrf.mxu0
      %v1700 = vadd.f32 %v1611, %v1699
      %1701 = vdwg.mxu0
      %1702 = vmatpush.bf16.msra.mxu0 %v1208
      %1703 = vmatpush.bf16.msra.mxu0 %v1207
      %1704 = vmatpush.bf16.msra.mxu0 %v1206
      %1705 = vmatpush.bf16.msra.mxu0 %v1205
      %1706 = vmatpush.bf16.msra.mxu0 %v1204
      %1707 = vmatpush.bf16.msra.mxu0 %v1203
      %1708 = vmatpush.bf16.msra.mxu0 %v1202
      %1709 = vmatpush.bf16.msra.mxu0 %v1201
      %1710 = vmatmul.bf16.gmra.mxu0 %v782
      %v1711 = vpop.f32.mrf.mxu0
      %v1712 = vadd.f32 %v1623, %v1711
      %v1713 = vpop.f32.mrf.mxu0
      %v1714 = vadd.f32 %v1625, %v1713
      %1715 = vmatmul.bf16.gmra.mxu0 %v788
      %v1716 = vpop.f32.mrf.mxu0
      %v1717 = vadd.f32 %v1628, %v1716
      %v1718 = vpop.f32.mrf.mxu0
      %v1719 = vadd.f32 %v1630, %v1718
      %1720 = vmatmul.bf16.gmra.mxu0 %v794
      %v1721 = vpop.f32.mrf.mxu0
      %v1722 = vadd.f32 %v1633, %v1721
      %v1723 = vpop.f32.mrf.mxu0
      %v1724 = vadd.f32 %v1635, %v1723
      %1725 = vmatmul.bf16.gmra.mxu0 %v800
      %v1726 = vpop.f32.mrf.mxu0
      %v1727 = vadd.f32 %v1638, %v1726
      %v1728 = vpop.f32.mrf.mxu0
      %v1729 = vadd.f32 %v1640, %v1728
      %1730 = vmatmul.bf16.gmra.mxu0 %v806
      %v1731 = vpop.f32.mrf.mxu0
      %v1732 = vadd.f32 %v1643, %v1731
      %v1733 = vpop.f32.mrf.mxu0
      %v1734 = vadd.f32 %v1645, %v1733
      %1735 = vmatmul.bf16.gmra.mxu0 %v812
      %v1736 = vpop.f32.mrf.mxu0
      %v1737 = vadd.f32 %v1648, %v1736
      %v1738 = vpop.f32.mrf.mxu0
      %v1739 = vadd.f32 %v1650, %v1738
      %1740 = vmatmul.bf16.gmra.mxu0 %v818
      %v1741 = vpop.f32.mrf.mxu0
      %v1742 = vadd.f32 %v1653, %v1741
      %v1743 = vpop.f32.mrf.mxu0
      %v1744 = vadd.f32 %v1655, %v1743
      %1745 = vmatmul.bf16.gmra.mxu0 %v824
      %v1746 = vpop.f32.mrf.mxu0
      %v1747 = vadd.f32 %v1658, %v1746
      %v1748 = vpop.f32.mrf.mxu0
      %v1749 = vadd.f32 %v1660, %v1748
      %1750 = vmatmul.bf16.gmra.mxu0 %v830
      %v1751 = vpop.f32.mrf.mxu0
      %v1752 = vadd.f32 %v1663, %v1751
      %v1753 = vpop.f32.mrf.mxu0
      %v1754 = vadd.f32 %v1665, %v1753
      %1755 = vmatmul.bf16.gmra.mxu0 %v836
      %v1756 = vpop.f32.mrf.mxu0
      %v1757 = vadd.f32 %v1668, %v1756
      %v1758 = vpop.f32.mrf.mxu0
      %v1759 = vadd.f32 %v1670, %v1758
      %1760 = vmatmul.bf16.gmra.mxu0 %v842
      %v1761 = vpop.f32.mrf.mxu0
      %v1762 = vadd.f32 %v1673, %v1761
      %v1763 = vpop.f32.mrf.mxu0
      %v1764 = vadd.f32 %v1675, %v1763
      %1765 = vmatmul.bf16.gmra.mxu0 %v848
      %v1766 = vpop.f32.mrf.mxu0
      %v1767 = vadd.f32 %v1678, %v1766
      %v1768 = vpop.f32.mrf.mxu0
      %v1769 = vadd.f32 %v1680, %v1768
      %1770 = vmatmul.bf16.gmra.mxu0 %v854
      %v1771 = vpop.f32.mrf.mxu0
      %v1772 = vadd.f32 %v1683, %v1771
      %v1773 = vpop.f32.mrf.mxu0
      %v1774 = vadd.f32 %v1685, %v1773
      %1775 = vmatmul.bf16.gmra.mxu0 %v860
      %v1776 = vpop.f32.mrf.mxu0
      %v1777 = vadd.f32 %v1688, %v1776
      %v1778 = vpop.f32.mrf.mxu0
      %v1779 = vadd.f32 %v1690, %v1778
      %1780 = vmatmul.bf16.gmra.mxu0 %v866
      %v1781 = vpop.f32.mrf.mxu0
      %v1782 = vadd.f32 %v1693, %v1781
      %v1783 = vpop.f32.mrf.mxu0
      %v1784 = vadd.f32 %v1695, %v1783
      %1785 = vmatmul.bf16.gmra.mxu0 %v872
      %v1786 = vpop.f32.mrf.mxu0
      %v1787 = vadd.f32 %v1698, %v1786
      %v1788 = vpop.f32.mrf.mxu0
      %v1789 = vadd.f32 %v1700, %v1788
      %1790 = vdwg.mxu0
      %1791 = vst [vmem:[#allocation2] sm:$0xff] %v1712
      %1792 = vst [vmem:[#allocation2 + $0x8] sm:$0xff] %v1714
      %1793 = vst [vmem:[#allocation2 + $0x10] sm:$0xff] %v1717
      %1794 = vst [vmem:[#allocation2 + $0x18] sm:$0xff] %v1719
      %1795 = vst [vmem:[#allocation2 + $0x20] sm:$0xff] %v1722
      %1796 = vst [vmem:[#allocation2 + $0x28] sm:$0xff] %v1724
      %1797 = vst [vmem:[#allocation2 + $0x30] sm:$0xff] %v1727
      %1798 = vst [vmem:[#allocation2 + $0x38] sm:$0xff] %v1729
      %1799 = vst [vmem:[#allocation2 + $0x40] sm:$0xff] %v1732
      %1800 = vst [vmem:[#allocation2 + $0x48] sm:$0xff] %v1734
      %1801 = vst [vmem:[#allocation2 + $0x50] sm:$0xff] %v1737
      %1802 = vst [vmem:[#allocation2 + $0x58] sm:$0xff] %v1739
      %1803 = vst [vmem:[#allocation2 + $0x60] sm:$0xff] %v1742
      %1804 = vst [vmem:[#allocation2 + $0x68] sm:$0xff] %v1744
      %1805 = vst [vmem:[#allocation2 + $0x70] sm:$0xff] %v1747
      %1806 = vst [vmem:[#allocation2 + $0x78] sm:$0xff] %v1749
      %1807 = vst [vmem:[#allocation2 + $0x80] sm:$0xff] %v1752
      %1808 = vst [vmem:[#allocation2 + $0x88] sm:$0xff] %v1754
      %1809 = vst [vmem:[#allocation2 + $0x90] sm:$0xff] %v1757
      %1810 = vst [vmem:[#allocation2 + $0x98] sm:$0xff] %v1759
      %1811 = vst [vmem:[#allocation2 + $0xa0] sm:$0xff] %v1762
      %1812 = vst [vmem:[#allocation2 + $0xa8] sm:$0xff] %v1764
      %1813 = vst [vmem:[#allocation2 + $0xb0] sm:$0xff] %v1767
      %1814 = vst [vmem:[#allocation2 + $0xb8] sm:$0xff] %v1769
      %1815 = vst [vmem:[#allocation2 + $0xc0] sm:$0xff] %v1772
      %1816 = vst [vmem:[#allocation2 + $0xc8] sm:$0xff] %v1774
      %1817 = vst [vmem:[#allocation2 + $0xd0] sm:$0xff] %v1777
      %1818 = vst [vmem:[#allocation2 + $0xd8] sm:$0xff] %v1779
      %1819 = vst [vmem:[#allocation2 + $0xe0] sm:$0xff] %v1782
      %1820 = vst [vmem:[#allocation2 + $0xe8] sm:$0xff] %v1784
      %1821 = vst [vmem:[#allocation2 + $0xf0] sm:$0xff] %v1787
      %1822 = vst [vmem:[#allocation2 + $0xf8] sm:$0xff] %v1789
      %s1823 = scalar_lea.vmem %s272, 48
      %v1824 = vld [vmem:[%s1823] sm:$0xff]
      %v1825 = vld [vmem:[%s1823 + $0x8] sm:$0xff]
      %v1826 = vld [vmem:[%s1823 + $0x10] sm:$0xff]
      %v1827 = vld [vmem:[%s1823 + $0x18] sm:$0xff]
      %v1828 = vld [vmem:[%s1823 + $0x20] sm:$0xff]
      %v1829 = vld [vmem:[%s1823 + $0x28] sm:$0xff]
      %v1830 = vld [vmem:[%s1823 + $0x30] sm:$0xff]
      %v1831 = vld [vmem:[%s1823 + $0x38] sm:$0xff]
      %v1832 = vld [vmem:[%s1823 + $0x40] sm:$0xff]
      %v1833 = vld [vmem:[%s1823 + $0x48] sm:$0xff]
      %v1834 = vld [vmem:[%s1823 + $0x50] sm:$0xff]
      %v1835 = vld [vmem:[%s1823 + $0x58] sm:$0xff]
      %v1836 = vld [vmem:[%s1823 + $0x60] sm:$0xff]
      %v1837 = vld [vmem:[%s1823 + $0x68] sm:$0xff]
      %v1838 = vld [vmem:[%s1823 + $0x70] sm:$0xff]
      %v1839 = vld [vmem:[%s1823 + $0x78] sm:$0xff]
      %v1840 = vld [vmem:[%s1823 + $0x80] sm:$0xff]
      %v1841 = vld [vmem:[%s1823 + $0x88] sm:$0xff]
      %v1842 = vld [vmem:[%s1823 + $0x90] sm:$0xff]
      %v1843 = vld [vmem:[%s1823 + $0x98] sm:$0xff]
      %v1844 = vld [vmem:[%s1823 + $0xa0] sm:$0xff]
      %v1845 = vld [vmem:[%s1823 + $0xa8] sm:$0xff]
      %v1846 = vld [vmem:[%s1823 + $0xb0] sm:$0xff]
      %v1847 = vld [vmem:[%s1823 + $0xb8] sm:$0xff]
      %v1848 = vld [vmem:[%s1823 + $0xc0] sm:$0xff]
      %v1849 = vld [vmem:[%s1823 + $0xc8] sm:$0xff]
      %v1850 = vld [vmem:[%s1823 + $0xd0] sm:$0xff]
      %v1851 = vld [vmem:[%s1823 + $0xd8] sm:$0xff]
      %v1852 = vld [vmem:[%s1823 + $0xe0] sm:$0xff]
      %v1853 = vld [vmem:[%s1823 + $0xe8] sm:$0xff]
      %v1854 = vld [vmem:[%s1823 + $0xf0] sm:$0xff]
      %v1855 = vld [vmem:[%s1823 + $0xf8] sm:$0xff]
      %v1856 = vld [vmem:[%s1823 + $0x100] sm:$0xff]
      %v1857 = vld [vmem:[%s1823 + $0x108] sm:$0xff]
      %v1858 = vld [vmem:[%s1823 + $0x110] sm:$0xff]
      %v1859 = vld [vmem:[%s1823 + $0x118] sm:$0xff]
      %v1860 = vld [vmem:[%s1823 + $0x120] sm:$0xff]
      %v1861 = vld [vmem:[%s1823 + $0x128] sm:$0xff]
      %v1862 = vld [vmem:[%s1823 + $0x130] sm:$0xff]
      %v1863 = vld [vmem:[%s1823 + $0x138] sm:$0xff]
      %v1864 = vld [vmem:[%s1823 + $0x140] sm:$0xff]
      %v1865 = vld [vmem:[%s1823 + $0x148] sm:$0xff]
      %v1866 = vld [vmem:[%s1823 + $0x150] sm:$0xff]
      %v1867 = vld [vmem:[%s1823 + $0x158] sm:$0xff]
      %v1868 = vld [vmem:[%s1823 + $0x160] sm:$0xff]
      %v1869 = vld [vmem:[%s1823 + $0x168] sm:$0xff]
      %v1870 = vld [vmem:[%s1823 + $0x170] sm:$0xff]
      %v1871 = vld [vmem:[%s1823 + $0x178] sm:$0xff]
      %v1872 = vld [vmem:[%s1823 + $0x180] sm:$0xff]
      %v1873 = vld [vmem:[%s1823 + $0x188] sm:$0xff]
      %v1874 = vld [vmem:[%s1823 + $0x190] sm:$0xff]
      %v1875 = vld [vmem:[%s1823 + $0x198] sm:$0xff]
      %v1876 = vld [vmem:[%s1823 + $0x1a0] sm:$0xff]
      %v1877 = vld [vmem:[%s1823 + $0x1a8] sm:$0xff]
      %v1878 = vld [vmem:[%s1823 + $0x1b0] sm:$0xff]
      %v1879 = vld [vmem:[%s1823 + $0x1b8] sm:$0xff]
      %v1880 = vld [vmem:[%s1823 + $0x1c0] sm:$0xff]
      %v1881 = vld [vmem:[%s1823 + $0x1c8] sm:$0xff]
      %v1882 = vld [vmem:[%s1823 + $0x1d0] sm:$0xff]
      %v1883 = vld [vmem:[%s1823 + $0x1d8] sm:$0xff]
      %v1884 = vld [vmem:[%s1823 + $0x1e0] sm:$0xff]
      %v1885 = vld [vmem:[%s1823 + $0x1e8] sm:$0xff]
      %v1886 = vld [vmem:[%s1823 + $0x1f0] sm:$0xff]
      %v1887 = vld [vmem:[%s1823 + $0x1f8] sm:$0xff]
      %v1888 = vld [vmem:[%s1823 + $0x200] sm:$0xff]
      %v1889 = vld [vmem:[%s1823 + $0x208] sm:$0xff]
      %v1890 = vld [vmem:[%s1823 + $0x210] sm:$0xff]
      %v1891 = vld [vmem:[%s1823 + $0x218] sm:$0xff]
      %v1892 = vld [vmem:[%s1823 + $0x220] sm:$0xff]
      %v1893 = vld [vmem:[%s1823 + $0x228] sm:$0xff]
      %v1894 = vld [vmem:[%s1823 + $0x230] sm:$0xff]
      %v1895 = vld [vmem:[%s1823 + $0x238] sm:$0xff]
      %v1896 = vld [vmem:[%s1823 + $0x240] sm:$0xff]
      %v1897 = vld [vmem:[%s1823 + $0x248] sm:$0xff]
      %v1898 = vld [vmem:[%s1823 + $0x250] sm:$0xff]
      %v1899 = vld [vmem:[%s1823 + $0x258] sm:$0xff]
      %v1900 = vld [vmem:[%s1823 + $0x260] sm:$0xff]
      %v1901 = vld [vmem:[%s1823 + $0x268] sm:$0xff]
      %v1902 = vld [vmem:[%s1823 + $0x270] sm:$0xff]
      %v1903 = vld [vmem:[%s1823 + $0x278] sm:$0xff]
      %v1904 = vld [vmem:[%s1823 + $0x280] sm:$0xff]
      %v1905 = vld [vmem:[%s1823 + $0x288] sm:$0xff]
      %v1906 = vld [vmem:[%s1823 + $0x290] sm:$0xff]
      %v1907 = vld [vmem:[%s1823 + $0x298] sm:$0xff]
      %v1908 = vld [vmem:[%s1823 + $0x2a0] sm:$0xff]
      %v1909 = vld [vmem:[%s1823 + $0x2a8] sm:$0xff]
      %v1910 = vld [vmem:[%s1823 + $0x2b0] sm:$0xff]
      %v1911 = vld [vmem:[%s1823 + $0x2b8] sm:$0xff]
      %v1912 = vld [vmem:[%s1823 + $0x2c0] sm:$0xff]
      %v1913 = vld [vmem:[%s1823 + $0x2c8] sm:$0xff]
      %v1914 = vld [vmem:[%s1823 + $0x2d0] sm:$0xff]
      %v1915 = vld [vmem:[%s1823 + $0x2d8] sm:$0xff]
      %v1916 = vld [vmem:[%s1823 + $0x2e0] sm:$0xff]
      %v1917 = vld [vmem:[%s1823 + $0x2e8] sm:$0xff]
      %v1918 = vld [vmem:[%s1823 + $0x2f0] sm:$0xff]
      %v1919 = vld [vmem:[%s1823 + $0x2f8] sm:$0xff]
      %v1920 = vld [vmem:[#allocation2] sm:$0xff]
      %v1921 = vld [vmem:[#allocation2 + $0x8] sm:$0xff]
      %v1922 = vld [vmem:[#allocation2 + $0x10] sm:$0xff]
      %v1923 = vld [vmem:[#allocation2 + $0x18] sm:$0xff]
      %v1924 = vld [vmem:[#allocation2 + $0x20] sm:$0xff]
      %v1925 = vld [vmem:[#allocation2 + $0x28] sm:$0xff]
      %v1926 = vld [vmem:[#allocation2 + $0x30] sm:$0xff]
      %v1927 = vld [vmem:[#allocation2 + $0x38] sm:$0xff]
      %v1928 = vld [vmem:[#allocation2 + $0x40] sm:$0xff]
      %v1929 = vld [vmem:[#allocation2 + $0x48] sm:$0xff]
      %v1930 = vld [vmem:[#allocation2 + $0x50] sm:$0xff]
      %v1931 = vld [vmem:[#allocation2 + $0x58] sm:$0xff]
      %v1932 = vld [vmem:[#allocation2 + $0x60] sm:$0xff]
      %v1933 = vld [vmem:[#allocation2 + $0x68] sm:$0xff]
      %v1934 = vld [vmem:[#allocation2 + $0x70] sm:$0xff]
      %v1935 = vld [vmem:[#allocation2 + $0x78] sm:$0xff]
      %v1936 = vld [vmem:[#allocation2 + $0x80] sm:$0xff]
      %v1937 = vld [vmem:[#allocation2 + $0x88] sm:$0xff]
      %v1938 = vld [vmem:[#allocation2 + $0x90] sm:$0xff]
      %v1939 = vld [vmem:[#allocation2 + $0x98] sm:$0xff]
      %v1940 = vld [vmem:[#allocation2 + $0xa0] sm:$0xff]
      %v1941 = vld [vmem:[#allocation2 + $0xa8] sm:$0xff]
      %v1942 = vld [vmem:[#allocation2 + $0xb0] sm:$0xff]
      %v1943 = vld [vmem:[#allocation2 + $0xb8] sm:$0xff]
      %v1944 = vld [vmem:[#allocation2 + $0xc0] sm:$0xff]
      %v1945 = vld [vmem:[#allocation2 + $0xc8] sm:$0xff]
      %v1946 = vld [vmem:[#allocation2 + $0xd0] sm:$0xff]
      %v1947 = vld [vmem:[#allocation2 + $0xd8] sm:$0xff]
      %v1948 = vld [vmem:[#allocation2 + $0xe0] sm:$0xff]
      %v1949 = vld [vmem:[#allocation2 + $0xe8] sm:$0xff]
      %v1950 = vld [vmem:[#allocation2 + $0xf0] sm:$0xff]
      %v1951 = vld [vmem:[#allocation2 + $0xf8] sm:$0xff]
      %s1952 = scalar_lea.vmem %s276, 384
      %v1953 = vld [vmem:[%s1952] sm:$0xf]
      %v1954 = vld [vmem:[%s1952 + $0x4] sm:$0xf]
      %v1955 = vld [vmem:[%s1952 + $0x8] sm:$0xf]
      %v1956 = vld [vmem:[%s1952 + $0xc] sm:$0xf]
      %v1957 = vld [vmem:[%s1952 + $0x10] sm:$0xf]
      %v1958 = vld [vmem:[%s1952 + $0x14] sm:$0xf]
      %v1959 = vld [vmem:[%s1952 + $0x18] sm:$0xf]
      %v1960 = vld [vmem:[%s1952 + $0x1c] sm:$0xf]
      %v1961 = vld [vmem:[%s1952 + $0x20] sm:$0xf]
      %v1962 = vld [vmem:[%s1952 + $0x24] sm:$0xf]
      %v1963 = vld [vmem:[%s1952 + $0x28] sm:$0xf]
      %v1964 = vld [vmem:[%s1952 + $0x2c] sm:$0xf]
      %v1965 = vld [vmem:[%s1952 + $0x30] sm:$0xf]
      %v1966 = vld [vmem:[%s1952 + $0x34] sm:$0xf]
      %v1967 = vld [vmem:[%s1952 + $0x38] sm:$0xf]
      %v1968 = vld [vmem:[%s1952 + $0x3c] sm:$0xf]
      %v1969 = vld [vmem:[%s1952 + $0x40] sm:$0xf]
      %v1970 = vld [vmem:[%s1952 + $0x44] sm:$0xf]
      %v1971 = vld [vmem:[%s1952 + $0x48] sm:$0xf]
      %v1972 = vld [vmem:[%s1952 + $0x4c] sm:$0xf]
      %v1973 = vld [vmem:[%s1952 + $0x50] sm:$0xf]
      %v1974 = vld [vmem:[%s1952 + $0x54] sm:$0xf]
      %v1975 = vld [vmem:[%s1952 + $0x58] sm:$0xf]
      %v1976 = vld [vmem:[%s1952 + $0x5c] sm:$0xf]
      %v1977 = vld [vmem:[%s1952 + $0x60] sm:$0xf]
      %v1978 = vld [vmem:[%s1952 + $0x64] sm:$0xf]
      %v1979 = vld [vmem:[%s1952 + $0x68] sm:$0xf]
      %v1980 = vld [vmem:[%s1952 + $0x6c] sm:$0xf]
      %v1981 = vld [vmem:[%s1952 + $0x70] sm:$0xf]
      %v1982 = vld [vmem:[%s1952 + $0x74] sm:$0xf]
      %v1983 = vld [vmem:[%s1952 + $0x78] sm:$0xf]
      %v1984 = vld [vmem:[%s1952 + $0x7c] sm:$0xf]
      %v1985 = vld [vmem:[%s1952 + $0x80] sm:$0xf]
      %v1986 = vld [vmem:[%s1952 + $0x84] sm:$0xf]
      %v1987 = vld [vmem:[%s1952 + $0x88] sm:$0xf]
      %v1988 = vld [vmem:[%s1952 + $0x8c] sm:$0xf]
      %v1989 = vld [vmem:[%s1952 + $0x90] sm:$0xf]
      %v1990 = vld [vmem:[%s1952 + $0x94] sm:$0xf]
      %v1991 = vld [vmem:[%s1952 + $0x98] sm:$0xf]
      %v1992 = vld [vmem:[%s1952 + $0x9c] sm:$0xf]
      %v1993 = vld [vmem:[%s1952 + $0xa0] sm:$0xf]
      %v1994 = vld [vmem:[%s1952 + $0xa4] sm:$0xf]
      %v1995 = vld [vmem:[%s1952 + $0xa8] sm:$0xf]
      %v1996 = vld [vmem:[%s1952 + $0xac] sm:$0xf]
      %v1997 = vld [vmem:[%s1952 + $0xb0] sm:$0xf]
      %v1998 = vld [vmem:[%s1952 + $0xb4] sm:$0xf]
      %v1999 = vld [vmem:[%s1952 + $0xb8] sm:$0xf]
      %v2000 = vld [vmem:[%s1952 + $0xbc] sm:$0xf]
      %v2001 = vld [vmem:[%s1952 + $0xc0] sm:$0xf]
      %v2002 = vld [vmem:[%s1952 + $0xc4] sm:$0xf]
      %v2003 = vld [vmem:[%s1952 + $0xc8] sm:$0xf]
      %v2004 = vld [vmem:[%s1952 + $0xcc] sm:$0xf]
      %v2005 = vld [vmem:[%s1952 + $0xd0] sm:$0xf]
      %v2006 = vld [vmem:[%s1952 + $0xd4] sm:$0xf]
      %v2007 = vld [vmem:[%s1952 + $0xd8] sm:$0xf]
      %v2008 = vld [vmem:[%s1952 + $0xdc] sm:$0xf]
      %v2009 = vld [vmem:[%s1952 + $0xe0] sm:$0xf]
      %v2010 = vld [vmem:[%s1952 + $0xe4] sm:$0xf]
      %v2011 = vld [vmem:[%s1952 + $0xe8] sm:$0xf]
      %v2012 = vld [vmem:[%s1952 + $0xec] sm:$0xf]
      %v2013 = vld [vmem:[%s1952 + $0xf0] sm:$0xf]
      %v2014 = vld [vmem:[%s1952 + $0xf4] sm:$0xf]
      %v2015 = vld [vmem:[%s1952 + $0xf8] sm:$0xf]
      %v2016 = vld [vmem:[%s1952 + $0xfc] sm:$0xf]
      %v2017 = vld [vmem:[%s1952 + $0x100] sm:$0xf]
      %v2018 = vld [vmem:[%s1952 + $0x104] sm:$0xf]
      %v2019 = vld [vmem:[%s1952 + $0x108] sm:$0xf]
      %v2020 = vld [vmem:[%s1952 + $0x10c] sm:$0xf]
      %v2021 = vld [vmem:[%s1952 + $0x110] sm:$0xf]
      %v2022 = vld [vmem:[%s1952 + $0x114] sm:$0xf]
      %v2023 = vld [vmem:[%s1952 + $0x118] sm:$0xf]
      %v2024 = vld [vmem:[%s1952 + $0x11c] sm:$0xf]
      %v2025 = vld [vmem:[%s1952 + $0x120] sm:$0xf]
      %v2026 = vld [vmem:[%s1952 + $0x124] sm:$0xf]
      %v2027 = vld [vmem:[%s1952 + $0x128] sm:$0xf]
      %v2028 = vld [vmem:[%s1952 + $0x12c] sm:$0xf]
      %v2029 = vld [vmem:[%s1952 + $0x130] sm:$0xf]
      %v2030 = vld [vmem:[%s1952 + $0x134] sm:$0xf]
      %v2031 = vld [vmem:[%s1952 + $0x138] sm:$0xf]
      %v2032 = vld [vmem:[%s1952 + $0x13c] sm:$0xf]
      %v2033 = vld [vmem:[%s1952 + $0x140] sm:$0xf]
      %v2034 = vld [vmem:[%s1952 + $0x144] sm:$0xf]
      %v2035 = vld [vmem:[%s1952 + $0x148] sm:$0xf]
      %v2036 = vld [vmem:[%s1952 + $0x14c] sm:$0xf]
      %v2037 = vld [vmem:[%s1952 + $0x150] sm:$0xf]
      %v2038 = vld [vmem:[%s1952 + $0x154] sm:$0xf]
      %v2039 = vld [vmem:[%s1952 + $0x158] sm:$0xf]
      %v2040 = vld [vmem:[%s1952 + $0x15c] sm:$0xf]
      %v2041 = vld [vmem:[%s1952 + $0x160] sm:$0xf]
      %v2042 = vld [vmem:[%s1952 + $0x164] sm:$0xf]
      %v2043 = vld [vmem:[%s1952 + $0x168] sm:$0xf]
      %v2044 = vld [vmem:[%s1952 + $0x16c] sm:$0xf]
      %v2045 = vld [vmem:[%s1952 + $0x170] sm:$0xf]
      %v2046 = vld [vmem:[%s1952 + $0x174] sm:$0xf]
      %v2047 = vld [vmem:[%s1952 + $0x178] sm:$0xf]
      %v2048 = vld [vmem:[%s1952 + $0x17c] sm:$0xf]
      %v2145 = vunpack.c.l.b16 %v1824
      %v2146 = vunpack.c.h.b16 %v1824
      %v2147 = vunpack.c.l.b16 %v1825
      %v2148 = vunpack.c.h.b16 %v1825
      %v2149 = vunpack.c.l.b16 %v1826
      %v2150 = vunpack.c.h.b16 %v1826
      %v2151 = vunpack.c.l.b16 %v1827
      %v2152 = vunpack.c.h.b16 %v1827
      %v2153 = vunpack.c.l.b16 %v1828
      %v2154 = vunpack.c.h.b16 %v1828
      %v2155 = vunpack.c.l.b16 %v1829
      %v2156 = vunpack.c.h.b16 %v1829
      %v2157 = vunpack.c.l.b16 %v1830
      %v2158 = vunpack.c.h.b16 %v1830
      %v2159 = vunpack.c.l.b16 %v1831
      %v2160 = vunpack.c.h.b16 %v1831
      %v2161 = vunpack.c.l.b16 %v1832
      %v2162 = vunpack.c.h.b16 %v1832
      %v2163 = vunpack.c.l.b16 %v1833
      %v2164 = vunpack.c.h.b16 %v1833
      %v2165 = vunpack.c.l.b16 %v1834
      %v2166 = vunpack.c.h.b16 %v1834
      %v2167 = vunpack.c.l.b16 %v1835
      %v2168 = vunpack.c.h.b16 %v1835
      %v2169 = vunpack.c.l.b16 %v1836
      %v2170 = vunpack.c.h.b16 %v1836
      %v2171 = vunpack.c.l.b16 %v1837
      %v2172 = vunpack.c.h.b16 %v1837
      %v2173 = vunpack.c.l.b16 %v1838
      %v2174 = vunpack.c.h.b16 %v1838
      %v2175 = vunpack.c.l.b16 %v1839
      %v2176 = vunpack.c.h.b16 %v1839
      %v2177 = vunpack.c.l.b16 %v1840
      %v2178 = vunpack.c.h.b16 %v1840
      %v2179 = vunpack.c.l.b16 %v1841
      %v2180 = vunpack.c.h.b16 %v1841
      %v2181 = vunpack.c.l.b16 %v1842
      %v2182 = vunpack.c.h.b16 %v1842
      %v2183 = vunpack.c.l.b16 %v1843
      %v2184 = vunpack.c.h.b16 %v1843
      %v2185 = vunpack.c.l.b16 %v1844
      %v2186 = vunpack.c.h.b16 %v1844
      %v2187 = vunpack.c.l.b16 %v1845
      %v2188 = vunpack.c.h.b16 %v1845
      %v2189 = vunpack.c.l.b16 %v1846
      %v2190 = vunpack.c.h.b16 %v1846
      %v2191 = vunpack.c.l.b16 %v1847
      %v2192 = vunpack.c.h.b16 %v1847
      %v2193 = vunpack.c.l.b16 %v1848
      %v2194 = vunpack.c.h.b16 %v1848
      %v2195 = vunpack.c.l.b16 %v1849
      %v2196 = vunpack.c.h.b16 %v1849
      %v2197 = vunpack.c.l.b16 %v1850
      %v2198 = vunpack.c.h.b16 %v1850
      %v2199 = vunpack.c.l.b16 %v1851
      %v2200 = vunpack.c.h.b16 %v1851
      %v2201 = vunpack.c.l.b16 %v1852
      %v2202 = vunpack.c.h.b16 %v1852
      %v2203 = vunpack.c.l.b16 %v1853
      %v2204 = vunpack.c.h.b16 %v1853
      %v2205 = vunpack.c.l.b16 %v1854
      %v2206 = vunpack.c.h.b16 %v1854
      %v2207 = vunpack.c.l.b16 %v1855
      %v2208 = vunpack.c.h.b16 %v1855
      %v2209 = vunpack.c.l.b16 %v1856
      %v2210 = vunpack.c.h.b16 %v1856
      %v2211 = vunpack.c.l.b16 %v1857
      %v2212 = vunpack.c.h.b16 %v1857
      %v2213 = vunpack.c.l.b16 %v1858
      %v2214 = vunpack.c.h.b16 %v1858
      %v2215 = vunpack.c.l.b16 %v1859
      %v2216 = vunpack.c.h.b16 %v1859
      %v2217 = vunpack.c.l.b16 %v1860
      %v2218 = vunpack.c.h.b16 %v1860
      %v2219 = vunpack.c.l.b16 %v1861
      %v2220 = vunpack.c.h.b16 %v1861
      %v2221 = vunpack.c.l.b16 %v1862
      %v2222 = vunpack.c.h.b16 %v1862
      %v2223 = vunpack.c.l.b16 %v1863
      %v2224 = vunpack.c.h.b16 %v1863
      %v2225 = vunpack.c.l.b16 %v1864
      %v2226 = vunpack.c.h.b16 %v1864
      %v2227 = vunpack.c.l.b16 %v1865
      %v2228 = vunpack.c.h.b16 %v1865
      %v2229 = vunpack.c.l.b16 %v1866
      %v2230 = vunpack.c.h.b16 %v1866
      %v2231 = vunpack.c.l.b16 %v1867
      %v2232 = vunpack.c.h.b16 %v1867
      %v2233 = vunpack.c.l.b16 %v1868
      %v2234 = vunpack.c.h.b16 %v1868
      %v2235 = vunpack.c.l.b16 %v1869
      %v2236 = vunpack.c.h.b16 %v1869
      %v2237 = vunpack.c.l.b16 %v1870
      %v2238 = vunpack.c.h.b16 %v1870
      %v2239 = vunpack.c.l.b16 %v1871
      %v2240 = vunpack.c.h.b16 %v1871
      %v2241 = vunpack.c.l.b16 %v1872
      %v2242 = vunpack.c.h.b16 %v1872
      %v2243 = vunpack.c.l.b16 %v1873
      %v2244 = vunpack.c.h.b16 %v1873
      %v2245 = vunpack.c.l.b16 %v1874
      %v2246 = vunpack.c.h.b16 %v1874
      %v2247 = vunpack.c.l.b16 %v1875
      %v2248 = vunpack.c.h.b16 %v1875
      %v2249 = vunpack.c.l.b16 %v1876
      %v2250 = vunpack.c.h.b16 %v1876
      %v2251 = vunpack.c.l.b16 %v1877
      %v2252 = vunpack.c.h.b16 %v1877
      %v2253 = vunpack.c.l.b16 %v1878
      %v2254 = vunpack.c.h.b16 %v1878
      %v2255 = vunpack.c.l.b16 %v1879
      %v2256 = vunpack.c.h.b16 %v1879
      %v2257 = vunpack.c.l.b16 %v1880
      %v2258 = vunpack.c.h.b16 %v1880
      %v2259 = vunpack.c.l.b16 %v1881
      %v2260 = vunpack.c.h.b16 %v1881
      %v2261 = vunpack.c.l.b16 %v1882
      %v2262 = vunpack.c.h.b16 %v1882
      %v2263 = vunpack.c.l.b16 %v1883
      %v2264 = vunpack.c.h.b16 %v1883
      %v2265 = vunpack.c.l.b16 %v1884
      %v2266 = vunpack.c.h.b16 %v1884
      %v2267 = vunpack.c.l.b16 %v1885
      %v2268 = vunpack.c.h.b16 %v1885
      %v2269 = vunpack.c.l.b16 %v1886
      %v2270 = vunpack.c.h.b16 %v1886
      %v2271 = vunpack.c.l.b16 %v1887
      %v2272 = vunpack.c.h.b16 %v1887
      %v2273 = vunpack.c.l.b16 %v1888
      %v2274 = vunpack.c.h.b16 %v1888
      %v2275 = vunpack.c.l.b16 %v1889
      %v2276 = vunpack.c.h.b16 %v1889
      %v2277 = vunpack.c.l.b16 %v1890
      %v2278 = vunpack.c.h.b16 %v1890
      %v2279 = vunpack.c.l.b16 %v1891
      %v2280 = vunpack.c.h.b16 %v1891
      %v2281 = vunpack.c.l.b16 %v1892
      %v2282 = vunpack.c.h.b16 %v1892
      %v2283 = vunpack.c.l.b16 %v1893
      %v2284 = vunpack.c.h.b16 %v1893
      %v2285 = vunpack.c.l.b16 %v1894
      %v2286 = vunpack.c.h.b16 %v1894
      %v2287 = vunpack.c.l.b16 %v1895
      %v2288 = vunpack.c.h.b16 %v1895
      %v2289 = vunpack.c.l.b16 %v1896
      %v2290 = vunpack.c.h.b16 %v1896
      %v2291 = vunpack.c.l.b16 %v1897
      %v2292 = vunpack.c.h.b16 %v1897
      %v2293 = vunpack.c.l.b16 %v1898
      %v2294 = vunpack.c.h.b16 %v1898
      %v2295 = vunpack.c.l.b16 %v1899
      %v2296 = vunpack.c.h.b16 %v1899
      %v2297 = vunpack.c.l.b16 %v1900
      %v2298 = vunpack.c.h.b16 %v1900
      %v2299 = vunpack.c.l.b16 %v1901
      %v2300 = vunpack.c.h.b16 %v1901
      %v2301 = vunpack.c.l.b16 %v1902
      %v2302 = vunpack.c.h.b16 %v1902
      %v2303 = vunpack.c.l.b16 %v1903
      %v2304 = vunpack.c.h.b16 %v1903
      %v2305 = vunpack.c.l.b16 %v1904
      %v2306 = vunpack.c.h.b16 %v1904
      %v2307 = vunpack.c.l.b16 %v1905
      %v2308 = vunpack.c.h.b16 %v1905
      %v2309 = vunpack.c.l.b16 %v1906
      %v2310 = vunpack.c.h.b16 %v1906
      %v2311 = vunpack.c.l.b16 %v1907
      %v2312 = vunpack.c.h.b16 %v1907
      %v2313 = vunpack.c.l.b16 %v1908
      %v2314 = vunpack.c.h.b16 %v1908
      %v2315 = vunpack.c.l.b16 %v1909
      %v2316 = vunpack.c.h.b16 %v1909
      %v2317 = vunpack.c.l.b16 %v1910
      %v2318 = vunpack.c.h.b16 %v1910
      %v2319 = vunpack.c.l.b16 %v1911
      %v2320 = vunpack.c.h.b16 %v1911
      %v2321 = vunpack.c.l.b16 %v1912
      %v2322 = vunpack.c.h.b16 %v1912
      %v2323 = vunpack.c.l.b16 %v1913
      %v2324 = vunpack.c.h.b16 %v1913
      %v2325 = vunpack.c.l.b16 %v1914
      %v2326 = vunpack.c.h.b16 %v1914
      %v2327 = vunpack.c.l.b16 %v1915
      %v2328 = vunpack.c.h.b16 %v1915
      %v2329 = vunpack.c.l.b16 %v1916
      %v2330 = vunpack.c.h.b16 %v1916
      %v2331 = vunpack.c.l.b16 %v1917
      %v2332 = vunpack.c.h.b16 %v1917
      %v2333 = vunpack.c.l.b16 %v1918
      %v2334 = vunpack.c.h.b16 %v1918
      %v2335 = vunpack.c.l.b16 %v1919
      %v2336 = vunpack.c.h.b16 %v1919
      %v2337 = vpack.c.b16 %v2151, %v2145
      %v2338 = vpack.c.b16 %v2152, %v2146
      %v2339 = vpack.c.b16 %v2153, %v2147
      %v2340 = vpack.c.b16 %v2154, %v2148
      %v2341 = vpack.c.b16 %v2155, %v2149
      %v2342 = vpack.c.b16 %v2156, %v2150
      %v2343 = vpack.c.b16 %v2163, %v2157
      %v2344 = vpack.c.b16 %v2164, %v2158
      %v2345 = vpack.c.b16 %v2165, %v2159
      %v2346 = vpack.c.b16 %v2166, %v2160
      %v2347 = vpack.c.b16 %v2167, %v2161
      %v2348 = vpack.c.b16 %v2168, %v2162
      %v2349 = vpack.c.b16 %v2175, %v2169
      %v2350 = vpack.c.b16 %v2176, %v2170
      %v2351 = vpack.c.b16 %v2177, %v2171
      %v2352 = vpack.c.b16 %v2178, %v2172
      %v2353 = vpack.c.b16 %v2179, %v2173
      %v2354 = vpack.c.b16 %v2180, %v2174
      %v2355 = vpack.c.b16 %v2187, %v2181
      %v2356 = vpack.c.b16 %v2188, %v2182
      %v2357 = vpack.c.b16 %v2189, %v2183
      %v2358 = vpack.c.b16 %v2190, %v2184
      %v2359 = vpack.c.b16 %v2191, %v2185
      %v2360 = vpack.c.b16 %v2192, %v2186
      %v2361 = vpack.c.b16 %v2199, %v2193
      %v2362 = vpack.c.b16 %v2200, %v2194
      %v2363 = vpack.c.b16 %v2201, %v2195
      %v2364 = vpack.c.b16 %v2202, %v2196
      %v2365 = vpack.c.b16 %v2203, %v2197
      %v2366 = vpack.c.b16 %v2204, %v2198
      %v2367 = vpack.c.b16 %v2211, %v2205
      %v2368 = vpack.c.b16 %v2212, %v2206
      %v2369 = vpack.c.b16 %v2213, %v2207
      %v2370 = vpack.c.b16 %v2214, %v2208
      %v2371 = vpack.c.b16 %v2215, %v2209
      %v2372 = vpack.c.b16 %v2216, %v2210
      %v2373 = vpack.c.b16 %v2223, %v2217
      %v2374 = vpack.c.b16 %v2224, %v2218
      %v2375 = vpack.c.b16 %v2225, %v2219
      %v2376 = vpack.c.b16 %v2226, %v2220
      %v2377 = vpack.c.b16 %v2227, %v2221
      %v2378 = vpack.c.b16 %v2228, %v2222
      %v2379 = vpack.c.b16 %v2235, %v2229
      %v2380 = vpack.c.b16 %v2236, %v2230
      %v2381 = vpack.c.b16 %v2237, %v2231
      %v2382 = vpack.c.b16 %v2238, %v2232
      %v2383 = vpack.c.b16 %v2239, %v2233
      %v2384 = vpack.c.b16 %v2240, %v2234
      %v2385 = vpack.c.b16 %v2247, %v2241
      %v2386 = vpack.c.b16 %v2248, %v2242
      %v2387 = vpack.c.b16 %v2249, %v2243
      %v2388 = vpack.c.b16 %v2250, %v2244
      %v2389 = vpack.c.b16 %v2251, %v2245
      %v2390 = vpack.c.b16 %v2252, %v2246
      %v2391 = vpack.c.b16 %v2259, %v2253
      %v2392 = vpack.c.b16 %v2260, %v2254
      %v2393 = vpack.c.b16 %v2261, %v2255
      %v2394 = vpack.c.b16 %v2262, %v2256
      %v2395 = vpack.c.b16 %v2263, %v2257
      %v2396 = vpack.c.b16 %v2264, %v2258
      %v2397 = vpack.c.b16 %v2271, %v2265
      %v2398 = vpack.c.b16 %v2272, %v2266
      %v2399 = vpack.c.b16 %v2273, %v2267
      %v2400 = vpack.c.b16 %v2274, %v2268
      %v2401 = vpack.c.b16 %v2275, %v2269
      %v2402 = vpack.c.b16 %v2276, %v2270
      %v2403 = vpack.c.b16 %v2283, %v2277
      %v2404 = vpack.c.b16 %v2284, %v2278
      %v2405 = vpack.c.b16 %v2285, %v2279
      %v2406 = vpack.c.b16 %v2286, %v2280
      %v2407 = vpack.c.b16 %v2287, %v2281
      %v2408 = vpack.c.b16 %v2288, %v2282
      %v2409 = vpack.c.b16 %v2295, %v2289
      %v2410 = vpack.c.b16 %v2296, %v2290
      %v2411 = vpack.c.b16 %v2297, %v2291
      %v2412 = vpack.c.b16 %v2298, %v2292
      %v2413 = vpack.c.b16 %v2299, %v2293
      %v2414 = vpack.c.b16 %v2300, %v2294
      %v2415 = vpack.c.b16 %v2307, %v2301
      %v2416 = vpack.c.b16 %v2308, %v2302
      %v2417 = vpack.c.b16 %v2309, %v2303
      %v2418 = vpack.c.b16 %v2310, %v2304
      %v2419 = vpack.c.b16 %v2311, %v2305
      %v2420 = vpack.c.b16 %v2312, %v2306
      %v2421 = vpack.c.b16 %v2319, %v2313
      %v2422 = vpack.c.b16 %v2320, %v2314
      %v2423 = vpack.c.b16 %v2321, %v2315
      %v2424 = vpack.c.b16 %v2322, %v2316
      %v2425 = vpack.c.b16 %v2323, %v2317
      %v2426 = vpack.c.b16 %v2324, %v2318
      %v2427 = vpack.c.b16 %v2331, %v2325
      %v2428 = vpack.c.b16 %v2332, %v2326
      %v2429 = vpack.c.b16 %v2333, %v2327
      %v2430 = vpack.c.b16 %v2334, %v2328
      %v2431 = vpack.c.b16 %v2335, %v2329
      %v2432 = vpack.c.b16 %v2336, %v2330
      %v2625 = vunpack.c.l.b16 %v1953
      %v2626 = vunpack.c.l.b16 %v1954
      %v2627 = vunpack.c.l.b16 %v1955
      %v2628 = vunpack.c.l.b16 %v1956
      %v2629 = vunpack.c.l.b16 %v1957
      %v2630 = vunpack.c.l.b16 %v1958
      %v2631 = vunpack.c.l.b16 %v1959
      %v2632 = vunpack.c.l.b16 %v1960
      %v2633 = vunpack.c.l.b16 %v1961
      %v2634 = vunpack.c.l.b16 %v1962
      %v2635 = vunpack.c.l.b16 %v1963
      %v2636 = vunpack.c.l.b16 %v1964
      %v2637 = vunpack.c.l.b16 %v1965
      %v2638 = vunpack.c.l.b16 %v1966
      %v2639 = vunpack.c.l.b16 %v1967
      %v2640 = vunpack.c.l.b16 %v1968
      %v2641 = vunpack.c.l.b16 %v1969
      %v2642 = vunpack.c.l.b16 %v1970
      %v2643 = vunpack.c.l.b16 %v1971
      %v2644 = vunpack.c.l.b16 %v1972
      %v2645 = vunpack.c.l.b16 %v1973
      %v2646 = vunpack.c.l.b16 %v1974
      %v2647 = vunpack.c.l.b16 %v1975
      %v2648 = vunpack.c.l.b16 %v1976
      %v2649 = vunpack.c.l.b16 %v1977
      %v2650 = vunpack.c.l.b16 %v1978
      %v2651 = vunpack.c.l.b16 %v1979
      %v2652 = vunpack.c.l.b16 %v1980
      %v2653 = vunpack.c.l.b16 %v1981
      %v2654 = vunpack.c.l.b16 %v1982
      %v2655 = vunpack.c.l.b16 %v1983
      %v2656 = vunpack.c.l.b16 %v1984
      %v2657 = vunpack.c.l.b16 %v1985
      %v2658 = vunpack.c.l.b16 %v1986
      %v2659 = vunpack.c.l.b16 %v1987
      %v2660 = vunpack.c.l.b16 %v1988
      %v2661 = vunpack.c.l.b16 %v1989
      %v2662 = vunpack.c.l.b16 %v1990
      %v2663 = vunpack.c.l.b16 %v1991
      %v2664 = vunpack.c.l.b16 %v1992
      %v2665 = vunpack.c.l.b16 %v1993
      %v2666 = vunpack.c.l.b16 %v1994
      %v2667 = vunpack.c.l.b16 %v1995
      %v2668 = vunpack.c.l.b16 %v1996
      %v2669 = vunpack.c.l.b16 %v1997
      %v2670 = vunpack.c.l.b16 %v1998
      %v2671 = vunpack.c.l.b16 %v1999
      %v2672 = vunpack.c.l.b16 %v2000
      %v2673 = vunpack.c.l.b16 %v2001
      %v2674 = vunpack.c.l.b16 %v2002
      %v2675 = vunpack.c.l.b16 %v2003
      %v2676 = vunpack.c.l.b16 %v2004
      %v2677 = vunpack.c.l.b16 %v2005
      %v2678 = vunpack.c.l.b16 %v2006
      %v2679 = vunpack.c.l.b16 %v2007
      %v2680 = vunpack.c.l.b16 %v2008
      %v2681 = vunpack.c.l.b16 %v2009
      %v2682 = vunpack.c.l.b16 %v2010
      %v2683 = vunpack.c.l.b16 %v2011
      %v2684 = vunpack.c.l.b16 %v2012
      %v2685 = vunpack.c.l.b16 %v2013
      %v2686 = vunpack.c.l.b16 %v2014
      %v2687 = vunpack.c.l.b16 %v2015
      %v2688 = vunpack.c.l.b16 %v2016
      %v2689 = vunpack.c.l.b16 %v2017
      %v2690 = vunpack.c.l.b16 %v2018
      %v2691 = vunpack.c.l.b16 %v2019
      %v2692 = vunpack.c.l.b16 %v2020
      %v2693 = vunpack.c.l.b16 %v2021
      %v2694 = vunpack.c.l.b16 %v2022
      %v2695 = vunpack.c.l.b16 %v2023
      %v2696 = vunpack.c.l.b16 %v2024
      %v2697 = vunpack.c.l.b16 %v2025
      %v2698 = vunpack.c.l.b16 %v2026
      %v2699 = vunpack.c.l.b16 %v2027
      %v2700 = vunpack.c.l.b16 %v2028
      %v2701 = vunpack.c.l.b16 %v2029
      %v2702 = vunpack.c.l.b16 %v2030
      %v2703 = vunpack.c.l.b16 %v2031
      %v2704 = vunpack.c.l.b16 %v2032
      %v2705 = vunpack.c.l.b16 %v2033
      %v2706 = vunpack.c.l.b16 %v2034
      %v2707 = vunpack.c.l.b16 %v2035
      %v2708 = vunpack.c.l.b16 %v2036
      %v2709 = vunpack.c.l.b16 %v2037
      %v2710 = vunpack.c.l.b16 %v2038
      %v2711 = vunpack.c.l.b16 %v2039
      %v2712 = vunpack.c.l.b16 %v2040
      %v2713 = vunpack.c.l.b16 %v2041
      %v2714 = vunpack.c.l.b16 %v2042
      %v2715 = vunpack.c.l.b16 %v2043
      %v2716 = vunpack.c.l.b16 %v2044
      %v2717 = vunpack.c.l.b16 %v2045
      %v2718 = vunpack.c.l.b16 %v2046
      %v2719 = vunpack.c.l.b16 %v2047
      %v2720 = vunpack.c.l.b16 %v2048
      %v2721 = vpack.c.b16 %v2626, %v2625
      %v2722 = vpack.c.b16 %v2628, %v2627
      %v2723 = vpack.c.b16 %v2630, %v2629
      %v2724 = vpack.c.b16 %v2632, %v2631
      %v2725 = vpack.c.b16 %v2634, %v2633
      %v2726 = vpack.c.b16 %v2636, %v2635
      %v2727 = vpack.c.b16 %v2638, %v2637
      %v2728 = vpack.c.b16 %v2640, %v2639
      %v2729 = vpack.c.b16 %v2642, %v2641
      %v2730 = vpack.c.b16 %v2644, %v2643
      %v2731 = vpack.c.b16 %v2646, %v2645
      %v2732 = vpack.c.b16 %v2648, %v2647
      %v2733 = vpack.c.b16 %v2650, %v2649
      %v2734 = vpack.c.b16 %v2652, %v2651
      %v2735 = vpack.c.b16 %v2654, %v2653
      %v2736 = vpack.c.b16 %v2656, %v2655
      %v2737 = vpack.c.b16 %v2658, %v2657
      %v2738 = vpack.c.b16 %v2660, %v2659
      %v2739 = vpack.c.b16 %v2662, %v2661
      %v2740 = vpack.c.b16 %v2664, %v2663
      %v2741 = vpack.c.b16 %v2666, %v2665
      %v2742 = vpack.c.b16 %v2668, %v2667
      %v2743 = vpack.c.b16 %v2670, %v2669
      %v2744 = vpack.c.b16 %v2672, %v2671
      %v2745 = vpack.c.b16 %v2674, %v2673
      %v2746 = vpack.c.b16 %v2676, %v2675
      %v2747 = vpack.c.b16 %v2678, %v2677
      %v2748 = vpack.c.b16 %v2680, %v2679
      %v2749 = vpack.c.b16 %v2682, %v2681
      %v2750 = vpack.c.b16 %v2684, %v2683
      %v2751 = vpack.c.b16 %v2686, %v2685
      %v2752 = vpack.c.b16 %v2688, %v2687
      %v2753 = vpack.c.b16 %v2690, %v2689
      %v2754 = vpack.c.b16 %v2692, %v2691
      %v2755 = vpack.c.b16 %v2694, %v2693
      %v2756 = vpack.c.b16 %v2696, %v2695
      %v2757 = vpack.c.b16 %v2698, %v2697
      %v2758 = vpack.c.b16 %v2700, %v2699
      %v2759 = vpack.c.b16 %v2702, %v2701
      %v2760 = vpack.c.b16 %v2704, %v2703
      %v2761 = vpack.c.b16 %v2706, %v2705
      %v2762 = vpack.c.b16 %v2708, %v2707
      %v2763 = vpack.c.b16 %v2710, %v2709
      %v2764 = vpack.c.b16 %v2712, %v2711
      %v2765 = vpack.c.b16 %v2714, %v2713
      %v2766 = vpack.c.b16 %v2716, %v2715
      %v2767 = vpack.c.b16 %v2718, %v2717
      %v2768 = vpack.c.b16 %v2720, %v2719
      %2817 = vmatpush.bf16.msra.mxu0 %v2728
      %2818 = vmatpush.bf16.msra.mxu0 %v2727
      %2819 = vmatpush.bf16.msra.mxu0 %v2726
      %2820 = vmatpush.bf16.msra.mxu0 %v2725
      %2821 = vmatpush.bf16.msra.mxu0 %v2724
      %2822 = vmatpush.bf16.msra.mxu0 %v2723
      %2823 = vmatpush.bf16.msra.mxu0 %v2722
      %2824 = vmatpush.bf16.msra.mxu0 %v2721
      %2825 = vmatmul.bf16.gmra.mxu0 %v2337
      %v2826 = vpop.f32.mrf.mxu0
      %v2827 = vadd.f32 0.0, %v2826
      %v2828 = vpop.f32.mrf.mxu0
      %v2829 = vadd.f32 0.0, %v2828
      %2830 = vmatmul.bf16.gmra.mxu0 %v2343
      %v2831 = vpop.f32.mrf.mxu0
      %v2832 = vadd.f32 0.0, %v2831
      %v2833 = vpop.f32.mrf.mxu0
      %v2834 = vadd.f32 0.0, %v2833
      %2835 = vmatmul.bf16.gmra.mxu0 %v2349
      %v2836 = vpop.f32.mrf.mxu0
      %v2837 = vadd.f32 0.0, %v2836
      %v2838 = vpop.f32.mrf.mxu0
      %v2839 = vadd.f32 0.0, %v2838
      %2840 = vmatmul.bf16.gmra.mxu0 %v2355
      %v2841 = vpop.f32.mrf.mxu0
      %v2842 = vadd.f32 0.0, %v2841
      %v2843 = vpop.f32.mrf.mxu0
      %v2844 = vadd.f32 0.0, %v2843
      %2845 = vmatmul.bf16.gmra.mxu0 %v2361
      %v2846 = vpop.f32.mrf.mxu0
      %v2847 = vadd.f32 0.0, %v2846
      %v2848 = vpop.f32.mrf.mxu0
      %v2849 = vadd.f32 0.0, %v2848
      %2850 = vmatmul.bf16.gmra.mxu0 %v2367
      %v2851 = vpop.f32.mrf.mxu0
      %v2852 = vadd.f32 0.0, %v2851
      %v2853 = vpop.f32.mrf.mxu0
      %v2854 = vadd.f32 0.0, %v2853
      %2855 = vmatmul.bf16.gmra.mxu0 %v2373
      %v2856 = vpop.f32.mrf.mxu0
      %v2857 = vadd.f32 0.0, %v2856
      %v2858 = vpop.f32.mrf.mxu0
      %v2859 = vadd.f32 0.0, %v2858
      %2860 = vmatmul.bf16.gmra.mxu0 %v2379
      %v2861 = vpop.f32.mrf.mxu0
      %v2862 = vadd.f32 0.0, %v2861
      %v2863 = vpop.f32.mrf.mxu0
      %v2864 = vadd.f32 0.0, %v2863
      %2865 = vmatmul.bf16.gmra.mxu0 %v2385
      %v2866 = vpop.f32.mrf.mxu0
      %v2867 = vadd.f32 0.0, %v2866
      %v2868 = vpop.f32.mrf.mxu0
      %v2869 = vadd.f32 0.0, %v2868
      %2870 = vmatmul.bf16.gmra.mxu0 %v2391
      %v2871 = vpop.f32.mrf.mxu0
      %v2872 = vadd.f32 0.0, %v2871
      %v2873 = vpop.f32.mrf.mxu0
      %v2874 = vadd.f32 0.0, %v2873
      %2875 = vmatmul.bf16.gmra.mxu0 %v2397
      %v2876 = vpop.f32.mrf.mxu0
      %v2877 = vadd.f32 0.0, %v2876
      %v2878 = vpop.f32.mrf.mxu0
      %v2879 = vadd.f32 0.0, %v2878
      %2880 = vmatmul.bf16.gmra.mxu0 %v2403
      %v2881 = vpop.f32.mrf.mxu0
      %v2882 = vadd.f32 0.0, %v2881
      %v2883 = vpop.f32.mrf.mxu0
      %v2884 = vadd.f32 0.0, %v2883
      %2885 = vmatmul.bf16.gmra.mxu0 %v2409
      %v2886 = vpop.f32.mrf.mxu0
      %v2887 = vadd.f32 0.0, %v2886
      %v2888 = vpop.f32.mrf.mxu0
      %v2889 = vadd.f32 0.0, %v2888
      %2890 = vmatmul.bf16.gmra.mxu0 %v2415
      %v2891 = vpop.f32.mrf.mxu0
      %v2892 = vadd.f32 0.0, %v2891
      %v2893 = vpop.f32.mrf.mxu0
      %v2894 = vadd.f32 0.0, %v2893
      %2895 = vmatmul.bf16.gmra.mxu0 %v2421
      %v2896 = vpop.f32.mrf.mxu0
      %v2897 = vadd.f32 0.0, %v2896
      %v2898 = vpop.f32.mrf.mxu0
      %v2899 = vadd.f32 0.0, %v2898
      %2900 = vmatmul.bf16.gmra.mxu0 %v2427
      %v2901 = vpop.f32.mrf.mxu0
      %v2902 = vadd.f32 0.0, %v2901
      %v2903 = vpop.f32.mrf.mxu0
      %v2904 = vadd.f32 0.0, %v2903
      %2905 = vdwg.mxu0
      %2906 = vmatpush.bf16.msra.mxu0 %v2736
      %2907 = vmatpush.bf16.msra.mxu0 %v2735
      %2908 = vmatpush.bf16.msra.mxu0 %v2734
      %2909 = vmatpush.bf16.msra.mxu0 %v2733
      %2910 = vmatpush.bf16.msra.mxu0 %v2732
      %2911 = vmatpush.bf16.msra.mxu0 %v2731
      %2912 = vmatpush.bf16.msra.mxu0 %v2730
      %2913 = vmatpush.bf16.msra.mxu0 %v2729
      %2914 = vmatmul.bf16.gmra.mxu0 %v2338
      %v2915 = vpop.f32.mrf.mxu0
      %v2916 = vadd.f32 %v2827, %v2915
      %v2917 = vpop.f32.mrf.mxu0
      %v2918 = vadd.f32 %v2829, %v2917
      %2919 = vmatmul.bf16.gmra.mxu0 %v2344
      %v2920 = vpop.f32.mrf.mxu0
      %v2921 = vadd.f32 %v2832, %v2920
      %v2922 = vpop.f32.mrf.mxu0
      %v2923 = vadd.f32 %v2834, %v2922
      %2924 = vmatmul.bf16.gmra.mxu0 %v2350
      %v2925 = vpop.f32.mrf.mxu0
      %v2926 = vadd.f32 %v2837, %v2925
      %v2927 = vpop.f32.mrf.mxu0
      %v2928 = vadd.f32 %v2839, %v2927
      %2929 = vmatmul.bf16.gmra.mxu0 %v2356
      %v2930 = vpop.f32.mrf.mxu0
      %v2931 = vadd.f32 %v2842, %v2930
      %v2932 = vpop.f32.mrf.mxu0
      %v2933 = vadd.f32 %v2844, %v2932
      %2934 = vmatmul.bf16.gmra.mxu0 %v2362
      %v2935 = vpop.f32.mrf.mxu0
      %v2936 = vadd.f32 %v2847, %v2935
      %v2937 = vpop.f32.mrf.mxu0
      %v2938 = vadd.f32 %v2849, %v2937
      %2939 = vmatmul.bf16.gmra.mxu0 %v2368
      %v2940 = vpop.f32.mrf.mxu0
      %v2941 = vadd.f32 %v2852, %v2940
      %v2942 = vpop.f32.mrf.mxu0
      %v2943 = vadd.f32 %v2854, %v2942
      %2944 = vmatmul.bf16.gmra.mxu0 %v2374
      %v2945 = vpop.f32.mrf.mxu0
      %v2946 = vadd.f32 %v2857, %v2945
      %v2947 = vpop.f32.mrf.mxu0
      %v2948 = vadd.f32 %v2859, %v2947
      %2949 = vmatmul.bf16.gmra.mxu0 %v2380
      %v2950 = vpop.f32.mrf.mxu0
      %v2951 = vadd.f32 %v2862, %v2950
      %v2952 = vpop.f32.mrf.mxu0
      %v2953 = vadd.f32 %v2864, %v2952
      %2954 = vmatmul.bf16.gmra.mxu0 %v2386
      %v2955 = vpop.f32.mrf.mxu0
      %v2956 = vadd.f32 %v2867, %v2955
      %v2957 = vpop.f32.mrf.mxu0
      %v2958 = vadd.f32 %v2869, %v2957
      %2959 = vmatmul.bf16.gmra.mxu0 %v2392
      %v2960 = vpop.f32.mrf.mxu0
      %v2961 = vadd.f32 %v2872, %v2960
      %v2962 = vpop.f32.mrf.mxu0
      %v2963 = vadd.f32 %v2874, %v2962
      %2964 = vmatmul.bf16.gmra.mxu0 %v2398
      %v2965 = vpop.f32.mrf.mxu0
      %v2966 = vadd.f32 %v2877, %v2965
      %v2967 = vpop.f32.mrf.mxu0
      %v2968 = vadd.f32 %v2879, %v2967
      %2969 = vmatmul.bf16.gmra.mxu0 %v2404
      %v2970 = vpop.f32.mrf.mxu0
      %v2971 = vadd.f32 %v2882, %v2970
      %v2972 = vpop.f32.mrf.mxu0
      %v2973 = vadd.f32 %v2884, %v2972
      %2974 = vmatmul.bf16.gmra.mxu0 %v2410
      %v2975 = vpop.f32.mrf.mxu0
      %v2976 = vadd.f32 %v2887, %v2975
      %v2977 = vpop.f32.mrf.mxu0
      %v2978 = vadd.f32 %v2889, %v2977
      %2979 = vmatmul.bf16.gmra.mxu0 %v2416
      %v2980 = vpop.f32.mrf.mxu0
      %v2981 = vadd.f32 %v2892, %v2980
      %v2982 = vpop.f32.mrf.mxu0
      %v2983 = vadd.f32 %v2894, %v2982
      %2984 = vmatmul.bf16.gmra.mxu0 %v2422
      %v2985 = vpop.f32.mrf.mxu0
      %v2986 = vadd.f32 %v2897, %v2985
      %v2987 = vpop.f32.mrf.mxu0
      %v2988 = vadd.f32 %v2899, %v2987
      %2989 = vmatmul.bf16.gmra.mxu0 %v2428
      %v2990 = vpop.f32.mrf.mxu0
      %v2991 = vadd.f32 %v2902, %v2990
      %v2992 = vpop.f32.mrf.mxu0
      %v2993 = vadd.f32 %v2904, %v2992
      %2994 = vdwg.mxu0
      %2995 = vmatpush.bf16.msra.mxu0 %v2744
      %2996 = vmatpush.bf16.msra.mxu0 %v2743
      %2997 = vmatpush.bf16.msra.mxu0 %v2742
      %2998 = vmatpush.bf16.msra.mxu0 %v2741
      %2999 = vmatpush.bf16.msra.mxu0 %v2740
      %3000 = vmatpush.bf16.msra.mxu0 %v2739
      %3001 = vmatpush.bf16.msra.mxu0 %v2738
      %3002 = vmatpush.bf16.msra.mxu0 %v2737
      %3003 = vmatmul.bf16.gmra.mxu0 %v2339
      %v3004 = vpop.f32.mrf.mxu0
      %v3005 = vadd.f32 %v2916, %v3004
      %v3006 = vpop.f32.mrf.mxu0
      %v3007 = vadd.f32 %v2918, %v3006
      %3008 = vmatmul.bf16.gmra.mxu0 %v2345
      %v3009 = vpop.f32.mrf.mxu0
      %v3010 = vadd.f32 %v2921, %v3009
      %v3011 = vpop.f32.mrf.mxu0
      %v3012 = vadd.f32 %v2923, %v3011
      %3013 = vmatmul.bf16.gmra.mxu0 %v2351
      %v3014 = vpop.f32.mrf.mxu0
      %v3015 = vadd.f32 %v2926, %v3014
      %v3016 = vpop.f32.mrf.mxu0
      %v3017 = vadd.f32 %v2928, %v3016
      %3018 = vmatmul.bf16.gmra.mxu0 %v2357
      %v3019 = vpop.f32.mrf.mxu0
      %v3020 = vadd.f32 %v2931, %v3019
      %v3021 = vpop.f32.mrf.mxu0
      %v3022 = vadd.f32 %v2933, %v3021
      %3023 = vmatmul.bf16.gmra.mxu0 %v2363
      %v3024 = vpop.f32.mrf.mxu0
      %v3025 = vadd.f32 %v2936, %v3024
      %v3026 = vpop.f32.mrf.mxu0
      %v3027 = vadd.f32 %v2938, %v3026
      %3028 = vmatmul.bf16.gmra.mxu0 %v2369
      %v3029 = vpop.f32.mrf.mxu0
      %v3030 = vadd.f32 %v2941, %v3029
      %v3031 = vpop.f32.mrf.mxu0
      %v3032 = vadd.f32 %v2943, %v3031
      %3033 = vmatmul.bf16.gmra.mxu0 %v2375
      %v3034 = vpop.f32.mrf.mxu0
      %v3035 = vadd.f32 %v2946, %v3034
      %v3036 = vpop.f32.mrf.mxu0
      %v3037 = vadd.f32 %v2948, %v3036
      %3038 = vmatmul.bf16.gmra.mxu0 %v2381
      %v3039 = vpop.f32.mrf.mxu0
      %v3040 = vadd.f32 %v2951, %v3039
      %v3041 = vpop.f32.mrf.mxu0
      %v3042 = vadd.f32 %v2953, %v3041
      %3043 = vmatmul.bf16.gmra.mxu0 %v2387
      %v3044 = vpop.f32.mrf.mxu0
      %v3045 = vadd.f32 %v2956, %v3044
      %v3046 = vpop.f32.mrf.mxu0
      %v3047 = vadd.f32 %v2958, %v3046
      %3048 = vmatmul.bf16.gmra.mxu0 %v2393
      %v3049 = vpop.f32.mrf.mxu0
      %v3050 = vadd.f32 %v2961, %v3049
      %v3051 = vpop.f32.mrf.mxu0
      %v3052 = vadd.f32 %v2963, %v3051
      %3053 = vmatmul.bf16.gmra.mxu0 %v2399
      %v3054 = vpop.f32.mrf.mxu0
      %v3055 = vadd.f32 %v2966, %v3054
      %v3056 = vpop.f32.mrf.mxu0
      %v3057 = vadd.f32 %v2968, %v3056
      %3058 = vmatmul.bf16.gmra.mxu0 %v2405
      %v3059 = vpop.f32.mrf.mxu0
      %v3060 = vadd.f32 %v2971, %v3059
      %v3061 = vpop.f32.mrf.mxu0
      %v3062 = vadd.f32 %v2973, %v3061
      %3063 = vmatmul.bf16.gmra.mxu0 %v2411
      %v3064 = vpop.f32.mrf.mxu0
      %v3065 = vadd.f32 %v2976, %v3064
      %v3066 = vpop.f32.mrf.mxu0
      %v3067 = vadd.f32 %v2978, %v3066
      %3068 = vmatmul.bf16.gmra.mxu0 %v2417
      %v3069 = vpop.f32.mrf.mxu0
      %v3070 = vadd.f32 %v2981, %v3069
      %v3071 = vpop.f32.mrf.mxu0
      %v3072 = vadd.f32 %v2983, %v3071
      %3073 = vmatmul.bf16.gmra.mxu0 %v2423
      %v3074 = vpop.f32.mrf.mxu0
      %v3075 = vadd.f32 %v2986, %v3074
      %v3076 = vpop.f32.mrf.mxu0
      %v3077 = vadd.f32 %v2988, %v3076
      %3078 = vmatmul.bf16.gmra.mxu0 %v2429
      %v3079 = vpop.f32.mrf.mxu0
      %v3080 = vadd.f32 %v2991, %v3079
      %v3081 = vpop.f32.mrf.mxu0
      %v3082 = vadd.f32 %v2993, %v3081
      %3083 = vdwg.mxu0
      %3084 = vmatpush.bf16.msra.mxu0 %v2752
      %3085 = vmatpush.bf16.msra.mxu0 %v2751
      %3086 = vmatpush.bf16.msra.mxu0 %v2750
      %3087 = vmatpush.bf16.msra.mxu0 %v2749
      %3088 = vmatpush.bf16.msra.mxu0 %v2748
      %3089 = vmatpush.bf16.msra.mxu0 %v2747
      %3090 = vmatpush.bf16.msra.mxu0 %v2746
      %3091 = vmatpush.bf16.msra.mxu0 %v2745
      %3092 = vmatmul.bf16.gmra.mxu0 %v2340
      %v3093 = vpop.f32.mrf.mxu0
      %v3094 = vadd.f32 %v3005, %v3093
      %v3095 = vpop.f32.mrf.mxu0
      %v3096 = vadd.f32 %v3007, %v3095
      %3097 = vmatmul.bf16.gmra.mxu0 %v2346
      %v3098 = vpop.f32.mrf.mxu0
      %v3099 = vadd.f32 %v3010, %v3098
      %v3100 = vpop.f32.mrf.mxu0
      %v3101 = vadd.f32 %v3012, %v3100
      %3102 = vmatmul.bf16.gmra.mxu0 %v2352
      %v3103 = vpop.f32.mrf.mxu0
      %v3104 = vadd.f32 %v3015, %v3103
      %v3105 = vpop.f32.mrf.mxu0
      %v3106 = vadd.f32 %v3017, %v3105
      %3107 = vmatmul.bf16.gmra.mxu0 %v2358
      %v3108 = vpop.f32.mrf.mxu0
      %v3109 = vadd.f32 %v3020, %v3108
      %v3110 = vpop.f32.mrf.mxu0
      %v3111 = vadd.f32 %v3022, %v3110
      %3112 = vmatmul.bf16.gmra.mxu0 %v2364
      %v3113 = vpop.f32.mrf.mxu0
      %v3114 = vadd.f32 %v3025, %v3113
      %v3115 = vpop.f32.mrf.mxu0
      %v3116 = vadd.f32 %v3027, %v3115
      %3117 = vmatmul.bf16.gmra.mxu0 %v2370
      %v3118 = vpop.f32.mrf.mxu0
      %v3119 = vadd.f32 %v3030, %v3118
      %v3120 = vpop.f32.mrf.mxu0
      %v3121 = vadd.f32 %v3032, %v3120
      %3122 = vmatmul.bf16.gmra.mxu0 %v2376
      %v3123 = vpop.f32.mrf.mxu0
      %v3124 = vadd.f32 %v3035, %v3123
      %v3125 = vpop.f32.mrf.mxu0
      %v3126 = vadd.f32 %v3037, %v3125
      %3127 = vmatmul.bf16.gmra.mxu0 %v2382
      %v3128 = vpop.f32.mrf.mxu0
      %v3129 = vadd.f32 %v3040, %v3128
      %v3130 = vpop.f32.mrf.mxu0
      %v3131 = vadd.f32 %v3042, %v3130
      %3132 = vmatmul.bf16.gmra.mxu0 %v2388
      %v3133 = vpop.f32.mrf.mxu0
      %v3134 = vadd.f32 %v3045, %v3133
      %v3135 = vpop.f32.mrf.mxu0
      %v3136 = vadd.f32 %v3047, %v3135
      %3137 = vmatmul.bf16.gmra.mxu0 %v2394
      %v3138 = vpop.f32.mrf.mxu0
      %v3139 = vadd.f32 %v3050, %v3138
      %v3140 = vpop.f32.mrf.mxu0
      %v3141 = vadd.f32 %v3052, %v3140
      %3142 = vmatmul.bf16.gmra.mxu0 %v2400
      %v3143 = vpop.f32.mrf.mxu0
      %v3144 = vadd.f32 %v3055, %v3143
      %v3145 = vpop.f32.mrf.mxu0
      %v3146 = vadd.f32 %v3057, %v3145
      %3147 = vmatmul.bf16.gmra.mxu0 %v2406
      %v3148 = vpop.f32.mrf.mxu0
      %v3149 = vadd.f32 %v3060, %v3148
      %v3150 = vpop.f32.mrf.mxu0
      %v3151 = vadd.f32 %v3062, %v3150
      %3152 = vmatmul.bf16.gmra.mxu0 %v2412
      %v3153 = vpop.f32.mrf.mxu0
      %v3154 = vadd.f32 %v3065, %v3153
      %v3155 = vpop.f32.mrf.mxu0
      %v3156 = vadd.f32 %v3067, %v3155
      %3157 = vmatmul.bf16.gmra.mxu0 %v2418
      %v3158 = vpop.f32.mrf.mxu0
      %v3159 = vadd.f32 %v3070, %v3158
      %v3160 = vpop.f32.mrf.mxu0
      %v3161 = vadd.f32 %v3072, %v3160
      %3162 = vmatmul.bf16.gmra.mxu0 %v2424
      %v3163 = vpop.f32.mrf.mxu0
      %v3164 = vadd.f32 %v3075, %v3163
      %v3165 = vpop.f32.mrf.mxu0
      %v3166 = vadd.f32 %v3077, %v3165
      %3167 = vmatmul.bf16.gmra.mxu0 %v2430
      %v3168 = vpop.f32.mrf.mxu0
      %v3169 = vadd.f32 %v3080, %v3168
      %v3170 = vpop.f32.mrf.mxu0
      %v3171 = vadd.f32 %v3082, %v3170
      %3172 = vdwg.mxu0
      %3173 = vmatpush.bf16.msra.mxu0 %v2760
      %3174 = vmatpush.bf16.msra.mxu0 %v2759
      %3175 = vmatpush.bf16.msra.mxu0 %v2758
      %3176 = vmatpush.bf16.msra.mxu0 %v2757
      %3177 = vmatpush.bf16.msra.mxu0 %v2756
      %3178 = vmatpush.bf16.msra.mxu0 %v2755
      %3179 = vmatpush.bf16.msra.mxu0 %v2754
      %3180 = vmatpush.bf16.msra.mxu0 %v2753
      %3181 = vmatmul.bf16.gmra.mxu0 %v2341
      %v3182 = vpop.f32.mrf.mxu0
      %v3183 = vadd.f32 %v3094, %v3182
      %v3184 = vpop.f32.mrf.mxu0
      %v3185 = vadd.f32 %v3096, %v3184
      %3186 = vmatmul.bf16.gmra.mxu0 %v2347
      %v3187 = vpop.f32.mrf.mxu0
      %v3188 = vadd.f32 %v3099, %v3187
      %v3189 = vpop.f32.mrf.mxu0
      %v3190 = vadd.f32 %v3101, %v3189
      %3191 = vmatmul.bf16.gmra.mxu0 %v2353
      %v3192 = vpop.f32.mrf.mxu0
      %v3193 = vadd.f32 %v3104, %v3192
      %v3194 = vpop.f32.mrf.mxu0
      %v3195 = vadd.f32 %v3106, %v3194
      %3196 = vmatmul.bf16.gmra.mxu0 %v2359
      %v3197 = vpop.f32.mrf.mxu0
      %v3198 = vadd.f32 %v3109, %v3197
      %v3199 = vpop.f32.mrf.mxu0
      %v3200 = vadd.f32 %v3111, %v3199
      %3201 = vmatmul.bf16.gmra.mxu0 %v2365
      %v3202 = vpop.f32.mrf.mxu0
      %v3203 = vadd.f32 %v3114, %v3202
      %v3204 = vpop.f32.mrf.mxu0
      %v3205 = vadd.f32 %v3116, %v3204
      %3206 = vmatmul.bf16.gmra.mxu0 %v2371
      %v3207 = vpop.f32.mrf.mxu0
      %v3208 = vadd.f32 %v3119, %v3207
      %v3209 = vpop.f32.mrf.mxu0
      %v3210 = vadd.f32 %v3121, %v3209
      %3211 = vmatmul.bf16.gmra.mxu0 %v2377
      %v3212 = vpop.f32.mrf.mxu0
      %v3213 = vadd.f32 %v3124, %v3212
      %v3214 = vpop.f32.mrf.mxu0
      %v3215 = vadd.f32 %v3126, %v3214
      %3216 = vmatmul.bf16.gmra.mxu0 %v2383
      %v3217 = vpop.f32.mrf.mxu0
      %v3218 = vadd.f32 %v3129, %v3217
      %v3219 = vpop.f32.mrf.mxu0
      %v3220 = vadd.f32 %v3131, %v3219
      %3221 = vmatmul.bf16.gmra.mxu0 %v2389
      %v3222 = vpop.f32.mrf.mxu0
      %v3223 = vadd.f32 %v3134, %v3222
      %v3224 = vpop.f32.mrf.mxu0
      %v3225 = vadd.f32 %v3136, %v3224
      %3226 = vmatmul.bf16.gmra.mxu0 %v2395
      %v3227 = vpop.f32.mrf.mxu0
      %v3228 = vadd.f32 %v3139, %v3227
      %v3229 = vpop.f32.mrf.mxu0
      %v3230 = vadd.f32 %v3141, %v3229
      %3231 = vmatmul.bf16.gmra.mxu0 %v2401
      %v3232 = vpop.f32.mrf.mxu0
      %v3233 = vadd.f32 %v3144, %v3232
      %v3234 = vpop.f32.mrf.mxu0
      %v3235 = vadd.f32 %v3146, %v3234
      %3236 = vmatmul.bf16.gmra.mxu0 %v2407
      %v3237 = vpop.f32.mrf.mxu0
      %v3238 = vadd.f32 %v3149, %v3237
      %v3239 = vpop.f32.mrf.mxu0
      %v3240 = vadd.f32 %v3151, %v3239
      %3241 = vmatmul.bf16.gmra.mxu0 %v2413
      %v3242 = vpop.f32.mrf.mxu0
      %v3243 = vadd.f32 %v3154, %v3242
      %v3244 = vpop.f32.mrf.mxu0
      %v3245 = vadd.f32 %v3156, %v3244
      %3246 = vmatmul.bf16.gmra.mxu0 %v2419
      %v3247 = vpop.f32.mrf.mxu0
      %v3248 = vadd.f32 %v3159, %v3247
      %v3249 = vpop.f32.mrf.mxu0
      %v3250 = vadd.f32 %v3161, %v3249
      %3251 = vmatmul.bf16.gmra.mxu0 %v2425
      %v3252 = vpop.f32.mrf.mxu0
      %v3253 = vadd.f32 %v3164, %v3252
      %v3254 = vpop.f32.mrf.mxu0
      %v3255 = vadd.f32 %v3166, %v3254
      %3256 = vmatmul.bf16.gmra.mxu0 %v2431
      %v3257 = vpop.f32.mrf.mxu0
      %v3258 = vadd.f32 %v3169, %v3257
      %v3259 = vpop.f32.mrf.mxu0
      %v3260 = vadd.f32 %v3171, %v3259
      %3261 = vdwg.mxu0
      %3262 = vmatpush.bf16.msra.mxu0 %v2768
      %3263 = vmatpush.bf16.msra.mxu0 %v2767
      %3264 = vmatpush.bf16.msra.mxu0 %v2766
      %3265 = vmatpush.bf16.msra.mxu0 %v2765
      %3266 = vmatpush.bf16.msra.mxu0 %v2764
      %3267 = vmatpush.bf16.msra.mxu0 %v2763
      %3268 = vmatpush.bf16.msra.mxu0 %v2762
      %3269 = vmatpush.bf16.msra.mxu0 %v2761
      %3270 = vmatmul.bf16.gmra.mxu0 %v2342
      %v3271 = vpop.f32.mrf.mxu0
      %v3272 = vadd.f32 %v3183, %v3271
      %v3273 = vpop.f32.mrf.mxu0
      %v3274 = vadd.f32 %v3185, %v3273
      %3275 = vmatmul.bf16.gmra.mxu0 %v2348
      %v3276 = vpop.f32.mrf.mxu0
      %v3277 = vadd.f32 %v3188, %v3276
      %v3278 = vpop.f32.mrf.mxu0
      %v3279 = vadd.f32 %v3190, %v3278
      %3280 = vmatmul.bf16.gmra.mxu0 %v2354
      %v3281 = vpop.f32.mrf.mxu0
      %v3282 = vadd.f32 %v3193, %v3281
      %v3283 = vpop.f32.mrf.mxu0
      %v3284 = vadd.f32 %v3195, %v3283
      %3285 = vmatmul.bf16.gmra.mxu0 %v2360
      %v3286 = vpop.f32.mrf.mxu0
      %v3287 = vadd.f32 %v3198, %v3286
      %v3288 = vpop.f32.mrf.mxu0
      %v3289 = vadd.f32 %v3200, %v3288
      %3290 = vmatmul.bf16.gmra.mxu0 %v2366
      %v3291 = vpop.f32.mrf.mxu0
      %v3292 = vadd.f32 %v3203, %v3291
      %v3293 = vpop.f32.mrf.mxu0
      %v3294 = vadd.f32 %v3205, %v3293
      %3295 = vmatmul.bf16.gmra.mxu0 %v2372
      %v3296 = vpop.f32.mrf.mxu0
      %v3297 = vadd.f32 %v3208, %v3296
      %v3298 = vpop.f32.mrf.mxu0
      %v3299 = vadd.f32 %v3210, %v3298
      %3300 = vmatmul.bf16.gmra.mxu0 %v2378
      %v3301 = vpop.f32.mrf.mxu0
      %v3302 = vadd.f32 %v3213, %v3301
      %v3303 = vpop.f32.mrf.mxu0
      %v3304 = vadd.f32 %v3215, %v3303
      %3305 = vmatmul.bf16.gmra.mxu0 %v2384
      %v3306 = vpop.f32.mrf.mxu0
      %v3307 = vadd.f32 %v3218, %v3306
      %v3308 = vpop.f32.mrf.mxu0
      %v3309 = vadd.f32 %v3220, %v3308
      %3310 = vmatmul.bf16.gmra.mxu0 %v2390
      %v3311 = vpop.f32.mrf.mxu0
      %v3312 = vadd.f32 %v3223, %v3311
      %v3313 = vpop.f32.mrf.mxu0
      %v3314 = vadd.f32 %v3225, %v3313
      %3315 = vmatmul.bf16.gmra.mxu0 %v2396
      %v3316 = vpop.f32.mrf.mxu0
      %v3317 = vadd.f32 %v3228, %v3316
      %v3318 = vpop.f32.mrf.mxu0
      %v3319 = vadd.f32 %v3230, %v3318
      %3320 = vmatmul.bf16.gmra.mxu0 %v2402
      %v3321 = vpop.f32.mrf.mxu0
      %v3322 = vadd.f32 %v3233, %v3321
      %v3323 = vpop.f32.mrf.mxu0
      %v3324 = vadd.f32 %v3235, %v3323
      %3325 = vmatmul.bf16.gmra.mxu0 %v2408
      %v3326 = vpop.f32.mrf.mxu0
      %v3327 = vadd.f32 %v3238, %v3326
      %v3328 = vpop.f32.mrf.mxu0
      %v3329 = vadd.f32 %v3240, %v3328
      %3330 = vmatmul.bf16.gmra.mxu0 %v2414
      %v3331 = vpop.f32.mrf.mxu0
      %v3332 = vadd.f32 %v3243, %v3331
      %v3333 = vpop.f32.mrf.mxu0
      %v3334 = vadd.f32 %v3245, %v3333
      %3335 = vmatmul.bf16.gmra.mxu0 %v2420
      %v3336 = vpop.f32.mrf.mxu0
      %v3337 = vadd.f32 %v3248, %v3336
      %v3338 = vpop.f32.mrf.mxu0
      %v3339 = vadd.f32 %v3250, %v3338
      %3340 = vmatmul.bf16.gmra.mxu0 %v2426
      %v3341 = vpop.f32.mrf.mxu0
      %v3342 = vadd.f32 %v3253, %v3341
      %v3343 = vpop.f32.mrf.mxu0
      %v3344 = vadd.f32 %v3255, %v3343
      %3345 = vmatmul.bf16.gmra.mxu0 %v2432
      %v3346 = vpop.f32.mrf.mxu0
      %v3347 = vadd.f32 %v3258, %v3346
      %v3348 = vpop.f32.mrf.mxu0
      %v3349 = vadd.f32 %v3260, %v3348
      %3350 = vdwg.mxu0
      %v3351 = vadd.f32 %v1920, %v3272
      %v3352 = vadd.f32 %v1921, %v3274
      %v3353 = vadd.f32 %v1922, %v3277
      %v3354 = vadd.f32 %v1923, %v3279
      %v3355 = vadd.f32 %v1924, %v3282
      %v3356 = vadd.f32 %v1925, %v3284
      %v3357 = vadd.f32 %v1926, %v3287
      %v3358 = vadd.f32 %v1927, %v3289
      %v3359 = vadd.f32 %v1928, %v3292
      %v3360 = vadd.f32 %v1929, %v3294
      %v3361 = vadd.f32 %v1930, %v3297
      %v3362 = vadd.f32 %v1931, %v3299
      %v3363 = vadd.f32 %v1932, %v3302
      %v3364 = vadd.f32 %v1933, %v3304
      %v3365 = vadd.f32 %v1934, %v3307
      %v3366 = vadd.f32 %v1935, %v3309
      %v3367 = vadd.f32 %v1936, %v3312
      %v3368 = vadd.f32 %v1937, %v3314
      %v3369 = vadd.f32 %v1938, %v3317
      %v3370 = vadd.f32 %v1939, %v3319
      %v3371 = vadd.f32 %v1940, %v3322
      %v3372 = vadd.f32 %v1941, %v3324
      %v3373 = vadd.f32 %v1942, %v3327
      %v3374 = vadd.f32 %v1943, %v3329
      %v3375 = vadd.f32 %v1944, %v3332
      %v3376 = vadd.f32 %v1945, %v3334
      %v3377 = vadd.f32 %v1946, %v3337
      %v3378 = vadd.f32 %v1947, %v3339
      %v3379 = vadd.f32 %v1948, %v3342
      %v3380 = vadd.f32 %v1949, %v3344
      %v3381 = vadd.f32 %v1950, %v3347
      %v3382 = vadd.f32 %v1951, %v3349
      %3383 = vst [vmem:[#allocation2] sm:$0xff] %v3351
      %3384 = vst [vmem:[#allocation2 + $0x8] sm:$0xff] %v3352
      %3385 = vst [vmem:[#allocation2 + $0x10] sm:$0xff] %v3353
      %3386 = vst [vmem:[#allocation2 + $0x18] sm:$0xff] %v3354
      %3387 = vst [vmem:[#allocation2 + $0x20] sm:$0xff] %v3355
      %3388 = vst [vmem:[#allocation2 + $0x28] sm:$0xff] %v3356
      %3389 = vst [vmem:[#allocation2 + $0x30] sm:$0xff] %v3357
      %3390 = vst [vmem:[#allocation2 + $0x38] sm:$0xff] %v3358
      %3391 = vst [vmem:[#allocation2 + $0x40] sm:$0xff] %v3359
      %3392 = vst [vmem:[#allocation2 + $0x48] sm:$0xff] %v3360
      %3393 = vst [vmem:[#allocation2 + $0x50] sm:$0xff] %v3361
      %3394 = vst [vmem:[#allocation2 + $0x58] sm:$0xff] %v3362
      %3395 = vst [vmem:[#allocation2 + $0x60] sm:$0xff] %v3363
      %3396 = vst [vmem:[#allocation2 + $0x68] sm:$0xff] %v3364
      %3397 = vst [vmem:[#allocation2 + $0x70] sm:$0xff] %v3365
      %3398 = vst [vmem:[#allocation2 + $0x78] sm:$0xff] %v3366
      %3399 = vst [vmem:[#allocation2 + $0x80] sm:$0xff] %v3367
      %3400 = vst [vmem:[#allocation2 + $0x88] sm:$0xff] %v3368
      %3401 = vst [vmem:[#allocation2 + $0x90] sm:$0xff] %v3369
      %3402 = vst [vmem:[#allocation2 + $0x98] sm:$0xff] %v3370
      %3403 = vst [vmem:[#allocation2 + $0xa0] sm:$0xff] %v3371
      %3404 = vst [vmem:[#allocation2 + $0xa8] sm:$0xff] %v3372
      %3405 = vst [vmem:[#allocation2 + $0xb0] sm:$0xff] %v3373
      %3406 = vst [vmem:[#allocation2 + $0xb8] sm:$0xff] %v3374
      %3407 = vst [vmem:[#allocation2 + $0xc0] sm:$0xff] %v3375
      %3408 = vst [vmem:[#allocation2 + $0xc8] sm:$0xff] %v3376
      %3409 = vst [vmem:[#allocation2 + $0xd0] sm:$0xff] %v3377
      %3410 = vst [vmem:[#allocation2 + $0xd8] sm:$0xff] %v3378
      %3411 = vst [vmem:[#allocation2 + $0xe0] sm:$0xff] %v3379
      %3412 = vst [vmem:[#allocation2 + $0xe8] sm:$0xff] %v3380
      %3413 = vst [vmem:[#allocation2 + $0xf0] sm:$0xff] %v3381
      %3414 = vst [vmem:[#allocation2 + $0xf8] sm:$0xff] %v3382
      %s3415 = scalar_lea.vmem %s272, 96
      %v3416 = vld [vmem:[%s3415] sm:$0xff]
      %v3417 = vld [vmem:[%s3415 + $0x8] sm:$0xff]
      %v3418 = vld [vmem:[%s3415 + $0x10] sm:$0xff]
      %v3419 = vld [vmem:[%s3415 + $0x18] sm:$0xff]
      %v3420 = vld [vmem:[%s3415 + $0x20] sm:$0xff]
      %v3421 = vld [vmem:[%s3415 + $0x28] sm:$0xff]
      %v3422 = vld [vmem:[%s3415 + $0x30] sm:$0xff]
      %v3423 = vld [vmem:[%s3415 + $0x38] sm:$0xff]
      %v3424 = vld [vmem:[%s3415 + $0x40] sm:$0xff]
      %v3425 = vld [vmem:[%s3415 + $0x48] sm:$0xff]
      %v3426 = vld [vmem:[%s3415 + $0x50] sm:$0xff]
      %v3427 = vld [vmem:[%s3415 + $0x58] sm:$0xff]
      %v3428 = vld [vmem:[%s3415 + $0x60] sm:$0xff]
      %v3429 = vld [vmem:[%s3415 + $0x68] sm:$0xff]
      %v3430 = vld [vmem:[%s3415 + $0x70] sm:$0xff]
      %v3431 = vld [vmem:[%s3415 + $0x78] sm:$0xff]
      %v3432 = vld [vmem:[%s3415 + $0x80] sm:$0xff]
      %v3433 = vld [vmem:[%s3415 + $0x88] sm:$0xff]
      %v3434 = vld [vmem:[%s3415 + $0x90] sm:$0xff]
      %v3435 = vld [vmem:[%s3415 + $0x98] sm:$0xff]
      %v3436 = vld [vmem:[%s3415 + $0xa0] sm:$0xff]
      %v3437 = vld [vmem:[%s3415 + $0xa8] sm:$0xff]
      %v3438 = vld [vmem:[%s3415 + $0xb0] sm:$0xff]
      %v3439 = vld [vmem:[%s3415 + $0xb8] sm:$0xff]
      %v3440 = vld [vmem:[%s3415 + $0xc0] sm:$0xff]
      %v3441 = vld [vmem:[%s3415 + $0xc8] sm:$0xff]
      %v3442 = vld [vmem:[%s3415 + $0xd0] sm:$0xff]
      %v3443 = vld [vmem:[%s3415 + $0xd8] sm:$0xff]
      %v3444 = vld [vmem:[%s3415 + $0xe0] sm:$0xff]
      %v3445 = vld [vmem:[%s3415 + $0xe8] sm:$0xff]
      %v3446 = vld [vmem:[%s3415 + $0xf0] sm:$0xff]
      %v3447 = vld [vmem:[%s3415 + $0xf8] sm:$0xff]
      %v3448 = vld [vmem:[%s3415 + $0x100] sm:$0xff]
      %v3449 = vld [vmem:[%s3415 + $0x108] sm:$0xff]
      %v3450 = vld [vmem:[%s3415 + $0x110] sm:$0xff]
      %v3451 = vld [vmem:[%s3415 + $0x118] sm:$0xff]
      %v3452 = vld [vmem:[%s3415 + $0x120] sm:$0xff]
      %v3453 = vld [vmem:[%s3415 + $0x128] sm:$0xff]
      %v3454 = vld [vmem:[%s3415 + $0x130] sm:$0xff]
      %v3455 = vld [vmem:[%s3415 + $0x138] sm:$0xff]
      %v3456 = vld [vmem:[%s3415 + $0x140] sm:$0xff]
      %v3457 = vld [vmem:[%s3415 + $0x148] sm:$0xff]
      %v3458 = vld [vmem:[%s3415 + $0x150] sm:$0xff]
      %v3459 = vld [vmem:[%s3415 + $0x158] sm:$0xff]
      %v3460 = vld [vmem:[%s3415 + $0x160] sm:$0xff]
      %v3461 = vld [vmem:[%s3415 + $0x168] sm:$0xff]
      %v3462 = vld [vmem:[%s3415 + $0x170] sm:$0xff]
      %v3463 = vld [vmem:[%s3415 + $0x178] sm:$0xff]
      %v3464 = vld [vmem:[%s3415 + $0x180] sm:$0xff]
      %v3465 = vld [vmem:[%s3415 + $0x188] sm:$0xff]
      %v3466 = vld [vmem:[%s3415 + $0x190] sm:$0xff]
      %v3467 = vld [vmem:[%s3415 + $0x198] sm:$0xff]
      %v3468 = vld [vmem:[%s3415 + $0x1a0] sm:$0xff]
      %v3469 = vld [vmem:[%s3415 + $0x1a8] sm:$0xff]
      %v3470 = vld [vmem:[%s3415 + $0x1b0] sm:$0xff]
      %v3471 = vld [vmem:[%s3415 + $0x1b8] sm:$0xff]
      %v3472 = vld [vmem:[%s3415 + $0x1c0] sm:$0xff]
      %v3473 = vld [vmem:[%s3415 + $0x1c8] sm:$0xff]
      %v3474 = vld [vmem:[%s3415 + $0x1d0] sm:$0xff]
      %v3475 = vld [vmem:[%s3415 + $0x1d8] sm:$0xff]
      %v3476 = vld [vmem:[%s3415 + $0x1e0] sm:$0xff]
      %v3477 = vld [vmem:[%s3415 + $0x1e8] sm:$0xff]
      %v3478 = vld [vmem:[%s3415 + $0x1f0] sm:$0xff]
      %v3479 = vld [vmem:[%s3415 + $0x1f8] sm:$0xff]
      %v3480 = vld [vmem:[%s3415 + $0x200] sm:$0xff]
      %v3481 = vld [vmem:[%s3415 + $0x208] sm:$0xff]
      %v3482 = vld [vmem:[%s3415 + $0x210] sm:$0xff]
      %v3483 = vld [vmem:[%s3415 + $0x218] sm:$0xff]
      %v3484 = vld [vmem:[%s3415 + $0x220] sm:$0xff]
      %v3485 = vld [vmem:[%s3415 + $0x228] sm:$0xff]
      %v3486 = vld [vmem:[%s3415 + $0x230] sm:$0xff]
      %v3487 = vld [vmem:[%s3415 + $0x238] sm:$0xff]
      %v3488 = vld [vmem:[%s3415 + $0x240] sm:$0xff]
      %v3489 = vld [vmem:[%s3415 + $0x248] sm:$0xff]
      %v3490 = vld [vmem:[%s3415 + $0x250] sm:$0xff]
      %v3491 = vld [vmem:[%s3415 + $0x258] sm:$0xff]
      %v3492 = vld [vmem:[%s3415 + $0x260] sm:$0xff]
      %v3493 = vld [vmem:[%s3415 + $0x268] sm:$0xff]
      %v3494 = vld [vmem:[%s3415 + $0x270] sm:$0xff]
      %v3495 = vld [vmem:[%s3415 + $0x278] sm:$0xff]
      %v3496 = vld [vmem:[%s3415 + $0x280] sm:$0xff]
      %v3497 = vld [vmem:[%s3415 + $0x288] sm:$0xff]
      %v3498 = vld [vmem:[%s3415 + $0x290] sm:$0xff]
      %v3499 = vld [vmem:[%s3415 + $0x298] sm:$0xff]
      %v3500 = vld [vmem:[%s3415 + $0x2a0] sm:$0xff]
      %v3501 = vld [vmem:[%s3415 + $0x2a8] sm:$0xff]
      %v3502 = vld [vmem:[%s3415 + $0x2b0] sm:$0xff]
      %v3503 = vld [vmem:[%s3415 + $0x2b8] sm:$0xff]
      %v3504 = vld [vmem:[%s3415 + $0x2c0] sm:$0xff]
      %v3505 = vld [vmem:[%s3415 + $0x2c8] sm:$0xff]
      %v3506 = vld [vmem:[%s3415 + $0x2d0] sm:$0xff]
      %v3507 = vld [vmem:[%s3415 + $0x2d8] sm:$0xff]
      %v3508 = vld [vmem:[%s3415 + $0x2e0] sm:$0xff]
      %v3509 = vld [vmem:[%s3415 + $0x2e8] sm:$0xff]
      %v3510 = vld [vmem:[%s3415 + $0x2f0] sm:$0xff]
      %v3511 = vld [vmem:[%s3415 + $0x2f8] sm:$0xff]
      %v3512 = vld [vmem:[#allocation2] sm:$0xff]
      %v3513 = vld [vmem:[#allocation2 + $0x8] sm:$0xff]
      %v3514 = vld [vmem:[#allocation2 + $0x10] sm:$0xff]
      %v3515 = vld [vmem:[#allocation2 + $0x18] sm:$0xff]
      %v3516 = vld [vmem:[#allocation2 + $0x20] sm:$0xff]
      %v3517 = vld [vmem:[#allocation2 + $0x28] sm:$0xff]
      %v3518 = vld [vmem:[#allocation2 + $0x30] sm:$0xff]
      %v3519 = vld [vmem:[#allocation2 + $0x38] sm:$0xff]
      %v3520 = vld [vmem:[#allocation2 + $0x40] sm:$0xff]
      %v3521 = vld [vmem:[#allocation2 + $0x48] sm:$0xff]
      %v3522 = vld [vmem:[#allocation2 + $0x50] sm:$0xff]
      %v3523 = vld [vmem:[#allocation2 + $0x58] sm:$0xff]
      %v3524 = vld [vmem:[#allocation2 + $0x60] sm:$0xff]
      %v3525 = vld [vmem:[#allocation2 + $0x68] sm:$0xff]
      %v3526 = vld [vmem:[#allocation2 + $0x70] sm:$0xff]
      %v3527 = vld [vmem:[#allocation2 + $0x78] sm:$0xff]
      %v3528 = vld [vmem:[#allocation2 + $0x80] sm:$0xff]
      %v3529 = vld [vmem:[#allocation2 + $0x88] sm:$0xff]
      %v3530 = vld [vmem:[#allocation2 + $0x90] sm:$0xff]
      %v3531 = vld [vmem:[#allocation2 + $0x98] sm:$0xff]
      %v3532 = vld [vmem:[#allocation2 + $0xa0] sm:$0xff]
      %v3533 = vld [vmem:[#allocation2 + $0xa8] sm:$0xff]
      %v3534 = vld [vmem:[#allocation2 + $0xb0] sm:$0xff]
      %v3535 = vld [vmem:[#allocation2 + $0xb8] sm:$0xff]
      %v3536 = vld [vmem:[#allocation2 + $0xc0] sm:$0xff]
      %v3537 = vld [vmem:[#allocation2 + $0xc8] sm:$0xff]
      %v3538 = vld [vmem:[#allocation2 + $0xd0] sm:$0xff]
      %v3539 = vld [vmem:[#allocation2 + $0xd8] sm:$0xff]
      %v3540 = vld [vmem:[#allocation2 + $0xe0] sm:$0xff]
      %v3541 = vld [vmem:[#allocation2 + $0xe8] sm:$0xff]
      %v3542 = vld [vmem:[#allocation2 + $0xf0] sm:$0xff]
      %v3543 = vld [vmem:[#allocation2 + $0xf8] sm:$0xff]
      %s3544 = scalar_lea.vmem %s276, 768
      %v3545 = vld [vmem:[%s3544] sm:$0xf]
      %v3546 = vld [vmem:[%s3544 + $0x4] sm:$0xf]
      %v3547 = vld [vmem:[%s3544 + $0x8] sm:$0xf]
      %v3548 = vld [vmem:[%s3544 + $0xc] sm:$0xf]
      %v3549 = vld [vmem:[%s3544 + $0x10] sm:$0xf]
      %v3550 = vld [vmem:[%s3544 + $0x14] sm:$0xf]
      %v3551 = vld [vmem:[%s3544 + $0x18] sm:$0xf]
      %v3552 = vld [vmem:[%s3544 + $0x1c] sm:$0xf]
      %v3553 = vld [vmem:[%s3544 + $0x20] sm:$0xf]
      %v3554 = vld [vmem:[%s3544 + $0x24] sm:$0xf]
      %v3555 = vld [vmem:[%s3544 + $0x28] sm:$0xf]
      %v3556 = vld [vmem:[%s3544 + $0x2c] sm:$0xf]
      %v3557 = vld [vmem:[%s3544 + $0x30] sm:$0xf]
      %v3558 = vld [vmem:[%s3544 + $0x34] sm:$0xf]
      %v3559 = vld [vmem:[%s3544 + $0x38] sm:$0xf]
      %v3560 = vld [vmem:[%s3544 + $0x3c] sm:$0xf]
      %v3561 = vld [vmem:[%s3544 + $0x40] sm:$0xf]
      %v3562 = vld [vmem:[%s3544 + $0x44] sm:$0xf]
      %v3563 = vld [vmem:[%s3544 + $0x48] sm:$0xf]
      %v3564 = vld [vmem:[%s3544 + $0x4c] sm:$0xf]
      %v3565 = vld [vmem:[%s3544 + $0x50] sm:$0xf]
      %v3566 = vld [vmem:[%s3544 + $0x54] sm:$0xf]
      %v3567 = vld [vmem:[%s3544 + $0x58] sm:$0xf]
      %v3568 = vld [vmem:[%s3544 + $0x5c] sm:$0xf]
      %v3569 = vld [vmem:[%s3544 + $0x60] sm:$0xf]
      %v3570 = vld [vmem:[%s3544 + $0x64] sm:$0xf]
      %v3571 = vld [vmem:[%s3544 + $0x68] sm:$0xf]
      %v3572 = vld [vmem:[%s3544 + $0x6c] sm:$0xf]
      %v3573 = vld [vmem:[%s3544 + $0x70] sm:$0xf]
      %v3574 = vld [vmem:[%s3544 + $0x74] sm:$0xf]
      %v3575 = vld [vmem:[%s3544 + $0x78] sm:$0xf]
      %v3576 = vld [vmem:[%s3544 + $0x7c] sm:$0xf]
      %v3577 = vld [vmem:[%s3544 + $0x80] sm:$0xf]
      %v3578 = vld [vmem:[%s3544 + $0x84] sm:$0xf]
      %v3579 = vld [vmem:[%s3544 + $0x88] sm:$0xf]
      %v3580 = vld [vmem:[%s3544 + $0x8c] sm:$0xf]
      %v3581 = vld [vmem:[%s3544 + $0x90] sm:$0xf]
      %v3582 = vld [vmem:[%s3544 + $0x94] sm:$0xf]
      %v3583 = vld [vmem:[%s3544 + $0x98] sm:$0xf]
      %v3584 = vld [vmem:[%s3544 + $0x9c] sm:$0xf]
      %v3585 = vld [vmem:[%s3544 + $0xa0] sm:$0xf]
      %v3586 = vld [vmem:[%s3544 + $0xa4] sm:$0xf]
      %v3587 = vld [vmem:[%s3544 + $0xa8] sm:$0xf]
      %v3588 = vld [vmem:[%s3544 + $0xac] sm:$0xf]
      %v3589 = vld [vmem:[%s3544 + $0xb0] sm:$0xf]
      %v3590 = vld [vmem:[%s3544 + $0xb4] sm:$0xf]
      %v3591 = vld [vmem:[%s3544 + $0xb8] sm:$0xf]
      %v3592 = vld [vmem:[%s3544 + $0xbc] sm:$0xf]
      %v3593 = vld [vmem:[%s3544 + $0xc0] sm:$0xf]
      %v3594 = vld [vmem:[%s3544 + $0xc4] sm:$0xf]
      %v3595 = vld [vmem:[%s3544 + $0xc8] sm:$0xf]
      %v3596 = vld [vmem:[%s3544 + $0xcc] sm:$0xf]
      %v3597 = vld [vmem:[%s3544 + $0xd0] sm:$0xf]
      %v3598 = vld [vmem:[%s3544 + $0xd4] sm:$0xf]
      %v3599 = vld [vmem:[%s3544 + $0xd8] sm:$0xf]
      %v3600 = vld [vmem:[%s3544 + $0xdc] sm:$0xf]
      %v3601 = vld [vmem:[%s3544 + $0xe0] sm:$0xf]
      %v3602 = vld [vmem:[%s3544 + $0xe4] sm:$0xf]
      %v3603 = vld [vmem:[%s3544 + $0xe8] sm:$0xf]
      %v3604 = vld [vmem:[%s3544 + $0xec] sm:$0xf]
      %v3605 = vld [vmem:[%s3544 + $0xf0] sm:$0xf]
      %v3606 = vld [vmem:[%s3544 + $0xf4] sm:$0xf]
      %v3607 = vld [vmem:[%s3544 + $0xf8] sm:$0xf]
      %v3608 = vld [vmem:[%s3544 + $0xfc] sm:$0xf]
      %v3609 = vld [vmem:[%s3544 + $0x100] sm:$0xf]
      %v3610 = vld [vmem:[%s3544 + $0x104] sm:$0xf]
      %v3611 = vld [vmem:[%s3544 + $0x108] sm:$0xf]
      %v3612 = vld [vmem:[%s3544 + $0x10c] sm:$0xf]
      %v3613 = vld [vmem:[%s3544 + $0x110] sm:$0xf]
      %v3614 = vld [vmem:[%s3544 + $0x114] sm:$0xf]
      %v3615 = vld [vmem:[%s3544 + $0x118] sm:$0xf]
      %v3616 = vld [vmem:[%s3544 + $0x11c] sm:$0xf]
      %v3617 = vld [vmem:[%s3544 + $0x120] sm:$0xf]
      %v3618 = vld [vmem:[%s3544 + $0x124] sm:$0xf]
      %v3619 = vld [vmem:[%s3544 + $0x128] sm:$0xf]
      %v3620 = vld [vmem:[%s3544 + $0x12c] sm:$0xf]
      %v3621 = vld [vmem:[%s3544 + $0x130] sm:$0xf]
      %v3622 = vld [vmem:[%s3544 + $0x134] sm:$0xf]
      %v3623 = vld [vmem:[%s3544 + $0x138] sm:$0xf]
      %v3624 = vld [vmem:[%s3544 + $0x13c] sm:$0xf]
      %v3625 = vld [vmem:[%s3544 + $0x140] sm:$0xf]
      %v3626 = vld [vmem:[%s3544 + $0x144] sm:$0xf]
      %v3627 = vld [vmem:[%s3544 + $0x148] sm:$0xf]
      %v3628 = vld [vmem:[%s3544 + $0x14c] sm:$0xf]
      %v3629 = vld [vmem:[%s3544 + $0x150] sm:$0xf]
      %v3630 = vld [vmem:[%s3544 + $0x154] sm:$0xf]
      %v3631 = vld [vmem:[%s3544 + $0x158] sm:$0xf]
      %v3632 = vld [vmem:[%s3544 + $0x15c] sm:$0xf]
      %v3633 = vld [vmem:[%s3544 + $0x160] sm:$0xf]
      %v3634 = vld [vmem:[%s3544 + $0x164] sm:$0xf]
      %v3635 = vld [vmem:[%s3544 + $0x168] sm:$0xf]
      %v3636 = vld [vmem:[%s3544 + $0x16c] sm:$0xf]
      %v3637 = vld [vmem:[%s3544 + $0x170] sm:$0xf]
      %v3638 = vld [vmem:[%s3544 + $0x174] sm:$0xf]
      %v3639 = vld [vmem:[%s3544 + $0x178] sm:$0xf]
      %v3640 = vld [vmem:[%s3544 + $0x17c] sm:$0xf]
      %v3737 = vunpack.c.l.b16 %v3416
      %v3738 = vunpack.c.h.b16 %v3416
      %v3739 = vunpack.c.l.b16 %v3417
      %v3740 = vunpack.c.h.b16 %v3417
      %v3741 = vunpack.c.l.b16 %v3418
      %v3742 = vunpack.c.h.b16 %v3418
      %v3743 = vunpack.c.l.b16 %v3419
      %v3744 = vunpack.c.h.b16 %v3419
      %v3745 = vunpack.c.l.b16 %v3420
      %v3746 = vunpack.c.h.b16 %v3420
      %v3747 = vunpack.c.l.b16 %v3421
      %v3748 = vunpack.c.h.b16 %v3421
      %v3749 = vunpack.c.l.b16 %v3422
      %v3750 = vunpack.c.h.b16 %v3422
      %v3751 = vunpack.c.l.b16 %v3423
      %v3752 = vunpack.c.h.b16 %v3423
      %v3753 = vunpack.c.l.b16 %v3424
      %v3754 = vunpack.c.h.b16 %v3424
      %v3755 = vunpack.c.l.b16 %v3425
      %v3756 = vunpack.c.h.b16 %v3425
      %v3757 = vunpack.c.l.b16 %v3426
      %v3758 = vunpack.c.h.b16 %v3426
      %v3759 = vunpack.c.l.b16 %v3427
      %v3760 = vunpack.c.h.b16 %v3427
      %v3761 = vunpack.c.l.b16 %v3428
      %v3762 = vunpack.c.h.b16 %v3428
      %v3763 = vunpack.c.l.b16 %v3429
      %v3764 = vunpack.c.h.b16 %v3429
      %v3765 = vunpack.c.l.b16 %v3430
      %v3766 = vunpack.c.h.b16 %v3430
      %v3767 = vunpack.c.l.b16 %v3431
      %v3768 = vunpack.c.h.b16 %v3431
      %v3769 = vunpack.c.l.b16 %v3432
      %v3770 = vunpack.c.h.b16 %v3432
      %v3771 = vunpack.c.l.b16 %v3433
      %v3772 = vunpack.c.h.b16 %v3433
      %v3773 = vunpack.c.l.b16 %v3434
      %v3774 = vunpack.c.h.b16 %v3434
      %v3775 = vunpack.c.l.b16 %v3435
      %v3776 = vunpack.c.h.b16 %v3435
      %v3777 = vunpack.c.l.b16 %v3436
      %v3778 = vunpack.c.h.b16 %v3436
      %v3779 = vunpack.c.l.b16 %v3437
      %v3780 = vunpack.c.h.b16 %v3437
      %v3781 = vunpack.c.l.b16 %v3438
      %v3782 = vunpack.c.h.b16 %v3438
      %v3783 = vunpack.c.l.b16 %v3439
      %v3784 = vunpack.c.h.b16 %v3439
      %v3785 = vunpack.c.l.b16 %v3440
      %v3786 = vunpack.c.h.b16 %v3440
      %v3787 = vunpack.c.l.b16 %v3441
      %v3788 = vunpack.c.h.b16 %v3441
      %v3789 = vunpack.c.l.b16 %v3442
      %v3790 = vunpack.c.h.b16 %v3442
      %v3791 = vunpack.c.l.b16 %v3443
      %v3792 = vunpack.c.h.b16 %v3443
      %v3793 = vunpack.c.l.b16 %v3444
      %v3794 = vunpack.c.h.b16 %v3444
      %v3795 = vunpack.c.l.b16 %v3445
      %v3796 = vunpack.c.h.b16 %v3445
      %v3797 = vunpack.c.l.b16 %v3446
      %v3798 = vunpack.c.h.b16 %v3446
      %v3799 = vunpack.c.l.b16 %v3447
      %v3800 = vunpack.c.h.b16 %v3447
      %v3801 = vunpack.c.l.b16 %v3448
      %v3802 = vunpack.c.h.b16 %v3448
      %v3803 = vunpack.c.l.b16 %v3449
      %v3804 = vunpack.c.h.b16 %v3449
      %v3805 = vunpack.c.l.b16 %v3450
      %v3806 = vunpack.c.h.b16 %v3450
      %v3807 = vunpack.c.l.b16 %v3451
      %v3808 = vunpack.c.h.b16 %v3451
      %v3809 = vunpack.c.l.b16 %v3452
      %v3810 = vunpack.c.h.b16 %v3452
      %v3811 = vunpack.c.l.b16 %v3453
      %v3812 = vunpack.c.h.b16 %v3453
      %v3813 = vunpack.c.l.b16 %v3454
      %v3814 = vunpack.c.h.b16 %v3454
      %v3815 = vunpack.c.l.b16 %v3455
      %v3816 = vunpack.c.h.b16 %v3455
      %v3817 = vunpack.c.l.b16 %v3456
      %v3818 = vunpack.c.h.b16 %v3456
      %v3819 = vunpack.c.l.b16 %v3457
      %v3820 = vunpack.c.h.b16 %v3457
      %v3821 = vunpack.c.l.b16 %v3458
      %v3822 = vunpack.c.h.b16 %v3458
      %v3823 = vunpack.c.l.b16 %v3459
      %v3824 = vunpack.c.h.b16 %v3459
      %v3825 = vunpack.c.l.b16 %v3460
      %v3826 = vunpack.c.h.b16 %v3460
      %v3827 = vunpack.c.l.b16 %v3461
      %v3828 = vunpack.c.h.b16 %v3461
      %v3829 = vunpack.c.l.b16 %v3462
      %v3830 = vunpack.c.h.b16 %v3462
      %v3831 = vunpack.c.l.b16 %v3463
      %v3832 = vunpack.c.h.b16 %v3463
      %v3833 = vunpack.c.l.b16 %v3464
      %v3834 = vunpack.c.h.b16 %v3464
      %v3835 = vunpack.c.l.b16 %v3465
      %v3836 = vunpack.c.h.b16 %v3465
      %v3837 = vunpack.c.l.b16 %v3466
      %v3838 = vunpack.c.h.b16 %v3466
      %v3839 = vunpack.c.l.b16 %v3467
      %v3840 = vunpack.c.h.b16 %v3467
      %v3841 = vunpack.c.l.b16 %v3468
      %v3842 = vunpack.c.h.b16 %v3468
      %v3843 = vunpack.c.l.b16 %v3469
      %v3844 = vunpack.c.h.b16 %v3469
      %v3845 = vunpack.c.l.b16 %v3470
      %v3846 = vunpack.c.h.b16 %v3470
      %v3847 = vunpack.c.l.b16 %v3471
      %v3848 = vunpack.c.h.b16 %v3471
      %v3849 = vunpack.c.l.b16 %v3472
      %v3850 = vunpack.c.h.b16 %v3472
      %v3851 = vunpack.c.l.b16 %v3473
      %v3852 = vunpack.c.h.b16 %v3473
      %v3853 = vunpack.c.l.b16 %v3474
      %v3854 = vunpack.c.h.b16 %v3474
      %v3855 = vunpack.c.l.b16 %v3475
      %v3856 = vunpack.c.h.b16 %v3475
      %v3857 = vunpack.c.l.b16 %v3476
      %v3858 = vunpack.c.h.b16 %v3476
      %v3859 = vunpack.c.l.b16 %v3477
      %v3860 = vunpack.c.h.b16 %v3477
      %v3861 = vunpack.c.l.b16 %v3478
      %v3862 = vunpack.c.h.b16 %v3478
      %v3863 = vunpack.c.l.b16 %v3479
      %v3864 = vunpack.c.h.b16 %v3479
      %v3865 = vunpack.c.l.b16 %v3480
      %v3866 = vunpack.c.h.b16 %v3480
      %v3867 = vunpack.c.l.b16 %v3481
      %v3868 = vunpack.c.h.b16 %v3481
      %v3869 = vunpack.c.l.b16 %v3482
      %v3870 = vunpack.c.h.b16 %v3482
      %v3871 = vunpack.c.l.b16 %v3483
      %v3872 = vunpack.c.h.b16 %v3483
      %v3873 = vunpack.c.l.b16 %v3484
      %v3874 = vunpack.c.h.b16 %v3484
      %v3875 = vunpack.c.l.b16 %v3485
      %v3876 = vunpack.c.h.b16 %v3485
      %v3877 = vunpack.c.l.b16 %v3486
      %v3878 = vunpack.c.h.b16 %v3486
      %v3879 = vunpack.c.l.b16 %v3487
      %v3880 = vunpack.c.h.b16 %v3487
      %v3881 = vunpack.c.l.b16 %v3488
      %v3882 = vunpack.c.h.b16 %v3488
      %v3883 = vunpack.c.l.b16 %v3489
      %v3884 = vunpack.c.h.b16 %v3489
      %v3885 = vunpack.c.l.b16 %v3490
      %v3886 = vunpack.c.h.b16 %v3490
      %v3887 = vunpack.c.l.b16 %v3491
      %v3888 = vunpack.c.h.b16 %v3491
      %v3889 = vunpack.c.l.b16 %v3492
      %v3890 = vunpack.c.h.b16 %v3492
      %v3891 = vunpack.c.l.b16 %v3493
      %v3892 = vunpack.c.h.b16 %v3493
      %v3893 = vunpack.c.l.b16 %v3494
      %v3894 = vunpack.c.h.b16 %v3494
      %v3895 = vunpack.c.l.b16 %v3495
      %v3896 = vunpack.c.h.b16 %v3495
      %v3897 = vunpack.c.l.b16 %v3496
      %v3898 = vunpack.c.h.b16 %v3496
      %v3899 = vunpack.c.l.b16 %v3497
      %v3900 = vunpack.c.h.b16 %v3497
      %v3901 = vunpack.c.l.b16 %v3498
      %v3902 = vunpack.c.h.b16 %v3498
      %v3903 = vunpack.c.l.b16 %v3499
      %v3904 = vunpack.c.h.b16 %v3499
      %v3905 = vunpack.c.l.b16 %v3500
      %v3906 = vunpack.c.h.b16 %v3500
      %v3907 = vunpack.c.l.b16 %v3501
      %v3908 = vunpack.c.h.b16 %v3501
      %v3909 = vunpack.c.l.b16 %v3502
      %v3910 = vunpack.c.h.b16 %v3502
      %v3911 = vunpack.c.l.b16 %v3503
      %v3912 = vunpack.c.h.b16 %v3503
      %v3913 = vunpack.c.l.b16 %v3504
      %v3914 = vunpack.c.h.b16 %v3504
      %v3915 = vunpack.c.l.b16 %v3505
      %v3916 = vunpack.c.h.b16 %v3505
      %v3917 = vunpack.c.l.b16 %v3506
      %v3918 = vunpack.c.h.b16 %v3506
      %v3919 = vunpack.c.l.b16 %v3507
      %v3920 = vunpack.c.h.b16 %v3507
      %v3921 = vunpack.c.l.b16 %v3508
      %v3922 = vunpack.c.h.b16 %v3508
      %v3923 = vunpack.c.l.b16 %v3509
      %v3924 = vunpack.c.h.b16 %v3509
      %v3925 = vunpack.c.l.b16 %v3510
      %v3926 = vunpack.c.h.b16 %v3510
      %v3927 = vunpack.c.l.b16 %v3511
      %v3928 = vunpack.c.h.b16 %v3511
      %v3929 = vpack.c.b16 %v3743, %v3737
      %v3930 = vpack.c.b16 %v3744, %v3738
      %v3931 = vpack.c.b16 %v3745, %v3739
      %v3932 = vpack.c.b16 %v3746, %v3740
      %v3933 = vpack.c.b16 %v3747, %v3741
      %v3934 = vpack.c.b16 %v3748, %v3742
      %v3935 = vpack.c.b16 %v3755, %v3749
      %v3936 = vpack.c.b16 %v3756, %v3750
      %v3937 = vpack.c.b16 %v3757, %v3751
      %v3938 = vpack.c.b16 %v3758, %v3752
      %v3939 = vpack.c.b16 %v3759, %v3753
      %v3940 = vpack.c.b16 %v3760, %v3754
      %v3941 = vpack.c.b16 %v3767, %v3761
      %v3942 = vpack.c.b16 %v3768, %v3762
      %v3943 = vpack.c.b16 %v3769, %v3763
      %v3944 = vpack.c.b16 %v3770, %v3764
      %v3945 = vpack.c.b16 %v3771, %v3765
      %v3946 = vpack.c.b16 %v3772, %v3766
      %v3947 = vpack.c.b16 %v3779, %v3773
      %v3948 = vpack.c.b16 %v3780, %v3774
      %v3949 = vpack.c.b16 %v3781, %v3775
      %v3950 = vpack.c.b16 %v3782, %v3776
      %v3951 = vpack.c.b16 %v3783, %v3777
      %v3952 = vpack.c.b16 %v3784, %v3778
      %v3953 = vpack.c.b16 %v3791, %v3785
      %v3954 = vpack.c.b16 %v3792, %v3786
      %v3955 = vpack.c.b16 %v3793, %v3787
      %v3956 = vpack.c.b16 %v3794, %v3788
      %v3957 = vpack.c.b16 %v3795, %v3789
      %v3958 = vpack.c.b16 %v3796, %v3790
      %v3959 = vpack.c.b16 %v3803, %v3797
      %v3960 = vpack.c.b16 %v3804, %v3798
      %v3961 = vpack.c.b16 %v3805, %v3799
      %v3962 = vpack.c.b16 %v3806, %v3800
      %v3963 = vpack.c.b16 %v3807, %v3801
      %v3964 = vpack.c.b16 %v3808, %v3802
      %v3965 = vpack.c.b16 %v3815, %v3809
      %v3966 = vpack.c.b16 %v3816, %v3810
      %v3967 = vpack.c.b16 %v3817, %v3811
      %v3968 = vpack.c.b16 %v3818, %v3812
      %v3969 = vpack.c.b16 %v3819, %v3813
      %v3970 = vpack.c.b16 %v3820, %v3814
      %v3971 = vpack.c.b16 %v3827, %v3821
      %v3972 = vpack.c.b16 %v3828, %v3822
      %v3973 = vpack.c.b16 %v3829, %v3823
      %v3974 = vpack.c.b16 %v3830, %v3824
      %v3975 = vpack.c.b16 %v3831, %v3825
      %v3976 = vpack.c.b16 %v3832, %v3826
      %v3977 = vpack.c.b16 %v3839, %v3833
      %v3978 = vpack.c.b16 %v3840, %v3834
      %v3979 = vpack.c.b16 %v3841, %v3835
      %v3980 = vpack.c.b16 %v3842, %v3836
      %v3981 = vpack.c.b16 %v3843, %v3837
      %v3982 = vpack.c.b16 %v3844, %v3838
      %v3983 = vpack.c.b16 %v3851, %v3845
      %v3984 = vpack.c.b16 %v3852, %v3846
      %v3985 = vpack.c.b16 %v3853, %v3847
      %v3986 = vpack.c.b16 %v3854, %v3848
      %v3987 = vpack.c.b16 %v3855, %v3849
      %v3988 = vpack.c.b16 %v3856, %v3850
      %v3989 = vpack.c.b16 %v3863, %v3857
      %v3990 = vpack.c.b16 %v3864, %v3858
      %v3991 = vpack.c.b16 %v3865, %v3859
      %v3992 = vpack.c.b16 %v3866, %v3860
      %v3993 = vpack.c.b16 %v3867, %v3861
      %v3994 = vpack.c.b16 %v3868, %v3862
      %v3995 = vpack.c.b16 %v3875, %v3869
      %v3996 = vpack.c.b16 %v3876, %v3870
      %v3997 = vpack.c.b16 %v3877, %v3871
      %v3998 = vpack.c.b16 %v3878, %v3872
      %v3999 = vpack.c.b16 %v3879, %v3873
      %v4000 = vpack.c.b16 %v3880, %v3874
      %v4001 = vpack.c.b16 %v3887, %v3881
      %v4002 = vpack.c.b16 %v3888, %v3882
      %v4003 = vpack.c.b16 %v3889, %v3883
      %v4004 = vpack.c.b16 %v3890, %v3884
      %v4005 = vpack.c.b16 %v3891, %v3885
      %v4006 = vpack.c.b16 %v3892, %v3886
      %v4007 = vpack.c.b16 %v3899, %v3893
      %v4008 = vpack.c.b16 %v3900, %v3894
      %v4009 = vpack.c.b16 %v3901, %v3895
      %v4010 = vpack.c.b16 %v3902, %v3896
      %v4011 = vpack.c.b16 %v3903, %v3897
      %v4012 = vpack.c.b16 %v3904, %v3898
      %v4013 = vpack.c.b16 %v3911, %v3905
      %v4014 = vpack.c.b16 %v3912, %v3906
      %v4015 = vpack.c.b16 %v3913, %v3907
      %v4016 = vpack.c.b16 %v3914, %v3908
      %v4017 = vpack.c.b16 %v3915, %v3909
      %v4018 = vpack.c.b16 %v3916, %v3910
      %v4019 = vpack.c.b16 %v3923, %v3917
      %v4020 = vpack.c.b16 %v3924, %v3918
      %v4021 = vpack.c.b16 %v3925, %v3919
      %v4022 = vpack.c.b16 %v3926, %v3920
      %v4023 = vpack.c.b16 %v3927, %v3921
      %v4024 = vpack.c.b16 %v3928, %v3922
      %v4217 = vunpack.c.l.b16 %v3545
      %v4218 = vunpack.c.l.b16 %v3546
      %v4219 = vunpack.c.l.b16 %v3547
      %v4220 = vunpack.c.l.b16 %v3548
      %v4221 = vunpack.c.l.b16 %v3549
      %v4222 = vunpack.c.l.b16 %v3550
      %v4223 = vunpack.c.l.b16 %v3551
      %v4224 = vunpack.c.l.b16 %v3552
      %v4225 = vunpack.c.l.b16 %v3553
      %v4226 = vunpack.c.l.b16 %v3554
      %v4227 = vunpack.c.l.b16 %v3555
      %v4228 = vunpack.c.l.b16 %v3556
      %v4229 = vunpack.c.l.b16 %v3557
      %v4230 = vunpack.c.l.b16 %v3558
      %v4231 = vunpack.c.l.b16 %v3559
      %v4232 = vunpack.c.l.b16 %v3560
      %v4233 = vunpack.c.l.b16 %v3561
      %v4234 = vunpack.c.l.b16 %v3562
      %v4235 = vunpack.c.l.b16 %v3563
      %v4236 = vunpack.c.l.b16 %v3564
      %v4237 = vunpack.c.l.b16 %v3565
      %v4238 = vunpack.c.l.b16 %v3566
      %v4239 = vunpack.c.l.b16 %v3567
      %v4240 = vunpack.c.l.b16 %v3568
      %v4241 = vunpack.c.l.b16 %v3569
      %v4242 = vunpack.c.l.b16 %v3570
      %v4243 = vunpack.c.l.b16 %v3571
      %v4244 = vunpack.c.l.b16 %v3572
      %v4245 = vunpack.c.l.b16 %v3573
      %v4246 = vunpack.c.l.b16 %v3574
      %v4247 = vunpack.c.l.b16 %v3575
      %v4248 = vunpack.c.l.b16 %v3576
      %v4249 = vunpack.c.l.b16 %v3577
      %v4250 = vunpack.c.l.b16 %v3578
      %v4251 = vunpack.c.l.b16 %v3579
      %v4252 = vunpack.c.l.b16 %v3580
      %v4253 = vunpack.c.l.b16 %v3581
      %v4254 = vunpack.c.l.b16 %v3582
      %v4255 = vunpack.c.l.b16 %v3583
      %v4256 = vunpack.c.l.b16 %v3584
      %v4257 = vunpack.c.l.b16 %v3585
      %v4258 = vunpack.c.l.b16 %v3586
      %v4259 = vunpack.c.l.b16 %v3587
      %v4260 = vunpack.c.l.b16 %v3588
      %v4261 = vunpack.c.l.b16 %v3589
      %v4262 = vunpack.c.l.b16 %v3590
      %v4263 = vunpack.c.l.b16 %v3591
      %v4264 = vunpack.c.l.b16 %v3592
      %v4265 = vunpack.c.l.b16 %v3593
      %v4266 = vunpack.c.l.b16 %v3594
      %v4267 = vunpack.c.l.b16 %v3595
      %v4268 = vunpack.c.l.b16 %v3596
      %v4269 = vunpack.c.l.b16 %v3597
      %v4270 = vunpack.c.l.b16 %v3598
      %v4271 = vunpack.c.l.b16 %v3599
      %v4272 = vunpack.c.l.b16 %v3600
      %v4273 = vunpack.c.l.b16 %v3601
      %v4274 = vunpack.c.l.b16 %v3602
      %v4275 = vunpack.c.l.b16 %v3603
      %v4276 = vunpack.c.l.b16 %v3604
      %v4277 = vunpack.c.l.b16 %v3605
      %v4278 = vunpack.c.l.b16 %v3606
      %v4279 = vunpack.c.l.b16 %v3607
      %v4280 = vunpack.c.l.b16 %v3608
      %v4281 = vunpack.c.l.b16 %v3609
      %v4282 = vunpack.c.l.b16 %v3610
      %v4283 = vunpack.c.l.b16 %v3611
      %v4284 = vunpack.c.l.b16 %v3612
      %v4285 = vunpack.c.l.b16 %v3613
      %v4286 = vunpack.c.l.b16 %v3614
      %v4287 = vunpack.c.l.b16 %v3615
      %v4288 = vunpack.c.l.b16 %v3616
      %v4289 = vunpack.c.l.b16 %v3617
      %v4290 = vunpack.c.l.b16 %v3618
      %v4291 = vunpack.c.l.b16 %v3619
      %v4292 = vunpack.c.l.b16 %v3620
      %v4293 = vunpack.c.l.b16 %v3621
      %v4294 = vunpack.c.l.b16 %v3622
      %v4295 = vunpack.c.l.b16 %v3623
      %v4296 = vunpack.c.l.b16 %v3624
      %v4297 = vunpack.c.l.b16 %v3625
      %v4298 = vunpack.c.l.b16 %v3626
      %v4299 = vunpack.c.l.b16 %v3627
      %v4300 = vunpack.c.l.b16 %v3628
      %v4301 = vunpack.c.l.b16 %v3629
      %v4302 = vunpack.c.l.b16 %v3630
      %v4303 = vunpack.c.l.b16 %v3631
      %v4304 = vunpack.c.l.b16 %v3632
      %v4305 = vunpack.c.l.b16 %v3633
      %v4306 = vunpack.c.l.b16 %v3634
      %v4307 = vunpack.c.l.b16 %v3635
      %v4308 = vunpack.c.l.b16 %v3636
      %v4309 = vunpack.c.l.b16 %v3637
      %v4310 = vunpack.c.l.b16 %v3638
      %v4311 = vunpack.c.l.b16 %v3639
      %v4312 = vunpack.c.l.b16 %v3640
      %v4313 = vpack.c.b16 %v4218, %v4217
      %v4314 = vpack.c.b16 %v4220, %v4219
      %v4315 = vpack.c.b16 %v4222, %v4221
      %v4316 = vpack.c.b16 %v4224, %v4223
      %v4317 = vpack.c.b16 %v4226, %v4225
      %v4318 = vpack.c.b16 %v4228, %v4227
      %v4319 = vpack.c.b16 %v4230, %v4229
      %v4320 = vpack.c.b16 %v4232, %v4231
      %v4321 = vpack.c.b16 %v4234, %v4233
      %v4322 = vpack.c.b16 %v4236, %v4235
      %v4323 = vpack.c.b16 %v4238, %v4237
      %v4324 = vpack.c.b16 %v4240, %v4239
      %v4325 = vpack.c.b16 %v4242, %v4241
      %v4326 = vpack.c.b16 %v4244, %v4243
      %v4327 = vpack.c.b16 %v4246, %v4245
      %v4328 = vpack.c.b16 %v4248, %v4247
      %v4329 = vpack.c.b16 %v4250, %v4249
      %v4330 = vpack.c.b16 %v4252, %v4251
      %v4331 = vpack.c.b16 %v4254, %v4253
      %v4332 = vpack.c.b16 %v4256, %v4255
      %v4333 = vpack.c.b16 %v4258, %v4257
      %v4334 = vpack.c.b16 %v4260, %v4259
      %v4335 = vpack.c.b16 %v4262, %v4261
      %v4336 = vpack.c.b16 %v4264, %v4263
      %v4337 = vpack.c.b16 %v4266, %v4265
      %v4338 = vpack.c.b16 %v4268, %v4267
      %v4339 = vpack.c.b16 %v4270, %v4269
      %v4340 = vpack.c.b16 %v4272, %v4271
      %v4341 = vpack.c.b16 %v4274, %v4273
      %v4342 = vpack.c.b16 %v4276, %v4275
      %v4343 = vpack.c.b16 %v4278, %v4277
      %v4344 = vpack.c.b16 %v4280, %v4279
      %v4345 = vpack.c.b16 %v4282, %v4281
      %v4346 = vpack.c.b16 %v4284, %v4283
      %v4347 = vpack.c.b16 %v4286, %v4285
      %v4348 = vpack.c.b16 %v4288, %v4287
      %v4349 = vpack.c.b16 %v4290, %v4289
      %v4350 = vpack.c.b16 %v4292, %v4291
      %v4351 = vpack.c.b16 %v4294, %v4293
      %v4352 = vpack.c.b16 %v4296, %v4295
      %v4353 = vpack.c.b16 %v4298, %v4297
      %v4354 = vpack.c.b16 %v4300, %v4299
      %v4355 = vpack.c.b16 %v4302, %v4301
      %v4356 = vpack.c.b16 %v4304, %v4303
      %v4357 = vpack.c.b16 %v4306, %v4305
      %v4358 = vpack.c.b16 %v4308, %v4307
      %v4359 = vpack.c.b16 %v4310, %v4309
      %v4360 = vpack.c.b16 %v4312, %v4311
      %4409 = vmatpush.bf16.msra.mxu0 %v4320
      %4410 = vmatpush.bf16.msra.mxu0 %v4319
      %4411 = vmatpush.bf16.msra.mxu0 %v4318
      %4412 = vmatpush.bf16.msra.mxu0 %v4317
      %4413 = vmatpush.bf16.msra.mxu0 %v4316
      %4414 = vmatpush.bf16.msra.mxu0 %v4315
      %4415 = vmatpush.bf16.msra.mxu0 %v4314
      %4416 = vmatpush.bf16.msra.mxu0 %v4313
      %4417 = vmatmul.bf16.gmra.mxu0 %v3929
      %v4418 = vpop.f32.mrf.mxu0
      %v4419 = vadd.f32 0.0, %v4418
      %v4420 = vpop.f32.mrf.mxu0
      %v4421 = vadd.f32 0.0, %v4420
      %4422 = vmatmul.bf16.gmra.mxu0 %v3935
      %v4423 = vpop.f32.mrf.mxu0
      %v4424 = vadd.f32 0.0, %v4423
      %v4425 = vpop.f32.mrf.mxu0
      %v4426 = vadd.f32 0.0, %v4425
      %4427 = vmatmul.bf16.gmra.mxu0 %v3941
      %v4428 = vpop.f32.mrf.mxu0
      %v4429 = vadd.f32 0.0, %v4428
      %v4430 = vpop.f32.mrf.mxu0
      %v4431 = vadd.f32 0.0, %v4430
      %4432 = vmatmul.bf16.gmra.mxu0 %v3947
      %v4433 = vpop.f32.mrf.mxu0
      %v4434 = vadd.f32 0.0, %v4433
      %v4435 = vpop.f32.mrf.mxu0
      %v4436 = vadd.f32 0.0, %v4435
      %4437 = vmatmul.bf16.gmra.mxu0 %v3953
      %v4438 = vpop.f32.mrf.mxu0
      %v4439 = vadd.f32 0.0, %v4438
      %v4440 = vpop.f32.mrf.mxu0
      %v4441 = vadd.f32 0.0, %v4440
      %4442 = vmatmul.bf16.gmra.mxu0 %v3959
      %v4443 = vpop.f32.mrf.mxu0
      %v4444 = vadd.f32 0.0, %v4443
      %v4445 = vpop.f32.mrf.mxu0
      %v4446 = vadd.f32 0.0, %v4445
      %4447 = vmatmul.bf16.gmra.mxu0 %v3965
      %v4448 = vpop.f32.mrf.mxu0
      %v4449 = vadd.f32 0.0, %v4448
      %v4450 = vpop.f32.mrf.mxu0
      %v4451 = vadd.f32 0.0, %v4450
      %4452 = vmatmul.bf16.gmra.mxu0 %v3971
      %v4453 = vpop.f32.mrf.mxu0
      %v4454 = vadd.f32 0.0, %v4453
      %v4455 = vpop.f32.mrf.mxu0
      %v4456 = vadd.f32 0.0, %v4455
      %4457 = vmatmul.bf16.gmra.mxu0 %v3977
      %v4458 = vpop.f32.mrf.mxu0
      %v4459 = vadd.f32 0.0, %v4458
      %v4460 = vpop.f32.mrf.mxu0
      %v4461 = vadd.f32 0.0, %v4460
      %4462 = vmatmul.bf16.gmra.mxu0 %v3983
      %v4463 = vpop.f32.mrf.mxu0
      %v4464 = vadd.f32 0.0, %v4463
      %v4465 = vpop.f32.mrf.mxu0
      %v4466 = vadd.f32 0.0, %v4465
      %4467 = vmatmul.bf16.gmra.mxu0 %v3989
      %v4468 = vpop.f32.mrf.mxu0
      %v4469 = vadd.f32 0.0, %v4468
      %v4470 = vpop.f32.mrf.mxu0
      %v4471 = vadd.f32 0.0, %v4470
      %4472 = vmatmul.bf16.gmra.mxu0 %v3995
      %v4473 = vpop.f32.mrf.mxu0
      %v4474 = vadd.f32 0.0, %v4473
      %v4475 = vpop.f32.mrf.mxu0
      %v4476 = vadd.f32 0.0, %v4475
      %4477 = vmatmul.bf16.gmra.mxu0 %v4001
      %v4478 = vpop.f32.mrf.mxu0
      %v4479 = vadd.f32 0.0, %v4478
      %v4480 = vpop.f32.mrf.mxu0
      %v4481 = vadd.f32 0.0, %v4480
      %4482 = vmatmul.bf16.gmra.mxu0 %v4007
      %v4483 = vpop.f32.mrf.mxu0
      %v4484 = vadd.f32 0.0, %v4483
      %v4485 = vpop.f32.mrf.mxu0
      %v4486 = vadd.f32 0.0, %v4485
      %4487 = vmatmul.bf16.gmra.mxu0 %v4013
      %v4488 = vpop.f32.mrf.mxu0
      %v4489 = vadd.f32 0.0, %v4488
      %v4490 = vpop.f32.mrf.mxu0
      %v4491 = vadd.f32 0.0, %v4490
      %4492 = vmatmul.bf16.gmra.mxu0 %v4019
      %v4493 = vpop.f32.mrf.mxu0
      %v4494 = vadd.f32 0.0, %v4493
      %v4495 = vpop.f32.mrf.mxu0
      %v4496 = vadd.f32 0.0, %v4495
      %4497 = vdwg.mxu0
      %4498 = vmatpush.bf16.msra.mxu0 %v4328
      %4499 = vmatpush.bf16.msra.mxu0 %v4327
      %4500 = vmatpush.bf16.msra.mxu0 %v4326
      %4501 = vmatpush.bf16.msra.mxu0 %v4325
      %4502 = vmatpush.bf16.msra.mxu0 %v4324
      %4503 = vmatpush.bf16.msra.mxu0 %v4323
      %4504 = vmatpush.bf16.msra.mxu0 %v4322
      %4505 = vmatpush.bf16.msra.mxu0 %v4321
      %4506 = vmatmul.bf16.gmra.mxu0 %v3930
      %v4507 = vpop.f32.mrf.mxu0
      %v4508 = vadd.f32 %v4419, %v4507
      %v4509 = vpop.f32.mrf.mxu0
      %v4510 = vadd.f32 %v4421, %v4509
      %4511 = vmatmul.bf16.gmra.mxu0 %v3936
      %v4512 = vpop.f32.mrf.mxu0
      %v4513 = vadd.f32 %v4424, %v4512
      %v4514 = vpop.f32.mrf.mxu0
      %v4515 = vadd.f32 %v4426, %v4514
      %4516 = vmatmul.bf16.gmra.mxu0 %v3942
      %v4517 = vpop.f32.mrf.mxu0
      %v4518 = vadd.f32 %v4429, %v4517
      %v4519 = vpop.f32.mrf.mxu0
      %v4520 = vadd.f32 %v4431, %v4519
      %4521 = vmatmul.bf16.gmra.mxu0 %v3948
      %v4522 = vpop.f32.mrf.mxu0
      %v4523 = vadd.f32 %v4434, %v4522
      %v4524 = vpop.f32.mrf.mxu0
      %v4525 = vadd.f32 %v4436, %v4524
      %4526 = vmatmul.bf16.gmra.mxu0 %v3954
      %v4527 = vpop.f32.mrf.mxu0
      %v4528 = vadd.f32 %v4439, %v4527
      %v4529 = vpop.f32.mrf.mxu0
      %v4530 = vadd.f32 %v4441, %v4529
      %4531 = vmatmul.bf16.gmra.mxu0 %v3960
      %v4532 = vpop.f32.mrf.mxu0
      %v4533 = vadd.f32 %v4444, %v4532
      %v4534 = vpop.f32.mrf.mxu0
      %v4535 = vadd.f32 %v4446, %v4534
      %4536 = vmatmul.bf16.gmra.mxu0 %v3966
      %v4537 = vpop.f32.mrf.mxu0
      %v4538 = vadd.f32 %v4449, %v4537
      %v4539 = vpop.f32.mrf.mxu0
      %v4540 = vadd.f32 %v4451, %v4539
      %4541 = vmatmul.bf16.gmra.mxu0 %v3972
      %v4542 = vpop.f32.mrf.mxu0
      %v4543 = vadd.f32 %v4454, %v4542
      %v4544 = vpop.f32.mrf.mxu0
      %v4545 = vadd.f32 %v4456, %v4544
      %4546 = vmatmul.bf16.gmra.mxu0 %v3978
      %v4547 = vpop.f32.mrf.mxu0
      %v4548 = vadd.f32 %v4459, %v4547
      %v4549 = vpop.f32.mrf.mxu0
      %v4550 = vadd.f32 %v4461, %v4549
      %4551 = vmatmul.bf16.gmra.mxu0 %v3984
      %v4552 = vpop.f32.mrf.mxu0
      %v4553 = vadd.f32 %v4464, %v4552
      %v4554 = vpop.f32.mrf.mxu0
      %v4555 = vadd.f32 %v4466, %v4554
      %4556 = vmatmul.bf16.gmra.mxu0 %v3990
      %v4557 = vpop.f32.mrf.mxu0
      %v4558 = vadd.f32 %v4469, %v4557
      %v4559 = vpop.f32.mrf.mxu0
      %v4560 = vadd.f32 %v4471, %v4559
      %4561 = vmatmul.bf16.gmra.mxu0 %v3996
      %v4562 = vpop.f32.mrf.mxu0
      %v4563 = vadd.f32 %v4474, %v4562
      %v4564 = vpop.f32.mrf.mxu0
      %v4565 = vadd.f32 %v4476, %v4564
      %4566 = vmatmul.bf16.gmra.mxu0 %v4002
      %v4567 = vpop.f32.mrf.mxu0
      %v4568 = vadd.f32 %v4479, %v4567
      %v4569 = vpop.f32.mrf.mxu0
      %v4570 = vadd.f32 %v4481, %v4569
      %4571 = vmatmul.bf16.gmra.mxu0 %v4008
      %v4572 = vpop.f32.mrf.mxu0
      %v4573 = vadd.f32 %v4484, %v4572
      %v4574 = vpop.f32.mrf.mxu0
      %v4575 = vadd.f32 %v4486, %v4574
      %4576 = vmatmul.bf16.gmra.mxu0 %v4014
      %v4577 = vpop.f32.mrf.mxu0
      %v4578 = vadd.f32 %v4489, %v4577
      %v4579 = vpop.f32.mrf.mxu0
      %v4580 = vadd.f32 %v4491, %v4579
      %4581 = vmatmul.bf16.gmra.mxu0 %v4020
      %v4582 = vpop.f32.mrf.mxu0
      %v4583 = vadd.f32 %v4494, %v4582
      %v4584 = vpop.f32.mrf.mxu0
      %v4585 = vadd.f32 %v4496, %v4584
      %4586 = vdwg.mxu0
      %4587 = vmatpush.bf16.msra.mxu0 %v4336
      %4588 = vmatpush.bf16.msra.mxu0 %v4335
      %4589 = vmatpush.bf16.msra.mxu0 %v4334
      %4590 = vmatpush.bf16.msra.mxu0 %v4333
      %4591 = vmatpush.bf16.msra.mxu0 %v4332
      %4592 = vmatpush.bf16.msra.mxu0 %v4331
      %4593 = vmatpush.bf16.msra.mxu0 %v4330
      %4594 = vmatpush.bf16.msra.mxu0 %v4329
      %4595 = vmatmul.bf16.gmra.mxu0 %v3931
      %v4596 = vpop.f32.mrf.mxu0
      %v4597 = vadd.f32 %v4508, %v4596
      %v4598 = vpop.f32.mrf.mxu0
      %v4599 = vadd.f32 %v4510, %v4598
      %4600 = vmatmul.bf16.gmra.mxu0 %v3937
      %v4601 = vpop.f32.mrf.mxu0
      %v4602 = vadd.f32 %v4513, %v4601
      %v4603 = vpop.f32.mrf.mxu0
      %v4604 = vadd.f32 %v4515, %v4603
      %4605 = vmatmul.bf16.gmra.mxu0 %v3943
      %v4606 = vpop.f32.mrf.mxu0
      %v4607 = vadd.f32 %v4518, %v4606
      %v4608 = vpop.f32.mrf.mxu0
      %v4609 = vadd.f32 %v4520, %v4608
      %4610 = vmatmul.bf16.gmra.mxu0 %v3949
      %v4611 = vpop.f32.mrf.mxu0
      %v4612 = vadd.f32 %v4523, %v4611
      %v4613 = vpop.f32.mrf.mxu0
      %v4614 = vadd.f32 %v4525, %v4613
      %4615 = vmatmul.bf16.gmra.mxu0 %v3955
      %v4616 = vpop.f32.mrf.mxu0
      %v4617 = vadd.f32 %v4528, %v4616
      %v4618 = vpop.f32.mrf.mxu0
      %v4619 = vadd.f32 %v4530, %v4618
      %4620 = vmatmul.bf16.gmra.mxu0 %v3961
      %v4621 = vpop.f32.mrf.mxu0
      %v4622 = vadd.f32 %v4533, %v4621
      %v4623 = vpop.f32.mrf.mxu0
      %v4624 = vadd.f32 %v4535, %v4623
      %4625 = vmatmul.bf16.gmra.mxu0 %v3967
      %v4626 = vpop.f32.mrf.mxu0
      %v4627 = vadd.f32 %v4538, %v4626
      %v4628 = vpop.f32.mrf.mxu0
      %v4629 = vadd.f32 %v4540, %v4628
      %4630 = vmatmul.bf16.gmra.mxu0 %v3973
      %v4631 = vpop.f32.mrf.mxu0
      %v4632 = vadd.f32 %v4543, %v4631
      %v4633 = vpop.f32.mrf.mxu0
      %v4634 = vadd.f32 %v4545, %v4633
      %4635 = vmatmul.bf16.gmra.mxu0 %v3979
      %v4636 = vpop.f32.mrf.mxu0
      %v4637 = vadd.f32 %v4548, %v4636
      %v4638 = vpop.f32.mrf.mxu0
      %v4639 = vadd.f32 %v4550, %v4638
      %4640 = vmatmul.bf16.gmra.mxu0 %v3985
      %v4641 = vpop.f32.mrf.mxu0
      %v4642 = vadd.f32 %v4553, %v4641
      %v4643 = vpop.f32.mrf.mxu0
      %v4644 = vadd.f32 %v4555, %v4643
      %4645 = vmatmul.bf16.gmra.mxu0 %v3991
      %v4646 = vpop.f32.mrf.mxu0
      %v4647 = vadd.f32 %v4558, %v4646
      %v4648 = vpop.f32.mrf.mxu0
      %v4649 = vadd.f32 %v4560, %v4648
      %4650 = vmatmul.bf16.gmra.mxu0 %v3997
      %v4651 = vpop.f32.mrf.mxu0
      %v4652 = vadd.f32 %v4563, %v4651
      %v4653 = vpop.f32.mrf.mxu0
      %v4654 = vadd.f32 %v4565, %v4653
      %4655 = vmatmul.bf16.gmra.mxu0 %v4003
      %v4656 = vpop.f32.mrf.mxu0
      %v4657 = vadd.f32 %v4568, %v4656
      %v4658 = vpop.f32.mrf.mxu0
      %v4659 = vadd.f32 %v4570, %v4658
      %4660 = vmatmul.bf16.gmra.mxu0 %v4009
      %v4661 = vpop.f32.mrf.mxu0
      %v4662 = vadd.f32 %v4573, %v4661
      %v4663 = vpop.f32.mrf.mxu0
      %v4664 = vadd.f32 %v4575, %v4663
      %4665 = vmatmul.bf16.gmra.mxu0 %v4015
      %v4666 = vpop.f32.mrf.mxu0
      %v4667 = vadd.f32 %v4578, %v4666
      %v4668 = vpop.f32.mrf.mxu0
      %v4669 = vadd.f32 %v4580, %v4668
      %4670 = vmatmul.bf16.gmra.mxu0 %v4021
      %v4671 = vpop.f32.mrf.mxu0
      %v4672 = vadd.f32 %v4583, %v4671
      %v4673 = vpop.f32.mrf.mxu0
      %v4674 = vadd.f32 %v4585, %v4673
      %4675 = vdwg.mxu0
      %4676 = vmatpush.bf16.msra.mxu0 %v4344
      %4677 = vmatpush.bf16.msra.mxu0 %v4343
      %4678 = vmatpush.bf16.msra.mxu0 %v4342
      %4679 = vmatpush.bf16.msra.mxu0 %v4341
      %4680 = vmatpush.bf16.msra.mxu0 %v4340
      %4681 = vmatpush.bf16.msra.mxu0 %v4339
      %4682 = vmatpush.bf16.msra.mxu0 %v4338
      %4683 = vmatpush.bf16.msra.mxu0 %v4337
      %4684 = vmatmul.bf16.gmra.mxu0 %v3932
      %v4685 = vpop.f32.mrf.mxu0
      %v4686 = vadd.f32 %v4597, %v4685
      %v4687 = vpop.f32.mrf.mxu0
      %v4688 = vadd.f32 %v4599, %v4687
      %4689 = vmatmul.bf16.gmra.mxu0 %v3938
      %v4690 = vpop.f32.mrf.mxu0
      %v4691 = vadd.f32 %v4602, %v4690
      %v4692 = vpop.f32.mrf.mxu0
      %v4693 = vadd.f32 %v4604, %v4692
      %4694 = vmatmul.bf16.gmra.mxu0 %v3944
      %v4695 = vpop.f32.mrf.mxu0
      %v4696 = vadd.f32 %v4607, %v4695
      %v4697 = vpop.f32.mrf.mxu0
      %v4698 = vadd.f32 %v4609, %v4697
      %4699 = vmatmul.bf16.gmra.mxu0 %v3950
      %v4700 = vpop.f32.mrf.mxu0
      %v4701 = vadd.f32 %v4612, %v4700
      %v4702 = vpop.f32.mrf.mxu0
      %v4703 = vadd.f32 %v4614, %v4702
      %4704 = vmatmul.bf16.gmra.mxu0 %v3956
      %v4705 = vpop.f32.mrf.mxu0
      %v4706 = vadd.f32 %v4617, %v4705
      %v4707 = vpop.f32.mrf.mxu0
      %v4708 = vadd.f32 %v4619, %v4707
      %4709 = vmatmul.bf16.gmra.mxu0 %v3962
      %v4710 = vpop.f32.mrf.mxu0
      %v4711 = vadd.f32 %v4622, %v4710
      %v4712 = vpop.f32.mrf.mxu0
      %v4713 = vadd.f32 %v4624, %v4712
      %4714 = vmatmul.bf16.gmra.mxu0 %v3968
      %v4715 = vpop.f32.mrf.mxu0
      %v4716 = vadd.f32 %v4627, %v4715
      %v4717 = vpop.f32.mrf.mxu0
      %v4718 = vadd.f32 %v4629, %v4717
      %4719 = vmatmul.bf16.gmra.mxu0 %v3974
      %v4720 = vpop.f32.mrf.mxu0
      %v4721 = vadd.f32 %v4632, %v4720
      %v4722 = vpop.f32.mrf.mxu0
      %v4723 = vadd.f32 %v4634, %v4722
      %4724 = vmatmul.bf16.gmra.mxu0 %v3980
      %v4725 = vpop.f32.mrf.mxu0
      %v4726 = vadd.f32 %v4637, %v4725
      %v4727 = vpop.f32.mrf.mxu0
      %v4728 = vadd.f32 %v4639, %v4727
      %4729 = vmatmul.bf16.gmra.mxu0 %v3986
      %v4730 = vpop.f32.mrf.mxu0
      %v4731 = vadd.f32 %v4642, %v4730
      %v4732 = vpop.f32.mrf.mxu0
      %v4733 = vadd.f32 %v4644, %v4732
      %4734 = vmatmul.bf16.gmra.mxu0 %v3992
      %v4735 = vpop.f32.mrf.mxu0
      %v4736 = vadd.f32 %v4647, %v4735
      %v4737 = vpop.f32.mrf.mxu0
      %v4738 = vadd.f32 %v4649, %v4737
      %4739 = vmatmul.bf16.gmra.mxu0 %v3998
      %v4740 = vpop.f32.mrf.mxu0
      %v4741 = vadd.f32 %v4652, %v4740
      %v4742 = vpop.f32.mrf.mxu0
      %v4743 = vadd.f32 %v4654, %v4742
      %4744 = vmatmul.bf16.gmra.mxu0 %v4004
      %v4745 = vpop.f32.mrf.mxu0
      %v4746 = vadd.f32 %v4657, %v4745
      %v4747 = vpop.f32.mrf.mxu0
      %v4748 = vadd.f32 %v4659, %v4747
      %4749 = vmatmul.bf16.gmra.mxu0 %v4010
      %v4750 = vpop.f32.mrf.mxu0
      %v4751 = vadd.f32 %v4662, %v4750
      %v4752 = vpop.f32.mrf.mxu0
      %v4753 = vadd.f32 %v4664, %v4752
      %4754 = vmatmul.bf16.gmra.mxu0 %v4016
      %v4755 = vpop.f32.mrf.mxu0
      %v4756 = vadd.f32 %v4667, %v4755
      %v4757 = vpop.f32.mrf.mxu0
      %v4758 = vadd.f32 %v4669, %v4757
      %4759 = vmatmul.bf16.gmra.mxu0 %v4022
      %v4760 = vpop.f32.mrf.mxu0
      %v4761 = vadd.f32 %v4672, %v4760
      %v4762 = vpop.f32.mrf.mxu0
      %v4763 = vadd.f32 %v4674, %v4762
      %4764 = vdwg.mxu0
      %4765 = vmatpush.bf16.msra.mxu0 %v4352
      %4766 = vmatpush.bf16.msra.mxu0 %v4351
      %4767 = vmatpush.bf16.msra.mxu0 %v4350
      %4768 = vmatpush.bf16.msra.mxu0 %v4349
      %4769 = vmatpush.bf16.msra.mxu0 %v4348
      %4770 = vmatpush.bf16.msra.mxu0 %v4347
      %4771 = vmatpush.bf16.msra.mxu0 %v4346
      %4772 = vmatpush.bf16.msra.mxu0 %v4345
      %4773 = vmatmul.bf16.gmra.mxu0 %v3933
      %v4774 = vpop.f32.mrf.mxu0
      %v4775 = vadd.f32 %v4686, %v4774
      %v4776 = vpop.f32.mrf.mxu0
      %v4777 = vadd.f32 %v4688, %v4776
      %4778 = vmatmul.bf16.gmra.mxu0 %v3939
      %v4779 = vpop.f32.mrf.mxu0
      %v4780 = vadd.f32 %v4691, %v4779
      %v4781 = vpop.f32.mrf.mxu0
      %v4782 = vadd.f32 %v4693, %v4781
      %4783 = vmatmul.bf16.gmra.mxu0 %v3945
      %v4784 = vpop.f32.mrf.mxu0
      %v4785 = vadd.f32 %v4696, %v4784
      %v4786 = vpop.f32.mrf.mxu0
      %v4787 = vadd.f32 %v4698, %v4786
      %4788 = vmatmul.bf16.gmra.mxu0 %v3951
      %v4789 = vpop.f32.mrf.mxu0
      %v4790 = vadd.f32 %v4701, %v4789
      %v4791 = vpop.f32.mrf.mxu0
      %v4792 = vadd.f32 %v4703, %v4791
      %4793 = vmatmul.bf16.gmra.mxu0 %v3957
      %v4794 = vpop.f32.mrf.mxu0
      %v4795 = vadd.f32 %v4706, %v4794
      %v4796 = vpop.f32.mrf.mxu0
      %v4797 = vadd.f32 %v4708, %v4796
      %4798 = vmatmul.bf16.gmra.mxu0 %v3963
      %v4799 = vpop.f32.mrf.mxu0
      %v4800 = vadd.f32 %v4711, %v4799
      %v4801 = vpop.f32.mrf.mxu0
      %v4802 = vadd.f32 %v4713, %v4801
      %4803 = vmatmul.bf16.gmra.mxu0 %v3969
      %v4804 = vpop.f32.mrf.mxu0
      %v4805 = vadd.f32 %v4716, %v4804
      %v4806 = vpop.f32.mrf.mxu0
      %v4807 = vadd.f32 %v4718, %v4806
      %4808 = vmatmul.bf16.gmra.mxu0 %v3975
      %v4809 = vpop.f32.mrf.mxu0
      %v4810 = vadd.f32 %v4721, %v4809
      %v4811 = vpop.f32.mrf.mxu0
      %v4812 = vadd.f32 %v4723, %v4811
      %4813 = vmatmul.bf16.gmra.mxu0 %v3981
      %v4814 = vpop.f32.mrf.mxu0
      %v4815 = vadd.f32 %v4726, %v4814
      %v4816 = vpop.f32.mrf.mxu0
      %v4817 = vadd.f32 %v4728, %v4816
      %4818 = vmatmul.bf16.gmra.mxu0 %v3987
      %v4819 = vpop.f32.mrf.mxu0
      %v4820 = vadd.f32 %v4731, %v4819
      %v4821 = vpop.f32.mrf.mxu0
      %v4822 = vadd.f32 %v4733, %v4821
      %4823 = vmatmul.bf16.gmra.mxu0 %v3993
      %v4824 = vpop.f32.mrf.mxu0
      %v4825 = vadd.f32 %v4736, %v4824
      %v4826 = vpop.f32.mrf.mxu0
      %v4827 = vadd.f32 %v4738, %v4826
      %4828 = vmatmul.bf16.gmra.mxu0 %v3999
      %v4829 = vpop.f32.mrf.mxu0
      %v4830 = vadd.f32 %v4741, %v4829
      %v4831 = vpop.f32.mrf.mxu0
      %v4832 = vadd.f32 %v4743, %v4831
      %4833 = vmatmul.bf16.gmra.mxu0 %v4005
      %v4834 = vpop.f32.mrf.mxu0
      %v4835 = vadd.f32 %v4746, %v4834
      %v4836 = vpop.f32.mrf.mxu0
      %v4837 = vadd.f32 %v4748, %v4836
      %4838 = vmatmul.bf16.gmra.mxu0 %v4011
      %v4839 = vpop.f32.mrf.mxu0
      %v4840 = vadd.f32 %v4751, %v4839
      %v4841 = vpop.f32.mrf.mxu0
      %v4842 = vadd.f32 %v4753, %v4841
      %4843 = vmatmul.bf16.gmra.mxu0 %v4017
      %v4844 = vpop.f32.mrf.mxu0
      %v4845 = vadd.f32 %v4756, %v4844
      %v4846 = vpop.f32.mrf.mxu0
      %v4847 = vadd.f32 %v4758, %v4846
      %4848 = vmatmul.bf16.gmra.mxu0 %v4023
      %v4849 = vpop.f32.mrf.mxu0
      %v4850 = vadd.f32 %v4761, %v4849
      %v4851 = vpop.f32.mrf.mxu0
      %v4852 = vadd.f32 %v4763, %v4851
      %4853 = vdwg.mxu0
      %4854 = vmatpush.bf16.msra.mxu0 %v4360
      %4855 = vmatpush.bf16.msra.mxu0 %v4359
      %4856 = vmatpush.bf16.msra.mxu0 %v4358
      %4857 = vmatpush.bf16.msra.mxu0 %v4357
      %4858 = vmatpush.bf16.msra.mxu0 %v4356
      %4859 = vmatpush.bf16.msra.mxu0 %v4355
      %4860 = vmatpush.bf16.msra.mxu0 %v4354
      %4861 = vmatpush.bf16.msra.mxu0 %v4353
      %4862 = vmatmul.bf16.gmra.mxu0 %v3934
      %v4863 = vpop.f32.mrf.mxu0
      %v4864 = vadd.f32 %v4775, %v4863
      %v4865 = vpop.f32.mrf.mxu0
      %v4866 = vadd.f32 %v4777, %v4865
      %4867 = vmatmul.bf16.gmra.mxu0 %v3940
      %v4868 = vpop.f32.mrf.mxu0
      %v4869 = vadd.f32 %v4780, %v4868
      %v4870 = vpop.f32.mrf.mxu0
      %v4871 = vadd.f32 %v4782, %v4870
      %4872 = vmatmul.bf16.gmra.mxu0 %v3946
      %v4873 = vpop.f32.mrf.mxu0
      %v4874 = vadd.f32 %v4785, %v4873
      %v4875 = vpop.f32.mrf.mxu0
      %v4876 = vadd.f32 %v4787, %v4875
      %4877 = vmatmul.bf16.gmra.mxu0 %v3952
      %v4878 = vpop.f32.mrf.mxu0
      %v4879 = vadd.f32 %v4790, %v4878
      %v4880 = vpop.f32.mrf.mxu0
      %v4881 = vadd.f32 %v4792, %v4880
      %4882 = vmatmul.bf16.gmra.mxu0 %v3958
      %v4883 = vpop.f32.mrf.mxu0
      %v4884 = vadd.f32 %v4795, %v4883
      %v4885 = vpop.f32.mrf.mxu0
      %v4886 = vadd.f32 %v4797, %v4885
      %4887 = vmatmul.bf16.gmra.mxu0 %v3964
      %v4888 = vpop.f32.mrf.mxu0
      %v4889 = vadd.f32 %v4800, %v4888
      %v4890 = vpop.f32.mrf.mxu0
      %v4891 = vadd.f32 %v4802, %v4890
      %4892 = vmatmul.bf16.gmra.mxu0 %v3970
      %v4893 = vpop.f32.mrf.mxu0
      %v4894 = vadd.f32 %v4805, %v4893
      %v4895 = vpop.f32.mrf.mxu0
      %v4896 = vadd.f32 %v4807, %v4895
      %4897 = vmatmul.bf16.gmra.mxu0 %v3976
      %v4898 = vpop.f32.mrf.mxu0
      %v4899 = vadd.f32 %v4810, %v4898
      %v4900 = vpop.f32.mrf.mxu0
      %v4901 = vadd.f32 %v4812, %v4900
      %4902 = vmatmul.bf16.gmra.mxu0 %v3982
      %v4903 = vpop.f32.mrf.mxu0
      %v4904 = vadd.f32 %v4815, %v4903
      %v4905 = vpop.f32.mrf.mxu0
      %v4906 = vadd.f32 %v4817, %v4905
      %4907 = vmatmul.bf16.gmra.mxu0 %v3988
      %v4908 = vpop.f32.mrf.mxu0
      %v4909 = vadd.f32 %v4820, %v4908
      %v4910 = vpop.f32.mrf.mxu0
      %v4911 = vadd.f32 %v4822, %v4910
      %4912 = vmatmul.bf16.gmra.mxu0 %v3994
      %v4913 = vpop.f32.mrf.mxu0
      %v4914 = vadd.f32 %v4825, %v4913
      %v4915 = vpop.f32.mrf.mxu0
      %v4916 = vadd.f32 %v4827, %v4915
      %4917 = vmatmul.bf16.gmra.mxu0 %v4000
      %v4918 = vpop.f32.mrf.mxu0
      %v4919 = vadd.f32 %v4830, %v4918
      %v4920 = vpop.f32.mrf.mxu0
      %v4921 = vadd.f32 %v4832, %v4920
      %4922 = vmatmul.bf16.gmra.mxu0 %v4006
      %v4923 = vpop.f32.mrf.mxu0
      %v4924 = vadd.f32 %v4835, %v4923
      %v4925 = vpop.f32.mrf.mxu0
      %v4926 = vadd.f32 %v4837, %v4925
      %4927 = vmatmul.bf16.gmra.mxu0 %v4012
      %v4928 = vpop.f32.mrf.mxu0
      %v4929 = vadd.f32 %v4840, %v4928
      %v4930 = vpop.f32.mrf.mxu0
      %v4931 = vadd.f32 %v4842, %v4930
      %4932 = vmatmul.bf16.gmra.mxu0 %v4018
      %v4933 = vpop.f32.mrf.mxu0
      %v4934 = vadd.f32 %v4845, %v4933
      %v4935 = vpop.f32.mrf.mxu0
      %v4936 = vadd.f32 %v4847, %v4935
      %4937 = vmatmul.bf16.gmra.mxu0 %v4024
      %v4938 = vpop.f32.mrf.mxu0
      %v4939 = vadd.f32 %v4850, %v4938
      %v4940 = vpop.f32.mrf.mxu0
      %v4941 = vadd.f32 %v4852, %v4940
      %4942 = vdwg.mxu0
      %v4943 = vadd.f32 %v3512, %v4864
      %v4944 = vadd.f32 %v3513, %v4866
      %v4945 = vadd.f32 %v3514, %v4869
      %v4946 = vadd.f32 %v3515, %v4871
      %v4947 = vadd.f32 %v3516, %v4874
      %v4948 = vadd.f32 %v3517, %v4876
      %v4949 = vadd.f32 %v3518, %v4879
      %v4950 = vadd.f32 %v3519, %v4881
      %v4951 = vadd.f32 %v3520, %v4884
      %v4952 = vadd.f32 %v3521, %v4886
      %v4953 = vadd.f32 %v3522, %v4889
      %v4954 = vadd.f32 %v3523, %v4891
      %v4955 = vadd.f32 %v3524, %v4894
      %v4956 = vadd.f32 %v3525, %v4896
      %v4957 = vadd.f32 %v3526, %v4899
      %v4958 = vadd.f32 %v3527, %v4901
      %v4959 = vadd.f32 %v3528, %v4904
      %v4960 = vadd.f32 %v3529, %v4906
      %v4961 = vadd.f32 %v3530, %v4909
      %v4962 = vadd.f32 %v3531, %v4911
      %v4963 = vadd.f32 %v3532, %v4914
      %v4964 = vadd.f32 %v3533, %v4916
      %v4965 = vadd.f32 %v3534, %v4919
      %v4966 = vadd.f32 %v3535, %v4921
      %v4967 = vadd.f32 %v3536, %v4924
      %v4968 = vadd.f32 %v3537, %v4926
      %v4969 = vadd.f32 %v3538, %v4929
      %v4970 = vadd.f32 %v3539, %v4931
      %v4971 = vadd.f32 %v3540, %v4934
      %v4972 = vadd.f32 %v3541, %v4936
      %v4973 = vadd.f32 %v3542, %v4939
      %v4974 = vadd.f32 %v3543, %v4941
      %4975 = vst [vmem:[#allocation2] sm:$0xff] %v4943
      %4976 = vst [vmem:[#allocation2 + $0x8] sm:$0xff] %v4944
      %4977 = vst [vmem:[#allocation2 + $0x10] sm:$0xff] %v4945
      %4978 = vst [vmem:[#allocation2 + $0x18] sm:$0xff] %v4946
      %4979 = vst [vmem:[#allocation2 + $0x20] sm:$0xff] %v4947
      %4980 = vst [vmem:[#allocation2 + $0x28] sm:$0xff] %v4948
      %4981 = vst [vmem:[#allocation2 + $0x30] sm:$0xff] %v4949
      %4982 = vst [vmem:[#allocation2 + $0x38] sm:$0xff] %v4950
      %4983 = vst [vmem:[#allocation2 + $0x40] sm:$0xff] %v4951
      %4984 = vst [vmem:[#allocation2 + $0x48] sm:$0xff] %v4952
      %4985 = vst [vmem:[#allocation2 + $0x50] sm:$0xff] %v4953
      %4986 = vst [vmem:[#allocation2 + $0x58] sm:$0xff] %v4954
      %4987 = vst [vmem:[#allocation2 + $0x60] sm:$0xff] %v4955
      %4988 = vst [vmem:[#allocation2 + $0x68] sm:$0xff] %v4956
      %4989 = vst [vmem:[#allocation2 + $0x70] sm:$0xff] %v4957
      %4990 = vst [vmem:[#allocation2 + $0x78] sm:$0xff] %v4958
      %4991 = vst [vmem:[#allocation2 + $0x80] sm:$0xff] %v4959
      %4992 = vst [vmem:[#allocation2 + $0x88] sm:$0xff] %v4960
      %4993 = vst [vmem:[#allocation2 + $0x90] sm:$0xff] %v4961
      %4994 = vst [vmem:[#allocation2 + $0x98] sm:$0xff] %v4962
      %4995 = vst [vmem:[#allocation2 + $0xa0] sm:$0xff] %v4963
      %4996 = vst [vmem:[#allocation2 + $0xa8] sm:$0xff] %v4964
      %4997 = vst [vmem:[#allocation2 + $0xb0] sm:$0xff] %v4965
      %4998 = vst [vmem:[#allocation2 + $0xb8] sm:$0xff] %v4966
      %4999 = vst [vmem:[#allocation2 + $0xc0] sm:$0xff] %v4967
      %5000 = vst [vmem:[#allocation2 + $0xc8] sm:$0xff] %v4968
      %5001 = vst [vmem:[#allocation2 + $0xd0] sm:$0xff] %v4969
      %5002 = vst [vmem:[#allocation2 + $0xd8] sm:$0xff] %v4970
      %5003 = vst [vmem:[#allocation2 + $0xe0] sm:$0xff] %v4971
      %5004 = vst [vmem:[#allocation2 + $0xe8] sm:$0xff] %v4972
      %5005 = vst [vmem:[#allocation2 + $0xf0] sm:$0xff] %v4973
      %5006 = vst [vmem:[#allocation2 + $0xf8] sm:$0xff] %v4974
      %v5007 = vld [vmem:[#allocation2] sm:$0xff]
      %v5008 = vld [vmem:[#allocation2 + $0x8] sm:$0xff]
      %v5009 = vld [vmem:[#allocation2 + $0x10] sm:$0xff]
      %v5010 = vld [vmem:[#allocation2 + $0x18] sm:$0xff]
      %v5011 = vld [vmem:[#allocation2 + $0x20] sm:$0xff]
      %v5012 = vld [vmem:[#allocation2 + $0x28] sm:$0xff]
      %v5013 = vld [vmem:[#allocation2 + $0x30] sm:$0xff]
      %v5014 = vld [vmem:[#allocation2 + $0x38] sm:$0xff]
      %v5015 = vld [vmem:[#allocation2 + $0x40] sm:$0xff]
      %v5016 = vld [vmem:[#allocation2 + $0x48] sm:$0xff]
      %v5017 = vld [vmem:[#allocation2 + $0x50] sm:$0xff]
      %v5018 = vld [vmem:[#allocation2 + $0x58] sm:$0xff]
      %v5019 = vld [vmem:[#allocation2 + $0x60] sm:$0xff]
      %v5020 = vld [vmem:[#allocation2 + $0x68] sm:$0xff]
      %v5021 = vld [vmem:[#allocation2 + $0x70] sm:$0xff]
      %v5022 = vld [vmem:[#allocation2 + $0x78] sm:$0xff]
      %v5023 = vld [vmem:[#allocation2 + $0x80] sm:$0xff]
      %v5024 = vld [vmem:[#allocation2 + $0x88] sm:$0xff]
      %v5025 = vld [vmem:[#allocation2 + $0x90] sm:$0xff]
      %v5026 = vld [vmem:[#allocation2 + $0x98] sm:$0xff]
      %v5027 = vld [vmem:[#allocation2 + $0xa0] sm:$0xff]
      %v5028 = vld [vmem:[#allocation2 + $0xa8] sm:$0xff]
      %v5029 = vld [vmem:[#allocation2 + $0xb0] sm:$0xff]
      %v5030 = vld [vmem:[#allocation2 + $0xb8] sm:$0xff]
      %v5031 = vld [vmem:[#allocation2 + $0xc0] sm:$0xff]
      %v5032 = vld [vmem:[#allocation2 + $0xc8] sm:$0xff]
      %v5033 = vld [vmem:[#allocation2 + $0xd0] sm:$0xff]
      %v5034 = vld [vmem:[#allocation2 + $0xd8] sm:$0xff]
      %v5035 = vld [vmem:[#allocation2 + $0xe0] sm:$0xff]
      %v5036 = vld [vmem:[#allocation2 + $0xe8] sm:$0xff]
      %v5037 = vld [vmem:[#allocation2 + $0xf0] sm:$0xff]
      %v5038 = vld [vmem:[#allocation2 + $0xf8] sm:$0xff]
      %v5039 = vld [vmem:[%s279] sm:$0x1]
      %v5041 = vperm.slane %v5039, 0
      %v5043 = vmul.f32 %v5007, %v5041
      %v5044 = vmul.f32 %v5008, %v5041
      %v5045 = vmul.f32 %v5009, %v5041
      %v5046 = vmul.f32 %v5010, %v5041
      %v5047 = vmul.f32 %v5011, %v5041
      %v5048 = vmul.f32 %v5012, %v5041
      %v5049 = vmul.f32 %v5013, %v5041
      %v5050 = vmul.f32 %v5014, %v5041
      %v5051 = vmul.f32 %v5015, %v5041
      %v5052 = vmul.f32 %v5016, %v5041
      %v5053 = vmul.f32 %v5017, %v5041
      %v5054 = vmul.f32 %v5018, %v5041
      %v5055 = vmul.f32 %v5019, %v5041
      %v5056 = vmul.f32 %v5020, %v5041
      %v5057 = vmul.f32 %v5021, %v5041
      %v5058 = vmul.f32 %v5022, %v5041
      %v5059 = vmul.f32 %v5023, %v5041
      %v5060 = vmul.f32 %v5024, %v5041
      %v5061 = vmul.f32 %v5025, %v5041
      %v5062 = vmul.f32 %v5026, %v5041
      %v5063 = vmul.f32 %v5027, %v5041
      %v5064 = vmul.f32 %v5028, %v5041
      %v5065 = vmul.f32 %v5029, %v5041
      %v5066 = vmul.f32 %v5030, %v5041
      %v5067 = vmul.f32 %v5031, %v5041
      %v5068 = vmul.f32 %v5032, %v5041
      %v5069 = vmul.f32 %v5033, %v5041
      %v5070 = vmul.f32 %v5034, %v5041
      %v5071 = vmul.f32 %v5035, %v5041
      %v5072 = vmul.f32 %v5036, %v5041
      %v5073 = vmul.f32 %v5037, %v5041
      %v5074 = vmul.f32 %v5038, %v5041
      %v5075 = vld [vmem:[%s282] sm:$0x1]
      %v5077 = vperm.slane %v5075, 0
      %v5079 = vadd.f32 %v5043, %v5077
      %v5080 = vadd.f32 %v5044, %v5077
      %v5081 = vadd.f32 %v5045, %v5077
      %v5082 = vadd.f32 %v5046, %v5077
      %v5083 = vadd.f32 %v5047, %v5077
      %v5084 = vadd.f32 %v5048, %v5077
      %v5085 = vadd.f32 %v5049, %v5077
      %v5086 = vadd.f32 %v5050, %v5077
      %v5087 = vadd.f32 %v5051, %v5077
      %v5088 = vadd.f32 %v5052, %v5077
      %v5089 = vadd.f32 %v5053, %v5077
      %v5090 = vadd.f32 %v5054, %v5077
      %v5091 = vadd.f32 %v5055, %v5077
      %v5092 = vadd.f32 %v5056, %v5077
      %v5093 = vadd.f32 %v5057, %v5077
      %v5094 = vadd.f32 %v5058, %v5077
      %v5095 = vadd.f32 %v5059, %v5077
      %v5096 = vadd.f32 %v5060, %v5077
      %v5097 = vadd.f32 %v5061, %v5077
      %v5098 = vadd.f32 %v5062, %v5077
      %v5099 = vadd.f32 %v5063, %v5077
      %v5100 = vadd.f32 %v5064, %v5077
      %v5101 = vadd.f32 %v5065, %v5077
      %v5102 = vadd.f32 %v5066, %v5077
      %v5103 = vadd.f32 %v5067, %v5077
      %v5104 = vadd.f32 %v5068, %v5077
      %v5105 = vadd.f32 %v5069, %v5077
      %v5106 = vadd.f32 %v5070, %v5077
      %v5107 = vadd.f32 %v5071, %v5077
      %v5108 = vadd.f32 %v5072, %v5077
      %v5109 = vadd.f32 %v5073, %v5077
      %v5110 = vadd.f32 %v5074, %v5077
      %v5111 = vmax.f32 %v5079, 0.0
      %v5112 = vmax.f32 %v5080, 0.0
      %v5113 = vmax.f32 %v5081, 0.0
      %v5114 = vmax.f32 %v5082, 0.0
      %v5115 = vmax.f32 %v5083, 0.0
      %v5116 = vmax.f32 %v5084, 0.0
      %v5117 = vmax.f32 %v5085, 0.0
      %v5118 = vmax.f32 %v5086, 0.0
      %v5119 = vmax.f32 %v5087, 0.0
      %v5120 = vmax.f32 %v5088, 0.0
      %v5121 = vmax.f32 %v5089, 0.0
      %v5122 = vmax.f32 %v5090, 0.0
      %v5123 = vmax.f32 %v5091, 0.0
      %v5124 = vmax.f32 %v5092, 0.0
      %v5125 = vmax.f32 %v5093, 0.0
      %v5126 = vmax.f32 %v5094, 0.0
      %v5127 = vmax.f32 %v5095, 0.0
      %v5128 = vmax.f32 %v5096, 0.0
      %v5129 = vmax.f32 %v5097, 0.0
      %v5130 = vmax.f32 %v5098, 0.0
      %v5131 = vmax.f32 %v5099, 0.0
      %v5132 = vmax.f32 %v5100, 0.0
      %v5133 = vmax.f32 %v5101, 0.0
      %v5134 = vmax.f32 %v5102, 0.0
      %v5135 = vmax.f32 %v5103, 0.0
      %v5136 = vmax.f32 %v5104, 0.0
      %v5137 = vmax.f32 %v5105, 0.0
      %v5138 = vmax.f32 %v5106, 0.0
      %v5139 = vmax.f32 %v5107, 0.0
      %v5140 = vmax.f32 %v5108, 0.0
      %v5141 = vmax.f32 %v5109, 0.0
      %v5142 = vmax.f32 %v5110, 0.0
      %v5143 = vpack.c.bf16 %v5111, %v5111
      %v5144 = vpack.c.bf16 %v5112, %v5112
      %v5145 = vpack.c.bf16 %v5113, %v5113
      %v5146 = vpack.c.bf16 %v5114, %v5114
      %v5147 = vpack.c.bf16 %v5115, %v5115
      %v5148 = vpack.c.bf16 %v5116, %v5116
      %v5149 = vpack.c.bf16 %v5117, %v5117
      %v5150 = vpack.c.bf16 %v5118, %v5118
      %v5151 = vpack.c.bf16 %v5119, %v5119
      %v5152 = vpack.c.bf16 %v5120, %v5120
      %v5153 = vpack.c.bf16 %v5121, %v5121
      %v5154 = vpack.c.bf16 %v5122, %v5122
      %v5155 = vpack.c.bf16 %v5123, %v5123
      %v5156 = vpack.c.bf16 %v5124, %v5124
      %v5157 = vpack.c.bf16 %v5125, %v5125
      %v5158 = vpack.c.bf16 %v5126, %v5126
      %v5159 = vpack.c.bf16 %v5127, %v5127
      %v5160 = vpack.c.bf16 %v5128, %v5128
      %v5161 = vpack.c.bf16 %v5129, %v5129
      %v5162 = vpack.c.bf16 %v5130, %v5130
      %v5163 = vpack.c.bf16 %v5131, %v5131
      %v5164 = vpack.c.bf16 %v5132, %v5132
      %v5165 = vpack.c.bf16 %v5133, %v5133
      %v5166 = vpack.c.bf16 %v5134, %v5134
      %v5167 = vpack.c.bf16 %v5135, %v5135
      %v5168 = vpack.c.bf16 %v5136, %v5136
      %v5169 = vpack.c.bf16 %v5137, %v5137
      %v5170 = vpack.c.bf16 %v5138, %v5138
      %v5171 = vpack.c.bf16 %v5139, %v5139
      %v5172 = vpack.c.bf16 %v5140, %v5140
      %v5173 = vpack.c.bf16 %v5141, %v5141
      %v5174 = vpack.c.bf16 %v5142, %v5142
      %5175 = vst [vmem:[%s295] sm:$0xf] %v5143
      %5176 = vst [vmem:[%s295 + $0x4] sm:$0xf] %v5144
      %5177 = vst [vmem:[%s295 + $0x8] sm:$0xf] %v5145
      %5178 = vst [vmem:[%s295 + $0xc] sm:$0xf] %v5146
      %5179 = vst [vmem:[%s295 + $0x10] sm:$0xf] %v5147
      %5180 = vst [vmem:[%s295 + $0x14] sm:$0xf] %v5148
      %5181 = vst [vmem:[%s295 + $0x18] sm:$0xf] %v5149
      %5182 = vst [vmem:[%s295 + $0x1c] sm:$0xf] %v5150
      %5183 = vst [vmem:[%s295 + $0x20] sm:$0xf] %v5151
      %5184 = vst [vmem:[%s295 + $0x24] sm:$0xf] %v5152
      %5185 = vst [vmem:[%s295 + $0x28] sm:$0xf] %v5153
      %5186 = vst [vmem:[%s295 + $0x2c] sm:$0xf] %v5154
      %5187 = vst [vmem:[%s295 + $0x30] sm:$0xf] %v5155
      %5188 = vst [vmem:[%s295 + $0x34] sm:$0xf] %v5156
      %5189 = vst [vmem:[%s295 + $0x38] sm:$0xf] %v5157
      %5190 = vst [vmem:[%s295 + $0x3c] sm:$0xf] %v5158
      %5191 = vst [vmem:[%s295 + $0x40] sm:$0xf] %v5159
      %5192 = vst [vmem:[%s295 + $0x44] sm:$0xf] %v5160
      %5193 = vst [vmem:[%s295 + $0x48] sm:$0xf] %v5161
      %5194 = vst [vmem:[%s295 + $0x4c] sm:$0xf] %v5162
      %5195 = vst [vmem:[%s295 + $0x50] sm:$0xf] %v5163
      %5196 = vst [vmem:[%s295 + $0x54] sm:$0xf] %v5164
      %5197 = vst [vmem:[%s295 + $0x58] sm:$0xf] %v5165
      %5198 = vst [vmem:[%s295 + $0x5c] sm:$0xf] %v5166
      %5199 = vst [vmem:[%s295 + $0x60] sm:$0xf] %v5167
      %5200 = vst [vmem:[%s295 + $0x64] sm:$0xf] %v5168
      %5201 = vst [vmem:[%s295 + $0x68] sm:$0xf] %v5169
      %5202 = vst [vmem:[%s295 + $0x6c] sm:$0xf] %v5170
      %5203 = vst [vmem:[%s295 + $0x70] sm:$0xf] %v5171
      %5204 = vst [vmem:[%s295 + $0x74] sm:$0xf] %v5172
      %5205 = vst [vmem:[%s295 + $0x78] sm:$0xf] %v5173
      %5206 = vst [vmem:[%s295 + $0x7c] sm:$0xf] %v5174
      %s5207 = smul.u32 16, %s22
      %p5208 = scmp.lt.s32.totalorder %s20, 1
      %s5209 = scalar_select %p5208, %s20, 1
      %p5210 = scmp.lt.s32.totalorder %s5207, 15
      %s5211 = scalar_select %p5210, %s5207, 15
      %p5212 = scmp.lt.s32.totalorder %s21, 0
      %s5213 = scalar_select %p5212, %s21, 0
      %s5214 = smul.addr %s5211, 2
      %s5215 = sadd.s32 %s5213, %s5214
      %s5216 = smul.addr %s5209, 32
      %s5217 = sadd.s32 %s5215, %s5216
      %s5218 = smul.addr %s5217, 4
      %s5219 = scalar_lea.vmem %s4, %s5218
      // Predicated region
      $region37: #{_lambda_.4} parent=35 // pred_check
        %p5220 = pneg %p162
      $region38: #{_lambda_.4} parent=35 // pred_check_branch
        %5222 = sbr.rel (%p5220) target = $region40
      $region39: #{_lambda_.4} parent=35 // pred_region
        %s5223 = smul.u32 16, %s22
      $region40: #{_lambda_.4} parent=35 // pred_fallthru
        _
    $region36: #{_lambda_.4} parent=5 // pred_fallthru
      _
    %p5224 = scmp.le.s32.totalorder 2, %s10
    // Predicated region
    $region41: #{_lambda_.4} parent=5 // pred_check
      %p5225 = pneg %p5224
    $region42: #{_lambda_.4} parent=5 // pred_check_branch
      %5227 = sbr.rel (%p5225) target = $region44
    $region43: #{_lambda_.4} parent=5 // pred_region
      %s5228 = ssub.s32 %s10, 2
      // Predicated region
      $region45: #{_lambda_.4} parent=43 // pred_check
        %p5229 = pneg %p168
      $region46: #{_lambda_.4} parent=43 // pred_check_branch
        %5231 = sbr.rel (%p5229) target = $region48
      $region47: #{_lambda_.4} parent=43 // pred_region
        %s5232 = smul.u32 16, %s25
        %p5233 = scmp.lt.s32.totalorder %s23, 1
        %s5234 = scalar_select %p5233, %s23, 1
        %p5235 = scmp.lt.s32.totalorder %s5232, 15
        %s5236 = scalar_select %p5235, %s5232, 15
        %p5237 = scmp.lt.s32.totalorder %s24, 0
        %s5238 = scalar_select %p5237, %s24, 0
        %s5239 = smul.addr %s5236, 2
        %s5240 = sadd.s32 %s5238, %s5239
        %s5241 = smul.addr %s5234, 32
        %s5242 = sadd.s32 %s5240, %s5241
        %s5243 = smul.addr %s5242, 4
        %s5244 = scalar_lea.vmem %s4, %s5243
      $region48: #{_lambda_.4} parent=43 // pred_fallthru
        _
    $region44: #{_lambda_.4} parent=5 // pred_fallthru
      _
  $region6: #{_lambda_.4} parent=0 // loop_footer
    %s14 = sadd.s32 1, %s10
  $region7: #{_lambda_.4} parent=0 // loop_footer_branch
    %9 = sbr.rel target = $region3
  $region8: #{_lambda_.4} parent=0 // loop_exit
    _

</llo_original>
